<compile_context>
chip_gen: v7x
topology: tpu7x:2x2x1
jax: 0.10.0
libtpu: 0.0.40
codegen_flags: <defaults>
</compile_context>

<pallas_src>
import jax
import jax.numpy as jnp
from jax.experimental import pallas as pl
from jax.experimental.pallas import tpu as pltpu

HIDDEN = 1000          # logical hidden width (nn.Linear(input_size, 1000))
HP = 1024              # lane-padded hidden width (multiple of 128)
OUT_PAD = 128          # lane-dense output width (cols 0/1 meaningful)
VMEM_LIMIT_BYTES = 48 << 20   # < 64 MiB -> v7x safe; plenty for v5e/v6e too


def two_networks_kernel(x_ref, w1_ref, b1_ref,
                        tw2_ref, tb2_ref, pw2_ref, pb2_ref,
                        w3_ref, b3_ref, out_ref):
    x = x_ref[...]                                   # bf16, pre-cast in wrapper

    # fc1 per half from the fused (D, 2*HP) weight block; relu + bf16 cast per
    # half so the f32 fc1 outputs of both nets are never live simultaneously.
    h = jnp.maximum(
        jnp.dot(x, w1_ref[:, :HP], preferred_element_type=jnp.float32)
        + b1_ref[:, :HP], 0.0).astype(jnp.bfloat16)          # "t" branch
    g = jnp.maximum(
        jnp.dot(x, w1_ref[:, HP:], preferred_element_type=jnp.float32)
        + b1_ref[:, HP:], 0.0).astype(jnp.bfloat16)          # "p" branch

    # Per-network fc2 on the MXU, f32 accumulation, relu.
    h2 = jnp.maximum(
        jnp.dot(h, tw2_ref[...], preferred_element_type=jnp.float32)
        + tb2_ref[...], 0.0)
    g2 = jnp.maximum(
        jnp.dot(g, pw2_ref[...], preferred_element_type=jnp.float32)
        + pb2_ref[...], 0.0)

    # fc3 per branch: VPU multiply against the f32 (1, HP) weight row + XLU
    # lane reduction.  No concat, no zero MACs, no extra bf16 cast.
    t_val = jnp.sum(h2 * w3_ref[0:1, :], axis=-1, keepdims=True) + b3_ref[0:1, 0:1]
    p_val = jnp.sum(g2 * w3_ref[1:2, :], axis=-1, keepdims=True) + b3_ref[0:1, 1:2]

    t = jnp.maximum(t_val, 0.0)            # (B, 1)
    p = jax.nn.sigmoid(p_val)              # (B, 1)

    # Lane-dense store: (B, OUT_PAD) with col 0 = t, col 1 = p, rest zero.
    col = jax.lax.broadcasted_iota(jnp.int32, out_ref.shape, 1)
    out_ref[...] = jnp.where(col == 0, t, jnp.where(col == 1, p, 0.0))


def two_networks_forward(x, packed, *, batch_block=512):
    """x: (B, input_size) f32. packed: dict from pack_params(). Returns (t, p)."""
    B, D = x.shape
    xb = x.astype(jnp.bfloat16)            # pre-cast: halves activation DMA bytes

    wts = (packed["w1"], packed["b1"],
           packed["tw2"], packed["tb2"], packed["pw2"], packed["pb2"],
           packed["w3"], packed["b3"])

    if B <= 128:
        # Tiny batch: gridless, everything resident in VMEM once (per-grid-step
        # overhead would be comparable to the whole kernel).
        vmem = pl.BlockSpec(memory_space=pltpu.MemorySpace.VMEM)
        out = pl.pallas_call(
            two_networks_kernel,
            out_shape=jax.ShapeDtypeStruct((B, OUT_PAD), jnp.float32),
            in_specs=[vmem] * (1 + len(wts)),
            out_specs=vmem,
            compiler_params=pltpu.CompilerParams(
                vmem_limit_bytes=VMEM_LIMIT_BYTES),
        )(xb, *wts)
        return out[:, 0:1], out[:, 1:2]

    # Gridded path: tile over batch with a parallel grid axis (megacore).
    bb = batch_block
    # Guarantee at least 2 grid steps so both v7x TensorCores get work.
    while bb >= 128 and pl.cdiv(B, bb) < 2:
        bb //= 2
    n_steps = pl.cdiv(B, bb)
    Bp = n_steps * bb
    if Bp != B:
        xb = jnp.pad(xb, ((0, Bp - B), (0, 0)))   # zero-pad the batch, slice later

    x_map = lambda i: (i, 0)
    const_map = lambda i: (0, 0)
    out_specs = pl.BlockSpec((bb, OUT_PAD), x_map)

    def make_call(weight_pipeline_mode):
        wspecs = []
        for w in wts:
            if weight_pipeline_mode is None:
                wspecs.append(pl.BlockSpec(w.shape, const_map))
            else:
                wspecs.append(pl.BlockSpec(w.shape, const_map,
                                           pipeline_mode=weight_pipeline_mode))
        return pl.pallas_call(
            two_networks_kernel,
            out_shape=jax.ShapeDtypeStruct((Bp, OUT_PAD), jnp.float32),
            grid=(n_steps,),
            in_specs=[pl.BlockSpec((bb, D), x_map)] + wspecs,
            out_specs=out_specs,
            compiler_params=pltpu.CompilerParams(
                dimension_semantics=("parallel",),
                vmem_limit_bytes=VMEM_LIMIT_BYTES),
        )

    try:
        # Constant-index weight blocks: single-buffered (saves ~4 MiB VMEM).
        out = make_call(pl.Buffered(1))(xb, *wts)
    except Exception:
        # Fallback: default double-buffered specs if Buffered(1) is rejected.
        out = make_call(None)(xb, *wts)

    out = out[:B]
    return out[:, 0:1], out[:, 1:2]


def init_params(key, input_size):
    """PyTorch-default Linear init (uniform +/- 1/sqrt(fan_in)); weights stored (in, out)."""
    def linear(k, fan_in, fan_out):
        kw, kb = jax.random.split(k)
        bound = 1.0 / jnp.sqrt(jnp.float32(fan_in))
        w = jax.random.uniform(kw, (fan_in, fan_out), jnp.float32, -bound, bound)
        b = jax.random.uniform(kb, (fan_out,), jnp.float32, -bound, bound)
        return w, b

    keys = jax.random.split(key, 6)
    tw1, tb1 = linear(keys[0], input_size, HIDDEN)
    tw2, tb2 = linear(keys[1], HIDDEN, HIDDEN)
    tw3, tb3 = linear(keys[2], HIDDEN, 1)
    pw1, pb1 = linear(keys[3], input_size, HIDDEN)
    pw2, pb2 = linear(keys[4], HIDDEN, HIDDEN)
    pw3, pb3 = linear(keys[5], HIDDEN, 1)
    return dict(tw1=tw1, tb1=tb1, tw2=tw2, tb2=tb2, tw3=tw3, tb3=tb3,
                pw1=pw1, pb1=pb1, pw2=pw2, pb2=pb2, pw3=pw3, pb3=pb3)


def pack_params(p):
    """Zero-pad hidden 1000->1024, fuse fc1 across nets, bf16 fc1/fc2 weights,
    f32 (2, HP) fc3 weight rows (consumed on the VPU)."""
    pad_h = HP - HIDDEN
    bf = jnp.bfloat16
    pad_cols = lambda w: jnp.pad(w, ((0, 0), (0, pad_h)))
    pad_rows = lambda w: jnp.pad(w, ((0, pad_h), (0, 0)))
    pad_vec = lambda b: jnp.pad(b, (0, pad_h))

    # fc1 fused: (D, 2*HP) bf16; columns [:HP] = t net, [HP:] = p net.
    w1 = jnp.concatenate([pad_cols(p["tw1"]), pad_cols(p["pw1"])], axis=1).astype(bf)
    b1 = jnp.concatenate([pad_vec(p["tb1"]), pad_vec(p["pb1"])])[None, :]      # (1, 2*HP) f32

    # fc2 per network.
    tw2 = pad_cols(pad_rows(p["tw2"])).astype(bf)
    pw2 = pad_cols(pad_rows(p["pw2"])).astype(bf)
    tb2 = pad_vec(p["tb2"])[None, :]
    pb2 = pad_vec(p["pb2"])[None, :]

    # fc3 weight rows kept in f32 (tiny): row 0 = t, row 1 = p.
    w3 = jnp.stack([pad_vec(p["tw3"][:, 0]), pad_vec(p["pw3"][:, 0])], axis=0)  # (2, HP)
    b3 = jnp.concatenate([p["tb3"], p["pb3"]])[None, :]                          # (1, 2)

    return dict(w1=w1, b1=b1, tw2=tw2, tb2=tb2, pw2=pw2, pb2=pb2, w3=w3, b3=b3)


def reference_forward_packed(x, pk):
    """Pure-JAX reference with the SAME bf16 / f32 mix as the kernel."""
    xb = x.astype(jnp.bfloat16)
    h = jnp.maximum(jnp.dot(xb, pk["w1"][:, :HP], preferred_element_type=jnp.float32)
                    + pk["b1"][:, :HP], 0.0).astype(jnp.bfloat16)
    g = jnp.maximum(jnp.dot(xb, pk["w1"][:, HP:], preferred_element_type=jnp.float32)
                    + pk["b1"][:, HP:], 0.0).astype(jnp.bfloat16)
    h2 = jnp.maximum(jnp.dot(h, pk["tw2"], preferred_element_type=jnp.float32)
                     + pk["tb2"], 0.0)
    g2 = jnp.maximum(jnp.dot(g, pk["pw2"], preferred_element_type=jnp.float32)
                     + pk["pb2"], 0.0)
    t = jnp.maximum(jnp.sum(h2 * pk["w3"][0:1, :], axis=-1, keepdims=True)
                    + pk["b3"][:, 0:1], 0.0)
    p = jax.nn.sigmoid(jnp.sum(g2 * pk["w3"][1:2, :], axis=-1, keepdims=True)
                       + pk["b3"][:, 1:2])
    return t, p


def reference_forward_f32(x, p):
    """Full-f32 reference of the original module (overall-semantics sanity check)."""
    h = jnp.maximum(x @ p["tw1"] + p["tb1"], 0.0)
    h = jnp.maximum(h @ p["tw2"] + p["tb2"], 0.0)
    t = jnp.maximum(h @ p["tw3"] + p["tb3"], 0.0)
    g = jnp.maximum(x @ p["pw1"] + p["pb1"], 0.0)
    g = jnp.maximum(g @ p["pw2"] + p["pb2"], 0.0)
    q = jax.nn.sigmoid(g @ p["pw3"] + p["pb3"])
    return t, q


if __name__ == "__main__":
    INPUT_SIZE = 32

    key = jax.random.PRNGKey(0)
    k_x, k_p, k_x2 = jax.random.split(key, 3)
    raw = init_params(k_p, INPUT_SIZE)
    packed = pack_params(raw)

    # Small batch -> gridless path.
    x = jax.random.normal(k_x, (8, INPUT_SIZE), jnp.float32)
    t_out, p_out = two_networks_forward(x, packed)
    jax.block_until_ready((t_out, p_out))
    assert t_out.shape == (8, 1) and p_out.shape == (8, 1)

    t_ref, p_ref = reference_forward_packed(x, packed)
    assert jnp.allclose(t_out, t_ref, atol=2e-3, rtol=2e-3)
    assert jnp.allclose(p_out, p_ref, atol=2e-3, rtol=2e-3)

    # Loose check vs the full-f32 original semantics (bf16 weights ~0.4% rel error).
    t32, p32 = reference_forward_f32(x, raw)
    assert jnp.allclose(t_out, t32, atol=1e-1, rtol=1e-1)
    assert jnp.allclose(p_out, p32, atol=1e-1, rtol=1e-1)

    # Larger non-multiple batch -> padded, batch-tiled, megacore-parallel path.
    x_big = jax.random.normal(k_x2, (300, INPUT_SIZE), jnp.float32)
    t_big, p_big = two_networks_forward(x_big, packed, batch_block=128)
    jax.block_until_ready((t_big, p_big))
    assert t_big.shape == (300, 1) and p_big.shape == (300, 1)
    tb_ref, pb_ref = reference_forward_packed(x_big, packed)
    assert jnp.allclose(t_big, tb_ref, atol=2e-3, rtol=2e-3)
    assert jnp.allclose(p_big, pb_ref, atol=2e-3, rtol=2e-3)

    print("KERNEL_OK")
</pallas_src>

<mosaic_0001>
module attributes {stable_mosaic.version = 11 : i64} {
  func.func @two_networks_kernel(%arg0: memref<8x32xbf16, #tpu.memory_space<vmem>>, %arg1: memref<32x2048xbf16, #tpu.memory_space<vmem>>, %arg2: memref<1x2048xf32, #tpu.memory_space<vmem>>, %arg3: memref<1024x1024xbf16, #tpu.memory_space<vmem>>, %arg4: memref<1x1024xf32, #tpu.memory_space<vmem>>, %arg5: memref<1024x1024xbf16, #tpu.memory_space<vmem>>, %arg6: memref<1x1024xf32, #tpu.memory_space<vmem>>, %arg7: memref<2x1024xf32, #tpu.memory_space<vmem>>, %arg8: memref<1x2xf32, #tpu.memory_space<vmem>>, %arg9: memref<8x128xf32, #tpu.memory_space<vmem>>) attributes {dimension_semantics = [], scalar_prefetch = 0 : i64, scratch_operands = 0 : i64, tpu.core_type = #tpu.core_type<tc>} {
    %c0 = arith.constant 0 : index
    %c0_0 = arith.constant 0 : index
    %0 = vector.load %arg0[%c0, %c0_0] : memref<8x32xbf16, #tpu.memory_space<vmem>>, vector<8x32xbf16>
    %c0_1 = arith.constant 0 : index
    %c0_2 = arith.constant 0 : index
    %1 = vector.load %arg1[%c0_1, %c0_2] : memref<32x2048xbf16, #tpu.memory_space<vmem>>, vector<32x1024xbf16>
    %cst = arith.constant dense<0.000000e+00> : vector<8x1024xf32>
    %2 = tpu.matmul %0, %1, %cst {dimension_numbers = #tpu.dot_dimension_numbers<[1], [0], [0], [1], [0, 0, 1, 1], [], []>} : vector<8x32xbf16>, vector<32x1024xbf16>, vector<8x1024xf32> -> vector<8x1024xf32>
    %c0_3 = arith.constant 0 : index
    %c0_4 = arith.constant 0 : index
    %3 = vector.load %arg2[%c0_3, %c0_4] : memref<1x2048xf32, #tpu.memory_space<vmem>>, vector<1x1024xf32>
    %4 = vector.broadcast %3 : vector<1x1024xf32> to vector<8x1024xf32>
    %5 = arith.addf %2, %4 : vector<8x1024xf32>
    %cst_5 = arith.constant 0.000000e+00 : f32
    %6 = vector.broadcast %cst_5 : f32 to vector<8x1024xf32>
    %7 = arith.maximumf %5, %6 : vector<8x1024xf32>
    %8 = arith.truncf %7 : vector<8x1024xf32> to vector<8x1024xbf16>
    %c0_6 = arith.constant 0 : index
    %c1024 = arith.constant 1024 : index
    %9 = vector.load %arg1[%c0_6, %c1024] : memref<32x2048xbf16, #tpu.memory_space<vmem>>, vector<32x1024xbf16>
    %cst_7 = arith.constant dense<0.000000e+00> : vector<8x1024xf32>
    %10 = tpu.matmul %0, %9, %cst_7 {dimension_numbers = #tpu.dot_dimension_numbers<[1], [0], [0], [1], [0, 0, 1, 1], [], []>} : vector<8x32xbf16>, vector<32x1024xbf16>, vector<8x1024xf32> -> vector<8x1024xf32>
    %c0_8 = arith.constant 0 : index
    %c1024_9 = arith.constant 1024 : index
    %11 = vector.load %arg2[%c0_8, %c1024_9] : memref<1x2048xf32, #tpu.memory_space<vmem>>, vector<1x1024xf32>
    %12 = vector.broadcast %11 : vector<1x1024xf32> to vector<8x1024xf32>
    %13 = arith.addf %10, %12 : vector<8x1024xf32>
    %cst_10 = arith.constant 0.000000e+00 : f32
    %14 = vector.broadcast %cst_10 : f32 to vector<8x1024xf32>
    %15 = arith.maximumf %13, %14 : vector<8x1024xf32>
    %16 = arith.truncf %15 : vector<8x1024xf32> to vector<8x1024xbf16>
    %c0_11 = arith.constant 0 : index
    %c0_12 = arith.constant 0 : index
    %17 = vector.load %arg3[%c0_11, %c0_12] : memref<1024x1024xbf16, #tpu.memory_space<vmem>>, vector<1024x1024xbf16>
    %cst_13 = arith.constant dense<0.000000e+00> : vector<8x1024xf32>
    %18 = tpu.matmul %8, %17, %cst_13 {dimension_numbers = #tpu.dot_dimension_numbers<[1], [0], [0], [1], [0, 0, 1, 1], [], []>} : vector<8x1024xbf16>, vector<1024x1024xbf16>, vector<8x1024xf32> -> vector<8x1024xf32>
    %c0_14 = arith.constant 0 : index
    %c0_15 = arith.constant 0 : index
    %19 = vector.load %arg4[%c0_14, %c0_15] : memref<1x1024xf32, #tpu.memory_space<vmem>>, vector<1x1024xf32>
    %20 = vector.broadcast %19 : vector<1x1024xf32> to vector<8x1024xf32>
    %21 = arith.addf %18, %20 : vector<8x1024xf32>
    %cst_16 = arith.constant 0.000000e+00 : f32
    %22 = vector.broadcast %cst_16 : f32 to vector<8x1024xf32>
    %23 = arith.maximumf %21, %22 : vector<8x1024xf32>
    %c0_17 = arith.constant 0 : index
    %c0_18 = arith.constant 0 : index
    %24 = vector.load %arg5[%c0_17, %c0_18] : memref<1024x1024xbf16, #tpu.memory_space<vmem>>, vector<1024x1024xbf16>
    %cst_19 = arith.constant dense<0.000000e+00> : vector<8x1024xf32>
    %25 = tpu.matmul %16, %24, %cst_19 {dimension_numbers = #tpu.dot_dimension_numbers<[1], [0], [0], [1], [0, 0, 1, 1], [], []>} : vector<8x1024xbf16>, vector<1024x1024xbf16>, vector<8x1024xf32> -> vector<8x1024xf32>
    %c0_20 = arith.constant 0 : index
    %c0_21 = arith.constant 0 : index
    %26 = vector.load %arg6[%c0_20, %c0_21] : memref<1x1024xf32, #tpu.memory_space<vmem>>, vector<1x1024xf32>
    %27 = vector.broadcast %26 : vector<1x1024xf32> to vector<8x1024xf32>
    %28 = arith.addf %25, %27 : vector<8x1024xf32>
    %cst_22 = arith.constant 0.000000e+00 : f32
    %29 = vector.broadcast %cst_22 : f32 to vector<8x1024xf32>
    %30 = arith.maximumf %28, %29 : vector<8x1024xf32>
    %c0_23 = arith.constant 0 : index
    %c0_24 = arith.constant 0 : index
    %31 = vector.load %arg7[%c0_23, %c0_24] : memref<2x1024xf32, #tpu.memory_space<vmem>>, vector<1x1024xf32>
    %32 = vector.broadcast %31 : vector<1x1024xf32> to vector<8x1024xf32>
    %33 = arith.mulf %23, %32 : vector<8x1024xf32>
    %cst_25 = arith.constant dense<0.000000e+00> : vector<8xf32>
    %34 = vector.multi_reduction <add>, %33, %cst_25 [1] : vector<8x1024xf32> to vector<8xf32>
    %35 = vector.shape_cast %34 : vector<8xf32> to vector<8x1xf32>
    %c0_26 = arith.constant 0 : index
    %c0_27 = arith.constant 0 : index
    %36 = vector.load %arg8[%c0_26, %c0_27] : memref<1x2xf32, #tpu.memory_space<vmem>>, vector<1x1xf32>
    %37 = vector.broadcast %36 : vector<1x1xf32> to vector<8x1xf32>
    %38 = arith.addf %35, %37 : vector<8x1xf32>
    %c1 = arith.constant 1 : index
    %c0_28 = arith.constant 0 : index
    %39 = vector.load %arg7[%c1, %c0_28] : memref<2x1024xf32, #tpu.memory_space<vmem>>, vector<1x1024xf32>
    %40 = vector.broadcast %39 : vector<1x1024xf32> to vector<8x1024xf32>
    %41 = arith.mulf %30, %40 : vector<8x1024xf32>
    %cst_29 = arith.constant dense<0.000000e+00> : vector<8xf32>
    %42 = vector.multi_reduction <add>, %41, %cst_29 [1] : vector<8x1024xf32> to vector<8xf32>
    %43 = vector.shape_cast %42 : vector<8xf32> to vector<8x1xf32>
    %c0_30 = arith.constant 0 : index
    %c1_31 = arith.constant 1 : index
    %44 = vector.load %arg8[%c0_30, %c1_31] : memref<1x2xf32, #tpu.memory_space<vmem>>, vector<1x1xf32>
    %45 = vector.broadcast %44 : vector<1x1xf32> to vector<8x1xf32>
    %46 = arith.addf %43, %45 : vector<8x1xf32>
    %cst_32 = arith.constant 0.000000e+00 : f32
    %47 = vector.broadcast %cst_32 : f32 to vector<8x1xf32>
    %48 = arith.maximumf %38, %47 : vector<8x1xf32>
    %49 = arith.negf %46 : vector<8x1xf32>
    %50 = math.exp %49 : vector<8x1xf32>
    %cst_33 = arith.constant 1.000000e+00 : f32
    %51 = vector.broadcast %cst_33 : f32 to vector<8x1xf32>
    %52 = arith.addf %51, %50 : vector<8x1xf32>
    %53 = arith.divf %51, %52 : vector<8x1xf32>
    %54 = tpu.iota {dimensions = array<i32: 1>} : vector<8x128xi32>
    %c0_i32 = arith.constant 0 : i32
    %55 = vector.broadcast %c0_i32 : i32 to vector<8x128xi32>
    %56 = arith.cmpi eq, %54, %55 : vector<8x128xi32>
    %c1_i32 = arith.constant 1 : i32
    %57 = vector.broadcast %c1_i32 : i32 to vector<8x128xi32>
    %58 = arith.cmpi eq, %54, %57 : vector<8x128xi32>
    %cst_34 = arith.constant 0.000000e+00 : f32
    %59 = vector.shape_cast %53 : vector<8x1xf32> to vector<8x1xf32>
    %60 = vector.broadcast %59 : vector<8x1xf32> to vector<8x128xf32>
    %61 = vector.broadcast %cst_34 : f32 to vector<8x128xf32>
    %62 = arith.select %58, %60, %61 : vector<8x128xi1>, vector<8x128xf32>
    %63 = vector.shape_cast %48 : vector<8x1xf32> to vector<8x1xf32>
    %64 = vector.broadcast %63 : vector<8x1xf32> to vector<8x128xf32>
    %65 = arith.select %56, %64, %62 : vector<8x128xi1>, vector<8x128xf32>
    %c0_35 = arith.constant 0 : index
    %c0_36 = arith.constant 0 : index
    %66 = vector.load %arg9[%c0_35, %c0_36] : memref<8x128xf32, #tpu.memory_space<vmem>>, vector<8x128xf32>
    tpu.vector_store %arg9[%c0_35, %c0_36], %65 {strides = array<i32>} : memref<8x128xf32, #tpu.memory_space<vmem>>, vector<8x128xf32>,
    return
  }
}

</mosaic_0001>

<llo_original>
// kernel: tpu_custom_call.1
$region0: #{tpu_custom_call.1}
  #allocation0 [shape = 'u32[]', space=smem, size = 0x4, offset = 0x4, fixed_abs, tag = 'smem constant byte address 0x4 - core index']
  #allocation1 [shape = 'u32[144,128]{1,0:T(1,128)}', space=vmem, size = 0x12000, scoped, tag = 'internal scratch']
  %s0 = inlined_call_operand.hbm [shape: bf16[8,32], index: 0, kind: input, shape index: {}]
  %s1 = inlined_call_operand.hbm [shape: bf16[32,2048], index: 1, kind: input, shape index: {}]
  %s2 = inlined_call_operand.hbm [shape: f32[1,2048], index: 2, kind: input, shape index: {}]
  %s3 = inlined_call_operand.hbm [shape: bf16[1024,1024], index: 3, kind: input, shape index: {}]
  %s4 = inlined_call_operand.hbm [shape: f32[1,1024], index: 4, kind: input, shape index: {}]
  %s5 = inlined_call_operand.hbm [shape: bf16[1024,1024], index: 5, kind: input, shape index: {}]
  %s6 = inlined_call_operand.hbm [shape: f32[1,1024], index: 6, kind: input, shape index: {}]
  %s7 = inlined_call_operand.hbm [shape: f32[2,1024], index: 7, kind: input, shape index: {}]
  %s8 = inlined_call_operand.hbm [shape: f32[1,2], index: 8, kind: input, shape index: {}]
  %s9 = inlined_call_operand.hbm [shape: f32[8,128], index: 9, kind: output, shape index: {}]
  %s10 = sld [smem:[#allocation0]]
  $region82: #{tpu_custom_call.1} parent=0
    _
  %s12 = ssub.s32 1, %s10
  %s13 = scalar_select 0, %s12, %s10
  $region1: #{tpu_custom_call.1} parent=0
    #allocation2 [shape = 'u8[2048]{0}', space=vmem, size = 0x800, scoped, tag = 'input window, operand 0, single buffered']
    #allocation3 [shape = 's32[1]{0}', space=sflag, size = 0x4, scoped, tag = 'scoped memory for tpu_custom_call.1']
    #allocation4 [shape = 's32[1]{0}', space=sflag, size = 0x4, scoped, tag = 'scoped memory for tpu_custom_call.1']
    #allocation5 [shape = 'u8[131072]{0}', space=vmem, size = 0x20000, scoped, tag = 'input window, operand 1, single buffered']
    #allocation6 [shape = 's32[1]{0}', space=sflag, size = 0x4, scoped, tag = 'scoped memory for tpu_custom_call.1']
    #allocation7 [shape = 'u8[8192]{0}', space=vmem, size = 0x2000, scoped, tag = 'input window, operand 2, single buffered']
    #allocation8 [shape = 'u8[2097152]{0}', space=vmem, size = 0x200000, scoped, tag = 'input window, operand 3, single buffered']
    #allocation9 [shape = 's32[1]{0}', space=sflag, size = 0x4, scoped, tag = 'scoped memory for tpu_custom_call.1']
    #allocation10 [shape = 'u8[4096]{0}', space=vmem, size = 0x1000, scoped, tag = 'input window, operand 4, single buffered']
    #allocation11 [shape = 'u8[2097152]{0}', space=vmem, size = 0x200000, scoped, tag = 'input window, operand 5, single buffered']
    #allocation12 [shape = 's32[1]{0}', space=sflag, size = 0x4, scoped, tag = 'scoped memory for tpu_custom_call.1']
    #allocation13 [shape = 'u8[4096]{0}', space=vmem, size = 0x1000, scoped, tag = 'input window, operand 6, single buffered']
    #allocation14 [shape = 'u8[8192]{0}', space=vmem, size = 0x2000, scoped, tag = 'input window, operand 7, single buffered']
    #allocation15 [shape = 's32[1]{0}', space=sflag, size = 0x4, scoped, tag = 'scoped memory for tpu_custom_call.1']
    #allocation16 [shape = 'u8[512]{0}', space=vmem, size = 0x400, scoped, tag = 'input window, operand 8, single buffered']
    #allocation17 [shape = 'u8[4096]{0}', space=vmem, size = 0x1000, scoped, tag = 'output window, operand 0, single buffered']
    %14 = vsyncpa [#allocation3], 0
    %15 = vsyncpa [#allocation6], 0
    %16 = vsyncpa [#allocation9], 0
    %17 = vsyncpa [#allocation12], 0
    %18 = vsyncpa [#allocation15], 0
    %19 = vsyncpa [#allocation4], 0
    // Predicated region
    $region2: #{tpu_custom_call.1} parent=1 // pred_check
      _
    $region3: #{tpu_custom_call.1} parent=1 // pred_check_branch
      %21 = sbr.rel (0) target = $region5
    $region4: #{tpu_custom_call.1} parent=1 // pred_region
      %s23 = ssub.s32 64, 64
      %24 = vsyncadd [#allocation3], %s23
      %s26 = sshll.u32 [#allocation2], 4
      %s27 = int_to_ptr.vmem [resolvable:$true] %s26
      %29 = dma.hbm_to_vmem [thread:$0]  %s0, 64, %s27, [#allocation3]
    $region5: #{tpu_custom_call.1} parent=1 // pred_fallthru
      _
    // Predicated region
    $region6: #{tpu_custom_call.1} parent=1 // pred_check
      _
    $region7: #{tpu_custom_call.1} parent=1 // pred_check_branch
      %31 = sbr.rel (0) target = $region9
    $region8: #{tpu_custom_call.1} parent=1 // pred_region
      %s33 = ssub.s32 4096, 4096
      %34 = vsyncadd [#allocation6], %s33
      %s35 = sshll.u32 [#allocation5], 4
      %s36 = int_to_ptr.vmem [resolvable:$true] %s35
      %41 = dma.hbm_to_vmem [thread:$0]  %s1, 4096, %s36, [#allocation6], 1024, 1024, 64
    $region9: #{tpu_custom_call.1} parent=1 // pred_fallthru
      _
    // Predicated region
    $region10: #{tpu_custom_call.1} parent=1 // pred_check
      _
    $region11: #{tpu_custom_call.1} parent=1 // pred_check_branch
      %43 = sbr.rel (0) target = $region13
    $region12: #{tpu_custom_call.1} parent=1 // pred_region
      %s45 = ssub.s32 256, 256
      %46 = vsyncadd [#allocation6], %s45
      %s48 = sshll.u32 [#allocation7], 4
      %s49 = int_to_ptr.vmem [resolvable:$true] %s48
      %51 = dma.hbm_to_vmem [thread:$0]  %s2, 256, %s49, [#allocation6]
    $region13: #{tpu_custom_call.1} parent=1 // pred_fallthru
      _
    // Predicated region
    $region14: #{tpu_custom_call.1} parent=1 // pred_check
      _
    $region15: #{tpu_custom_call.1} parent=1 // pred_check_branch
      %53 = sbr.rel (0) target = $region17
    $region16: #{tpu_custom_call.1} parent=1 // pred_region
      %s55 = ssub.s32 65536, 65536
      %56 = vsyncadd [#allocation9], %s55
      %s57 = sshll.u32 [#allocation8], 4
      %s58 = int_to_ptr.vmem [resolvable:$true] %s57
      %63 = dma.hbm_to_vmem [thread:$0]  %s3, 65536, %s58, [#allocation9], 512, 512, 32
    $region17: #{tpu_custom_call.1} parent=1 // pred_fallthru
      _
    // Predicated region
    $region18: #{tpu_custom_call.1} parent=1 // pred_check
      _
    $region19: #{tpu_custom_call.1} parent=1 // pred_check_branch
      %65 = sbr.rel (0) target = $region21
    $region20: #{tpu_custom_call.1} parent=1 // pred_region
      %s67 = ssub.s32 128, 128
      %68 = vsyncadd [#allocation9], %s67
      %s70 = sshll.u32 [#allocation10], 4
      %s71 = int_to_ptr.vmem [resolvable:$true] %s70
      %73 = dma.hbm_to_vmem [thread:$0]  %s4, 128, %s71, [#allocation9]
    $region21: #{tpu_custom_call.1} parent=1 // pred_fallthru
      _
    // Predicated region
    $region22: #{tpu_custom_call.1} parent=1 // pred_check
      _
    $region23: #{tpu_custom_call.1} parent=1 // pred_check_branch
      %75 = sbr.rel (0) target = $region25
    $region24: #{tpu_custom_call.1} parent=1 // pred_region
      %s77 = ssub.s32 65536, 65536
      %78 = vsyncadd [#allocation12], %s77
      %s79 = sshll.u32 [#allocation11], 4
      %s80 = int_to_ptr.vmem [resolvable:$true] %s79
      %85 = dma.hbm_to_vmem [thread:$0]  %s5, 65536, %s80, [#allocation12], 512, 512, 32
    $region25: #{tpu_custom_call.1} parent=1 // pred_fallthru
      _
    // Predicated region
    $region26: #{tpu_custom_call.1} parent=1 // pred_check
      _
    $region27: #{tpu_custom_call.1} parent=1 // pred_check_branch
      %87 = sbr.rel (0) target = $region29
    $region28: #{tpu_custom_call.1} parent=1 // pred_region
      %s89 = ssub.s32 128, 128
      %90 = vsyncadd [#allocation12], %s89
      %s92 = sshll.u32 [#allocation13], 4
      %s93 = int_to_ptr.vmem [resolvable:$true] %s92
      %95 = dma.hbm_to_vmem [thread:$0]  %s6, 128, %s93, [#allocation12]
    $region29: #{tpu_custom_call.1} parent=1 // pred_fallthru
      _
    // Predicated region
    $region30: #{tpu_custom_call.1} parent=1 // pred_check
      _
    $region31: #{tpu_custom_call.1} parent=1 // pred_check_branch
      %97 = sbr.rel (0) target = $region33
    $region32: #{tpu_custom_call.1} parent=1 // pred_region
      %s99 = ssub.s32 256, 256
      %100 = vsyncadd [#allocation15], %s99
      %s102 = sshll.u32 [#allocation14], 4
      %s103 = int_to_ptr.vmem [resolvable:$true] %s102
      %105 = dma.hbm_to_vmem [thread:$0]  %s7, 256, %s103, [#allocation15]
    $region33: #{tpu_custom_call.1} parent=1 // pred_fallthru
      _
    // Predicated region
    $region34: #{tpu_custom_call.1} parent=1 // pred_check
      _
    $region35: #{tpu_custom_call.1} parent=1 // pred_check_branch
      %107 = sbr.rel (0) target = $region37
    $region36: #{tpu_custom_call.1} parent=1 // pred_region
      %s109 = ssub.s32 16, 16
      %110 = vsyncadd [#allocation15], %s109
      %s112 = sshll.u32 [#allocation16], 4
      %s113 = int_to_ptr.vmem [resolvable:$true] %s112
      %115 = dma.hbm_to_vmem [thread:$0]  %s8, 16, %s113, [#allocation15]
    $region37: #{tpu_custom_call.1} parent=1 // pred_fallthru
      _
    // Predicated region
    $region38: #{tpu_custom_call.1} parent=1 // pred_check
      _
    $region39: #{tpu_custom_call.1} parent=1 // pred_check_branch
      %117 = sbr.rel (0) target = $region41
    $region40: #{tpu_custom_call.1} parent=1 // pred_region
      %118 = dma.done [#allocation3], 64
    $region41: #{tpu_custom_call.1} parent=1 // pred_fallthru
      _
    // Predicated region
    $region42: #{tpu_custom_call.1} parent=1 // pred_check
      _
    $region43: #{tpu_custom_call.1} parent=1 // pred_check_branch
      %120 = sbr.rel (0) target = $region45
    $region44: #{tpu_custom_call.1} parent=1 // pred_region
      %121 = dma.done [#allocation6], 4096
    $region45: #{tpu_custom_call.1} parent=1 // pred_fallthru
      _
    // Predicated region
    $region46: #{tpu_custom_call.1} parent=1 // pred_check
      _
    $region47: #{tpu_custom_call.1} parent=1 // pred_check_branch
      %123 = sbr.rel (0) target = $region49
    $region48: #{tpu_custom_call.1} parent=1 // pred_region
      %124 = dma.done [#allocation6], 256
    $region49: #{tpu_custom_call.1} parent=1 // pred_fallthru
      _
    // Predicated region
    $region50: #{tpu_custom_call.1} parent=1 // pred_check
      _
    $region51: #{tpu_custom_call.1} parent=1 // pred_check_branch
      %126 = sbr.rel (0) target = $region53
    $region52: #{tpu_custom_call.1} parent=1 // pred_region
      %127 = dma.done [#allocation9], 65536
    $region53: #{tpu_custom_call.1} parent=1 // pred_fallthru
      _
    // Predicated region
    $region54: #{tpu_custom_call.1} parent=1 // pred_check
      _
    $region55: #{tpu_custom_call.1} parent=1 // pred_check_branch
      %129 = sbr.rel (0) target = $region57
    $region56: #{tpu_custom_call.1} parent=1 // pred_region
      %130 = dma.done [#allocation9], 128
    $region57: #{tpu_custom_call.1} parent=1 // pred_fallthru
      _
    // Predicated region
    $region58: #{tpu_custom_call.1} parent=1 // pred_check
      _
    $region59: #{tpu_custom_call.1} parent=1 // pred_check_branch
      %132 = sbr.rel (0) target = $region61
    $region60: #{tpu_custom_call.1} parent=1 // pred_region
      %133 = dma.done [#allocation12], 65536
    $region61: #{tpu_custom_call.1} parent=1 // pred_fallthru
      _
    // Predicated region
    $region62: #{tpu_custom_call.1} parent=1 // pred_check
      _
    $region63: #{tpu_custom_call.1} parent=1 // pred_check_branch
      %135 = sbr.rel (0) target = $region65
    $region64: #{tpu_custom_call.1} parent=1 // pred_region
      %136 = dma.done [#allocation12], 128
    $region65: #{tpu_custom_call.1} parent=1 // pred_fallthru
      _
    // Predicated region
    $region66: #{tpu_custom_call.1} parent=1 // pred_check
      _
    $region67: #{tpu_custom_call.1} parent=1 // pred_check_branch
      %138 = sbr.rel (0) target = $region69
    $region68: #{tpu_custom_call.1} parent=1 // pred_region
      %139 = dma.done [#allocation15], 256
    $region69: #{tpu_custom_call.1} parent=1 // pred_fallthru
      _
    // Predicated region
    $region70: #{tpu_custom_call.1} parent=1 // pred_check
      _
    $region71: #{tpu_custom_call.1} parent=1 // pred_check_branch
      %141 = sbr.rel (0) target = $region73
    $region72: #{tpu_custom_call.1} parent=1 // pred_region
      %142 = dma.done [#allocation15], 16
    $region73: #{tpu_custom_call.1} parent=1 // pred_fallthru
      _
    %v144 = vld [vmem:[#allocation2] sm:$0xf]
    %v145 = vld [vmem:[#allocation5] sm:$0xff]
    %v146 = vld [vmem:[#allocation5 + $0x8] sm:$0xff]
    %v147 = vld [vmem:[#allocation5 + $0x10] sm:$0xff]
    %v148 = vld [vmem:[#allocation5 + $0x18] sm:$0xff]
    %v149 = vld [vmem:[#allocation5 + $0x40] sm:$0xff]
    %v150 = vld [vmem:[#allocation5 + $0x48] sm:$0xff]
    %v151 = vld [vmem:[#allocation5 + $0x50] sm:$0xff]
    %v152 = vld [vmem:[#allocation5 + $0x58] sm:$0xff]
    %v153 = vld [vmem:[#allocation5 + $0x80] sm:$0xff]
    %v154 = vld [vmem:[#allocation5 + $0x88] sm:$0xff]
    %v155 = vld [vmem:[#allocation5 + $0x90] sm:$0xff]
    %v156 = vld [vmem:[#allocation5 + $0x98] sm:$0xff]
    %v157 = vld [vmem:[#allocation5 + $0xc0] sm:$0xff]
    %v158 = vld [vmem:[#allocation5 + $0xc8] sm:$0xff]
    %v159 = vld [vmem:[#allocation5 + $0xd0] sm:$0xff]
    %v160 = vld [vmem:[#allocation5 + $0xd8] sm:$0xff]
    %v161 = vld [vmem:[#allocation7] sm:$0xff]
    %v163 = vlaneseq
    %v164 = vshrl.u32 %v163, 7
    %v165 = vsub.s32 0, %v164
    %v166 = vrot.slane %v161, %v165
    %v167 = vlaneseq
    %v168 = vshrl.u32 %v167, 7
    %v169 = vsub.s32 1, %v168
    %v170 = vrot.slane %v161, %v169
    %v171 = vlaneseq
    %v172 = vshrl.u32 %v171, 7
    %v173 = vsub.s32 2, %v172
    %v174 = vrot.slane %v161, %v173
    %v175 = vlaneseq
    %v176 = vshrl.u32 %v175, 7
    %v177 = vsub.s32 3, %v176
    %v178 = vrot.slane %v161, %v177
    %v179 = vlaneseq
    %v180 = vshrl.u32 %v179, 7
    %v181 = vsub.s32 4, %v180
    %v182 = vrot.slane %v161, %v181
    %v183 = vlaneseq
    %v184 = vshrl.u32 %v183, 7
    %v185 = vsub.s32 5, %v184
    %v186 = vrot.slane %v161, %v185
    %v187 = vlaneseq
    %v188 = vshrl.u32 %v187, 7
    %v189 = vsub.s32 6, %v188
    %v190 = vrot.slane %v161, %v189
    %v191 = vlaneseq
    %v192 = vshrl.u32 %v191, 7
    %v193 = vsub.s32 7, %v192
    %v194 = vrot.slane %v161, %v193
    %v219 = vunpack.c.l.b16 %v145
    %v220 = vunpack.c.h.b16 %v145
    %v221 = vunpack.c.l.b16 %v146
    %v222 = vunpack.c.h.b16 %v146
    %v223 = vunpack.c.l.b16 %v147
    %v224 = vunpack.c.h.b16 %v147
    %v225 = vunpack.c.l.b16 %v148
    %v226 = vunpack.c.h.b16 %v148
    %v227 = vunpack.c.l.b16 %v149
    %v228 = vunpack.c.h.b16 %v149
    %v229 = vunpack.c.l.b16 %v150
    %v230 = vunpack.c.h.b16 %v150
    %v231 = vunpack.c.l.b16 %v151
    %v232 = vunpack.c.h.b16 %v151
    %v233 = vunpack.c.l.b16 %v152
    %v234 = vunpack.c.h.b16 %v152
    %v235 = vunpack.c.l.b16 %v153
    %v236 = vunpack.c.h.b16 %v153
    %v237 = vunpack.c.l.b16 %v154
    %v238 = vunpack.c.h.b16 %v154
    %v239 = vunpack.c.l.b16 %v155
    %v240 = vunpack.c.h.b16 %v155
    %v241 = vunpack.c.l.b16 %v156
    %v242 = vunpack.c.h.b16 %v156
    %v243 = vunpack.c.l.b16 %v157
    %v244 = vunpack.c.h.b16 %v157
    %v245 = vunpack.c.l.b16 %v158
    %v246 = vunpack.c.h.b16 %v158
    %v247 = vunpack.c.l.b16 %v159
    %v248 = vunpack.c.h.b16 %v159
    %v249 = vunpack.c.l.b16 %v160
    %v250 = vunpack.c.h.b16 %v160
    %v251 = vpack.c.b16 %v227, %v219
    %v252 = vpack.c.b16 %v228, %v220
    %v253 = vpack.c.b16 %v229, %v221
    %v254 = vpack.c.b16 %v230, %v222
    %v255 = vpack.c.b16 %v231, %v223
    %v256 = vpack.c.b16 %v232, %v224
    %v257 = vpack.c.b16 %v233, %v225
    %v258 = vpack.c.b16 %v234, %v226
    %v259 = vpack.c.b16 %v243, %v235
    %v260 = vpack.c.b16 %v244, %v236
    %v261 = vpack.c.b16 %v245, %v237
    %v262 = vpack.c.b16 %v246, %v238
    %v263 = vpack.c.b16 %v247, %v239
    %v264 = vpack.c.b16 %v248, %v240
    %v265 = vpack.c.b16 %v249, %v241
    %v266 = vpack.c.b16 %v250, %v242
    %vm283 = vcmask 261120
    %v285 = vsel %vm283, %v144, 0
    %287 = vmatprep.subr.bf16.mxu0 %v252
    %288 = vmatpush1.bf16.msra.mxu0 %v251
    %289 = vmatprep.subr.bf16.mxu0 %v260
    %290 = vmatpush1.bf16.msra.mxu0 %v259
    %291 = vmatprep.subr.bf16.mxu0 0
    %292 = vmatpush1.bf16.msra.mxu0 0
    %293 = vmatprep.subr.bf16.mxu0 0
    %294 = vmatpush1.bf16.msra.mxu0 0
    %295 = vmatprep.subr.bf16.mxu0 0
    %296 = vmatpush1.bf16.msra.mxu0 0
    %297 = vmatprep.subr.bf16.mxu0 0
    %298 = vmatpush1.bf16.msra.mxu0 0
    %299 = vmatprep.subr.bf16.mxu0 0
    %300 = vmatpush1.bf16.msra.mxu0 0
    %301 = vmatprep.subr.bf16.mxu0 0
    %302 = vmatpush1.bf16.msra.mxu0 0
    %303 = vmatprep.subr.bf16.mxu0 0
    %304 = vmatpush1.bf16.msra.mxu0 0
    %305 = vmatprep.subr.bf16.mxu0 0
    %306 = vmatpush1.bf16.msra.mxu0 0
    %307 = vmatprep.subr.bf16.mxu0 0
    %308 = vmatpush1.bf16.msra.mxu0 0
    %309 = vmatprep.subr.bf16.mxu0 0
    %310 = vmatpush1.bf16.msra.mxu0 0
    %311 = vmatprep.subr.bf16.mxu0 0
    %312 = vmatpush1.bf16.msra.mxu0 0
    %313 = vmatprep.subr.bf16.mxu0 0
    %314 = vmatpush1.bf16.msra.mxu0 0
    %315 = vmatprep.subr.bf16.mxu0 0
    %316 = vmatpush1.bf16.msra.mxu0 0
    %317 = vmatprep.subr.bf16.mxu0 0
    %318 = vmatpush1.bf16.msra.mxu0 0
    %319 = vmatprep.mubr.bf16.mxu0 0
    %320 = vmatmul.mubr.bf16.gmra.mrb[0].mxu0 %v285
    %v321 = vpop.f32.mrb[0].mxu0
    %v322 = vadd.f32 %v166, %v321
    %v323 = vpop.f32.mrb[0].mxu0
    %v324 = vadd.f32 %v170, %v323
    %v325 = vpop.f32.mrb[0].mxu0
    %v326 = vpop.f32.mrb[0].mxu0
    %327 = vdwg.mxu0
    %328 = vmatprep.subr.bf16.mxu0 %v254
    %329 = vmatpush1.bf16.msra.mxu0 %v253
    %330 = vmatprep.subr.bf16.mxu0 %v262
    %331 = vmatpush1.bf16.msra.mxu0 %v261
    %332 = vmatprep.subr.bf16.mxu0 0
    %333 = vmatpush1.bf16.msra.mxu0 0
    %334 = vmatprep.subr.bf16.mxu0 0
    %335 = vmatpush1.bf16.msra.mxu0 0
    %336 = vmatprep.subr.bf16.mxu0 0
    %337 = vmatpush1.bf16.msra.mxu0 0
    %338 = vmatprep.subr.bf16.mxu0 0
    %339 = vmatpush1.bf16.msra.mxu0 0
    %340 = vmatprep.subr.bf16.mxu0 0
    %341 = vmatpush1.bf16.msra.mxu0 0
    %342 = vmatprep.subr.bf16.mxu0 0
    %343 = vmatpush1.bf16.msra.mxu0 0
    %344 = vmatprep.subr.bf16.mxu0 0
    %345 = vmatpush1.bf16.msra.mxu0 0
    %346 = vmatprep.subr.bf16.mxu0 0
    %347 = vmatpush1.bf16.msra.mxu0 0
    %348 = vmatprep.subr.bf16.mxu0 0
    %349 = vmatpush1.bf16.msra.mxu0 0
    %350 = vmatprep.subr.bf16.mxu0 0
    %351 = vmatpush1.bf16.msra.mxu0 0
    %352 = vmatprep.subr.bf16.mxu0 0
    %353 = vmatpush1.bf16.msra.mxu0 0
    %354 = vmatprep.subr.bf16.mxu0 0
    %355 = vmatpush1.bf16.msra.mxu0 0
    %356 = vmatprep.subr.bf16.mxu0 0
    %357 = vmatpush1.bf16.msra.mxu0 0
    %358 = vmatprep.subr.bf16.mxu0 0
    %359 = vmatpush1.bf16.msra.mxu0 0
    %360 = vmatprep.mubr.bf16.mxu0 0
    %361 = vmatmul.mubr.bf16.gmra.mrb[0].mxu0 %v285
    %v362 = vpop.f32.mrb[0].mxu0
    %v363 = vadd.f32 %v174, %v362
    %v364 = vpop.f32.mrb[0].mxu0
    %v365 = vadd.f32 %v178, %v364
    %v366 = vpop.f32.mrb[0].mxu0
    %v367 = vpop.f32.mrb[0].mxu0
    %368 = vdwg.mxu0
    %369 = vmatprep.subr.bf16.mxu0 %v256
    %370 = vmatpush1.bf16.msra.mxu0 %v255
    %371 = vmatprep.subr.bf16.mxu0 %v264
    %372 = vmatpush1.bf16.msra.mxu0 %v263
    %373 = vmatprep.subr.bf16.mxu0 0
    %374 = vmatpush1.bf16.msra.mxu0 0
    %375 = vmatprep.subr.bf16.mxu0 0
    %376 = vmatpush1.bf16.msra.mxu0 0
    %377 = vmatprep.subr.bf16.mxu0 0
    %378 = vmatpush1.bf16.msra.mxu0 0
    %379 = vmatprep.subr.bf16.mxu0 0
    %380 = vmatpush1.bf16.msra.mxu0 0
    %381 = vmatprep.subr.bf16.mxu0 0
    %382 = vmatpush1.bf16.msra.mxu0 0
    %383 = vmatprep.subr.bf16.mxu0 0
    %384 = vmatpush1.bf16.msra.mxu0 0
    %385 = vmatprep.subr.bf16.mxu0 0
    %386 = vmatpush1.bf16.msra.mxu0 0
    %387 = vmatprep.subr.bf16.mxu0 0
    %388 = vmatpush1.bf16.msra.mxu0 0
    %389 = vmatprep.subr.bf16.mxu0 0
    %390 = vmatpush1.bf16.msra.mxu0 0
    %391 = vmatprep.subr.bf16.mxu0 0
    %392 = vmatpush1.bf16.msra.mxu0 0
    %393 = vmatprep.subr.bf16.mxu0 0
    %394 = vmatpush1.bf16.msra.mxu0 0
    %395 = vmatprep.subr.bf16.mxu0 0
    %396 = vmatpush1.bf16.msra.mxu0 0
    %397 = vmatprep.subr.bf16.mxu0 0
    %398 = vmatpush1.bf16.msra.mxu0 0
    %399 = vmatprep.subr.bf16.mxu0 0
    %400 = vmatpush1.bf16.msra.mxu0 0
    %401 = vmatprep.mubr.bf16.mxu0 0
    %402 = vmatmul.mubr.bf16.gmra.mrb[0].mxu0 %v285
    %v403 = vpop.f32.mrb[0].mxu0
    %v404 = vadd.f32 %v182, %v403
    %v405 = vpop.f32.mrb[0].mxu0
    %v406 = vadd.f32 %v186, %v405
    %v407 = vpop.f32.mrb[0].mxu0
    %v408 = vpop.f32.mrb[0].mxu0
    %409 = vdwg.mxu0
    %410 = vmatprep.subr.bf16.mxu0 %v258
    %411 = vmatpush1.bf16.msra.mxu0 %v257
    %412 = vmatprep.subr.bf16.mxu0 %v266
    %413 = vmatpush1.bf16.msra.mxu0 %v265
    %414 = vmatprep.subr.bf16.mxu0 0
    %415 = vmatpush1.bf16.msra.mxu0 0
    %416 = vmatprep.subr.bf16.mxu0 0
    %417 = vmatpush1.bf16.msra.mxu0 0
    %418 = vmatprep.subr.bf16.mxu0 0
    %419 = vmatpush1.bf16.msra.mxu0 0
    %420 = vmatprep.subr.bf16.mxu0 0
    %421 = vmatpush1.bf16.msra.mxu0 0
    %422 = vmatprep.subr.bf16.mxu0 0
    %423 = vmatpush1.bf16.msra.mxu0 0
    %424 = vmatprep.subr.bf16.mxu0 0
    %425 = vmatpush1.bf16.msra.mxu0 0
    %426 = vmatprep.subr.bf16.mxu0 0
    %427 = vmatpush1.bf16.msra.mxu0 0
    %428 = vmatprep.subr.bf16.mxu0 0
    %429 = vmatpush1.bf16.msra.mxu0 0
    %430 = vmatprep.subr.bf16.mxu0 0
    %431 = vmatpush1.bf16.msra.mxu0 0
    %432 = vmatprep.subr.bf16.mxu0 0
    %433 = vmatpush1.bf16.msra.mxu0 0
    %434 = vmatprep.subr.bf16.mxu0 0
    %435 = vmatpush1.bf16.msra.mxu0 0
    %436 = vmatprep.subr.bf16.mxu0 0
    %437 = vmatpush1.bf16.msra.mxu0 0
    %438 = vmatprep.subr.bf16.mxu0 0
    %439 = vmatpush1.bf16.msra.mxu0 0
    %440 = vmatprep.subr.bf16.mxu0 0
    %441 = vmatpush1.bf16.msra.mxu0 0
    %442 = vmatprep.mubr.bf16.mxu0 0
    %443 = vmatmul.mubr.bf16.gmra.mrb[0].mxu0 %v285
    %v444 = vpop.f32.mrb[0].mxu0
    %v445 = vadd.f32 %v190, %v444
    %v446 = vpop.f32.mrb[0].mxu0
    %v447 = vadd.f32 %v194, %v446
    %v448 = vpop.f32.mrb[0].mxu0
    %v449 = vpop.f32.mrb[0].mxu0
    %450 = vdwg.mxu0
    %v451 = vmax.f32 %v322, 0.0
    %v452 = vmax.f32 %v324, 0.0
    %v453 = vmax.f32 %v363, 0.0
    %v454 = vmax.f32 %v365, 0.0
    %v455 = vmax.f32 %v404, 0.0
    %v456 = vmax.f32 %v406, 0.0
    %v457 = vmax.f32 %v445, 0.0
    %v458 = vmax.f32 %v447, 0.0
    %v459 = vpack.c.bf16 %v451, %v451
    %v460 = vpack.c.bf16 %v452, %v452
    %v461 = vpack.c.bf16 %v453, %v453
    %v462 = vpack.c.bf16 %v454, %v454
    %v463 = vpack.c.bf16 %v455, %v455
    %v464 = vpack.c.bf16 %v456, %v456
    %v465 = vpack.c.bf16 %v457, %v457
    %v466 = vpack.c.bf16 %v458, %v458
    %v467 = vld [vmem:[#allocation5 + $0x20] sm:$0xff]
    %v468 = vld [vmem:[#allocation5 + $0x28] sm:$0xff]
    %v469 = vld [vmem:[#allocation5 + $0x30] sm:$0xff]
    %v470 = vld [vmem:[#allocation5 + $0x38] sm:$0xff]
    %v471 = vld [vmem:[#allocation5 + $0x60] sm:$0xff]
    %v472 = vld [vmem:[#allocation5 + $0x68] sm:$0xff]
    %v473 = vld [vmem:[#allocation5 + $0x70] sm:$0xff]
    %v474 = vld [vmem:[#allocation5 + $0x78] sm:$0xff]
    %v475 = vld [vmem:[#allocation5 + $0xa0] sm:$0xff]
    %v476 = vld [vmem:[#allocation5 + $0xa8] sm:$0xff]
    %v477 = vld [vmem:[#allocation5 + $0xb0] sm:$0xff]
    %v478 = vld [vmem:[#allocation5 + $0xb8] sm:$0xff]
    %v479 = vld [vmem:[#allocation5 + $0xe0] sm:$0xff]
    %v480 = vld [vmem:[#allocation5 + $0xe8] sm:$0xff]
    %v481 = vld [vmem:[#allocation5 + $0xf0] sm:$0xff]
    %v482 = vld [vmem:[#allocation5 + $0xf8] sm:$0xff]
    %v483 = vld [vmem:[#allocation7 + $0x8] sm:$0xff]
    %v485 = vlaneseq
    %v486 = vshrl.u32 %v485, 7
    %v487 = vsub.s32 0, %v486
    %v488 = vrot.slane %v483, %v487
    %v489 = vlaneseq
    %v490 = vshrl.u32 %v489, 7
    %v491 = vsub.s32 1, %v490
    %v492 = vrot.slane %v483, %v491
    %v493 = vlaneseq
    %v494 = vshrl.u32 %v493, 7
    %v495 = vsub.s32 2, %v494
    %v496 = vrot.slane %v483, %v495
    %v497 = vlaneseq
    %v498 = vshrl.u32 %v497, 7
    %v499 = vsub.s32 3, %v498
    %v500 = vrot.slane %v483, %v499
    %v501 = vlaneseq
    %v502 = vshrl.u32 %v501, 7
    %v503 = vsub.s32 4, %v502
    %v504 = vrot.slane %v483, %v503
    %v505 = vlaneseq
    %v506 = vshrl.u32 %v505, 7
    %v507 = vsub.s32 5, %v506
    %v508 = vrot.slane %v483, %v507
    %v509 = vlaneseq
    %v510 = vshrl.u32 %v509, 7
    %v511 = vsub.s32 6, %v510
    %v512 = vrot.slane %v483, %v511
    %v513 = vlaneseq
    %v514 = vshrl.u32 %v513, 7
    %v515 = vsub.s32 7, %v514
    %v516 = vrot.slane %v483, %v515
    %v541 = vunpack.c.l.b16 %v467
    %v542 = vunpack.c.h.b16 %v467
    %v543 = vunpack.c.l.b16 %v468
    %v544 = vunpack.c.h.b16 %v468
    %v545 = vunpack.c.l.b16 %v469
    %v546 = vunpack.c.h.b16 %v469
    %v547 = vunpack.c.l.b16 %v470
    %v548 = vunpack.c.h.b16 %v470
    %v549 = vunpack.c.l.b16 %v471
    %v550 = vunpack.c.h.b16 %v471
    %v551 = vunpack.c.l.b16 %v472
    %v552 = vunpack.c.h.b16 %v472
    %v553 = vunpack.c.l.b16 %v473
    %v554 = vunpack.c.h.b16 %v473
    %v555 = vunpack.c.l.b16 %v474
    %v556 = vunpack.c.h.b16 %v474
    %v557 = vunpack.c.l.b16 %v475
    %v558 = vunpack.c.h.b16 %v475
    %v559 = vunpack.c.l.b16 %v476
    %v560 = vunpack.c.h.b16 %v476
    %v561 = vunpack.c.l.b16 %v477
    %v562 = vunpack.c.h.b16 %v477
    %v563 = vunpack.c.l.b16 %v478
    %v564 = vunpack.c.h.b16 %v478
    %v565 = vunpack.c.l.b16 %v479
    %v566 = vunpack.c.h.b16 %v479
    %v567 = vunpack.c.l.b16 %v480
    %v568 = vunpack.c.h.b16 %v480
    %v569 = vunpack.c.l.b16 %v481
    %v570 = vunpack.c.h.b16 %v481
    %v571 = vunpack.c.l.b16 %v482
    %v572 = vunpack.c.h.b16 %v482
    %v573 = vpack.c.b16 %v549, %v541
    %v574 = vpack.c.b16 %v550, %v542
    %v575 = vpack.c.b16 %v551, %v543
    %v576 = vpack.c.b16 %v552, %v544
    %v577 = vpack.c.b16 %v553, %v545
    %v578 = vpack.c.b16 %v554, %v546
    %v579 = vpack.c.b16 %v555, %v547
    %v580 = vpack.c.b16 %v556, %v548
    %v581 = vpack.c.b16 %v565, %v557
    %v582 = vpack.c.b16 %v566, %v558
    %v583 = vpack.c.b16 %v567, %v559
    %v584 = vpack.c.b16 %v568, %v560
    %v585 = vpack.c.b16 %v569, %v561
    %v586 = vpack.c.b16 %v570, %v562
    %v587 = vpack.c.b16 %v571, %v563
    %v588 = vpack.c.b16 %v572, %v564
    %605 = vmatprep.subr.bf16.mxu0 %v574
    %606 = vmatpush1.bf16.msra.mxu0 %v573
    %607 = vmatprep.subr.bf16.mxu0 %v582
    %608 = vmatpush1.bf16.msra.mxu0 %v581
    %609 = vmatprep.subr.bf16.mxu0 0
    %610 = vmatpush1.bf16.msra.mxu0 0
    %611 = vmatprep.subr.bf16.mxu0 0
    %612 = vmatpush1.bf16.msra.mxu0 0
    %613 = vmatprep.subr.bf16.mxu0 0
    %614 = vmatpush1.bf16.msra.mxu0 0
    %615 = vmatprep.subr.bf16.mxu0 0
    %616 = vmatpush1.bf16.msra.mxu0 0
    %617 = vmatprep.subr.bf16.mxu0 0
    %618 = vmatpush1.bf16.msra.mxu0 0
    %619 = vmatprep.subr.bf16.mxu0 0
    %620 = vmatpush1.bf16.msra.mxu0 0
    %621 = vmatprep.subr.bf16.mxu0 0
    %622 = vmatpush1.bf16.msra.mxu0 0
    %623 = vmatprep.subr.bf16.mxu0 0
    %624 = vmatpush1.bf16.msra.mxu0 0
    %625 = vmatprep.subr.bf16.mxu0 0
    %626 = vmatpush1.bf16.msra.mxu0 0
    %627 = vmatprep.subr.bf16.mxu0 0
    %628 = vmatpush1.bf16.msra.mxu0 0
    %629 = vmatprep.subr.bf16.mxu0 0
    %630 = vmatpush1.bf16.msra.mxu0 0
    %631 = vmatprep.subr.bf16.mxu0 0
    %632 = vmatpush1.bf16.msra.mxu0 0
    %633 = vmatprep.subr.bf16.mxu0 0
    %634 = vmatpush1.bf16.msra.mxu0 0
    %635 = vmatprep.subr.bf16.mxu0 0
    %636 = vmatpush1.bf16.msra.mxu0 0
    %637 = vmatprep.mubr.bf16.mxu0 0
    %638 = vmatmul.mubr.bf16.gmra.mrb[0].mxu0 %v285
    %v639 = vpop.f32.mrb[0].mxu0
    %v640 = vadd.f32 %v488, %v639
    %v641 = vpop.f32.mrb[0].mxu0
    %v642 = vadd.f32 %v492, %v641
    %v643 = vpop.f32.mrb[0].mxu0
    %v644 = vpop.f32.mrb[0].mxu0
    %645 = vdwg.mxu0
    %646 = vmatprep.subr.bf16.mxu0 %v576
    %647 = vmatpush1.bf16.msra.mxu0 %v575
    %648 = vmatprep.subr.bf16.mxu0 %v584
    %649 = vmatpush1.bf16.msra.mxu0 %v583
    %650 = vmatprep.subr.bf16.mxu0 0
    %651 = vmatpush1.bf16.msra.mxu0 0
    %652 = vmatprep.subr.bf16.mxu0 0
    %653 = vmatpush1.bf16.msra.mxu0 0
    %654 = vmatprep.subr.bf16.mxu0 0
    %655 = vmatpush1.bf16.msra.mxu0 0
    %656 = vmatprep.subr.bf16.mxu0 0
    %657 = vmatpush1.bf16.msra.mxu0 0
    %658 = vmatprep.subr.bf16.mxu0 0
    %659 = vmatpush1.bf16.msra.mxu0 0
    %660 = vmatprep.subr.bf16.mxu0 0
    %661 = vmatpush1.bf16.msra.mxu0 0
    %662 = vmatprep.subr.bf16.mxu0 0
    %663 = vmatpush1.bf16.msra.mxu0 0
    %664 = vmatprep.subr.bf16.mxu0 0
    %665 = vmatpush1.bf16.msra.mxu0 0
    %666 = vmatprep.subr.bf16.mxu0 0
    %667 = vmatpush1.bf16.msra.mxu0 0
    %668 = vmatprep.subr.bf16.mxu0 0
    %669 = vmatpush1.bf16.msra.mxu0 0
    %670 = vmatprep.subr.bf16.mxu0 0
    %671 = vmatpush1.bf16.msra.mxu0 0
    %672 = vmatprep.subr.bf16.mxu0 0
    %673 = vmatpush1.bf16.msra.mxu0 0
    %674 = vmatprep.subr.bf16.mxu0 0
    %675 = vmatpush1.bf16.msra.mxu0 0
    %676 = vmatprep.subr.bf16.mxu0 0
    %677 = vmatpush1.bf16.msra.mxu0 0
    %678 = vmatprep.mubr.bf16.mxu0 0
    %679 = vmatmul.mubr.bf16.gmra.mrb[0].mxu0 %v285
    %v680 = vpop.f32.mrb[0].mxu0
    %v681 = vadd.f32 %v496, %v680
    %v682 = vpop.f32.mrb[0].mxu0
    %v683 = vadd.f32 %v500, %v682
    %v684 = vpop.f32.mrb[0].mxu0
    %v685 = vpop.f32.mrb[0].mxu0
    %686 = vdwg.mxu0
    %687 = vmatprep.subr.bf16.mxu0 %v578
    %688 = vmatpush1.bf16.msra.mxu0 %v577
    %689 = vmatprep.subr.bf16.mxu0 %v586
    %690 = vmatpush1.bf16.msra.mxu0 %v585
    %691 = vmatprep.subr.bf16.mxu0 0
    %692 = vmatpush1.bf16.msra.mxu0 0
    %693 = vmatprep.subr.bf16.mxu0 0
    %694 = vmatpush1.bf16.msra.mxu0 0
    %695 = vmatprep.subr.bf16.mxu0 0
    %696 = vmatpush1.bf16.msra.mxu0 0
    %697 = vmatprep.subr.bf16.mxu0 0
    %698 = vmatpush1.bf16.msra.mxu0 0
    %699 = vmatprep.subr.bf16.mxu0 0
    %700 = vmatpush1.bf16.msra.mxu0 0
    %701 = vmatprep.subr.bf16.mxu0 0
    %702 = vmatpush1.bf16.msra.mxu0 0
    %703 = vmatprep.subr.bf16.mxu0 0
    %704 = vmatpush1.bf16.msra.mxu0 0
    %705 = vmatprep.subr.bf16.mxu0 0
    %706 = vmatpush1.bf16.msra.mxu0 0
    %707 = vmatprep.subr.bf16.mxu0 0
    %708 = vmatpush1.bf16.msra.mxu0 0
    %709 = vmatprep.subr.bf16.mxu0 0
    %710 = vmatpush1.bf16.msra.mxu0 0
    %711 = vmatprep.subr.bf16.mxu0 0
    %712 = vmatpush1.bf16.msra.mxu0 0
    %713 = vmatprep.subr.bf16.mxu0 0
    %714 = vmatpush1.bf16.msra.mxu0 0
    %715 = vmatprep.subr.bf16.mxu0 0
    %716 = vmatpush1.bf16.msra.mxu0 0
    %717 = vmatprep.subr.bf16.mxu0 0
    %718 = vmatpush1.bf16.msra.mxu0 0
    %719 = vmatprep.mubr.bf16.mxu0 0
    %720 = vmatmul.mubr.bf16.gmra.mrb[0].mxu0 %v285
    %v721 = vpop.f32.mrb[0].mxu0
    %v722 = vadd.f32 %v504, %v721
    %v723 = vpop.f32.mrb[0].mxu0
    %v724 = vadd.f32 %v508, %v723
    %v725 = vpop.f32.mrb[0].mxu0
    %v726 = vpop.f32.mrb[0].mxu0
    %727 = vdwg.mxu0
    %728 = vmatprep.subr.bf16.mxu0 %v580
    %729 = vmatpush1.bf16.msra.mxu0 %v579
    %730 = vmatprep.subr.bf16.mxu0 %v588
    %731 = vmatpush1.bf16.msra.mxu0 %v587
    %732 = vmatprep.subr.bf16.mxu0 0
    %733 = vmatpush1.bf16.msra.mxu0 0
    %734 = vmatprep.subr.bf16.mxu0 0
    %735 = vmatpush1.bf16.msra.mxu0 0
    %736 = vmatprep.subr.bf16.mxu0 0
    %737 = vmatpush1.bf16.msra.mxu0 0
    %738 = vmatprep.subr.bf16.mxu0 0
    %739 = vmatpush1.bf16.msra.mxu0 0
    %740 = vmatprep.subr.bf16.mxu0 0
    %741 = vmatpush1.bf16.msra.mxu0 0
    %742 = vmatprep.subr.bf16.mxu0 0
    %743 = vmatpush1.bf16.msra.mxu0 0
    %744 = vmatprep.subr.bf16.mxu0 0
    %745 = vmatpush1.bf16.msra.mxu0 0
    %746 = vmatprep.subr.bf16.mxu0 0
    %747 = vmatpush1.bf16.msra.mxu0 0
    %748 = vmatprep.subr.bf16.mxu0 0
    %749 = vmatpush1.bf16.msra.mxu0 0
    %750 = vmatprep.subr.bf16.mxu0 0
    %751 = vmatpush1.bf16.msra.mxu0 0
    %752 = vmatprep.subr.bf16.mxu0 0
    %753 = vmatpush1.bf16.msra.mxu0 0
    %754 = vmatprep.subr.bf16.mxu0 0
    %755 = vmatpush1.bf16.msra.mxu0 0
    %756 = vmatprep.subr.bf16.mxu0 0
    %757 = vmatpush1.bf16.msra.mxu0 0
    %758 = vmatprep.subr.bf16.mxu0 0
    %759 = vmatpush1.bf16.msra.mxu0 0
    %760 = vmatprep.mubr.bf16.mxu0 0
    %761 = vmatmul.mubr.bf16.gmra.mrb[0].mxu0 %v285
    %v762 = vpop.f32.mrb[0].mxu0
    %v763 = vadd.f32 %v512, %v762
    %v764 = vpop.f32.mrb[0].mxu0
    %v765 = vadd.f32 %v516, %v764
    %v766 = vpop.f32.mrb[0].mxu0
    %v767 = vpop.f32.mrb[0].mxu0
    %768 = vdwg.mxu0
    %v769 = vmax.f32 %v640, 0.0
    %v770 = vmax.f32 %v642, 0.0
    %v771 = vmax.f32 %v681, 0.0
    %v772 = vmax.f32 %v683, 0.0
    %v773 = vmax.f32 %v722, 0.0
    %v774 = vmax.f32 %v724, 0.0
    %v775 = vmax.f32 %v763, 0.0
    %v776 = vmax.f32 %v765, 0.0
    %v777 = vpack.c.bf16 %v769, %v769
    %v778 = vpack.c.bf16 %v770, %v770
    %v779 = vpack.c.bf16 %v771, %v771
    %v780 = vpack.c.bf16 %v772, %v772
    %v781 = vpack.c.bf16 %v773, %v773
    %v782 = vpack.c.bf16 %v774, %v774
    %v783 = vpack.c.bf16 %v775, %v775
    %v784 = vpack.c.bf16 %v776, %v776
    %v785 = vld [vmem:[#allocation8] sm:$0xff]
    %v786 = vld [vmem:[#allocation8 + $0x8] sm:$0xff]
    %v787 = vld [vmem:[#allocation8 + $0x10] sm:$0xff]
    %v788 = vld [vmem:[#allocation8 + $0x18] sm:$0xff]
    %v789 = vld [vmem:[#allocation8 + $0x20] sm:$0xff]
    %v790 = vld [vmem:[#allocation8 + $0x28] sm:$0xff]
    %v791 = vld [vmem:[#allocation8 + $0x30] sm:$0xff]
    %v792 = vld [vmem:[#allocation8 + $0x38] sm:$0xff]
    %v793 = vld [vmem:[#allocation8 + $0x40] sm:$0xff]
    %v794 = vld [vmem:[#allocation8 + $0x48] sm:$0xff]
    %v795 = vld [vmem:[#allocation8 + $0x50] sm:$0xff]
    %v796 = vld [vmem:[#allocation8 + $0x58] sm:$0xff]
    %v797 = vld [vmem:[#allocation8 + $0x60] sm:$0xff]
    %v798 = vld [vmem:[#allocation8 + $0x68] sm:$0xff]
    %v799 = vld [vmem:[#allocation8 + $0x70] sm:$0xff]
    %v800 = vld [vmem:[#allocation8 + $0x78] sm:$0xff]
    %v801 = vld [vmem:[#allocation8 + $0x80] sm:$0xff]
    %v802 = vld [vmem:[#allocation8 + $0x88] sm:$0xff]
    %v803 = vld [vmem:[#allocation8 + $0x90] sm:$0xff]
    %v804 = vld [vmem:[#allocation8 + $0x98] sm:$0xff]
    %v805 = vld [vmem:[#allocation8 + $0xa0] sm:$0xff]
    %v806 = vld [vmem:[#allocation8 + $0xa8] sm:$0xff]
    %v807 = vld [vmem:[#allocation8 + $0xb0] sm:$0xff]
    %v808 = vld [vmem:[#allocation8 + $0xb8] sm:$0xff]
    %v809 = vld [vmem:[#allocation8 + $0xc0] sm:$0xff]
    %v810 = vld [vmem:[#allocation8 + $0xc8] sm:$0xff]
    %v811 = vld [vmem:[#allocation8 + $0xd0] sm:$0xff]
    %v812 = vld [vmem:[#allocation8 + $0xd8] sm:$0xff]
    %v813 = vld [vmem:[#allocation8 + $0xe0] sm:$0xff]
    %v814 = vld [vmem:[#allocation8 + $0xe8] sm:$0xff]
    %v815 = vld [vmem:[#allocation8 + $0xf0] sm:$0xff]
    %v816 = vld [vmem:[#allocation8 + $0xf8] sm:$0xff]
    %v817 = vld [vmem:[#allocation8 + $0x100] sm:$0xff]
    %v818 = vld [vmem:[#allocation8 + $0x108] sm:$0xff]
    %v819 = vld [vmem:[#allocation8 + $0x110] sm:$0xff]
    %v820 = vld [vmem:[#allocation8 + $0x118] sm:$0xff]
    %v821 = vld [vmem:[#allocation8 + $0x120] sm:$0xff]
    %v822 = vld [vmem:[#allocation8 + $0x128] sm:$0xff]
    %v823 = vld [vmem:[#allocation8 + $0x130] sm:$0xff]
    %v824 = vld [vmem:[#allocation8 + $0x138] sm:$0xff]
    %v825 = vld [vmem:[#allocation8 + $0x140] sm:$0xff]
    %v826 = vld [vmem:[#allocation8 + $0x148] sm:$0xff]
    %v827 = vld [vmem:[#allocation8 + $0x150] sm:$0xff]
    %v828 = vld [vmem:[#allocation8 + $0x158] sm:$0xff]
    %v829 = vld [vmem:[#allocation8 + $0x160] sm:$0xff]
    %v830 = vld [vmem:[#allocation8 + $0x168] sm:$0xff]
    %v831 = vld [vmem:[#allocation8 + $0x170] sm:$0xff]
    %v832 = vld [vmem:[#allocation8 + $0x178] sm:$0xff]
    %v833 = vld [vmem:[#allocation8 + $0x180] sm:$0xff]
    %v834 = vld [vmem:[#allocation8 + $0x188] sm:$0xff]
    %v835 = vld [vmem:[#allocation8 + $0x190] sm:$0xff]
    %v836 = vld [vmem:[#allocation8 + $0x198] sm:$0xff]
    %v837 = vld [vmem:[#allocation8 + $0x1a0] sm:$0xff]
    %v838 = vld [vmem:[#allocation8 + $0x1a8] sm:$0xff]
    %v839 = vld [vmem:[#allocation8 + $0x1b0] sm:$0xff]
    %v840 = vld [vmem:[#allocation8 + $0x1b8] sm:$0xff]
    %v841 = vld [vmem:[#allocation8 + $0x1c0] sm:$0xff]
    %v842 = vld [vmem:[#allocation8 + $0x1c8] sm:$0xff]
    %v843 = vld [vmem:[#allocation8 + $0x1d0] sm:$0xff]
    %v844 = vld [vmem:[#allocation8 + $0x1d8] sm:$0xff]
    %v845 = vld [vmem:[#allocation8 + $0x1e0] sm:$0xff]
    %v846 = vld [vmem:[#allocation8 + $0x1e8] sm:$0xff]
    %v847 = vld [vmem:[#allocation8 + $0x1f0] sm:$0xff]
    %v848 = vld [vmem:[#allocation8 + $0x1f8] sm:$0xff]
    %v849 = vld [vmem:[#allocation8 + $0x200] sm:$0xff]
    %v850 = vld [vmem:[#allocation8 + $0x208] sm:$0xff]
    %v851 = vld [vmem:[#allocation8 + $0x210] sm:$0xff]
    %v852 = vld [vmem:[#allocation8 + $0x218] sm:$0xff]
    %v853 = vld [vmem:[#allocation8 + $0x220] sm:$0xff]
    %v854 = vld [vmem:[#allocation8 + $0x228] sm:$0xff]
    %v855 = vld [vmem:[#allocation8 + $0x230] sm:$0xff]
    %v856 = vld [vmem:[#allocation8 + $0x238] sm:$0xff]
    %v857 = vld [vmem:[#allocation8 + $0x240] sm:$0xff]
    %v858 = vld [vmem:[#allocation8 + $0x248] sm:$0xff]
    %v859 = vld [vmem:[#allocation8 + $0x250] sm:$0xff]
    %v860 = vld [vmem:[#allocation8 + $0x258] sm:$0xff]
    %v861 = vld [vmem:[#allocation8 + $0x260] sm:$0xff]
    %v862 = vld [vmem:[#allocation8 + $0x268] sm:$0xff]
    %v863 = vld [vmem:[#allocation8 + $0x270] sm:$0xff]
    %v864 = vld [vmem:[#allocation8 + $0x278] sm:$0xff]
    %v865 = vld [vmem:[#allocation8 + $0x280] sm:$0xff]
    %v866 = vld [vmem:[#allocation8 + $0x288] sm:$0xff]
    %v867 = vld [vmem:[#allocation8 + $0x290] sm:$0xff]
    %v868 = vld [vmem:[#allocation8 + $0x298] sm:$0xff]
    %v869 = vld [vmem:[#allocation8 + $0x2a0] sm:$0xff]
    %v870 = vld [vmem:[#allocation8 + $0x2a8] sm:$0xff]
    %v871 = vld [vmem:[#allocation8 + $0x2b0] sm:$0xff]
    %v872 = vld [vmem:[#allocation8 + $0x2b8] sm:$0xff]
    %v873 = vld [vmem:[#allocation8 + $0x2c0] sm:$0xff]
    %v874 = vld [vmem:[#allocation8 + $0x2c8] sm:$0xff]
    %v875 = vld [vmem:[#allocation8 + $0x2d0] sm:$0xff]
    %v876 = vld [vmem:[#allocation8 + $0x2d8] sm:$0xff]
    %v877 = vld [vmem:[#allocation8 + $0x2e0] sm:$0xff]
    %v878 = vld [vmem:[#allocation8 + $0x2e8] sm:$0xff]
    %v879 = vld [vmem:[#allocation8 + $0x2f0] sm:$0xff]
    %v880 = vld [vmem:[#allocation8 + $0x2f8] sm:$0xff]
    %v881 = vld [vmem:[#allocation8 + $0x300] sm:$0xff]
    %v882 = vld [vmem:[#allocation8 + $0x308] sm:$0xff]
    %v883 = vld [vmem:[#allocation8 + $0x310] sm:$0xff]
    %v884 = vld [vmem:[#allocation8 + $0x318] sm:$0xff]
    %v885 = vld [vmem:[#allocation8 + $0x320] sm:$0xff]
    %v886 = vld [vmem:[#allocation8 + $0x328] sm:$0xff]
    %v887 = vld [vmem:[#allocation8 + $0x330] sm:$0xff]
    %v888 = vld [vmem:[#allocation8 + $0x338] sm:$0xff]
    %v889 = vld [vmem:[#allocation8 + $0x340] sm:$0xff]
    %v890 = vld [vmem:[#allocation8 + $0x348] sm:$0xff]
    %v891 = vld [vmem:[#allocation8 + $0x350] sm:$0xff]
    %v892 = vld [vmem:[#allocation8 + $0x358] sm:$0xff]
    %v893 = vld [vmem:[#allocation8 + $0x360] sm:$0xff]
    %v894 = vld [vmem:[#allocation8 + $0x368] sm:$0xff]
    %v895 = vld [vmem:[#allocation8 + $0x370] sm:$0xff]
    %v896 = vld [vmem:[#allocation8 + $0x378] sm:$0xff]
    %v897 = vld [vmem:[#allocation8 + $0x380] sm:$0xff]
    %v898 = vld [vmem:[#allocation8 + $0x388] sm:$0xff]
    %v899 = vld [vmem:[#allocation8 + $0x390] sm:$0xff]
    %v900 = vld [vmem:[#allocation8 + $0x398] sm:$0xff]
    %v901 = vld [vmem:[#allocation8 + $0x3a0] sm:$0xff]
    %v902 = vld [vmem:[#allocation8 + $0x3a8] sm:$0xff]
    %v903 = vld [vmem:[#allocation8 + $0x3b0] sm:$0xff]
    %v904 = vld [vmem:[#allocation8 + $0x3b8] sm:$0xff]
    %v905 = vld [vmem:[#allocation8 + $0x3c0] sm:$0xff]
    %v906 = vld [vmem:[#allocation8 + $0x3c8] sm:$0xff]
    %v907 = vld [vmem:[#allocation8 + $0x3d0] sm:$0xff]
    %v908 = vld [vmem:[#allocation8 + $0x3d8] sm:$0xff]
    %v909 = vld [vmem:[#allocation8 + $0x3e0] sm:$0xff]
    %v910 = vld [vmem:[#allocation8 + $0x3e8] sm:$0xff]
    %v911 = vld [vmem:[#allocation8 + $0x3f0] sm:$0xff]
    %v912 = vld [vmem:[#allocation8 + $0x3f8] sm:$0xff]
    %v913 = vld [vmem:[#allocation8 + $0x400] sm:$0xff]
    %v914 = vld [vmem:[#allocation8 + $0x408] sm:$0xff]
    %v915 = vld [vmem:[#allocation8 + $0x410] sm:$0xff]
    %v916 = vld [vmem:[#allocation8 + $0x418] sm:$0xff]
    %v917 = vld [vmem:[#allocation8 + $0x420] sm:$0xff]
    %v918 = vld [vmem:[#allocation8 + $0x428] sm:$0xff]
    %v919 = vld [vmem:[#allocation8 + $0x430] sm:$0xff]
    %v920 = vld [vmem:[#allocation8 + $0x438] sm:$0xff]
    %v921 = vld [vmem:[#allocation8 + $0x440] sm:$0xff]
    %v922 = vld [vmem:[#allocation8 + $0x448] sm:$0xff]
    %v923 = vld [vmem:[#allocation8 + $0x450] sm:$0xff]
    %v924 = vld [vmem:[#allocation8 + $0x458] sm:$0xff]
    %v925 = vld [vmem:[#allocation8 + $0x460] sm:$0xff]
    %v926 = vld [vmem:[#allocation8 + $0x468] sm:$0xff]
    %v927 = vld [vmem:[#allocation8 + $0x470] sm:$0xff]
    %v928 = vld [vmem:[#allocation8 + $0x478] sm:$0xff]
    %v929 = vld [vmem:[#allocation8 + $0x480] sm:$0xff]
    %v930 = vld [vmem:[#allocation8 + $0x488] sm:$0xff]
    %v931 = vld [vmem:[#allocation8 + $0x490] sm:$0xff]
    %v932 = vld [vmem:[#allocation8 + $0x498] sm:$0xff]
    %v933 = vld [vmem:[#allocation8 + $0x4a0] sm:$0xff]
    %v934 = vld [vmem:[#allocation8 + $0x4a8] sm:$0xff]
    %v935 = vld [vmem:[#allocation8 + $0x4b0] sm:$0xff]
    %v936 = vld [vmem:[#allocation8 + $0x4b8] sm:$0xff]
    %v937 = vld [vmem:[#allocation8 + $0x4c0] sm:$0xff]
    %v938 = vld [vmem:[#allocation8 + $0x4c8] sm:$0xff]
    %v939 = vld [vmem:[#allocation8 + $0x4d0] sm:$0xff]
    %v940 = vld [vmem:[#allocation8 + $0x4d8] sm:$0xff]
    %v941 = vld [vmem:[#allocation8 + $0x4e0] sm:$0xff]
    %v942 = vld [vmem:[#allocation8 + $0x4e8] sm:$0xff]
    %v943 = vld [vmem:[#allocation8 + $0x4f0] sm:$0xff]
    %v944 = vld [vmem:[#allocation8 + $0x4f8] sm:$0xff]
    %v945 = vld [vmem:[#allocation8 + $0x500] sm:$0xff]
    %v946 = vld [vmem:[#allocation8 + $0x508] sm:$0xff]
    %v947 = vld [vmem:[#allocation8 + $0x510] sm:$0xff]
    %v948 = vld [vmem:[#allocation8 + $0x518] sm:$0xff]
    %v949 = vld [vmem:[#allocation8 + $0x520] sm:$0xff]
    %v950 = vld [vmem:[#allocation8 + $0x528] sm:$0xff]
    %v951 = vld [vmem:[#allocation8 + $0x530] sm:$0xff]
    %v952 = vld [vmem:[#allocation8 + $0x538] sm:$0xff]
    %v953 = vld [vmem:[#allocation8 + $0x540] sm:$0xff]
    %v954 = vld [vmem:[#allocation8 + $0x548] sm:$0xff]
    %v955 = vld [vmem:[#allocation8 + $0x550] sm:$0xff]
    %v956 = vld [vmem:[#allocation8 + $0x558] sm:$0xff]
    %v957 = vld [vmem:[#allocation8 + $0x560] sm:$0xff]
    %v958 = vld [vmem:[#allocation8 + $0x568] sm:$0xff]
    %v959 = vld [vmem:[#allocation8 + $0x570] sm:$0xff]
    %v960 = vld [vmem:[#allocation8 + $0x578] sm:$0xff]
    %v961 = vld [vmem:[#allocation8 + $0x580] sm:$0xff]
    %v962 = vld [vmem:[#allocation8 + $0x588] sm:$0xff]
    %v963 = vld [vmem:[#allocation8 + $0x590] sm:$0xff]
    %v964 = vld [vmem:[#allocation8 + $0x598] sm:$0xff]
    %v965 = vld [vmem:[#allocation8 + $0x5a0] sm:$0xff]
    %v966 = vld [vmem:[#allocation8 + $0x5a8] sm:$0xff]
    %v967 = vld [vmem:[#allocation8 + $0x5b0] sm:$0xff]
    %v968 = vld [vmem:[#allocation8 + $0x5b8] sm:$0xff]
    %v969 = vld [vmem:[#allocation8 + $0x5c0] sm:$0xff]
    %v970 = vld [vmem:[#allocation8 + $0x5c8] sm:$0xff]
    %v971 = vld [vmem:[#allocation8 + $0x5d0] sm:$0xff]
    %v972 = vld [vmem:[#allocation8 + $0x5d8] sm:$0xff]
    %v973 = vld [vmem:[#allocation8 + $0x5e0] sm:$0xff]
    %v974 = vld [vmem:[#allocation8 + $0x5e8] sm:$0xff]
    %v975 = vld [vmem:[#allocation8 + $0x5f0] sm:$0xff]
    %v976 = vld [vmem:[#allocation8 + $0x5f8] sm:$0xff]
    %v977 = vld [vmem:[#allocation8 + $0x600] sm:$0xff]
    %v978 = vld [vmem:[#allocation8 + $0x608] sm:$0xff]
    %v979 = vld [vmem:[#allocation8 + $0x610] sm:$0xff]
    %v980 = vld [vmem:[#allocation8 + $0x618] sm:$0xff]
    %v981 = vld [vmem:[#allocation8 + $0x620] sm:$0xff]
    %v982 = vld [vmem:[#allocation8 + $0x628] sm:$0xff]
    %v983 = vld [vmem:[#allocation8 + $0x630] sm:$0xff]
    %v984 = vld [vmem:[#allocation8 + $0x638] sm:$0xff]
    %v985 = vld [vmem:[#allocation8 + $0x640] sm:$0xff]
    %v986 = vld [vmem:[#allocation8 + $0x648] sm:$0xff]
    %v987 = vld [vmem:[#allocation8 + $0x650] sm:$0xff]
    %v988 = vld [vmem:[#allocation8 + $0x658] sm:$0xff]
    %v989 = vld [vmem:[#allocation8 + $0x660] sm:$0xff]
    %v990 = vld [vmem:[#allocation8 + $0x668] sm:$0xff]
    %v991 = vld [vmem:[#allocation8 + $0x670] sm:$0xff]
    %v992 = vld [vmem:[#allocation8 + $0x678] sm:$0xff]
    %v993 = vld [vmem:[#allocation8 + $0x680] sm:$0xff]
    %v994 = vld [vmem:[#allocation8 + $0x688] sm:$0xff]
    %v995 = vld [vmem:[#allocation8 + $0x690] sm:$0xff]
    %v996 = vld [vmem:[#allocation8 + $0x698] sm:$0xff]
    %v997 = vld [vmem:[#allocation8 + $0x6a0] sm:$0xff]
    %v998 = vld [vmem:[#allocation8 + $0x6a8] sm:$0xff]
    %v999 = vld [vmem:[#allocation8 + $0x6b0] sm:$0xff]
    %v1000 = vld [vmem:[#allocation8 + $0x6b8] sm:$0xff]
    %v1001 = vld [vmem:[#allocation8 + $0x6c0] sm:$0xff]
    %v1002 = vld [vmem:[#allocation8 + $0x6c8] sm:$0xff]
    %v1003 = vld [vmem:[#allocation8 + $0x6d0] sm:$0xff]
    %v1004 = vld [vmem:[#allocation8 + $0x6d8] sm:$0xff]
    %v1005 = vld [vmem:[#allocation8 + $0x6e0] sm:$0xff]
    %v1006 = vld [vmem:[#allocation8 + $0x6e8] sm:$0xff]
    %v1007 = vld [vmem:[#allocation8 + $0x6f0] sm:$0xff]
    %v1008 = vld [vmem:[#allocation8 + $0x6f8] sm:$0xff]
    %v1009 = vld [vmem:[#allocation8 + $0x700] sm:$0xff]
    %v1010 = vld [vmem:[#allocation8 + $0x708] sm:$0xff]
    %v1011 = vld [vmem:[#allocation8 + $0x710] sm:$0xff]
    %v1012 = vld [vmem:[#allocation8 + $0x718] sm:$0xff]
    %v1013 = vld [vmem:[#allocation8 + $0x720] sm:$0xff]
    %v1014 = vld [vmem:[#allocation8 + $0x728] sm:$0xff]
    %v1015 = vld [vmem:[#allocation8 + $0x730] sm:$0xff]
    %v1016 = vld [vmem:[#allocation8 + $0x738] sm:$0xff]
    %v1017 = vld [vmem:[#allocation8 + $0x740] sm:$0xff]
    %v1018 = vld [vmem:[#allocation8 + $0x748] sm:$0xff]
    %v1019 = vld [vmem:[#allocation8 + $0x750] sm:$0xff]
    %v1020 = vld [vmem:[#allocation8 + $0x758] sm:$0xff]
    %v1021 = vld [vmem:[#allocation8 + $0x760] sm:$0xff]
    %v1022 = vld [vmem:[#allocation8 + $0x768] sm:$0xff]
    %v1023 = vld [vmem:[#allocation8 + $0x770] sm:$0xff]
    %v1024 = vld [vmem:[#allocation8 + $0x778] sm:$0xff]
    %v1025 = vld [vmem:[#allocation8 + $0x780] sm:$0xff]
    %v1026 = vld [vmem:[#allocation8 + $0x788] sm:$0xff]
    %v1027 = vld [vmem:[#allocation8 + $0x790] sm:$0xff]
    %v1028 = vld [vmem:[#allocation8 + $0x798] sm:$0xff]
    %v1029 = vld [vmem:[#allocation8 + $0x7a0] sm:$0xff]
    %v1030 = vld [vmem:[#allocation8 + $0x7a8] sm:$0xff]
    %v1031 = vld [vmem:[#allocation8 + $0x7b0] sm:$0xff]
    %v1032 = vld [vmem:[#allocation8 + $0x7b8] sm:$0xff]
    %v1033 = vld [vmem:[#allocation8 + $0x7c0] sm:$0xff]
    %v1034 = vld [vmem:[#allocation8 + $0x7c8] sm:$0xff]
    %v1035 = vld [vmem:[#allocation8 + $0x7d0] sm:$0xff]
    %v1036 = vld [vmem:[#allocation8 + $0x7d8] sm:$0xff]
    %v1037 = vld [vmem:[#allocation8 + $0x7e0] sm:$0xff]
    %v1038 = vld [vmem:[#allocation8 + $0x7e8] sm:$0xff]
    %v1039 = vld [vmem:[#allocation8 + $0x7f0] sm:$0xff]
    %v1040 = vld [vmem:[#allocation8 + $0x7f8] sm:$0xff]
    %v1041 = vld [vmem:[#allocation8 + $0x800] sm:$0xff]
    %v1042 = vld [vmem:[#allocation8 + $0x808] sm:$0xff]
    %v1043 = vld [vmem:[#allocation8 + $0x810] sm:$0xff]
    %v1044 = vld [vmem:[#allocation8 + $0x818] sm:$0xff]
    %v1045 = vld [vmem:[#allocation8 + $0x820] sm:$0xff]
    %v1046 = vld [vmem:[#allocation8 + $0x828] sm:$0xff]
    %v1047 = vld [vmem:[#allocation8 + $0x830] sm:$0xff]
    %v1048 = vld [vmem:[#allocation8 + $0x838] sm:$0xff]
    %v1049 = vld [vmem:[#allocation8 + $0x840] sm:$0xff]
    %v1050 = vld [vmem:[#allocation8 + $0x848] sm:$0xff]
    %v1051 = vld [vmem:[#allocation8 + $0x850] sm:$0xff]
    %v1052 = vld [vmem:[#allocation8 + $0x858] sm:$0xff]
    %v1053 = vld [vmem:[#allocation8 + $0x860] sm:$0xff]
    %v1054 = vld [vmem:[#allocation8 + $0x868] sm:$0xff]
    %v1055 = vld [vmem:[#allocation8 + $0x870] sm:$0xff]
    %v1056 = vld [vmem:[#allocation8 + $0x878] sm:$0xff]
    %v1057 = vld [vmem:[#allocation8 + $0x880] sm:$0xff]
    %v1058 = vld [vmem:[#allocation8 + $0x888] sm:$0xff]
    %v1059 = vld [vmem:[#allocation8 + $0x890] sm:$0xff]
    %v1060 = vld [vmem:[#allocation8 + $0x898] sm:$0xff]
    %v1061 = vld [vmem:[#allocation8 + $0x8a0] sm:$0xff]
    %v1062 = vld [vmem:[#allocation8 + $0x8a8] sm:$0xff]
    %v1063 = vld [vmem:[#allocation8 + $0x8b0] sm:$0xff]
    %v1064 = vld [vmem:[#allocation8 + $0x8b8] sm:$0xff]
    %v1065 = vld [vmem:[#allocation8 + $0x8c0] sm:$0xff]
    %v1066 = vld [vmem:[#allocation8 + $0x8c8] sm:$0xff]
    %v1067 = vld [vmem:[#allocation8 + $0x8d0] sm:$0xff]
    %v1068 = vld [vmem:[#allocation8 + $0x8d8] sm:$0xff]
    %v1069 = vld [vmem:[#allocation8 + $0x8e0] sm:$0xff]
    %v1070 = vld [vmem:[#allocation8 + $0x8e8] sm:$0xff]
    %v1071 = vld [vmem:[#allocation8 + $0x8f0] sm:$0xff]
    %v1072 = vld [vmem:[#allocation8 + $0x8f8] sm:$0xff]
    %v1073 = vld [vmem:[#allocation8 + $0x900] sm:$0xff]
    %v1074 = vld [vmem:[#allocation8 + $0x908] sm:$0xff]
    %v1075 = vld [vmem:[#allocation8 + $0x910] sm:$0xff]
    %v1076 = vld [vmem:[#allocation8 + $0x918] sm:$0xff]
    %v1077 = vld [vmem:[#allocation8 + $0x920] sm:$0xff]
    %v1078 = vld [vmem:[#allocation8 + $0x928] sm:$0xff]
    %v1079 = vld [vmem:[#allocation8 + $0x930] sm:$0xff]
    %v1080 = vld [vmem:[#allocation8 + $0x938] sm:$0xff]
    %v1081 = vld [vmem:[#allocation8 + $0x940] sm:$0xff]
    %v1082 = vld [vmem:[#allocation8 + $0x948] sm:$0xff]
    %v1083 = vld [vmem:[#allocation8 + $0x950] sm:$0xff]
    %v1084 = vld [vmem:[#allocation8 + $0x958] sm:$0xff]
    %v1085 = vld [vmem:[#allocation8 + $0x960] sm:$0xff]
    %v1086 = vld [vmem:[#allocation8 + $0x968] sm:$0xff]
    %v1087 = vld [vmem:[#allocation8 + $0x970] sm:$0xff]
    %v1088 = vld [vmem:[#allocation8 + $0x978] sm:$0xff]
    %v1089 = vld [vmem:[#allocation8 + $0x980] sm:$0xff]
    %v1090 = vld [vmem:[#allocation8 + $0x988] sm:$0xff]
    %v1091 = vld [vmem:[#allocation8 + $0x990] sm:$0xff]
    %v1092 = vld [vmem:[#allocation8 + $0x998] sm:$0xff]
    %v1093 = vld [vmem:[#allocation8 + $0x9a0] sm:$0xff]
    %v1094 = vld [vmem:[#allocation8 + $0x9a8] sm:$0xff]
    %v1095 = vld [vmem:[#allocation8 + $0x9b0] sm:$0xff]
    %v1096 = vld [vmem:[#allocation8 + $0x9b8] sm:$0xff]
    %v1097 = vld [vmem:[#allocation8 + $0x9c0] sm:$0xff]
    %v1098 = vld [vmem:[#allocation8 + $0x9c8] sm:$0xff]
    %v1099 = vld [vmem:[#allocation8 + $0x9d0] sm:$0xff]
    %v1100 = vld [vmem:[#allocation8 + $0x9d8] sm:$0xff]
    %v1101 = vld [vmem:[#allocation8 + $0x9e0] sm:$0xff]
    %v1102 = vld [vmem:[#allocation8 + $0x9e8] sm:$0xff]
    %v1103 = vld [vmem:[#allocation8 + $0x9f0] sm:$0xff]
    %v1104 = vld [vmem:[#allocation8 + $0x9f8] sm:$0xff]
    %v1105 = vld [vmem:[#allocation8 + $0xa00] sm:$0xff]
    %v1106 = vld [vmem:[#allocation8 + $0xa08] sm:$0xff]
    %v1107 = vld [vmem:[#allocation8 + $0xa10] sm:$0xff]
    %v1108 = vld [vmem:[#allocation8 + $0xa18] sm:$0xff]
    %v1109 = vld [vmem:[#allocation8 + $0xa20] sm:$0xff]
    %v1110 = vld [vmem:[#allocation8 + $0xa28] sm:$0xff]
    %v1111 = vld [vmem:[#allocation8 + $0xa30] sm:$0xff]
    %v1112 = vld [vmem:[#allocation8 + $0xa38] sm:$0xff]
    %v1113 = vld [vmem:[#allocation8 + $0xa40] sm:$0xff]
    %v1114 = vld [vmem:[#allocation8 + $0xa48] sm:$0xff]
    %v1115 = vld [vmem:[#allocation8 + $0xa50] sm:$0xff]
    %v1116 = vld [vmem:[#allocation8 + $0xa58] sm:$0xff]
    %v1117 = vld [vmem:[#allocation8 + $0xa60] sm:$0xff]
    %v1118 = vld [vmem:[#allocation8 + $0xa68] sm:$0xff]
    %v1119 = vld [vmem:[#allocation8 + $0xa70] sm:$0xff]
    %v1120 = vld [vmem:[#allocation8 + $0xa78] sm:$0xff]
    %v1121 = vld [vmem:[#allocation8 + $0xa80] sm:$0xff]
    %v1122 = vld [vmem:[#allocation8 + $0xa88] sm:$0xff]
    %v1123 = vld [vmem:[#allocation8 + $0xa90] sm:$0xff]
    %v1124 = vld [vmem:[#allocation8 + $0xa98] sm:$0xff]
    %v1125 = vld [vmem:[#allocation8 + $0xaa0] sm:$0xff]
    %v1126 = vld [vmem:[#allocation8 + $0xaa8] sm:$0xff]
    %v1127 = vld [vmem:[#allocation8 + $0xab0] sm:$0xff]
    %v1128 = vld [vmem:[#allocation8 + $0xab8] sm:$0xff]
    %v1129 = vld [vmem:[#allocation8 + $0xac0] sm:$0xff]
    %v1130 = vld [vmem:[#allocation8 + $0xac8] sm:$0xff]
    %v1131 = vld [vmem:[#allocation8 + $0xad0] sm:$0xff]
    %v1132 = vld [vmem:[#allocation8 + $0xad8] sm:$0xff]
    %v1133 = vld [vmem:[#allocation8 + $0xae0] sm:$0xff]
    %v1134 = vld [vmem:[#allocation8 + $0xae8] sm:$0xff]
    %v1135 = vld [vmem:[#allocation8 + $0xaf0] sm:$0xff]
    %v1136 = vld [vmem:[#allocation8 + $0xaf8] sm:$0xff]
    %v1137 = vld [vmem:[#allocation8 + $0xb00] sm:$0xff]
    %v1138 = vld [vmem:[#allocation8 + $0xb08] sm:$0xff]
    %v1139 = vld [vmem:[#allocation8 + $0xb10] sm:$0xff]
    %v1140 = vld [vmem:[#allocation8 + $0xb18] sm:$0xff]
    %v1141 = vld [vmem:[#allocation8 + $0xb20] sm:$0xff]
    %v1142 = vld [vmem:[#allocation8 + $0xb28] sm:$0xff]
    %v1143 = vld [vmem:[#allocation8 + $0xb30] sm:$0xff]
    %v1144 = vld [vmem:[#allocation8 + $0xb38] sm:$0xff]
    %v1145 = vld [vmem:[#allocation8 + $0xb40] sm:$0xff]
    %v1146 = vld [vmem:[#allocation8 + $0xb48] sm:$0xff]
    %v1147 = vld [vmem:[#allocation8 + $0xb50] sm:$0xff]
    %v1148 = vld [vmem:[#allocation8 + $0xb58] sm:$0xff]
    %v1149 = vld [vmem:[#allocation8 + $0xb60] sm:$0xff]
    %v1150 = vld [vmem:[#allocation8 + $0xb68] sm:$0xff]
    %v1151 = vld [vmem:[#allocation8 + $0xb70] sm:$0xff]
    %v1152 = vld [vmem:[#allocation8 + $0xb78] sm:$0xff]
    %v1153 = vld [vmem:[#allocation8 + $0xb80] sm:$0xff]
    %v1154 = vld [vmem:[#allocation8 + $0xb88] sm:$0xff]
    %v1155 = vld [vmem:[#allocation8 + $0xb90] sm:$0xff]
    %v1156 = vld [vmem:[#allocation8 + $0xb98] sm:$0xff]
    %v1157 = vld [vmem:[#allocation8 + $0xba0] sm:$0xff]
    %v1158 = vld [vmem:[#allocation8 + $0xba8] sm:$0xff]
    %v1159 = vld [vmem:[#allocation8 + $0xbb0] sm:$0xff]
    %v1160 = vld [vmem:[#allocation8 + $0xbb8] sm:$0xff]
    %v1161 = vld [vmem:[#allocation8 + $0xbc0] sm:$0xff]
    %v1162 = vld [vmem:[#allocation8 + $0xbc8] sm:$0xff]
    %v1163 = vld [vmem:[#allocation8 + $0xbd0] sm:$0xff]
    %v1164 = vld [vmem:[#allocation8 + $0xbd8] sm:$0xff]
    %v1165 = vld [vmem:[#allocation8 + $0xbe0] sm:$0xff]
    %v1166 = vld [vmem:[#allocation8 + $0xbe8] sm:$0xff]
    %v1167 = vld [vmem:[#allocation8 + $0xbf0] sm:$0xff]
    %v1168 = vld [vmem:[#allocation8 + $0xbf8] sm:$0xff]
    %v1169 = vld [vmem:[#allocation8 + $0xc00] sm:$0xff]
    %v1170 = vld [vmem:[#allocation8 + $0xc08] sm:$0xff]
    %v1171 = vld [vmem:[#allocation8 + $0xc10] sm:$0xff]
    %v1172 = vld [vmem:[#allocation8 + $0xc18] sm:$0xff]
    %v1173 = vld [vmem:[#allocation8 + $0xc20] sm:$0xff]
    %v1174 = vld [vmem:[#allocation8 + $0xc28] sm:$0xff]
    %v1175 = vld [vmem:[#allocation8 + $0xc30] sm:$0xff]
    %v1176 = vld [vmem:[#allocation8 + $0xc38] sm:$0xff]
    %v1177 = vld [vmem:[#allocation8 + $0xc40] sm:$0xff]
    %v1178 = vld [vmem:[#allocation8 + $0xc48] sm:$0xff]
    %v1179 = vld [vmem:[#allocation8 + $0xc50] sm:$0xff]
    %v1180 = vld [vmem:[#allocation8 + $0xc58] sm:$0xff]
    %v1181 = vld [vmem:[#allocation8 + $0xc60] sm:$0xff]
    %v1182 = vld [vmem:[#allocation8 + $0xc68] sm:$0xff]
    %v1183 = vld [vmem:[#allocation8 + $0xc70] sm:$0xff]
    %v1184 = vld [vmem:[#allocation8 + $0xc78] sm:$0xff]
    %v1185 = vld [vmem:[#allocation8 + $0xc80] sm:$0xff]
    %v1186 = vld [vmem:[#allocation8 + $0xc88] sm:$0xff]
    %v1187 = vld [vmem:[#allocation8 + $0xc90] sm:$0xff]
    %v1188 = vld [vmem:[#allocation8 + $0xc98] sm:$0xff]
    %v1189 = vld [vmem:[#allocation8 + $0xca0] sm:$0xff]
    %v1190 = vld [vmem:[#allocation8 + $0xca8] sm:$0xff]
    %v1191 = vld [vmem:[#allocation8 + $0xcb0] sm:$0xff]
    %v1192 = vld [vmem:[#allocation8 + $0xcb8] sm:$0xff]
    %v1193 = vld [vmem:[#allocation8 + $0xcc0] sm:$0xff]
    %v1194 = vld [vmem:[#allocation8 + $0xcc8] sm:$0xff]
    %v1195 = vld [vmem:[#allocation8 + $0xcd0] sm:$0xff]
    %v1196 = vld [vmem:[#allocation8 + $0xcd8] sm:$0xff]
    %v1197 = vld [vmem:[#allocation8 + $0xce0] sm:$0xff]
    %v1198 = vld [vmem:[#allocation8 + $0xce8] sm:$0xff]
    %v1199 = vld [vmem:[#allocation8 + $0xcf0] sm:$0xff]
    %v1200 = vld [vmem:[#allocation8 + $0xcf8] sm:$0xff]
    %v1201 = vld [vmem:[#allocation8 + $0xd00] sm:$0xff]
    %v1202 = vld [vmem:[#allocation8 + $0xd08] sm:$0xff]
    %v1203 = vld [vmem:[#allocation8 + $0xd10] sm:$0xff]
    %v1204 = vld [vmem:[#allocation8 + $0xd18] sm:$0xff]
    %v1205 = vld [vmem:[#allocation8 + $0xd20] sm:$0xff]
    %v1206 = vld [vmem:[#allocation8 + $0xd28] sm:$0xff]
    %v1207 = vld [vmem:[#allocation8 + $0xd30] sm:$0xff]
    %v1208 = vld [vmem:[#allocation8 + $0xd38] sm:$0xff]
    %v1209 = vld [vmem:[#allocation8 + $0xd40] sm:$0xff]
    %v1210 = vld [vmem:[#allocation8 + $0xd48] sm:$0xff]
    %v1211 = vld [vmem:[#allocation8 + $0xd50] sm:$0xff]
    %v1212 = vld [vmem:[#allocation8 + $0xd58] sm:$0xff]
    %v1213 = vld [vmem:[#allocation8 + $0xd60] sm:$0xff]
    %v1214 = vld [vmem:[#allocation8 + $0xd68] sm:$0xff]
    %v1215 = vld [vmem:[#allocation8 + $0xd70] sm:$0xff]
    %v1216 = vld [vmem:[#allocation8 + $0xd78] sm:$0xff]
    %v1217 = vld [vmem:[#allocation8 + $0xd80] sm:$0xff]
    %v1218 = vld [vmem:[#allocation8 + $0xd88] sm:$0xff]
    %v1219 = vld [vmem:[#allocation8 + $0xd90] sm:$0xff]
    %v1220 = vld [vmem:[#allocation8 + $0xd98] sm:$0xff]
    %v1221 = vld [vmem:[#allocation8 + $0xda0] sm:$0xff]
    %v1222 = vld [vmem:[#allocation8 + $0xda8] sm:$0xff]
    %v1223 = vld [vmem:[#allocation8 + $0xdb0] sm:$0xff]
    %v1224 = vld [vmem:[#allocation8 + $0xdb8] sm:$0xff]
    %v1225 = vld [vmem:[#allocation8 + $0xdc0] sm:$0xff]
    %v1226 = vld [vmem:[#allocation8 + $0xdc8] sm:$0xff]
    %v1227 = vld [vmem:[#allocation8 + $0xdd0] sm:$0xff]
    %v1228 = vld [vmem:[#allocation8 + $0xdd8] sm:$0xff]
    %v1229 = vld [vmem:[#allocation8 + $0xde0] sm:$0xff]
    %v1230 = vld [vmem:[#allocation8 + $0xde8] sm:$0xff]
    %v1231 = vld [vmem:[#allocation8 + $0xdf0] sm:$0xff]
    %v1232 = vld [vmem:[#allocation8 + $0xdf8] sm:$0xff]
    %v1233 = vld [vmem:[#allocation8 + $0xe00] sm:$0xff]
    %v1234 = vld [vmem:[#allocation8 + $0xe08] sm:$0xff]
    %v1235 = vld [vmem:[#allocation8 + $0xe10] sm:$0xff]
    %v1236 = vld [vmem:[#allocation8 + $0xe18] sm:$0xff]
    %v1237 = vld [vmem:[#allocation8 + $0xe20] sm:$0xff]
    %v1238 = vld [vmem:[#allocation8 + $0xe28] sm:$0xff]
    %v1239 = vld [vmem:[#allocation8 + $0xe30] sm:$0xff]
    %v1240 = vld [vmem:[#allocation8 + $0xe38] sm:$0xff]
    %v1241 = vld [vmem:[#allocation8 + $0xe40] sm:$0xff]
    %v1242 = vld [vmem:[#allocation8 + $0xe48] sm:$0xff]
    %v1243 = vld [vmem:[#allocation8 + $0xe50] sm:$0xff]
    %v1244 = vld [vmem:[#allocation8 + $0xe58] sm:$0xff]
    %v1245 = vld [vmem:[#allocation8 + $0xe60] sm:$0xff]
    %v1246 = vld [vmem:[#allocation8 + $0xe68] sm:$0xff]
    %v1247 = vld [vmem:[#allocation8 + $0xe70] sm:$0xff]
    %v1248 = vld [vmem:[#allocation8 + $0xe78] sm:$0xff]
    %v1249 = vld [vmem:[#allocation8 + $0xe80] sm:$0xff]
    %v1250 = vld [vmem:[#allocation8 + $0xe88] sm:$0xff]
    %v1251 = vld [vmem:[#allocation8 + $0xe90] sm:$0xff]
    %v1252 = vld [vmem:[#allocation8 + $0xe98] sm:$0xff]
    %v1253 = vld [vmem:[#allocation8 + $0xea0] sm:$0xff]
    %v1254 = vld [vmem:[#allocation8 + $0xea8] sm:$0xff]
    %v1255 = vld [vmem:[#allocation8 + $0xeb0] sm:$0xff]
    %v1256 = vld [vmem:[#allocation8 + $0xeb8] sm:$0xff]
    %v1257 = vld [vmem:[#allocation8 + $0xec0] sm:$0xff]
    %v1258 = vld [vmem:[#allocation8 + $0xec8] sm:$0xff]
    %v1259 = vld [vmem:[#allocation8 + $0xed0] sm:$0xff]
    %v1260 = vld [vmem:[#allocation8 + $0xed8] sm:$0xff]
    %v1261 = vld [vmem:[#allocation8 + $0xee0] sm:$0xff]
    %v1262 = vld [vmem:[#allocation8 + $0xee8] sm:$0xff]
    %v1263 = vld [vmem:[#allocation8 + $0xef0] sm:$0xff]
    %v1264 = vld [vmem:[#allocation8 + $0xef8] sm:$0xff]
    %v1265 = vld [vmem:[#allocation8 + $0xf00] sm:$0xff]
    %v1266 = vld [vmem:[#allocation8 + $0xf08] sm:$0xff]
    %v1267 = vld [vmem:[#allocation8 + $0xf10] sm:$0xff]
    %v1268 = vld [vmem:[#allocation8 + $0xf18] sm:$0xff]
    %v1269 = vld [vmem:[#allocation8 + $0xf20] sm:$0xff]
    %v1270 = vld [vmem:[#allocation8 + $0xf28] sm:$0xff]
    %v1271 = vld [vmem:[#allocation8 + $0xf30] sm:$0xff]
    %v1272 = vld [vmem:[#allocation8 + $0xf38] sm:$0xff]
    %v1273 = vld [vmem:[#allocation8 + $0xf40] sm:$0xff]
    %v1274 = vld [vmem:[#allocation8 + $0xf48] sm:$0xff]
    %v1275 = vld [vmem:[#allocation8 + $0xf50] sm:$0xff]
    %v1276 = vld [vmem:[#allocation8 + $0xf58] sm:$0xff]
    %v1277 = vld [vmem:[#allocation8 + $0xf60] sm:$0xff]
    %v1278 = vld [vmem:[#allocation8 + $0xf68] sm:$0xff]
    %v1279 = vld [vmem:[#allocation8 + $0xf70] sm:$0xff]
    %v1280 = vld [vmem:[#allocation8 + $0xf78] sm:$0xff]
    %v1281 = vld [vmem:[#allocation8 + $0xf80] sm:$0xff]
    %v1282 = vld [vmem:[#allocation8 + $0xf88] sm:$0xff]
    %v1283 = vld [vmem:[#allocation8 + $0xf90] sm:$0xff]
    %v1284 = vld [vmem:[#allocation8 + $0xf98] sm:$0xff]
    %v1285 = vld [vmem:[#allocation8 + $0xfa0] sm:$0xff]
    %v1286 = vld [vmem:[#allocation8 + $0xfa8] sm:$0xff]
    %v1287 = vld [vmem:[#allocation8 + $0xfb0] sm:$0xff]
    %v1288 = vld [vmem:[#allocation8 + $0xfb8] sm:$0xff]
    %v1289 = vld [vmem:[#allocation8 + $0xfc0] sm:$0xff]
    %v1290 = vld [vmem:[#allocation8 + $0xfc8] sm:$0xff]
    %v1291 = vld [vmem:[#allocation8 + $0xfd0] sm:$0xff]
    %v1292 = vld [vmem:[#allocation8 + $0xfd8] sm:$0xff]
    %v1293 = vld [vmem:[#allocation8 + $0xfe0] sm:$0xff]
    %v1294 = vld [vmem:[#allocation8 + $0xfe8] sm:$0xff]
    %v1295 = vld [vmem:[#allocation8 + $0xff0] sm:$0xff]
    %v1296 = vld [vmem:[#allocation8 + $0xff8] sm:$0xff]
    %v1297 = vld [vmem:[#allocation10] sm:$0xff]
    %v1299 = vlaneseq
    %v1300 = vshrl.u32 %v1299, 7
    %v1301 = vsub.s32 0, %v1300
    %v1302 = vrot.slane %v1297, %v1301
    %v1303 = vlaneseq
    %v1304 = vshrl.u32 %v1303, 7
    %v1305 = vsub.s32 1, %v1304
    %v1306 = vrot.slane %v1297, %v1305
    %v1307 = vlaneseq
    %v1308 = vshrl.u32 %v1307, 7
    %v1309 = vsub.s32 2, %v1308
    %v1310 = vrot.slane %v1297, %v1309
    %v1311 = vlaneseq
    %v1312 = vshrl.u32 %v1311, 7
    %v1313 = vsub.s32 3, %v1312
    %v1314 = vrot.slane %v1297, %v1313
    %v1315 = vlaneseq
    %v1316 = vshrl.u32 %v1315, 7
    %v1317 = vsub.s32 4, %v1316
    %v1318 = vrot.slane %v1297, %v1317
    %v1319 = vlaneseq
    %v1320 = vshrl.u32 %v1319, 7
    %v1321 = vsub.s32 5, %v1320
    %v1322 = vrot.slane %v1297, %v1321
    %v1323 = vlaneseq
    %v1324 = vshrl.u32 %v1323, 7
    %v1325 = vsub.s32 6, %v1324
    %v1326 = vrot.slane %v1297, %v1325
    %v1327 = vlaneseq
    %v1328 = vshrl.u32 %v1327, 7
    %v1329 = vsub.s32 7, %v1328
    %v1330 = vrot.slane %v1297, %v1329
    %v1851 = vunpack.c.l.b16 %v785
    %v1852 = vunpack.c.h.b16 %v785
    %v1853 = vunpack.c.l.b16 %v786
    %v1854 = vunpack.c.h.b16 %v786
    %v1855 = vunpack.c.l.b16 %v787
    %v1856 = vunpack.c.h.b16 %v787
    %v1857 = vunpack.c.l.b16 %v788
    %v1858 = vunpack.c.h.b16 %v788
    %v1859 = vunpack.c.l.b16 %v789
    %v1860 = vunpack.c.h.b16 %v789
    %v1861 = vunpack.c.l.b16 %v790
    %v1862 = vunpack.c.h.b16 %v790
    %v1863 = vunpack.c.l.b16 %v791
    %v1864 = vunpack.c.h.b16 %v791
    %v1865 = vunpack.c.l.b16 %v792
    %v1866 = vunpack.c.h.b16 %v792
    %v1867 = vunpack.c.l.b16 %v793
    %v1868 = vunpack.c.h.b16 %v793
    %v1869 = vunpack.c.l.b16 %v794
    %v1870 = vunpack.c.h.b16 %v794
    %v1871 = vunpack.c.l.b16 %v795
    %v1872 = vunpack.c.h.b16 %v795
    %v1873 = vunpack.c.l.b16 %v796
    %v1874 = vunpack.c.h.b16 %v796
    %v1875 = vunpack.c.l.b16 %v797
    %v1876 = vunpack.c.h.b16 %v797
    %v1877 = vunpack.c.l.b16 %v798
    %v1878 = vunpack.c.h.b16 %v798
    %v1879 = vunpack.c.l.b16 %v799
    %v1880 = vunpack.c.h.b16 %v799
    %v1881 = vunpack.c.l.b16 %v800
    %v1882 = vunpack.c.h.b16 %v800
    %v1883 = vunpack.c.l.b16 %v801
    %v1884 = vunpack.c.h.b16 %v801
    %v1885 = vunpack.c.l.b16 %v802
    %v1886 = vunpack.c.h.b16 %v802
    %v1887 = vunpack.c.l.b16 %v803
    %v1888 = vunpack.c.h.b16 %v803
    %v1889 = vunpack.c.l.b16 %v804
    %v1890 = vunpack.c.h.b16 %v804
    %v1891 = vunpack.c.l.b16 %v805
    %v1892 = vunpack.c.h.b16 %v805
    %v1893 = vunpack.c.l.b16 %v806
    %v1894 = vunpack.c.h.b16 %v806
    %v1895 = vunpack.c.l.b16 %v807
    %v1896 = vunpack.c.h.b16 %v807
    %v1897 = vunpack.c.l.b16 %v808
    %v1898 = vunpack.c.h.b16 %v808
    %v1899 = vunpack.c.l.b16 %v809
    %v1900 = vunpack.c.h.b16 %v809
    %v1901 = vunpack.c.l.b16 %v810
    %v1902 = vunpack.c.h.b16 %v810
    %v1903 = vunpack.c.l.b16 %v811
    %v1904 = vunpack.c.h.b16 %v811
    %v1905 = vunpack.c.l.b16 %v812
    %v1906 = vunpack.c.h.b16 %v812
    %v1907 = vunpack.c.l.b16 %v813
    %v1908 = vunpack.c.h.b16 %v813
    %v1909 = vunpack.c.l.b16 %v814
    %v1910 = vunpack.c.h.b16 %v814
    %v1911 = vunpack.c.l.b16 %v815
    %v1912 = vunpack.c.h.b16 %v815
    %v1913 = vunpack.c.l.b16 %v816
    %v1914 = vunpack.c.h.b16 %v816
    %v1915 = vunpack.c.l.b16 %v817
    %v1916 = vunpack.c.h.b16 %v817
    %v1917 = vunpack.c.l.b16 %v818
    %v1918 = vunpack.c.h.b16 %v818
    %v1919 = vunpack.c.l.b16 %v819
    %v1920 = vunpack.c.h.b16 %v819
    %v1921 = vunpack.c.l.b16 %v820
    %v1922 = vunpack.c.h.b16 %v820
    %v1923 = vunpack.c.l.b16 %v821
    %v1924 = vunpack.c.h.b16 %v821
    %v1925 = vunpack.c.l.b16 %v822
    %v1926 = vunpack.c.h.b16 %v822
    %v1927 = vunpack.c.l.b16 %v823
    %v1928 = vunpack.c.h.b16 %v823
    %v1929 = vunpack.c.l.b16 %v824
    %v1930 = vunpack.c.h.b16 %v824
    %v1931 = vunpack.c.l.b16 %v825
    %v1932 = vunpack.c.h.b16 %v825
    %v1933 = vunpack.c.l.b16 %v826
    %v1934 = vunpack.c.h.b16 %v826
    %v1935 = vunpack.c.l.b16 %v827
    %v1936 = vunpack.c.h.b16 %v827
    %v1937 = vunpack.c.l.b16 %v828
    %v1938 = vunpack.c.h.b16 %v828
    %v1939 = vunpack.c.l.b16 %v829
    %v1940 = vunpack.c.h.b16 %v829
    %v1941 = vunpack.c.l.b16 %v830
    %v1942 = vunpack.c.h.b16 %v830
    %v1943 = vunpack.c.l.b16 %v831
    %v1944 = vunpack.c.h.b16 %v831
    %v1945 = vunpack.c.l.b16 %v832
    %v1946 = vunpack.c.h.b16 %v832
    %v1947 = vunpack.c.l.b16 %v833
    %v1948 = vunpack.c.h.b16 %v833
    %v1949 = vunpack.c.l.b16 %v834
    %v1950 = vunpack.c.h.b16 %v834
    %v1951 = vunpack.c.l.b16 %v835
    %v1952 = vunpack.c.h.b16 %v835
    %v1953 = vunpack.c.l.b16 %v836
    %v1954 = vunpack.c.h.b16 %v836
    %v1955 = vunpack.c.l.b16 %v837
    %v1956 = vunpack.c.h.b16 %v837
    %v1957 = vunpack.c.l.b16 %v838
    %v1958 = vunpack.c.h.b16 %v838
    %v1959 = vunpack.c.l.b16 %v839
    %v1960 = vunpack.c.h.b16 %v839
    %v1961 = vunpack.c.l.b16 %v840
    %v1962 = vunpack.c.h.b16 %v840
    %v1963 = vunpack.c.l.b16 %v841
    %v1964 = vunpack.c.h.b16 %v841
    %v1965 = vunpack.c.l.b16 %v842
    %v1966 = vunpack.c.h.b16 %v842
    %v1967 = vunpack.c.l.b16 %v843
    %v1968 = vunpack.c.h.b16 %v843
    %v1969 = vunpack.c.l.b16 %v844
    %v1970 = vunpack.c.h.b16 %v844
    %v1971 = vunpack.c.l.b16 %v845
    %v1972 = vunpack.c.h.b16 %v845
    %v1973 = vunpack.c.l.b16 %v846
    %v1974 = vunpack.c.h.b16 %v846
    %v1975 = vunpack.c.l.b16 %v847
    %v1976 = vunpack.c.h.b16 %v847
    %v1977 = vunpack.c.l.b16 %v848
    %v1978 = vunpack.c.h.b16 %v848
    %v1979 = vunpack.c.l.b16 %v849
    %v1980 = vunpack.c.h.b16 %v849
    %v1981 = vunpack.c.l.b16 %v850
    %v1982 = vunpack.c.h.b16 %v850
    %v1983 = vunpack.c.l.b16 %v851
    %v1984 = vunpack.c.h.b16 %v851
    %v1985 = vunpack.c.l.b16 %v852
    %v1986 = vunpack.c.h.b16 %v852
    %v1987 = vunpack.c.l.b16 %v853
    %v1988 = vunpack.c.h.b16 %v853
    %v1989 = vunpack.c.l.b16 %v854
    %v1990 = vunpack.c.h.b16 %v854
    %v1991 = vunpack.c.l.b16 %v855
    %v1992 = vunpack.c.h.b16 %v855
    %v1993 = vunpack.c.l.b16 %v856
    %v1994 = vunpack.c.h.b16 %v856
    %v1995 = vunpack.c.l.b16 %v857
    %v1996 = vunpack.c.h.b16 %v857
    %v1997 = vunpack.c.l.b16 %v858
    %v1998 = vunpack.c.h.b16 %v858
    %v1999 = vunpack.c.l.b16 %v859
    %v2000 = vunpack.c.h.b16 %v859
    %v2001 = vunpack.c.l.b16 %v860
    %v2002 = vunpack.c.h.b16 %v860
    %v2003 = vunpack.c.l.b16 %v861
    %v2004 = vunpack.c.h.b16 %v861
    %v2005 = vunpack.c.l.b16 %v862
    %v2006 = vunpack.c.h.b16 %v862
    %v2007 = vunpack.c.l.b16 %v863
    %v2008 = vunpack.c.h.b16 %v863
    %v2009 = vunpack.c.l.b16 %v864
    %v2010 = vunpack.c.h.b16 %v864
    %v2011 = vunpack.c.l.b16 %v865
    %v2012 = vunpack.c.h.b16 %v865
    %v2013 = vunpack.c.l.b16 %v866
    %v2014 = vunpack.c.h.b16 %v866
    %v2015 = vunpack.c.l.b16 %v867
    %v2016 = vunpack.c.h.b16 %v867
    %v2017 = vunpack.c.l.b16 %v868
    %v2018 = vunpack.c.h.b16 %v868
    %v2019 = vunpack.c.l.b16 %v869
    %v2020 = vunpack.c.h.b16 %v869
    %v2021 = vunpack.c.l.b16 %v870
    %v2022 = vunpack.c.h.b16 %v870
    %v2023 = vunpack.c.l.b16 %v871
    %v2024 = vunpack.c.h.b16 %v871
    %v2025 = vunpack.c.l.b16 %v872
    %v2026 = vunpack.c.h.b16 %v872
    %v2027 = vunpack.c.l.b16 %v873
    %v2028 = vunpack.c.h.b16 %v873
    %v2029 = vunpack.c.l.b16 %v874
    %v2030 = vunpack.c.h.b16 %v874
    %v2031 = vunpack.c.l.b16 %v875
    %v2032 = vunpack.c.h.b16 %v875
    %v2033 = vunpack.c.l.b16 %v876
    %v2034 = vunpack.c.h.b16 %v876
    %v2035 = vunpack.c.l.b16 %v877
    %v2036 = vunpack.c.h.b16 %v877
    %v2037 = vunpack.c.l.b16 %v878
    %v2038 = vunpack.c.h.b16 %v878
    %v2039 = vunpack.c.l.b16 %v879
    %v2040 = vunpack.c.h.b16 %v879
    %v2041 = vunpack.c.l.b16 %v880
    %v2042 = vunpack.c.h.b16 %v880
    %v2043 = vunpack.c.l.b16 %v881
    %v2044 = vunpack.c.h.b16 %v881
    %v2045 = vunpack.c.l.b16 %v882
    %v2046 = vunpack.c.h.b16 %v882
    %v2047 = vunpack.c.l.b16 %v883
    %v2048 = vunpack.c.h.b16 %v883
    %v2049 = vunpack.c.l.b16 %v884
    %v2050 = vunpack.c.h.b16 %v884
    %v2051 = vunpack.c.l.b16 %v885
    %v2052 = vunpack.c.h.b16 %v885
    %v2053 = vunpack.c.l.b16 %v886
    %v2054 = vunpack.c.h.b16 %v886
    %v2055 = vunpack.c.l.b16 %v887
    %v2056 = vunpack.c.h.b16 %v887
    %v2057 = vunpack.c.l.b16 %v888
    %v2058 = vunpack.c.h.b16 %v888
    %v2059 = vunpack.c.l.b16 %v889
    %v2060 = vunpack.c.h.b16 %v889
    %v2061 = vunpack.c.l.b16 %v890
    %v2062 = vunpack.c.h.b16 %v890
    %v2063 = vunpack.c.l.b16 %v891
    %v2064 = vunpack.c.h.b16 %v891
    %v2065 = vunpack.c.l.b16 %v892
    %v2066 = vunpack.c.h.b16 %v892
    %v2067 = vunpack.c.l.b16 %v893
    %v2068 = vunpack.c.h.b16 %v893
    %v2069 = vunpack.c.l.b16 %v894
    %v2070 = vunpack.c.h.b16 %v894
    %v2071 = vunpack.c.l.b16 %v895
    %v2072 = vunpack.c.h.b16 %v895
    %v2073 = vunpack.c.l.b16 %v896
    %v2074 = vunpack.c.h.b16 %v896
    %v2075 = vunpack.c.l.b16 %v897
    %v2076 = vunpack.c.h.b16 %v897
    %v2077 = vunpack.c.l.b16 %v898
    %v2078 = vunpack.c.h.b16 %v898
    %v2079 = vunpack.c.l.b16 %v899
    %v2080 = vunpack.c.h.b16 %v899
    %v2081 = vunpack.c.l.b16 %v900
    %v2082 = vunpack.c.h.b16 %v900
    %v2083 = vunpack.c.l.b16 %v901
    %v2084 = vunpack.c.h.b16 %v901
    %v2085 = vunpack.c.l.b16 %v902
    %v2086 = vunpack.c.h.b16 %v902
    %v2087 = vunpack.c.l.b16 %v903
    %v2088 = vunpack.c.h.b16 %v903
    %v2089 = vunpack.c.l.b16 %v904
    %v2090 = vunpack.c.h.b16 %v904
    %v2091 = vunpack.c.l.b16 %v905
    %v2092 = vunpack.c.h.b16 %v905
    %v2093 = vunpack.c.l.b16 %v906
    %v2094 = vunpack.c.h.b16 %v906
    %v2095 = vunpack.c.l.b16 %v907
    %v2096 = vunpack.c.h.b16 %v907
    %v2097 = vunpack.c.l.b16 %v908
    %v2098 = vunpack.c.h.b16 %v908
    %v2099 = vunpack.c.l.b16 %v909
    %v2100 = vunpack.c.h.b16 %v909
    %v2101 = vunpack.c.l.b16 %v910
    %v2102 = vunpack.c.h.b16 %v910
    %v2103 = vunpack.c.l.b16 %v911
    %v2104 = vunpack.c.h.b16 %v911
    %v2105 = vunpack.c.l.b16 %v912
    %v2106 = vunpack.c.h.b16 %v912
    %v2107 = vunpack.c.l.b16 %v913
    %v2108 = vunpack.c.h.b16 %v913
    %v2109 = vunpack.c.l.b16 %v914
    %v2110 = vunpack.c.h.b16 %v914
    %v2111 = vunpack.c.l.b16 %v915
    %v2112 = vunpack.c.h.b16 %v915
    %v2113 = vunpack.c.l.b16 %v916
    %v2114 = vunpack.c.h.b16 %v916
    %v2115 = vunpack.c.l.b16 %v917
    %v2116 = vunpack.c.h.b16 %v917
    %v2117 = vunpack.c.l.b16 %v918
    %v2118 = vunpack.c.h.b16 %v918
    %v2119 = vunpack.c.l.b16 %v919
    %v2120 = vunpack.c.h.b16 %v919
    %v2121 = vunpack.c.l.b16 %v920
    %v2122 = vunpack.c.h.b16 %v920
    %v2123 = vunpack.c.l.b16 %v921
    %v2124 = vunpack.c.h.b16 %v921
    %v2125 = vunpack.c.l.b16 %v922
    %v2126 = vunpack.c.h.b16 %v922
    %v2127 = vunpack.c.l.b16 %v923
    %v2128 = vunpack.c.h.b16 %v923
    %v2129 = vunpack.c.l.b16 %v924
    %v2130 = vunpack.c.h.b16 %v924
    %v2131 = vunpack.c.l.b16 %v925
    %v2132 = vunpack.c.h.b16 %v925
    %v2133 = vunpack.c.l.b16 %v926
    %v2134 = vunpack.c.h.b16 %v926
    %v2135 = vunpack.c.l.b16 %v927
    %v2136 = vunpack.c.h.b16 %v927
    %v2137 = vunpack.c.l.b16 %v928
    %v2138 = vunpack.c.h.b16 %v928
    %v2139 = vunpack.c.l.b16 %v929
    %v2140 = vunpack.c.h.b16 %v929
    %v2141 = vunpack.c.l.b16 %v930
    %v2142 = vunpack.c.h.b16 %v930
    %v2143 = vunpack.c.l.b16 %v931
    %v2144 = vunpack.c.h.b16 %v931
    %v2145 = vunpack.c.l.b16 %v932
    %v2146 = vunpack.c.h.b16 %v932
    %v2147 = vunpack.c.l.b16 %v933
    %v2148 = vunpack.c.h.b16 %v933
    %v2149 = vunpack.c.l.b16 %v934
    %v2150 = vunpack.c.h.b16 %v934
    %v2151 = vunpack.c.l.b16 %v935
    %v2152 = vunpack.c.h.b16 %v935
    %v2153 = vunpack.c.l.b16 %v936
    %v2154 = vunpack.c.h.b16 %v936
    %v2155 = vunpack.c.l.b16 %v937
    %v2156 = vunpack.c.h.b16 %v937
    %v2157 = vunpack.c.l.b16 %v938
    %v2158 = vunpack.c.h.b16 %v938
    %v2159 = vunpack.c.l.b16 %v939
    %v2160 = vunpack.c.h.b16 %v939
    %v2161 = vunpack.c.l.b16 %v940
    %v2162 = vunpack.c.h.b16 %v940
    %v2163 = vunpack.c.l.b16 %v941
    %v2164 = vunpack.c.h.b16 %v941
    %v2165 = vunpack.c.l.b16 %v942
    %v2166 = vunpack.c.h.b16 %v942
    %v2167 = vunpack.c.l.b16 %v943
    %v2168 = vunpack.c.h.b16 %v943
    %v2169 = vunpack.c.l.b16 %v944
    %v2170 = vunpack.c.h.b16 %v944
    %v2171 = vunpack.c.l.b16 %v945
    %v2172 = vunpack.c.h.b16 %v945
    %v2173 = vunpack.c.l.b16 %v946
    %v2174 = vunpack.c.h.b16 %v946
    %v2175 = vunpack.c.l.b16 %v947
    %v2176 = vunpack.c.h.b16 %v947
    %v2177 = vunpack.c.l.b16 %v948
    %v2178 = vunpack.c.h.b16 %v948
    %v2179 = vunpack.c.l.b16 %v949
    %v2180 = vunpack.c.h.b16 %v949
    %v2181 = vunpack.c.l.b16 %v950
    %v2182 = vunpack.c.h.b16 %v950
    %v2183 = vunpack.c.l.b16 %v951
    %v2184 = vunpack.c.h.b16 %v951
    %v2185 = vunpack.c.l.b16 %v952
    %v2186 = vunpack.c.h.b16 %v952
    %v2187 = vunpack.c.l.b16 %v953
    %v2188 = vunpack.c.h.b16 %v953
    %v2189 = vunpack.c.l.b16 %v954
    %v2190 = vunpack.c.h.b16 %v954
    %v2191 = vunpack.c.l.b16 %v955
    %v2192 = vunpack.c.h.b16 %v955
    %v2193 = vunpack.c.l.b16 %v956
    %v2194 = vunpack.c.h.b16 %v956
    %v2195 = vunpack.c.l.b16 %v957
    %v2196 = vunpack.c.h.b16 %v957
    %v2197 = vunpack.c.l.b16 %v958
    %v2198 = vunpack.c.h.b16 %v958
    %v2199 = vunpack.c.l.b16 %v959
    %v2200 = vunpack.c.h.b16 %v959
    %v2201 = vunpack.c.l.b16 %v960
    %v2202 = vunpack.c.h.b16 %v960
    %v2203 = vunpack.c.l.b16 %v961
    %v2204 = vunpack.c.h.b16 %v961
    %v2205 = vunpack.c.l.b16 %v962
    %v2206 = vunpack.c.h.b16 %v962
    %v2207 = vunpack.c.l.b16 %v963
    %v2208 = vunpack.c.h.b16 %v963
    %v2209 = vunpack.c.l.b16 %v964
    %v2210 = vunpack.c.h.b16 %v964
    %v2211 = vunpack.c.l.b16 %v965
    %v2212 = vunpack.c.h.b16 %v965
    %v2213 = vunpack.c.l.b16 %v966
    %v2214 = vunpack.c.h.b16 %v966
    %v2215 = vunpack.c.l.b16 %v967
    %v2216 = vunpack.c.h.b16 %v967
    %v2217 = vunpack.c.l.b16 %v968
    %v2218 = vunpack.c.h.b16 %v968
    %v2219 = vunpack.c.l.b16 %v969
    %v2220 = vunpack.c.h.b16 %v969
    %v2221 = vunpack.c.l.b16 %v970
    %v2222 = vunpack.c.h.b16 %v970
    %v2223 = vunpack.c.l.b16 %v971
    %v2224 = vunpack.c.h.b16 %v971
    %v2225 = vunpack.c.l.b16 %v972
    %v2226 = vunpack.c.h.b16 %v972
    %v2227 = vunpack.c.l.b16 %v973
    %v2228 = vunpack.c.h.b16 %v973
    %v2229 = vunpack.c.l.b16 %v974
    %v2230 = vunpack.c.h.b16 %v974
    %v2231 = vunpack.c.l.b16 %v975
    %v2232 = vunpack.c.h.b16 %v975
    %v2233 = vunpack.c.l.b16 %v976
    %v2234 = vunpack.c.h.b16 %v976
    %v2235 = vunpack.c.l.b16 %v977
    %v2236 = vunpack.c.h.b16 %v977
    %v2237 = vunpack.c.l.b16 %v978
    %v2238 = vunpack.c.h.b16 %v978
    %v2239 = vunpack.c.l.b16 %v979
    %v2240 = vunpack.c.h.b16 %v979
    %v2241 = vunpack.c.l.b16 %v980
    %v2242 = vunpack.c.h.b16 %v980
    %v2243 = vunpack.c.l.b16 %v981
    %v2244 = vunpack.c.h.b16 %v981
    %v2245 = vunpack.c.l.b16 %v982
    %v2246 = vunpack.c.h.b16 %v982
    %v2247 = vunpack.c.l.b16 %v983
    %v2248 = vunpack.c.h.b16 %v983
    %v2249 = vunpack.c.l.b16 %v984
    %v2250 = vunpack.c.h.b16 %v984
    %v2251 = vunpack.c.l.b16 %v985
    %v2252 = vunpack.c.h.b16 %v985
    %v2253 = vunpack.c.l.b16 %v986
    %v2254 = vunpack.c.h.b16 %v986
    %v2255 = vunpack.c.l.b16 %v987
    %v2256 = vunpack.c.h.b16 %v987
    %v2257 = vunpack.c.l.b16 %v988
    %v2258 = vunpack.c.h.b16 %v988
    %v2259 = vunpack.c.l.b16 %v989
    %v2260 = vunpack.c.h.b16 %v989
    %v2261 = vunpack.c.l.b16 %v990
    %v2262 = vunpack.c.h.b16 %v990
    %v2263 = vunpack.c.l.b16 %v991
    %v2264 = vunpack.c.h.b16 %v991
    %v2265 = vunpack.c.l.b16 %v992
    %v2266 = vunpack.c.h.b16 %v992
    %v2267 = vunpack.c.l.b16 %v993
    %v2268 = vunpack.c.h.b16 %v993
    %v2269 = vunpack.c.l.b16 %v994
    %v2270 = vunpack.c.h.b16 %v994
    %v2271 = vunpack.c.l.b16 %v995
    %v2272 = vunpack.c.h.b16 %v995
    %v2273 = vunpack.c.l.b16 %v996
    %v2274 = vunpack.c.h.b16 %v996
    %v2275 = vunpack.c.l.b16 %v997
    %v2276 = vunpack.c.h.b16 %v997
    %v2277 = vunpack.c.l.b16 %v998
    %v2278 = vunpack.c.h.b16 %v998
    %v2279 = vunpack.c.l.b16 %v999
    %v2280 = vunpack.c.h.b16 %v999
    %v2281 = vunpack.c.l.b16 %v1000
    %v2282 = vunpack.c.h.b16 %v1000
    %v2283 = vunpack.c.l.b16 %v1001
    %v2284 = vunpack.c.h.b16 %v1001
    %v2285 = vunpack.c.l.b16 %v1002
    %v2286 = vunpack.c.h.b16 %v1002
    %v2287 = vunpack.c.l.b16 %v1003
    %v2288 = vunpack.c.h.b16 %v1003
    %v2289 = vunpack.c.l.b16 %v1004
    %v2290 = vunpack.c.h.b16 %v1004
    %v2291 = vunpack.c.l.b16 %v1005
    %v2292 = vunpack.c.h.b16 %v1005
    %v2293 = vunpack.c.l.b16 %v1006
    %v2294 = vunpack.c.h.b16 %v1006
    %v2295 = vunpack.c.l.b16 %v1007
    %v2296 = vunpack.c.h.b16 %v1007
    %v2297 = vunpack.c.l.b16 %v1008
    %v2298 = vunpack.c.h.b16 %v1008
    %v2299 = vunpack.c.l.b16 %v1009
    %v2300 = vunpack.c.h.b16 %v1009
    %v2301 = vunpack.c.l.b16 %v1010
    %v2302 = vunpack.c.h.b16 %v1010
    %v2303 = vunpack.c.l.b16 %v1011
    %v2304 = vunpack.c.h.b16 %v1011
    %v2305 = vunpack.c.l.b16 %v1012
    %v2306 = vunpack.c.h.b16 %v1012
    %v2307 = vunpack.c.l.b16 %v1013
    %v2308 = vunpack.c.h.b16 %v1013
    %v2309 = vunpack.c.l.b16 %v1014
    %v2310 = vunpack.c.h.b16 %v1014
    %v2311 = vunpack.c.l.b16 %v1015
    %v2312 = vunpack.c.h.b16 %v1015
    %v2313 = vunpack.c.l.b16 %v1016
    %v2314 = vunpack.c.h.b16 %v1016
    %v2315 = vunpack.c.l.b16 %v1017
    %v2316 = vunpack.c.h.b16 %v1017
    %v2317 = vunpack.c.l.b16 %v1018
    %v2318 = vunpack.c.h.b16 %v1018
    %v2319 = vunpack.c.l.b16 %v1019
    %v2320 = vunpack.c.h.b16 %v1019
    %v2321 = vunpack.c.l.b16 %v1020
    %v2322 = vunpack.c.h.b16 %v1020
    %v2323 = vunpack.c.l.b16 %v1021
    %v2324 = vunpack.c.h.b16 %v1021
    %v2325 = vunpack.c.l.b16 %v1022
    %v2326 = vunpack.c.h.b16 %v1022
    %v2327 = vunpack.c.l.b16 %v1023
    %v2328 = vunpack.c.h.b16 %v1023
    %v2329 = vunpack.c.l.b16 %v1024
    %v2330 = vunpack.c.h.b16 %v1024
    %v2331 = vunpack.c.l.b16 %v1025
    %v2332 = vunpack.c.h.b16 %v1025
    %v2333 = vunpack.c.l.b16 %v1026
    %v2334 = vunpack.c.h.b16 %v1026
    %v2335 = vunpack.c.l.b16 %v1027
    %v2336 = vunpack.c.h.b16 %v1027
    %v2337 = vunpack.c.l.b16 %v1028
    %v2338 = vunpack.c.h.b16 %v1028
    %v2339 = vunpack.c.l.b16 %v1029
    %v2340 = vunpack.c.h.b16 %v1029
    %v2341 = vunpack.c.l.b16 %v1030
    %v2342 = vunpack.c.h.b16 %v1030
    %v2343 = vunpack.c.l.b16 %v1031
    %v2344 = vunpack.c.h.b16 %v1031
    %v2345 = vunpack.c.l.b16 %v1032
    %v2346 = vunpack.c.h.b16 %v1032
    %v2347 = vunpack.c.l.b16 %v1033
    %v2348 = vunpack.c.h.b16 %v1033
    %v2349 = vunpack.c.l.b16 %v1034
    %v2350 = vunpack.c.h.b16 %v1034
    %v2351 = vunpack.c.l.b16 %v1035
    %v2352 = vunpack.c.h.b16 %v1035
    %v2353 = vunpack.c.l.b16 %v1036
    %v2354 = vunpack.c.h.b16 %v1036
    %v2355 = vunpack.c.l.b16 %v1037
    %v2356 = vunpack.c.h.b16 %v1037
    %v2357 = vunpack.c.l.b16 %v1038
    %v2358 = vunpack.c.h.b16 %v1038
    %v2359 = vunpack.c.l.b16 %v1039
    %v2360 = vunpack.c.h.b16 %v1039
    %v2361 = vunpack.c.l.b16 %v1040
    %v2362 = vunpack.c.h.b16 %v1040
    %v2363 = vunpack.c.l.b16 %v1041
    %v2364 = vunpack.c.h.b16 %v1041
    %v2365 = vunpack.c.l.b16 %v1042
    %v2366 = vunpack.c.h.b16 %v1042
    %v2367 = vunpack.c.l.b16 %v1043
    %v2368 = vunpack.c.h.b16 %v1043
    %v2369 = vunpack.c.l.b16 %v1044
    %v2370 = vunpack.c.h.b16 %v1044
    %v2371 = vunpack.c.l.b16 %v1045
    %v2372 = vunpack.c.h.b16 %v1045
    %v2373 = vunpack.c.l.b16 %v1046
    %v2374 = vunpack.c.h.b16 %v1046
    %v2375 = vunpack.c.l.b16 %v1047
    %v2376 = vunpack.c.h.b16 %v1047
    %v2377 = vunpack.c.l.b16 %v1048
    %v2378 = vunpack.c.h.b16 %v1048
    %v2379 = vunpack.c.l.b16 %v1049
    %v2380 = vunpack.c.h.b16 %v1049
    %v2381 = vunpack.c.l.b16 %v1050
    %v2382 = vunpack.c.h.b16 %v1050
    %v2383 = vunpack.c.l.b16 %v1051
    %v2384 = vunpack.c.h.b16 %v1051
    %v2385 = vunpack.c.l.b16 %v1052
    %v2386 = vunpack.c.h.b16 %v1052
    %v2387 = vunpack.c.l.b16 %v1053
    %v2388 = vunpack.c.h.b16 %v1053
    %v2389 = vunpack.c.l.b16 %v1054
    %v2390 = vunpack.c.h.b16 %v1054
    %v2391 = vunpack.c.l.b16 %v1055
    %v2392 = vunpack.c.h.b16 %v1055
    %v2393 = vunpack.c.l.b16 %v1056
    %v2394 = vunpack.c.h.b16 %v1056
    %v2395 = vunpack.c.l.b16 %v1057
    %v2396 = vunpack.c.h.b16 %v1057
    %v2397 = vunpack.c.l.b16 %v1058
    %v2398 = vunpack.c.h.b16 %v1058
    %v2399 = vunpack.c.l.b16 %v1059
    %v2400 = vunpack.c.h.b16 %v1059
    %v2401 = vunpack.c.l.b16 %v1060
    %v2402 = vunpack.c.h.b16 %v1060
    %v2403 = vunpack.c.l.b16 %v1061
    %v2404 = vunpack.c.h.b16 %v1061
    %v2405 = vunpack.c.l.b16 %v1062
    %v2406 = vunpack.c.h.b16 %v1062
    %v2407 = vunpack.c.l.b16 %v1063
    %v2408 = vunpack.c.h.b16 %v1063
    %v2409 = vunpack.c.l.b16 %v1064
    %v2410 = vunpack.c.h.b16 %v1064
    %v2411 = vunpack.c.l.b16 %v1065
    %v2412 = vunpack.c.h.b16 %v1065
    %v2413 = vunpack.c.l.b16 %v1066
    %v2414 = vunpack.c.h.b16 %v1066
    %v2415 = vunpack.c.l.b16 %v1067
    %v2416 = vunpack.c.h.b16 %v1067
    %v2417 = vunpack.c.l.b16 %v1068
    %v2418 = vunpack.c.h.b16 %v1068
    %v2419 = vunpack.c.l.b16 %v1069
    %v2420 = vunpack.c.h.b16 %v1069
    %v2421 = vunpack.c.l.b16 %v1070
    %v2422 = vunpack.c.h.b16 %v1070
    %v2423 = vunpack.c.l.b16 %v1071
    %v2424 = vunpack.c.h.b16 %v1071
    %v2425 = vunpack.c.l.b16 %v1072
    %v2426 = vunpack.c.h.b16 %v1072
    %v2427 = vunpack.c.l.b16 %v1073
    %v2428 = vunpack.c.h.b16 %v1073
    %v2429 = vunpack.c.l.b16 %v1074
    %v2430 = vunpack.c.h.b16 %v1074
    %v2431 = vunpack.c.l.b16 %v1075
    %v2432 = vunpack.c.h.b16 %v1075
    %v2433 = vunpack.c.l.b16 %v1076
    %v2434 = vunpack.c.h.b16 %v1076
    %v2435 = vunpack.c.l.b16 %v1077
    %v2436 = vunpack.c.h.b16 %v1077
    %v2437 = vunpack.c.l.b16 %v1078
    %v2438 = vunpack.c.h.b16 %v1078
    %v2439 = vunpack.c.l.b16 %v1079
    %v2440 = vunpack.c.h.b16 %v1079
    %v2441 = vunpack.c.l.b16 %v1080
    %v2442 = vunpack.c.h.b16 %v1080
    %v2443 = vunpack.c.l.b16 %v1081
    %v2444 = vunpack.c.h.b16 %v1081
    %v2445 = vunpack.c.l.b16 %v1082
    %v2446 = vunpack.c.h.b16 %v1082
    %v2447 = vunpack.c.l.b16 %v1083
    %v2448 = vunpack.c.h.b16 %v1083
    %v2449 = vunpack.c.l.b16 %v1084
    %v2450 = vunpack.c.h.b16 %v1084
    %v2451 = vunpack.c.l.b16 %v1085
    %v2452 = vunpack.c.h.b16 %v1085
    %v2453 = vunpack.c.l.b16 %v1086
    %v2454 = vunpack.c.h.b16 %v1086
    %v2455 = vunpack.c.l.b16 %v1087
    %v2456 = vunpack.c.h.b16 %v1087
    %v2457 = vunpack.c.l.b16 %v1088
    %v2458 = vunpack.c.h.b16 %v1088
    %v2459 = vunpack.c.l.b16 %v1089
    %v2460 = vunpack.c.h.b16 %v1089
    %v2461 = vunpack.c.l.b16 %v1090
    %v2462 = vunpack.c.h.b16 %v1090
    %v2463 = vunpack.c.l.b16 %v1091
    %v2464 = vunpack.c.h.b16 %v1091
    %v2465 = vunpack.c.l.b16 %v1092
    %v2466 = vunpack.c.h.b16 %v1092
    %v2467 = vunpack.c.l.b16 %v1093
    %v2468 = vunpack.c.h.b16 %v1093
    %v2469 = vunpack.c.l.b16 %v1094
    %v2470 = vunpack.c.h.b16 %v1094
    %v2471 = vunpack.c.l.b16 %v1095
    %v2472 = vunpack.c.h.b16 %v1095
    %v2473 = vunpack.c.l.b16 %v1096
    %v2474 = vunpack.c.h.b16 %v1096
    %v2475 = vunpack.c.l.b16 %v1097
    %v2476 = vunpack.c.h.b16 %v1097
    %v2477 = vunpack.c.l.b16 %v1098
    %v2478 = vunpack.c.h.b16 %v1098
    %v2479 = vunpack.c.l.b16 %v1099
    %v2480 = vunpack.c.h.b16 %v1099
    %v2481 = vunpack.c.l.b16 %v1100
    %v2482 = vunpack.c.h.b16 %v1100
    %v2483 = vunpack.c.l.b16 %v1101
    %v2484 = vunpack.c.h.b16 %v1101
    %v2485 = vunpack.c.l.b16 %v1102
    %v2486 = vunpack.c.h.b16 %v1102
    %v2487 = vunpack.c.l.b16 %v1103
    %v2488 = vunpack.c.h.b16 %v1103
    %v2489 = vunpack.c.l.b16 %v1104
    %v2490 = vunpack.c.h.b16 %v1104
    %v2491 = vunpack.c.l.b16 %v1105
    %v2492 = vunpack.c.h.b16 %v1105
    %v2493 = vunpack.c.l.b16 %v1106
    %v2494 = vunpack.c.h.b16 %v1106
    %v2495 = vunpack.c.l.b16 %v1107
    %v2496 = vunpack.c.h.b16 %v1107
    %v2497 = vunpack.c.l.b16 %v1108
    %v2498 = vunpack.c.h.b16 %v1108
    %v2499 = vunpack.c.l.b16 %v1109
    %v2500 = vunpack.c.h.b16 %v1109
    %v2501 = vunpack.c.l.b16 %v1110
    %v2502 = vunpack.c.h.b16 %v1110
    %v2503 = vunpack.c.l.b16 %v1111
    %v2504 = vunpack.c.h.b16 %v1111
    %v2505 = vunpack.c.l.b16 %v1112
    %v2506 = vunpack.c.h.b16 %v1112
    %v2507 = vunpack.c.l.b16 %v1113
    %v2508 = vunpack.c.h.b16 %v1113
    %v2509 = vunpack.c.l.b16 %v1114
    %v2510 = vunpack.c.h.b16 %v1114
    %v2511 = vunpack.c.l.b16 %v1115
    %v2512 = vunpack.c.h.b16 %v1115
    %v2513 = vunpack.c.l.b16 %v1116
    %v2514 = vunpack.c.h.b16 %v1116
    %v2515 = vunpack.c.l.b16 %v1117
    %v2516 = vunpack.c.h.b16 %v1117
    %v2517 = vunpack.c.l.b16 %v1118
    %v2518 = vunpack.c.h.b16 %v1118
    %v2519 = vunpack.c.l.b16 %v1119
    %v2520 = vunpack.c.h.b16 %v1119
    %v2521 = vunpack.c.l.b16 %v1120
    %v2522 = vunpack.c.h.b16 %v1120
    %v2523 = vunpack.c.l.b16 %v1121
    %v2524 = vunpack.c.h.b16 %v1121
    %v2525 = vunpack.c.l.b16 %v1122
    %v2526 = vunpack.c.h.b16 %v1122
    %v2527 = vunpack.c.l.b16 %v1123
    %v2528 = vunpack.c.h.b16 %v1123
    %v2529 = vunpack.c.l.b16 %v1124
    %v2530 = vunpack.c.h.b16 %v1124
    %v2531 = vunpack.c.l.b16 %v1125
    %v2532 = vunpack.c.h.b16 %v1125
    %v2533 = vunpack.c.l.b16 %v1126
    %v2534 = vunpack.c.h.b16 %v1126
    %v2535 = vunpack.c.l.b16 %v1127
    %v2536 = vunpack.c.h.b16 %v1127
    %v2537 = vunpack.c.l.b16 %v1128
    %v2538 = vunpack.c.h.b16 %v1128
    %v2539 = vunpack.c.l.b16 %v1129
    %v2540 = vunpack.c.h.b16 %v1129
    %v2541 = vunpack.c.l.b16 %v1130
    %v2542 = vunpack.c.h.b16 %v1130
    %v2543 = vunpack.c.l.b16 %v1131
    %v2544 = vunpack.c.h.b16 %v1131
    %v2545 = vunpack.c.l.b16 %v1132
    %v2546 = vunpack.c.h.b16 %v1132
    %v2547 = vunpack.c.l.b16 %v1133
    %v2548 = vunpack.c.h.b16 %v1133
    %v2549 = vunpack.c.l.b16 %v1134
    %v2550 = vunpack.c.h.b16 %v1134
    %v2551 = vunpack.c.l.b16 %v1135
    %v2552 = vunpack.c.h.b16 %v1135
    %v2553 = vunpack.c.l.b16 %v1136
    %v2554 = vunpack.c.h.b16 %v1136
    %v2555 = vunpack.c.l.b16 %v1137
    %v2556 = vunpack.c.h.b16 %v1137
    %v2557 = vunpack.c.l.b16 %v1138
    %v2558 = vunpack.c.h.b16 %v1138
    %v2559 = vunpack.c.l.b16 %v1139
    %v2560 = vunpack.c.h.b16 %v1139
    %v2561 = vunpack.c.l.b16 %v1140
    %v2562 = vunpack.c.h.b16 %v1140
    %v2563 = vunpack.c.l.b16 %v1141
    %v2564 = vunpack.c.h.b16 %v1141
    %v2565 = vunpack.c.l.b16 %v1142
    %v2566 = vunpack.c.h.b16 %v1142
    %v2567 = vunpack.c.l.b16 %v1143
    %v2568 = vunpack.c.h.b16 %v1143
    %v2569 = vunpack.c.l.b16 %v1144
    %v2570 = vunpack.c.h.b16 %v1144
    %v2571 = vunpack.c.l.b16 %v1145
    %v2572 = vunpack.c.h.b16 %v1145
    %v2573 = vunpack.c.l.b16 %v1146
    %v2574 = vunpack.c.h.b16 %v1146
    %v2575 = vunpack.c.l.b16 %v1147
    %v2576 = vunpack.c.h.b16 %v1147
    %v2577 = vunpack.c.l.b16 %v1148
    %v2578 = vunpack.c.h.b16 %v1148
    %v2579 = vunpack.c.l.b16 %v1149
    %v2580 = vunpack.c.h.b16 %v1149
    %v2581 = vunpack.c.l.b16 %v1150
    %v2582 = vunpack.c.h.b16 %v1150
    %v2583 = vunpack.c.l.b16 %v1151
    %v2584 = vunpack.c.h.b16 %v1151
    %v2585 = vunpack.c.l.b16 %v1152
    %v2586 = vunpack.c.h.b16 %v1152
    %v2587 = vunpack.c.l.b16 %v1153
    %v2588 = vunpack.c.h.b16 %v1153
    %v2589 = vunpack.c.l.b16 %v1154
    %v2590 = vunpack.c.h.b16 %v1154
    %v2591 = vunpack.c.l.b16 %v1155
    %v2592 = vunpack.c.h.b16 %v1155
    %v2593 = vunpack.c.l.b16 %v1156
    %v2594 = vunpack.c.h.b16 %v1156
    %v2595 = vunpack.c.l.b16 %v1157
    %v2596 = vunpack.c.h.b16 %v1157
    %v2597 = vunpack.c.l.b16 %v1158
    %v2598 = vunpack.c.h.b16 %v1158
    %v2599 = vunpack.c.l.b16 %v1159
    %v2600 = vunpack.c.h.b16 %v1159
    %v2601 = vunpack.c.l.b16 %v1160
    %v2602 = vunpack.c.h.b16 %v1160
    %v2603 = vunpack.c.l.b16 %v1161
    %v2604 = vunpack.c.h.b16 %v1161
    %v2605 = vunpack.c.l.b16 %v1162
    %v2606 = vunpack.c.h.b16 %v1162
    %v2607 = vunpack.c.l.b16 %v1163
    %v2608 = vunpack.c.h.b16 %v1163
    %v2609 = vunpack.c.l.b16 %v1164
    %v2610 = vunpack.c.h.b16 %v1164
    %v2611 = vunpack.c.l.b16 %v1165
    %v2612 = vunpack.c.h.b16 %v1165
    %v2613 = vunpack.c.l.b16 %v1166
    %v2614 = vunpack.c.h.b16 %v1166
    %v2615 = vunpack.c.l.b16 %v1167
    %v2616 = vunpack.c.h.b16 %v1167
    %v2617 = vunpack.c.l.b16 %v1168
    %v2618 = vunpack.c.h.b16 %v1168
    %v2619 = vunpack.c.l.b16 %v1169
    %v2620 = vunpack.c.h.b16 %v1169
    %v2621 = vunpack.c.l.b16 %v1170
    %v2622 = vunpack.c.h.b16 %v1170
    %v2623 = vunpack.c.l.b16 %v1171
    %v2624 = vunpack.c.h.b16 %v1171
    %v2625 = vunpack.c.l.b16 %v1172
    %v2626 = vunpack.c.h.b16 %v1172
    %v2627 = vunpack.c.l.b16 %v1173
    %v2628 = vunpack.c.h.b16 %v1173
    %v2629 = vunpack.c.l.b16 %v1174
    %v2630 = vunpack.c.h.b16 %v1174
    %v2631 = vunpack.c.l.b16 %v1175
    %v2632 = vunpack.c.h.b16 %v1175
    %v2633 = vunpack.c.l.b16 %v1176
    %v2634 = vunpack.c.h.b16 %v1176
    %v2635 = vunpack.c.l.b16 %v1177
    %v2636 = vunpack.c.h.b16 %v1177
    %v2637 = vunpack.c.l.b16 %v1178
    %v2638 = vunpack.c.h.b16 %v1178
    %v2639 = vunpack.c.l.b16 %v1179
    %v2640 = vunpack.c.h.b16 %v1179
    %v2641 = vunpack.c.l.b16 %v1180
    %v2642 = vunpack.c.h.b16 %v1180
    %v2643 = vunpack.c.l.b16 %v1181
    %v2644 = vunpack.c.h.b16 %v1181
    %v2645 = vunpack.c.l.b16 %v1182
    %v2646 = vunpack.c.h.b16 %v1182
    %v2647 = vunpack.c.l.b16 %v1183
    %v2648 = vunpack.c.h.b16 %v1183
    %v2649 = vunpack.c.l.b16 %v1184
    %v2650 = vunpack.c.h.b16 %v1184
    %v2651 = vunpack.c.l.b16 %v1185
    %v2652 = vunpack.c.h.b16 %v1185
    %v2653 = vunpack.c.l.b16 %v1186
    %v2654 = vunpack.c.h.b16 %v1186
    %v2655 = vunpack.c.l.b16 %v1187
    %v2656 = vunpack.c.h.b16 %v1187
    %v2657 = vunpack.c.l.b16 %v1188
    %v2658 = vunpack.c.h.b16 %v1188
    %v2659 = vunpack.c.l.b16 %v1189
    %v2660 = vunpack.c.h.b16 %v1189
    %v2661 = vunpack.c.l.b16 %v1190
    %v2662 = vunpack.c.h.b16 %v1190
    %v2663 = vunpack.c.l.b16 %v1191
    %v2664 = vunpack.c.h.b16 %v1191
    %v2665 = vunpack.c.l.b16 %v1192
    %v2666 = vunpack.c.h.b16 %v1192
    %v2667 = vunpack.c.l.b16 %v1193
    %v2668 = vunpack.c.h.b16 %v1193
    %v2669 = vunpack.c.l.b16 %v1194
    %v2670 = vunpack.c.h.b16 %v1194
    %v2671 = vunpack.c.l.b16 %v1195
    %v2672 = vunpack.c.h.b16 %v1195
    %v2673 = vunpack.c.l.b16 %v1196
    %v2674 = vunpack.c.h.b16 %v1196
    %v2675 = vunpack.c.l.b16 %v1197
    %v2676 = vunpack.c.h.b16 %v1197
    %v2677 = vunpack.c.l.b16 %v1198
    %v2678 = vunpack.c.h.b16 %v1198
    %v2679 = vunpack.c.l.b16 %v1199
    %v2680 = vunpack.c.h.b16 %v1199
    %v2681 = vunpack.c.l.b16 %v1200
    %v2682 = vunpack.c.h.b16 %v1200
    %v2683 = vunpack.c.l.b16 %v1201
    %v2684 = vunpack.c.h.b16 %v1201
    %v2685 = vunpack.c.l.b16 %v1202
    %v2686 = vunpack.c.h.b16 %v1202
    %v2687 = vunpack.c.l.b16 %v1203
    %v2688 = vunpack.c.h.b16 %v1203
    %v2689 = vunpack.c.l.b16 %v1204
    %v2690 = vunpack.c.h.b16 %v1204
    %v2691 = vunpack.c.l.b16 %v1205
    %v2692 = vunpack.c.h.b16 %v1205
    %v2693 = vunpack.c.l.b16 %v1206
    %v2694 = vunpack.c.h.b16 %v1206
    %v2695 = vunpack.c.l.b16 %v1207
    %v2696 = vunpack.c.h.b16 %v1207
    %v2697 = vunpack.c.l.b16 %v1208
    %v2698 = vunpack.c.h.b16 %v1208
    %v2699 = vunpack.c.l.b16 %v1209
    %v2700 = vunpack.c.h.b16 %v1209
    %v2701 = vunpack.c.l.b16 %v1210
    %v2702 = vunpack.c.h.b16 %v1210
    %v2703 = vunpack.c.l.b16 %v1211
    %v2704 = vunpack.c.h.b16 %v1211
    %v2705 = vunpack.c.l.b16 %v1212
    %v2706 = vunpack.c.h.b16 %v1212
    %v2707 = vunpack.c.l.b16 %v1213
    %v2708 = vunpack.c.h.b16 %v1213
    %v2709 = vunpack.c.l.b16 %v1214
    %v2710 = vunpack.c.h.b16 %v1214
    %v2711 = vunpack.c.l.b16 %v1215
    %v2712 = vunpack.c.h.b16 %v1215
    %v2713 = vunpack.c.l.b16 %v1216
    %v2714 = vunpack.c.h.b16 %v1216
    %v2715 = vunpack.c.l.b16 %v1217
    %v2716 = vunpack.c.h.b16 %v1217
    %v2717 = vunpack.c.l.b16 %v1218
    %v2718 = vunpack.c.h.b16 %v1218
    %v2719 = vunpack.c.l.b16 %v1219
    %v2720 = vunpack.c.h.b16 %v1219
    %v2721 = vunpack.c.l.b16 %v1220
    %v2722 = vunpack.c.h.b16 %v1220
    %v2723 = vunpack.c.l.b16 %v1221
    %v2724 = vunpack.c.h.b16 %v1221
    %v2725 = vunpack.c.l.b16 %v1222
    %v2726 = vunpack.c.h.b16 %v1222
    %v2727 = vunpack.c.l.b16 %v1223
    %v2728 = vunpack.c.h.b16 %v1223
    %v2729 = vunpack.c.l.b16 %v1224
    %v2730 = vunpack.c.h.b16 %v1224
    %v2731 = vunpack.c.l.b16 %v1225
    %v2732 = vunpack.c.h.b16 %v1225
    %v2733 = vunpack.c.l.b16 %v1226
    %v2734 = vunpack.c.h.b16 %v1226
    %v2735 = vunpack.c.l.b16 %v1227
    %v2736 = vunpack.c.h.b16 %v1227
    %v2737 = vunpack.c.l.b16 %v1228
    %v2738 = vunpack.c.h.b16 %v1228
    %v2739 = vunpack.c.l.b16 %v1229
    %v2740 = vunpack.c.h.b16 %v1229
    %v2741 = vunpack.c.l.b16 %v1230
    %v2742 = vunpack.c.h.b16 %v1230
    %v2743 = vunpack.c.l.b16 %v1231
    %v2744 = vunpack.c.h.b16 %v1231
    %v2745 = vunpack.c.l.b16 %v1232
    %v2746 = vunpack.c.h.b16 %v1232
    %v2747 = vunpack.c.l.b16 %v1233
    %v2748 = vunpack.c.h.b16 %v1233
    %v2749 = vunpack.c.l.b16 %v1234
    %v2750 = vunpack.c.h.b16 %v1234
    %v2751 = vunpack.c.l.b16 %v1235
    %v2752 = vunpack.c.h.b16 %v1235
    %v2753 = vunpack.c.l.b16 %v1236
    %v2754 = vunpack.c.h.b16 %v1236
    %v2755 = vunpack.c.l.b16 %v1237
    %v2756 = vunpack.c.h.b16 %v1237
    %v2757 = vunpack.c.l.b16 %v1238
    %v2758 = vunpack.c.h.b16 %v1238
    %v2759 = vunpack.c.l.b16 %v1239
    %v2760 = vunpack.c.h.b16 %v1239
    %v2761 = vunpack.c.l.b16 %v1240
    %v2762 = vunpack.c.h.b16 %v1240
    %v2763 = vunpack.c.l.b16 %v1241
    %v2764 = vunpack.c.h.b16 %v1241
    %v2765 = vunpack.c.l.b16 %v1242
    %v2766 = vunpack.c.h.b16 %v1242
    %v2767 = vunpack.c.l.b16 %v1243
    %v2768 = vunpack.c.h.b16 %v1243
    %v2769 = vunpack.c.l.b16 %v1244
    %v2770 = vunpack.c.h.b16 %v1244
    %v2771 = vunpack.c.l.b16 %v1245
    %v2772 = vunpack.c.h.b16 %v1245
    %v2773 = vunpack.c.l.b16 %v1246
    %v2774 = vunpack.c.h.b16 %v1246
    %v2775 = vunpack.c.l.b16 %v1247
    %v2776 = vunpack.c.h.b16 %v1247
    %v2777 = vunpack.c.l.b16 %v1248
    %v2778 = vunpack.c.h.b16 %v1248
    %v2779 = vunpack.c.l.b16 %v1249
    %v2780 = vunpack.c.h.b16 %v1249
    %v2781 = vunpack.c.l.b16 %v1250
    %v2782 = vunpack.c.h.b16 %v1250
    %v2783 = vunpack.c.l.b16 %v1251
    %v2784 = vunpack.c.h.b16 %v1251
    %v2785 = vunpack.c.l.b16 %v1252
    %v2786 = vunpack.c.h.b16 %v1252
    %v2787 = vunpack.c.l.b16 %v1253
    %v2788 = vunpack.c.h.b16 %v1253
    %v2789 = vunpack.c.l.b16 %v1254
    %v2790 = vunpack.c.h.b16 %v1254
    %v2791 = vunpack.c.l.b16 %v1255
    %v2792 = vunpack.c.h.b16 %v1255
    %v2793 = vunpack.c.l.b16 %v1256
    %v2794 = vunpack.c.h.b16 %v1256
    %v2795 = vunpack.c.l.b16 %v1257
    %v2796 = vunpack.c.h.b16 %v1257
    %v2797 = vunpack.c.l.b16 %v1258
    %v2798 = vunpack.c.h.b16 %v1258
    %v2799 = vunpack.c.l.b16 %v1259
    %v2800 = vunpack.c.h.b16 %v1259
    %v2801 = vunpack.c.l.b16 %v1260
    %v2802 = vunpack.c.h.b16 %v1260
    %v2803 = vunpack.c.l.b16 %v1261
    %v2804 = vunpack.c.h.b16 %v1261
    %v2805 = vunpack.c.l.b16 %v1262
    %v2806 = vunpack.c.h.b16 %v1262
    %v2807 = vunpack.c.l.b16 %v1263
    %v2808 = vunpack.c.h.b16 %v1263
    %v2809 = vunpack.c.l.b16 %v1264
    %v2810 = vunpack.c.h.b16 %v1264
    %v2811 = vunpack.c.l.b16 %v1265
    %v2812 = vunpack.c.h.b16 %v1265
    %v2813 = vunpack.c.l.b16 %v1266
    %v2814 = vunpack.c.h.b16 %v1266
    %v2815 = vunpack.c.l.b16 %v1267
    %v2816 = vunpack.c.h.b16 %v1267
    %v2817 = vunpack.c.l.b16 %v1268
    %v2818 = vunpack.c.h.b16 %v1268
    %v2819 = vunpack.c.l.b16 %v1269
    %v2820 = vunpack.c.h.b16 %v1269
    %v2821 = vunpack.c.l.b16 %v1270
    %v2822 = vunpack.c.h.b16 %v1270
    %v2823 = vunpack.c.l.b16 %v1271
    %v2824 = vunpack.c.h.b16 %v1271
    %v2825 = vunpack.c.l.b16 %v1272
    %v2826 = vunpack.c.h.b16 %v1272
    %v2827 = vunpack.c.l.b16 %v1273
    %v2828 = vunpack.c.h.b16 %v1273
    %v2829 = vunpack.c.l.b16 %v1274
    %v2830 = vunpack.c.h.b16 %v1274
    %v2831 = vunpack.c.l.b16 %v1275
    %v2832 = vunpack.c.h.b16 %v1275
    %v2833 = vunpack.c.l.b16 %v1276
    %v2834 = vunpack.c.h.b16 %v1276
    %v2835 = vunpack.c.l.b16 %v1277
    %v2836 = vunpack.c.h.b16 %v1277
    %v2837 = vunpack.c.l.b16 %v1278
    %v2838 = vunpack.c.h.b16 %v1278
    %v2839 = vunpack.c.l.b16 %v1279
    %v2840 = vunpack.c.h.b16 %v1279
    %v2841 = vunpack.c.l.b16 %v1280
    %v2842 = vunpack.c.h.b16 %v1280
    %v2843 = vunpack.c.l.b16 %v1281
    %v2844 = vunpack.c.h.b16 %v1281
    %v2845 = vunpack.c.l.b16 %v1282
    %v2846 = vunpack.c.h.b16 %v1282
    %v2847 = vunpack.c.l.b16 %v1283
    %v2848 = vunpack.c.h.b16 %v1283
    %v2849 = vunpack.c.l.b16 %v1284
    %v2850 = vunpack.c.h.b16 %v1284
    %v2851 = vunpack.c.l.b16 %v1285
    %v2852 = vunpack.c.h.b16 %v1285
    %v2853 = vunpack.c.l.b16 %v1286
    %v2854 = vunpack.c.h.b16 %v1286
    %v2855 = vunpack.c.l.b16 %v1287
    %v2856 = vunpack.c.h.b16 %v1287
    %v2857 = vunpack.c.l.b16 %v1288
    %v2858 = vunpack.c.h.b16 %v1288
    %v2859 = vunpack.c.l.b16 %v1289
    %v2860 = vunpack.c.h.b16 %v1289
    %v2861 = vunpack.c.l.b16 %v1290
    %v2862 = vunpack.c.h.b16 %v1290
    %v2863 = vunpack.c.l.b16 %v1291
    %v2864 = vunpack.c.h.b16 %v1291
    %v2865 = vunpack.c.l.b16 %v1292
    %v2866 = vunpack.c.h.b16 %v1292
    %v2867 = vunpack.c.l.b16 %v1293
    %v2868 = vunpack.c.h.b16 %v1293
    %v2869 = vunpack.c.l.b16 %v1294
    %v2870 = vunpack.c.h.b16 %v1294
    %v2871 = vunpack.c.l.b16 %v1295
    %v2872 = vunpack.c.h.b16 %v1295
    %v2873 = vunpack.c.l.b16 %v1296
    %v2874 = vunpack.c.h.b16 %v1296
    %v2875 = vpack.c.b16 %v1859, %v1851
    %v2876 = vpack.c.b16 %v1860, %v1852
    %v2877 = vpack.c.b16 %v1861, %v1853
    %v2878 = vpack.c.b16 %v1862, %v1854
    %v2879 = vpack.c.b16 %v1863, %v1855
    %v2880 = vpack.c.b16 %v1864, %v1856
    %v2881 = vpack.c.b16 %v1865, %v1857
    %v2882 = vpack.c.b16 %v1866, %v1858
    %v2883 = vpack.c.b16 %v1875, %v1867
    %v2884 = vpack.c.b16 %v1876, %v1868
    %v2885 = vpack.c.b16 %v1877, %v1869
    %v2886 = vpack.c.b16 %v1878, %v1870
    %v2887 = vpack.c.b16 %v1879, %v1871
    %v2888 = vpack.c.b16 %v1880, %v1872
    %v2889 = vpack.c.b16 %v1881, %v1873
    %v2890 = vpack.c.b16 %v1882, %v1874
    %v2891 = vpack.c.b16 %v1891, %v1883
    %v2892 = vpack.c.b16 %v1892, %v1884
    %v2893 = vpack.c.b16 %v1893, %v1885
    %v2894 = vpack.c.b16 %v1894, %v1886
    %v2895 = vpack.c.b16 %v1895, %v1887
    %v2896 = vpack.c.b16 %v1896, %v1888
    %v2897 = vpack.c.b16 %v1897, %v1889
    %v2898 = vpack.c.b16 %v1898, %v1890
    %v2899 = vpack.c.b16 %v1907, %v1899
    %v2900 = vpack.c.b16 %v1908, %v1900
    %v2901 = vpack.c.b16 %v1909, %v1901
    %v2902 = vpack.c.b16 %v1910, %v1902
    %v2903 = vpack.c.b16 %v1911, %v1903
    %v2904 = vpack.c.b16 %v1912, %v1904
    %v2905 = vpack.c.b16 %v1913, %v1905
    %v2906 = vpack.c.b16 %v1914, %v1906
    %v2907 = vpack.c.b16 %v1923, %v1915
    %v2908 = vpack.c.b16 %v1924, %v1916
    %v2909 = vpack.c.b16 %v1925, %v1917
    %v2910 = vpack.c.b16 %v1926, %v1918
    %v2911 = vpack.c.b16 %v1927, %v1919
    %v2912 = vpack.c.b16 %v1928, %v1920
    %v2913 = vpack.c.b16 %v1929, %v1921
    %v2914 = vpack.c.b16 %v1930, %v1922
    %v2915 = vpack.c.b16 %v1939, %v1931
    %v2916 = vpack.c.b16 %v1940, %v1932
    %v2917 = vpack.c.b16 %v1941, %v1933
    %v2918 = vpack.c.b16 %v1942, %v1934
    %v2919 = vpack.c.b16 %v1943, %v1935
    %v2920 = vpack.c.b16 %v1944, %v1936
    %v2921 = vpack.c.b16 %v1945, %v1937
    %v2922 = vpack.c.b16 %v1946, %v1938
    %v2923 = vpack.c.b16 %v1955, %v1947
    %v2924 = vpack.c.b16 %v1956, %v1948
    %v2925 = vpack.c.b16 %v1957, %v1949
    %v2926 = vpack.c.b16 %v1958, %v1950
    %v2927 = vpack.c.b16 %v1959, %v1951
    %v2928 = vpack.c.b16 %v1960, %v1952
    %v2929 = vpack.c.b16 %v1961, %v1953
    %v2930 = vpack.c.b16 %v1962, %v1954
    %v2931 = vpack.c.b16 %v1971, %v1963
    %v2932 = vpack.c.b16 %v1972, %v1964
    %v2933 = vpack.c.b16 %v1973, %v1965
    %v2934 = vpack.c.b16 %v1974, %v1966
    %v2935 = vpack.c.b16 %v1975, %v1967
    %v2936 = vpack.c.b16 %v1976, %v1968
    %v2937 = vpack.c.b16 %v1977, %v1969
    %v2938 = vpack.c.b16 %v1978, %v1970
    %v2939 = vpack.c.b16 %v1987, %v1979
    %v2940 = vpack.c.b16 %v1988, %v1980
    %v2941 = vpack.c.b16 %v1989, %v1981
    %v2942 = vpack.c.b16 %v1990, %v1982
    %v2943 = vpack.c.b16 %v1991, %v1983
    %v2944 = vpack.c.b16 %v1992, %v1984
    %v2945 = vpack.c.b16 %v1993, %v1985
    %v2946 = vpack.c.b16 %v1994, %v1986
    %v2947 = vpack.c.b16 %v2003, %v1995
    %v2948 = vpack.c.b16 %v2004, %v1996
    %v2949 = vpack.c.b16 %v2005, %v1997
    %v2950 = vpack.c.b16 %v2006, %v1998
    %v2951 = vpack.c.b16 %v2007, %v1999
    %v2952 = vpack.c.b16 %v2008, %v2000
    %v2953 = vpack.c.b16 %v2009, %v2001
    %v2954 = vpack.c.b16 %v2010, %v2002
    %v2955 = vpack.c.b16 %v2019, %v2011
    %v2956 = vpack.c.b16 %v2020, %v2012
    %v2957 = vpack.c.b16 %v2021, %v2013
    %v2958 = vpack.c.b16 %v2022, %v2014
    %v2959 = vpack.c.b16 %v2023, %v2015
    %v2960 = vpack.c.b16 %v2024, %v2016
    %v2961 = vpack.c.b16 %v2025, %v2017
    %v2962 = vpack.c.b16 %v2026, %v2018
    %v2963 = vpack.c.b16 %v2035, %v2027
    %v2964 = vpack.c.b16 %v2036, %v2028
    %v2965 = vpack.c.b16 %v2037, %v2029
    %v2966 = vpack.c.b16 %v2038, %v2030
    %v2967 = vpack.c.b16 %v2039, %v2031
    %v2968 = vpack.c.b16 %v2040, %v2032
    %v2969 = vpack.c.b16 %v2041, %v2033
    %v2970 = vpack.c.b16 %v2042, %v2034
    %v2971 = vpack.c.b16 %v2051, %v2043
    %v2972 = vpack.c.b16 %v2052, %v2044
    %v2973 = vpack.c.b16 %v2053, %v2045
    %v2974 = vpack.c.b16 %v2054, %v2046
    %v2975 = vpack.c.b16 %v2055, %v2047
    %v2976 = vpack.c.b16 %v2056, %v2048
    %v2977 = vpack.c.b16 %v2057, %v2049
    %v2978 = vpack.c.b16 %v2058, %v2050
    %v2979 = vpack.c.b16 %v2067, %v2059
    %v2980 = vpack.c.b16 %v2068, %v2060
    %v2981 = vpack.c.b16 %v2069, %v2061
    %v2982 = vpack.c.b16 %v2070, %v2062
    %v2983 = vpack.c.b16 %v2071, %v2063
    %v2984 = vpack.c.b16 %v2072, %v2064
    %v2985 = vpack.c.b16 %v2073, %v2065
    %v2986 = vpack.c.b16 %v2074, %v2066
    %v2987 = vpack.c.b16 %v2083, %v2075
    %v2988 = vpack.c.b16 %v2084, %v2076
    %v2989 = vpack.c.b16 %v2085, %v2077
    %v2990 = vpack.c.b16 %v2086, %v2078
    %v2991 = vpack.c.b16 %v2087, %v2079
    %v2992 = vpack.c.b16 %v2088, %v2080
    %v2993 = vpack.c.b16 %v2089, %v2081
    %v2994 = vpack.c.b16 %v2090, %v2082
    %v2995 = vpack.c.b16 %v2099, %v2091
    %v2996 = vpack.c.b16 %v2100, %v2092
    %v2997 = vpack.c.b16 %v2101, %v2093
    %v2998 = vpack.c.b16 %v2102, %v2094
    %v2999 = vpack.c.b16 %v2103, %v2095
    %v3000 = vpack.c.b16 %v2104, %v2096
    %v3001 = vpack.c.b16 %v2105, %v2097
    %v3002 = vpack.c.b16 %v2106, %v2098
    %v3003 = vpack.c.b16 %v2115, %v2107
    %v3004 = vpack.c.b16 %v2116, %v2108
    %v3005 = vpack.c.b16 %v2117, %v2109
    %v3006 = vpack.c.b16 %v2118, %v2110
    %v3007 = vpack.c.b16 %v2119, %v2111
    %v3008 = vpack.c.b16 %v2120, %v2112
    %v3009 = vpack.c.b16 %v2121, %v2113
    %v3010 = vpack.c.b16 %v2122, %v2114
    %v3011 = vpack.c.b16 %v2131, %v2123
    %v3012 = vpack.c.b16 %v2132, %v2124
    %v3013 = vpack.c.b16 %v2133, %v2125
    %v3014 = vpack.c.b16 %v2134, %v2126
    %v3015 = vpack.c.b16 %v2135, %v2127
    %v3016 = vpack.c.b16 %v2136, %v2128
    %v3017 = vpack.c.b16 %v2137, %v2129
    %v3018 = vpack.c.b16 %v2138, %v2130
    %v3019 = vpack.c.b16 %v2147, %v2139
    %v3020 = vpack.c.b16 %v2148, %v2140
    %v3021 = vpack.c.b16 %v2149, %v2141
    %v3022 = vpack.c.b16 %v2150, %v2142
    %v3023 = vpack.c.b16 %v2151, %v2143
    %v3024 = vpack.c.b16 %v2152, %v2144
    %v3025 = vpack.c.b16 %v2153, %v2145
    %v3026 = vpack.c.b16 %v2154, %v2146
    %v3027 = vpack.c.b16 %v2163, %v2155
    %v3028 = vpack.c.b16 %v2164, %v2156
    %v3029 = vpack.c.b16 %v2165, %v2157
    %v3030 = vpack.c.b16 %v2166, %v2158
    %v3031 = vpack.c.b16 %v2167, %v2159
    %v3032 = vpack.c.b16 %v2168, %v2160
    %v3033 = vpack.c.b16 %v2169, %v2161
    %v3034 = vpack.c.b16 %v2170, %v2162
    %v3035 = vpack.c.b16 %v2179, %v2171
    %v3036 = vpack.c.b16 %v2180, %v2172
    %v3037 = vpack.c.b16 %v2181, %v2173
    %v3038 = vpack.c.b16 %v2182, %v2174
    %v3039 = vpack.c.b16 %v2183, %v2175
    %v3040 = vpack.c.b16 %v2184, %v2176
    %v3041 = vpack.c.b16 %v2185, %v2177
    %v3042 = vpack.c.b16 %v2186, %v2178
    %v3043 = vpack.c.b16 %v2195, %v2187
    %v3044 = vpack.c.b16 %v2196, %v2188
    %v3045 = vpack.c.b16 %v2197, %v2189
    %v3046 = vpack.c.b16 %v2198, %v2190
    %v3047 = vpack.c.b16 %v2199, %v2191
    %v3048 = vpack.c.b16 %v2200, %v2192
    %v3049 = vpack.c.b16 %v2201, %v2193
    %v3050 = vpack.c.b16 %v2202, %v2194
    %v3051 = vpack.c.b16 %v2211, %v2203
    %v3052 = vpack.c.b16 %v2212, %v2204
    %v3053 = vpack.c.b16 %v2213, %v2205
    %v3054 = vpack.c.b16 %v2214, %v2206
    %v3055 = vpack.c.b16 %v2215, %v2207
    %v3056 = vpack.c.b16 %v2216, %v2208
    %v3057 = vpack.c.b16 %v2217, %v2209
    %v3058 = vpack.c.b16 %v2218, %v2210
    %v3059 = vpack.c.b16 %v2227, %v2219
    %v3060 = vpack.c.b16 %v2228, %v2220
    %v3061 = vpack.c.b16 %v2229, %v2221
    %v3062 = vpack.c.b16 %v2230, %v2222
    %v3063 = vpack.c.b16 %v2231, %v2223
    %v3064 = vpack.c.b16 %v2232, %v2224
    %v3065 = vpack.c.b16 %v2233, %v2225
    %v3066 = vpack.c.b16 %v2234, %v2226
    %v3067 = vpack.c.b16 %v2243, %v2235
    %v3068 = vpack.c.b16 %v2244, %v2236
    %v3069 = vpack.c.b16 %v2245, %v2237
    %v3070 = vpack.c.b16 %v2246, %v2238
    %v3071 = vpack.c.b16 %v2247, %v2239
    %v3072 = vpack.c.b16 %v2248, %v2240
    %v3073 = vpack.c.b16 %v2249, %v2241
    %v3074 = vpack.c.b16 %v2250, %v2242
    %v3075 = vpack.c.b16 %v2259, %v2251
    %v3076 = vpack.c.b16 %v2260, %v2252
    %v3077 = vpack.c.b16 %v2261, %v2253
    %v3078 = vpack.c.b16 %v2262, %v2254
    %v3079 = vpack.c.b16 %v2263, %v2255
    %v3080 = vpack.c.b16 %v2264, %v2256
    %v3081 = vpack.c.b16 %v2265, %v2257
    %v3082 = vpack.c.b16 %v2266, %v2258
    %v3083 = vpack.c.b16 %v2275, %v2267
    %v3084 = vpack.c.b16 %v2276, %v2268
    %v3085 = vpack.c.b16 %v2277, %v2269
    %v3086 = vpack.c.b16 %v2278, %v2270
    %v3087 = vpack.c.b16 %v2279, %v2271
    %v3088 = vpack.c.b16 %v2280, %v2272
    %v3089 = vpack.c.b16 %v2281, %v2273
    %v3090 = vpack.c.b16 %v2282, %v2274
    %v3091 = vpack.c.b16 %v2291, %v2283
    %v3092 = vpack.c.b16 %v2292, %v2284
    %v3093 = vpack.c.b16 %v2293, %v2285
    %v3094 = vpack.c.b16 %v2294, %v2286
    %v3095 = vpack.c.b16 %v2295, %v2287
    %v3096 = vpack.c.b16 %v2296, %v2288
    %v3097 = vpack.c.b16 %v2297, %v2289
    %v3098 = vpack.c.b16 %v2298, %v2290
    %v3099 = vpack.c.b16 %v2307, %v2299
    %v3100 = vpack.c.b16 %v2308, %v2300
    %v3101 = vpack.c.b16 %v2309, %v2301
    %v3102 = vpack.c.b16 %v2310, %v2302
    %v3103 = vpack.c.b16 %v2311, %v2303
    %v3104 = vpack.c.b16 %v2312, %v2304
    %v3105 = vpack.c.b16 %v2313, %v2305
    %v3106 = vpack.c.b16 %v2314, %v2306
    %v3107 = vpack.c.b16 %v2323, %v2315
    %v3108 = vpack.c.b16 %v2324, %v2316
    %v3109 = vpack.c.b16 %v2325, %v2317
    %v3110 = vpack.c.b16 %v2326, %v2318
    %v3111 = vpack.c.b16 %v2327, %v2319
    %v3112 = vpack.c.b16 %v2328, %v2320
    %v3113 = vpack.c.b16 %v2329, %v2321
    %v3114 = vpack.c.b16 %v2330, %v2322
    %v3115 = vpack.c.b16 %v2339, %v2331
    %v3116 = vpack.c.b16 %v2340, %v2332
    %v3117 = vpack.c.b16 %v2341, %v2333
    %v3118 = vpack.c.b16 %v2342, %v2334
    %v3119 = vpack.c.b16 %v2343, %v2335
    %v3120 = vpack.c.b16 %v2344, %v2336
    %v3121 = vpack.c.b16 %v2345, %v2337
    %v3122 = vpack.c.b16 %v2346, %v2338
    %v3123 = vpack.c.b16 %v2355, %v2347
    %v3124 = vpack.c.b16 %v2356, %v2348
    %v3125 = vpack.c.b16 %v2357, %v2349
    %v3126 = vpack.c.b16 %v2358, %v2350
    %v3127 = vpack.c.b16 %v2359, %v2351
    %v3128 = vpack.c.b16 %v2360, %v2352
    %v3129 = vpack.c.b16 %v2361, %v2353
    %v3130 = vpack.c.b16 %v2362, %v2354
    %v3131 = vpack.c.b16 %v2371, %v2363
    %v3132 = vpack.c.b16 %v2372, %v2364
    %v3133 = vpack.c.b16 %v2373, %v2365
    %v3134 = vpack.c.b16 %v2374, %v2366
    %v3135 = vpack.c.b16 %v2375, %v2367
    %v3136 = vpack.c.b16 %v2376, %v2368
    %v3137 = vpack.c.b16 %v2377, %v2369
    %v3138 = vpack.c.b16 %v2378, %v2370
    %v3139 = vpack.c.b16 %v2387, %v2379
    %v3140 = vpack.c.b16 %v2388, %v2380
    %v3141 = vpack.c.b16 %v2389, %v2381
    %v3142 = vpack.c.b16 %v2390, %v2382
    %v3143 = vpack.c.b16 %v2391, %v2383
    %v3144 = vpack.c.b16 %v2392, %v2384
    %v3145 = vpack.c.b16 %v2393, %v2385
    %v3146 = vpack.c.b16 %v2394, %v2386
    %v3147 = vpack.c.b16 %v2403, %v2395
    %v3148 = vpack.c.b16 %v2404, %v2396
    %v3149 = vpack.c.b16 %v2405, %v2397
    %v3150 = vpack.c.b16 %v2406, %v2398
    %v3151 = vpack.c.b16 %v2407, %v2399
    %v3152 = vpack.c.b16 %v2408, %v2400
    %v3153 = vpack.c.b16 %v2409, %v2401
    %v3154 = vpack.c.b16 %v2410, %v2402
    %v3155 = vpack.c.b16 %v2419, %v2411
    %v3156 = vpack.c.b16 %v2420, %v2412
    %v3157 = vpack.c.b16 %v2421, %v2413
    %v3158 = vpack.c.b16 %v2422, %v2414
    %v3159 = vpack.c.b16 %v2423, %v2415
    %v3160 = vpack.c.b16 %v2424, %v2416
    %v3161 = vpack.c.b16 %v2425, %v2417
    %v3162 = vpack.c.b16 %v2426, %v2418
    %v3163 = vpack.c.b16 %v2435, %v2427
    %v3164 = vpack.c.b16 %v2436, %v2428
    %v3165 = vpack.c.b16 %v2437, %v2429
    %v3166 = vpack.c.b16 %v2438, %v2430
    %v3167 = vpack.c.b16 %v2439, %v2431
    %v3168 = vpack.c.b16 %v2440, %v2432
    %v3169 = vpack.c.b16 %v2441, %v2433
    %v3170 = vpack.c.b16 %v2442, %v2434
    %v3171 = vpack.c.b16 %v2451, %v2443
    %v3172 = vpack.c.b16 %v2452, %v2444
    %v3173 = vpack.c.b16 %v2453, %v2445
    %v3174 = vpack.c.b16 %v2454, %v2446
    %v3175 = vpack.c.b16 %v2455, %v2447
    %v3176 = vpack.c.b16 %v2456, %v2448
    %v3177 = vpack.c.b16 %v2457, %v2449
    %v3178 = vpack.c.b16 %v2458, %v2450
    %v3179 = vpack.c.b16 %v2467, %v2459
    %v3180 = vpack.c.b16 %v2468, %v2460
    %v3181 = vpack.c.b16 %v2469, %v2461
    %v3182 = vpack.c.b16 %v2470, %v2462
    %v3183 = vpack.c.b16 %v2471, %v2463
    %v3184 = vpack.c.b16 %v2472, %v2464
    %v3185 = vpack.c.b16 %v2473, %v2465
    %v3186 = vpack.c.b16 %v2474, %v2466
    %v3187 = vpack.c.b16 %v2483, %v2475
    %v3188 = vpack.c.b16 %v2484, %v2476
    %v3189 = vpack.c.b16 %v2485, %v2477
    %v3190 = vpack.c.b16 %v2486, %v2478
    %v3191 = vpack.c.b16 %v2487, %v2479
    %v3192 = vpack.c.b16 %v2488, %v2480
    %v3193 = vpack.c.b16 %v2489, %v2481
    %v3194 = vpack.c.b16 %v2490, %v2482
    %v3195 = vpack.c.b16 %v2499, %v2491
    %v3196 = vpack.c.b16 %v2500, %v2492
    %v3197 = vpack.c.b16 %v2501, %v2493
    %v3198 = vpack.c.b16 %v2502, %v2494
    %v3199 = vpack.c.b16 %v2503, %v2495
    %v3200 = vpack.c.b16 %v2504, %v2496
    %v3201 = vpack.c.b16 %v2505, %v2497
    %v3202 = vpack.c.b16 %v2506, %v2498
    %v3203 = vpack.c.b16 %v2515, %v2507
    %v3204 = vpack.c.b16 %v2516, %v2508
    %v3205 = vpack.c.b16 %v2517, %v2509
    %v3206 = vpack.c.b16 %v2518, %v2510
    %v3207 = vpack.c.b16 %v2519, %v2511
    %v3208 = vpack.c.b16 %v2520, %v2512
    %v3209 = vpack.c.b16 %v2521, %v2513
    %v3210 = vpack.c.b16 %v2522, %v2514
    %v3211 = vpack.c.b16 %v2531, %v2523
    %v3212 = vpack.c.b16 %v2532, %v2524
    %v3213 = vpack.c.b16 %v2533, %v2525
    %v3214 = vpack.c.b16 %v2534, %v2526
    %v3215 = vpack.c.b16 %v2535, %v2527
    %v3216 = vpack.c.b16 %v2536, %v2528
    %v3217 = vpack.c.b16 %v2537, %v2529
    %v3218 = vpack.c.b16 %v2538, %v2530
    %v3219 = vpack.c.b16 %v2547, %v2539
    %v3220 = vpack.c.b16 %v2548, %v2540
    %v3221 = vpack.c.b16 %v2549, %v2541
    %v3222 = vpack.c.b16 %v2550, %v2542
    %v3223 = vpack.c.b16 %v2551, %v2543
    %v3224 = vpack.c.b16 %v2552, %v2544
    %v3225 = vpack.c.b16 %v2553, %v2545
    %v3226 = vpack.c.b16 %v2554, %v2546
    %v3227 = vpack.c.b16 %v2563, %v2555
    %v3228 = vpack.c.b16 %v2564, %v2556
    %v3229 = vpack.c.b16 %v2565, %v2557
    %v3230 = vpack.c.b16 %v2566, %v2558
    %v3231 = vpack.c.b16 %v2567, %v2559
    %v3232 = vpack.c.b16 %v2568, %v2560
    %v3233 = vpack.c.b16 %v2569, %v2561
    %v3234 = vpack.c.b16 %v2570, %v2562
    %v3235 = vpack.c.b16 %v2579, %v2571
    %v3236 = vpack.c.b16 %v2580, %v2572
    %v3237 = vpack.c.b16 %v2581, %v2573
    %v3238 = vpack.c.b16 %v2582, %v2574
    %v3239 = vpack.c.b16 %v2583, %v2575
    %v3240 = vpack.c.b16 %v2584, %v2576
    %v3241 = vpack.c.b16 %v2585, %v2577
    %v3242 = vpack.c.b16 %v2586, %v2578
    %v3243 = vpack.c.b16 %v2595, %v2587
    %v3244 = vpack.c.b16 %v2596, %v2588
    %v3245 = vpack.c.b16 %v2597, %v2589
    %v3246 = vpack.c.b16 %v2598, %v2590
    %v3247 = vpack.c.b16 %v2599, %v2591
    %v3248 = vpack.c.b16 %v2600, %v2592
    %v3249 = vpack.c.b16 %v2601, %v2593
    %v3250 = vpack.c.b16 %v2602, %v2594
    %v3251 = vpack.c.b16 %v2611, %v2603
    %v3252 = vpack.c.b16 %v2612, %v2604
    %v3253 = vpack.c.b16 %v2613, %v2605
    %v3254 = vpack.c.b16 %v2614, %v2606
    %v3255 = vpack.c.b16 %v2615, %v2607
    %v3256 = vpack.c.b16 %v2616, %v2608
    %v3257 = vpack.c.b16 %v2617, %v2609
    %v3258 = vpack.c.b16 %v2618, %v2610
    %v3259 = vpack.c.b16 %v2627, %v2619
    %v3260 = vpack.c.b16 %v2628, %v2620
    %v3261 = vpack.c.b16 %v2629, %v2621
    %v3262 = vpack.c.b16 %v2630, %v2622
    %v3263 = vpack.c.b16 %v2631, %v2623
    %v3264 = vpack.c.b16 %v2632, %v2624
    %v3265 = vpack.c.b16 %v2633, %v2625
    %v3266 = vpack.c.b16 %v2634, %v2626
    %v3267 = vpack.c.b16 %v2643, %v2635
    %v3268 = vpack.c.b16 %v2644, %v2636
    %v3269 = vpack.c.b16 %v2645, %v2637
    %v3270 = vpack.c.b16 %v2646, %v2638
    %v3271 = vpack.c.b16 %v2647, %v2639
    %v3272 = vpack.c.b16 %v2648, %v2640
    %v3273 = vpack.c.b16 %v2649, %v2641
    %v3274 = vpack.c.b16 %v2650, %v2642
    %v3275 = vpack.c.b16 %v2659, %v2651
    %v3276 = vpack.c.b16 %v2660, %v2652
    %v3277 = vpack.c.b16 %v2661, %v2653
    %v3278 = vpack.c.b16 %v2662, %v2654
    %v3279 = vpack.c.b16 %v2663, %v2655
    %v3280 = vpack.c.b16 %v2664, %v2656
    %v3281 = vpack.c.b16 %v2665, %v2657
    %v3282 = vpack.c.b16 %v2666, %v2658
    %v3283 = vpack.c.b16 %v2675, %v2667
    %v3284 = vpack.c.b16 %v2676, %v2668
    %v3285 = vpack.c.b16 %v2677, %v2669
    %v3286 = vpack.c.b16 %v2678, %v2670
    %v3287 = vpack.c.b16 %v2679, %v2671
    %v3288 = vpack.c.b16 %v2680, %v2672
    %v3289 = vpack.c.b16 %v2681, %v2673
    %v3290 = vpack.c.b16 %v2682, %v2674
    %v3291 = vpack.c.b16 %v2691, %v2683
    %v3292 = vpack.c.b16 %v2692, %v2684
    %v3293 = vpack.c.b16 %v2693, %v2685
    %v3294 = vpack.c.b16 %v2694, %v2686
    %v3295 = vpack.c.b16 %v2695, %v2687
    %v3296 = vpack.c.b16 %v2696, %v2688
    %v3297 = vpack.c.b16 %v2697, %v2689
    %v3298 = vpack.c.b16 %v2698, %v2690
    %v3299 = vpack.c.b16 %v2707, %v2699
    %v3300 = vpack.c.b16 %v2708, %v2700
    %v3301 = vpack.c.b16 %v2709, %v2701
    %v3302 = vpack.c.b16 %v2710, %v2702
    %v3303 = vpack.c.b16 %v2711, %v2703
    %v3304 = vpack.c.b16 %v2712, %v2704
    %v3305 = vpack.c.b16 %v2713, %v2705
    %v3306 = vpack.c.b16 %v2714, %v2706
    %v3307 = vpack.c.b16 %v2723, %v2715
    %v3308 = vpack.c.b16 %v2724, %v2716
    %v3309 = vpack.c.b16 %v2725, %v2717
    %v3310 = vpack.c.b16 %v2726, %v2718
    %v3311 = vpack.c.b16 %v2727, %v2719
    %v3312 = vpack.c.b16 %v2728, %v2720
    %v3313 = vpack.c.b16 %v2729, %v2721
    %v3314 = vpack.c.b16 %v2730, %v2722
    %v3315 = vpack.c.b16 %v2739, %v2731
    %v3316 = vpack.c.b16 %v2740, %v2732
    %v3317 = vpack.c.b16 %v2741, %v2733
    %v3318 = vpack.c.b16 %v2742, %v2734
    %v3319 = vpack.c.b16 %v2743, %v2735
    %v3320 = vpack.c.b16 %v2744, %v2736
    %v3321 = vpack.c.b16 %v2745, %v2737
    %v3322 = vpack.c.b16 %v2746, %v2738
    %v3323 = vpack.c.b16 %v2755, %v2747
    %v3324 = vpack.c.b16 %v2756, %v2748
    %v3325 = vpack.c.b16 %v2757, %v2749
    %v3326 = vpack.c.b16 %v2758, %v2750
    %v3327 = vpack.c.b16 %v2759, %v2751
    %v3328 = vpack.c.b16 %v2760, %v2752
    %v3329 = vpack.c.b16 %v2761, %v2753
    %v3330 = vpack.c.b16 %v2762, %v2754
    %v3331 = vpack.c.b16 %v2771, %v2763
    %v3332 = vpack.c.b16 %v2772, %v2764
    %v3333 = vpack.c.b16 %v2773, %v2765
    %v3334 = vpack.c.b16 %v2774, %v2766
    %v3335 = vpack.c.b16 %v2775, %v2767
    %v3336 = vpack.c.b16 %v2776, %v2768
    %v3337 = vpack.c.b16 %v2777, %v2769
    %v3338 = vpack.c.b16 %v2778, %v2770
    %v3339 = vpack.c.b16 %v2787, %v2779
    %v3340 = vpack.c.b16 %v2788, %v2780
    %v3341 = vpack.c.b16 %v2789, %v2781
    %v3342 = vpack.c.b16 %v2790, %v2782
    %v3343 = vpack.c.b16 %v2791, %v2783
    %v3344 = vpack.c.b16 %v2792, %v2784
    %v3345 = vpack.c.b16 %v2793, %v2785
    %v3346 = vpack.c.b16 %v2794, %v2786
    %v3347 = vpack.c.b16 %v2803, %v2795
    %v3348 = vpack.c.b16 %v2804, %v2796
    %v3349 = vpack.c.b16 %v2805, %v2797
    %v3350 = vpack.c.b16 %v2806, %v2798
    %v3351 = vpack.c.b16 %v2807, %v2799
    %v3352 = vpack.c.b16 %v2808, %v2800
    %v3353 = vpack.c.b16 %v2809, %v2801
    %v3354 = vpack.c.b16 %v2810, %v2802
    %v3355 = vpack.c.b16 %v2819, %v2811
    %v3356 = vpack.c.b16 %v2820, %v2812
    %v3357 = vpack.c.b16 %v2821, %v2813
    %v3358 = vpack.c.b16 %v2822, %v2814
    %v3359 = vpack.c.b16 %v2823, %v2815
    %v3360 = vpack.c.b16 %v2824, %v2816
    %v3361 = vpack.c.b16 %v2825, %v2817
    %v3362 = vpack.c.b16 %v2826, %v2818
    %v3363 = vpack.c.b16 %v2835, %v2827
    %v3364 = vpack.c.b16 %v2836, %v2828
    %v3365 = vpack.c.b16 %v2837, %v2829
    %v3366 = vpack.c.b16 %v2838, %v2830
    %v3367 = vpack.c.b16 %v2839, %v2831
    %v3368 = vpack.c.b16 %v2840, %v2832
    %v3369 = vpack.c.b16 %v2841, %v2833
    %v3370 = vpack.c.b16 %v2842, %v2834
    %v3371 = vpack.c.b16 %v2851, %v2843
    %v3372 = vpack.c.b16 %v2852, %v2844
    %v3373 = vpack.c.b16 %v2853, %v2845
    %v3374 = vpack.c.b16 %v2854, %v2846
    %v3375 = vpack.c.b16 %v2855, %v2847
    %v3376 = vpack.c.b16 %v2856, %v2848
    %v3377 = vpack.c.b16 %v2857, %v2849
    %v3378 = vpack.c.b16 %v2858, %v2850
    %v3379 = vpack.c.b16 %v2867, %v2859
    %v3380 = vpack.c.b16 %v2868, %v2860
    %v3381 = vpack.c.b16 %v2869, %v2861
    %v3382 = vpack.c.b16 %v2870, %v2862
    %v3383 = vpack.c.b16 %v2871, %v2863
    %v3384 = vpack.c.b16 %v2872, %v2864
    %v3385 = vpack.c.b16 %v2873, %v2865
    %v3386 = vpack.c.b16 %v2874, %v2866
    %3899 = vmatprep.subr.bf16.mxu0 %v2876
    %3900 = vmatpush1.bf16.msra.mxu0 %v2875
    %3901 = vmatprep.subr.bf16.mxu0 %v2884
    %3902 = vmatpush1.bf16.msra.mxu0 %v2883
    %3903 = vmatprep.subr.bf16.mxu0 %v2892
    %3904 = vmatpush1.bf16.msra.mxu0 %v2891
    %3905 = vmatprep.subr.bf16.mxu0 %v2900
    %3906 = vmatpush1.bf16.msra.mxu0 %v2899
    %3907 = vmatprep.subr.bf16.mxu0 %v2908
    %3908 = vmatpush1.bf16.msra.mxu0 %v2907
    %3909 = vmatprep.subr.bf16.mxu0 %v2916
    %3910 = vmatpush1.bf16.msra.mxu0 %v2915
    %3911 = vmatprep.subr.bf16.mxu0 %v2924
    %3912 = vmatpush1.bf16.msra.mxu0 %v2923
    %3913 = vmatprep.subr.bf16.mxu0 %v2932
    %3914 = vmatpush1.bf16.msra.mxu0 %v2931
    %3915 = vmatprep.subr.bf16.mxu0 %v2940
    %3916 = vmatpush1.bf16.msra.mxu0 %v2939
    %3917 = vmatprep.subr.bf16.mxu0 %v2948
    %3918 = vmatpush1.bf16.msra.mxu0 %v2947
    %3919 = vmatprep.subr.bf16.mxu0 %v2956
    %3920 = vmatpush1.bf16.msra.mxu0 %v2955
    %3921 = vmatprep.subr.bf16.mxu0 %v2964
    %3922 = vmatpush1.bf16.msra.mxu0 %v2963
    %3923 = vmatprep.subr.bf16.mxu0 %v2972
    %3924 = vmatpush1.bf16.msra.mxu0 %v2971
    %3925 = vmatprep.subr.bf16.mxu0 %v2980
    %3926 = vmatpush1.bf16.msra.mxu0 %v2979
    %3927 = vmatprep.subr.bf16.mxu0 %v2988
    %3928 = vmatpush1.bf16.msra.mxu0 %v2987
    %3929 = vmatprep.subr.bf16.mxu0 %v2996
    %3930 = vmatpush1.bf16.msra.mxu0 %v2995
    %3931 = vmatprep.mubr.bf16.mxu0 %v460
    %3932 = vmatmul.mubr.bf16.gmra.mrb[0].mxu0 %v459
    %v3933 = vpop.f32.mrb[0].mxu0
    %v3934 = vadd.f32 %v1302, %v3933
    %v3935 = vpop.f32.mrb[0].mxu0
    %v3936 = vadd.f32 %v1306, %v3935
    %v3937 = vpop.f32.mrb[0].mxu0
    %v3938 = vpop.f32.mrb[0].mxu0
    %3939 = vdwg.mxu0
    %3940 = vmatprep.subr.bf16.mxu0 %v3004
    %3941 = vmatpush1.bf16.msra.mxu0 %v3003
    %3942 = vmatprep.subr.bf16.mxu0 %v3012
    %3943 = vmatpush1.bf16.msra.mxu0 %v3011
    %3944 = vmatprep.subr.bf16.mxu0 %v3020
    %3945 = vmatpush1.bf16.msra.mxu0 %v3019
    %3946 = vmatprep.subr.bf16.mxu0 %v3028
    %3947 = vmatpush1.bf16.msra.mxu0 %v3027
    %3948 = vmatprep.subr.bf16.mxu0 %v3036
    %3949 = vmatpush1.bf16.msra.mxu0 %v3035
    %3950 = vmatprep.subr.bf16.mxu0 %v3044
    %3951 = vmatpush1.bf16.msra.mxu0 %v3043
    %3952 = vmatprep.subr.bf16.mxu0 %v3052
    %3953 = vmatpush1.bf16.msra.mxu0 %v3051
    %3954 = vmatprep.subr.bf16.mxu0 %v3060
    %3955 = vmatpush1.bf16.msra.mxu0 %v3059
    %3956 = vmatprep.subr.bf16.mxu0 %v3068
    %3957 = vmatpush1.bf16.msra.mxu0 %v3067
    %3958 = vmatprep.subr.bf16.mxu0 %v3076
    %3959 = vmatpush1.bf16.msra.mxu0 %v3075
    %3960 = vmatprep.subr.bf16.mxu0 %v3084
    %3961 = vmatpush1.bf16.msra.mxu0 %v3083
    %3962 = vmatprep.subr.bf16.mxu0 %v3092
    %3963 = vmatpush1.bf16.msra.mxu0 %v3091
    %3964 = vmatprep.subr.bf16.mxu0 %v3100
    %3965 = vmatpush1.bf16.msra.mxu0 %v3099
    %3966 = vmatprep.subr.bf16.mxu0 %v3108
    %3967 = vmatpush1.bf16.msra.mxu0 %v3107
    %3968 = vmatprep.subr.bf16.mxu0 %v3116
    %3969 = vmatpush1.bf16.msra.mxu0 %v3115
    %3970 = vmatprep.subr.bf16.mxu0 %v3124
    %3971 = vmatpush1.bf16.msra.mxu0 %v3123
    %3972 = vmatprep.mubr.bf16.mxu0 %v462
    %3973 = vmatmul.mubr.bf16.gmra.mrb[0].mxu0 %v461
    %v3974 = vpop.f32.mrb[0].mxu0
    %v3975 = vadd.f32 %v3934, %v3974
    %v3976 = vpop.f32.mrb[0].mxu0
    %v3977 = vadd.f32 %v3936, %v3976
    %v3978 = vpop.f32.mrb[0].mxu0
    %v3979 = vpop.f32.mrb[0].mxu0
    %3980 = vdwg.mxu0
    %3981 = vmatprep.subr.bf16.mxu0 %v3132
    %3982 = vmatpush1.bf16.msra.mxu0 %v3131
    %3983 = vmatprep.subr.bf16.mxu0 %v3140
    %3984 = vmatpush1.bf16.msra.mxu0 %v3139
    %3985 = vmatprep.subr.bf16.mxu0 %v3148
    %3986 = vmatpush1.bf16.msra.mxu0 %v3147
    %3987 = vmatprep.subr.bf16.mxu0 %v3156
    %3988 = vmatpush1.bf16.msra.mxu0 %v3155
    %3989 = vmatprep.subr.bf16.mxu0 %v3164
    %3990 = vmatpush1.bf16.msra.mxu0 %v3163
    %3991 = vmatprep.subr.bf16.mxu0 %v3172
    %3992 = vmatpush1.bf16.msra.mxu0 %v3171
    %3993 = vmatprep.subr.bf16.mxu0 %v3180
    %3994 = vmatpush1.bf16.msra.mxu0 %v3179
    %3995 = vmatprep.subr.bf16.mxu0 %v3188
    %3996 = vmatpush1.bf16.msra.mxu0 %v3187
    %3997 = vmatprep.subr.bf16.mxu0 %v3196
    %3998 = vmatpush1.bf16.msra.mxu0 %v3195
    %3999 = vmatprep.subr.bf16.mxu0 %v3204
    %4000 = vmatpush1.bf16.msra.mxu0 %v3203
    %4001 = vmatprep.subr.bf16.mxu0 %v3212
    %4002 = vmatpush1.bf16.msra.mxu0 %v3211
    %4003 = vmatprep.subr.bf16.mxu0 %v3220
    %4004 = vmatpush1.bf16.msra.mxu0 %v3219
    %4005 = vmatprep.subr.bf16.mxu0 %v3228
    %4006 = vmatpush1.bf16.msra.mxu0 %v3227
    %4007 = vmatprep.subr.bf16.mxu0 %v3236
    %4008 = vmatpush1.bf16.msra.mxu0 %v3235
    %4009 = vmatprep.subr.bf16.mxu0 %v3244
    %4010 = vmatpush1.bf16.msra.mxu0 %v3243
    %4011 = vmatprep.subr.bf16.mxu0 %v3252
    %4012 = vmatpush1.bf16.msra.mxu0 %v3251
    %4013 = vmatprep.mubr.bf16.mxu0 %v464
    %4014 = vmatmul.mubr.bf16.gmra.mrb[0].mxu0 %v463
    %v4015 = vpop.f32.mrb[0].mxu0
    %v4016 = vadd.f32 %v3975, %v4015
    %v4017 = vpop.f32.mrb[0].mxu0
    %v4018 = vadd.f32 %v3977, %v4017
    %v4019 = vpop.f32.mrb[0].mxu0
    %v4020 = vpop.f32.mrb[0].mxu0
    %4021 = vdwg.mxu0
    %4022 = vmatprep.subr.bf16.mxu0 %v3260
    %4023 = vmatpush1.bf16.msra.mxu0 %v3259
    %4024 = vmatprep.subr.bf16.mxu0 %v3268
    %4025 = vmatpush1.bf16.msra.mxu0 %v3267
    %4026 = vmatprep.subr.bf16.mxu0 %v3276
    %4027 = vmatpush1.bf16.msra.mxu0 %v3275
    %4028 = vmatprep.subr.bf16.mxu0 %v3284
    %4029 = vmatpush1.bf16.msra.mxu0 %v3283
    %4030 = vmatprep.subr.bf16.mxu0 %v3292
    %4031 = vmatpush1.bf16.msra.mxu0 %v3291
    %4032 = vmatprep.subr.bf16.mxu0 %v3300
    %4033 = vmatpush1.bf16.msra.mxu0 %v3299
    %4034 = vmatprep.subr.bf16.mxu0 %v3308
    %4035 = vmatpush1.bf16.msra.mxu0 %v3307
    %4036 = vmatprep.subr.bf16.mxu0 %v3316
    %4037 = vmatpush1.bf16.msra.mxu0 %v3315
    %4038 = vmatprep.subr.bf16.mxu0 %v3324
    %4039 = vmatpush1.bf16.msra.mxu0 %v3323
    %4040 = vmatprep.subr.bf16.mxu0 %v3332
    %4041 = vmatpush1.bf16.msra.mxu0 %v3331
    %4042 = vmatprep.subr.bf16.mxu0 %v3340
    %4043 = vmatpush1.bf16.msra.mxu0 %v3339
    %4044 = vmatprep.subr.bf16.mxu0 %v3348
    %4045 = vmatpush1.bf16.msra.mxu0 %v3347
    %4046 = vmatprep.subr.bf16.mxu0 %v3356
    %4047 = vmatpush1.bf16.msra.mxu0 %v3355
    %4048 = vmatprep.subr.bf16.mxu0 %v3364
    %4049 = vmatpush1.bf16.msra.mxu0 %v3363
    %4050 = vmatprep.subr.bf16.mxu0 %v3372
    %4051 = vmatpush1.bf16.msra.mxu0 %v3371
    %4052 = vmatprep.subr.bf16.mxu0 %v3380
    %4053 = vmatpush1.bf16.msra.mxu0 %v3379
    %4054 = vmatprep.mubr.bf16.mxu0 %v466
    %4055 = vmatmul.mubr.bf16.gmra.mrb[0].mxu0 %v465
    %v4056 = vpop.f32.mrb[0].mxu0
    %v4057 = vadd.f32 %v4016, %v4056
    %v4058 = vpop.f32.mrb[0].mxu0
    %v4059 = vadd.f32 %v4018, %v4058
    %v4060 = vpop.f32.mrb[0].mxu0
    %v4061 = vpop.f32.mrb[0].mxu0
    %4062 = vdwg.mxu0
    %4063 = vmatprep.subr.bf16.mxu0 %v2878
    %4064 = vmatpush1.bf16.msra.mxu0 %v2877
    %4065 = vmatprep.subr.bf16.mxu0 %v2886
    %4066 = vmatpush1.bf16.msra.mxu0 %v2885
    %4067 = vmatprep.subr.bf16.mxu0 %v2894
    %4068 = vmatpush1.bf16.msra.mxu0 %v2893
    %4069 = vmatprep.subr.bf16.mxu0 %v2902
    %4070 = vmatpush1.bf16.msra.mxu0 %v2901
    %4071 = vmatprep.subr.bf16.mxu0 %v2910
    %4072 = vmatpush1.bf16.msra.mxu0 %v2909
    %4073 = vmatprep.subr.bf16.mxu0 %v2918
    %4074 = vmatpush1.bf16.msra.mxu0 %v2917
    %4075 = vmatprep.subr.bf16.mxu0 %v2926
    %4076 = vmatpush1.bf16.msra.mxu0 %v2925
    %4077 = vmatprep.subr.bf16.mxu0 %v2934
    %4078 = vmatpush1.bf16.msra.mxu0 %v2933
    %4079 = vmatprep.subr.bf16.mxu0 %v2942
    %4080 = vmatpush1.bf16.msra.mxu0 %v2941
    %4081 = vmatprep.subr.bf16.mxu0 %v2950
    %4082 = vmatpush1.bf16.msra.mxu0 %v2949
    %4083 = vmatprep.subr.bf16.mxu0 %v2958
    %4084 = vmatpush1.bf16.msra.mxu0 %v2957
    %4085 = vmatprep.subr.bf16.mxu0 %v2966
    %4086 = vmatpush1.bf16.msra.mxu0 %v2965
    %4087 = vmatprep.subr.bf16.mxu0 %v2974
    %4088 = vmatpush1.bf16.msra.mxu0 %v2973
    %4089 = vmatprep.subr.bf16.mxu0 %v2982
    %4090 = vmatpush1.bf16.msra.mxu0 %v2981
    %4091 = vmatprep.subr.bf16.mxu0 %v2990
    %4092 = vmatpush1.bf16.msra.mxu0 %v2989
    %4093 = vmatprep.subr.bf16.mxu0 %v2998
    %4094 = vmatpush1.bf16.msra.mxu0 %v2997
    %4095 = vmatprep.mubr.bf16.mxu0 %v460
    %4096 = vmatmul.mubr.bf16.gmra.mrb[0].mxu0 %v459
    %v4097 = vpop.f32.mrb[0].mxu0
    %v4098 = vadd.f32 %v1310, %v4097
    %v4099 = vpop.f32.mrb[0].mxu0
    %v4100 = vadd.f32 %v1314, %v4099
    %v4101 = vpop.f32.mrb[0].mxu0
    %v4102 = vpop.f32.mrb[0].mxu0
    %4103 = vdwg.mxu0
    %4104 = vmatprep.subr.bf16.mxu0 %v3006
    %4105 = vmatpush1.bf16.msra.mxu0 %v3005
    %4106 = vmatprep.subr.bf16.mxu0 %v3014
    %4107 = vmatpush1.bf16.msra.mxu0 %v3013
    %4108 = vmatprep.subr.bf16.mxu0 %v3022
    %4109 = vmatpush1.bf16.msra.mxu0 %v3021
    %4110 = vmatprep.subr.bf16.mxu0 %v3030
    %4111 = vmatpush1.bf16.msra.mxu0 %v3029
    %4112 = vmatprep.subr.bf16.mxu0 %v3038
    %4113 = vmatpush1.bf16.msra.mxu0 %v3037
    %4114 = vmatprep.subr.bf16.mxu0 %v3046
    %4115 = vmatpush1.bf16.msra.mxu0 %v3045
    %4116 = vmatprep.subr.bf16.mxu0 %v3054
    %4117 = vmatpush1.bf16.msra.mxu0 %v3053
    %4118 = vmatprep.subr.bf16.mxu0 %v3062
    %4119 = vmatpush1.bf16.msra.mxu0 %v3061
    %4120 = vmatprep.subr.bf16.mxu0 %v3070
    %4121 = vmatpush1.bf16.msra.mxu0 %v3069
    %4122 = vmatprep.subr.bf16.mxu0 %v3078
    %4123 = vmatpush1.bf16.msra.mxu0 %v3077
    %4124 = vmatprep.subr.bf16.mxu0 %v3086
    %4125 = vmatpush1.bf16.msra.mxu0 %v3085
    %4126 = vmatprep.subr.bf16.mxu0 %v3094
    %4127 = vmatpush1.bf16.msra.mxu0 %v3093
    %4128 = vmatprep.subr.bf16.mxu0 %v3102
    %4129 = vmatpush1.bf16.msra.mxu0 %v3101
    %4130 = vmatprep.subr.bf16.mxu0 %v3110
    %4131 = vmatpush1.bf16.msra.mxu0 %v3109
    %4132 = vmatprep.subr.bf16.mxu0 %v3118
    %4133 = vmatpush1.bf16.msra.mxu0 %v3117
    %4134 = vmatprep.subr.bf16.mxu0 %v3126
    %4135 = vmatpush1.bf16.msra.mxu0 %v3125
    %4136 = vmatprep.mubr.bf16.mxu0 %v462
    %4137 = vmatmul.mubr.bf16.gmra.mrb[0].mxu0 %v461
    %v4138 = vpop.f32.mrb[0].mxu0
    %v4139 = vadd.f32 %v4098, %v4138
    %v4140 = vpop.f32.mrb[0].mxu0
    %v4141 = vadd.f32 %v4100, %v4140
    %v4142 = vpop.f32.mrb[0].mxu0
    %v4143 = vpop.f32.mrb[0].mxu0
    %4144 = vdwg.mxu0
    %4145 = vmatprep.subr.bf16.mxu0 %v3134
    %4146 = vmatpush1.bf16.msra.mxu0 %v3133
    %4147 = vmatprep.subr.bf16.mxu0 %v3142
    %4148 = vmatpush1.bf16.msra.mxu0 %v3141
    %4149 = vmatprep.subr.bf16.mxu0 %v3150
    %4150 = vmatpush1.bf16.msra.mxu0 %v3149
    %4151 = vmatprep.subr.bf16.mxu0 %v3158
    %4152 = vmatpush1.bf16.msra.mxu0 %v3157
    %4153 = vmatprep.subr.bf16.mxu0 %v3166
    %4154 = vmatpush1.bf16.msra.mxu0 %v3165
    %4155 = vmatprep.subr.bf16.mxu0 %v3174
    %4156 = vmatpush1.bf16.msra.mxu0 %v3173
    %4157 = vmatprep.subr.bf16.mxu0 %v3182
    %4158 = vmatpush1.bf16.msra.mxu0 %v3181
    %4159 = vmatprep.subr.bf16.mxu0 %v3190
    %4160 = vmatpush1.bf16.msra.mxu0 %v3189
    %4161 = vmatprep.subr.bf16.mxu0 %v3198
    %4162 = vmatpush1.bf16.msra.mxu0 %v3197
    %4163 = vmatprep.subr.bf16.mxu0 %v3206
    %4164 = vmatpush1.bf16.msra.mxu0 %v3205
    %4165 = vmatprep.subr.bf16.mxu0 %v3214
    %4166 = vmatpush1.bf16.msra.mxu0 %v3213
    %4167 = vmatprep.subr.bf16.mxu0 %v3222
    %4168 = vmatpush1.bf16.msra.mxu0 %v3221
    %4169 = vmatprep.subr.bf16.mxu0 %v3230
    %4170 = vmatpush1.bf16.msra.mxu0 %v3229
    %4171 = vmatprep.subr.bf16.mxu0 %v3238
    %4172 = vmatpush1.bf16.msra.mxu0 %v3237
    %4173 = vmatprep.subr.bf16.mxu0 %v3246
    %4174 = vmatpush1.bf16.msra.mxu0 %v3245
    %4175 = vmatprep.subr.bf16.mxu0 %v3254
    %4176 = vmatpush1.bf16.msra.mxu0 %v3253
    %4177 = vmatprep.mubr.bf16.mxu0 %v464
    %4178 = vmatmul.mubr.bf16.gmra.mrb[0].mxu0 %v463
    %v4179 = vpop.f32.mrb[0].mxu0
    %v4180 = vadd.f32 %v4139, %v4179
    %v4181 = vpop.f32.mrb[0].mxu0
    %v4182 = vadd.f32 %v4141, %v4181
    %v4183 = vpop.f32.mrb[0].mxu0
    %v4184 = vpop.f32.mrb[0].mxu0
    %4185 = vdwg.mxu0
    %4186 = vmatprep.subr.bf16.mxu0 %v3262
    %4187 = vmatpush1.bf16.msra.mxu0 %v3261
    %4188 = vmatprep.subr.bf16.mxu0 %v3270
    %4189 = vmatpush1.bf16.msra.mxu0 %v3269
    %4190 = vmatprep.subr.bf16.mxu0 %v3278
    %4191 = vmatpush1.bf16.msra.mxu0 %v3277
    %4192 = vmatprep.subr.bf16.mxu0 %v3286
    %4193 = vmatpush1.bf16.msra.mxu0 %v3285
    %4194 = vmatprep.subr.bf16.mxu0 %v3294
    %4195 = vmatpush1.bf16.msra.mxu0 %v3293
    %4196 = vmatprep.subr.bf16.mxu0 %v3302
    %4197 = vmatpush1.bf16.msra.mxu0 %v3301
    %4198 = vmatprep.subr.bf16.mxu0 %v3310
    %4199 = vmatpush1.bf16.msra.mxu0 %v3309
    %4200 = vmatprep.subr.bf16.mxu0 %v3318
    %4201 = vmatpush1.bf16.msra.mxu0 %v3317
    %4202 = vmatprep.subr.bf16.mxu0 %v3326
    %4203 = vmatpush1.bf16.msra.mxu0 %v3325
    %4204 = vmatprep.subr.bf16.mxu0 %v3334
    %4205 = vmatpush1.bf16.msra.mxu0 %v3333
    %4206 = vmatprep.subr.bf16.mxu0 %v3342
    %4207 = vmatpush1.bf16.msra.mxu0 %v3341
    %4208 = vmatprep.subr.bf16.mxu0 %v3350
    %4209 = vmatpush1.bf16.msra.mxu0 %v3349
    %4210 = vmatprep.subr.bf16.mxu0 %v3358
    %4211 = vmatpush1.bf16.msra.mxu0 %v3357
    %4212 = vmatprep.subr.bf16.mxu0 %v3366
    %4213 = vmatpush1.bf16.msra.mxu0 %v3365
    %4214 = vmatprep.subr.bf16.mxu0 %v3374
    %4215 = vmatpush1.bf16.msra.mxu0 %v3373
    %4216 = vmatprep.subr.bf16.mxu0 %v3382
    %4217 = vmatpush1.bf16.msra.mxu0 %v3381
    %4218 = vmatprep.mubr.bf16.mxu0 %v466
    %4219 = vmatmul.mubr.bf16.gmra.mrb[0].mxu0 %v465
    %v4220 = vpop.f32.mrb[0].mxu0
    %v4221 = vadd.f32 %v4180, %v4220
    %v4222 = vpop.f32.mrb[0].mxu0
    %v4223 = vadd.f32 %v4182, %v4222
    %v4224 = vpop.f32.mrb[0].mxu0
    %v4225 = vpop.f32.mrb[0].mxu0
    %4226 = vdwg.mxu0
    %4227 = vmatprep.subr.bf16.mxu0 %v2880
    %4228 = vmatpush1.bf16.msra.mxu0 %v2879
    %4229 = vmatprep.subr.bf16.mxu0 %v2888
    %4230 = vmatpush1.bf16.msra.mxu0 %v2887
    %4231 = vmatprep.subr.bf16.mxu0 %v2896
    %4232 = vmatpush1.bf16.msra.mxu0 %v2895
    %4233 = vmatprep.subr.bf16.mxu0 %v2904
    %4234 = vmatpush1.bf16.msra.mxu0 %v2903
    %4235 = vmatprep.subr.bf16.mxu0 %v2912
    %4236 = vmatpush1.bf16.msra.mxu0 %v2911
    %4237 = vmatprep.subr.bf16.mxu0 %v2920
    %4238 = vmatpush1.bf16.msra.mxu0 %v2919
    %4239 = vmatprep.subr.bf16.mxu0 %v2928
    %4240 = vmatpush1.bf16.msra.mxu0 %v2927
    %4241 = vmatprep.subr.bf16.mxu0 %v2936
    %4242 = vmatpush1.bf16.msra.mxu0 %v2935
    %4243 = vmatprep.subr.bf16.mxu0 %v2944
    %4244 = vmatpush1.bf16.msra.mxu0 %v2943
    %4245 = vmatprep.subr.bf16.mxu0 %v2952
    %4246 = vmatpush1.bf16.msra.mxu0 %v2951
    %4247 = vmatprep.subr.bf16.mxu0 %v2960
    %4248 = vmatpush1.bf16.msra.mxu0 %v2959
    %4249 = vmatprep.subr.bf16.mxu0 %v2968
    %4250 = vmatpush1.bf16.msra.mxu0 %v2967
    %4251 = vmatprep.subr.bf16.mxu0 %v2976
    %4252 = vmatpush1.bf16.msra.mxu0 %v2975
    %4253 = vmatprep.subr.bf16.mxu0 %v2984
    %4254 = vmatpush1.bf16.msra.mxu0 %v2983
    %4255 = vmatprep.subr.bf16.mxu0 %v2992
    %4256 = vmatpush1.bf16.msra.mxu0 %v2991
    %4257 = vmatprep.subr.bf16.mxu0 %v3000
    %4258 = vmatpush1.bf16.msra.mxu0 %v2999
    %4259 = vmatprep.mubr.bf16.mxu0 %v460
    %4260 = vmatmul.mubr.bf16.gmra.mrb[0].mxu0 %v459
    %v4261 = vpop.f32.mrb[0].mxu0
    %v4262 = vadd.f32 %v1318, %v4261
    %v4263 = vpop.f32.mrb[0].mxu0
    %v4264 = vadd.f32 %v1322, %v4263
    %v4265 = vpop.f32.mrb[0].mxu0
    %v4266 = vpop.f32.mrb[0].mxu0
    %4267 = vdwg.mxu0
    %4268 = vmatprep.subr.bf16.mxu0 %v3008
    %4269 = vmatpush1.bf16.msra.mxu0 %v3007
    %4270 = vmatprep.subr.bf16.mxu0 %v3016
    %4271 = vmatpush1.bf16.msra.mxu0 %v3015
    %4272 = vmatprep.subr.bf16.mxu0 %v3024
    %4273 = vmatpush1.bf16.msra.mxu0 %v3023
    %4274 = vmatprep.subr.bf16.mxu0 %v3032
    %4275 = vmatpush1.bf16.msra.mxu0 %v3031
    %4276 = vmatprep.subr.bf16.mxu0 %v3040
    %4277 = vmatpush1.bf16.msra.mxu0 %v3039
    %4278 = vmatprep.subr.bf16.mxu0 %v3048
    %4279 = vmatpush1.bf16.msra.mxu0 %v3047
    %4280 = vmatprep.subr.bf16.mxu0 %v3056
    %4281 = vmatpush1.bf16.msra.mxu0 %v3055
    %4282 = vmatprep.subr.bf16.mxu0 %v3064
    %4283 = vmatpush1.bf16.msra.mxu0 %v3063
    %4284 = vmatprep.subr.bf16.mxu0 %v3072
    %4285 = vmatpush1.bf16.msra.mxu0 %v3071
    %4286 = vmatprep.subr.bf16.mxu0 %v3080
    %4287 = vmatpush1.bf16.msra.mxu0 %v3079
    %4288 = vmatprep.subr.bf16.mxu0 %v3088
    %4289 = vmatpush1.bf16.msra.mxu0 %v3087
    %4290 = vmatprep.subr.bf16.mxu0 %v3096
    %4291 = vmatpush1.bf16.msra.mxu0 %v3095
    %4292 = vmatprep.subr.bf16.mxu0 %v3104
    %4293 = vmatpush1.bf16.msra.mxu0 %v3103
    %4294 = vmatprep.subr.bf16.mxu0 %v3112
    %4295 = vmatpush1.bf16.msra.mxu0 %v3111
    %4296 = vmatprep.subr.bf16.mxu0 %v3120
    %4297 = vmatpush1.bf16.msra.mxu0 %v3119
    %4298 = vmatprep.subr.bf16.mxu0 %v3128
    %4299 = vmatpush1.bf16.msra.mxu0 %v3127
    %4300 = vmatprep.mubr.bf16.mxu0 %v462
    %4301 = vmatmul.mubr.bf16.gmra.mrb[0].mxu0 %v461
    %v4302 = vpop.f32.mrb[0].mxu0
    %v4303 = vadd.f32 %v4262, %v4302
    %v4304 = vpop.f32.mrb[0].mxu0
    %v4305 = vadd.f32 %v4264, %v4304
    %v4306 = vpop.f32.mrb[0].mxu0
    %v4307 = vpop.f32.mrb[0].mxu0
    %4308 = vdwg.mxu0
    %4309 = vmatprep.subr.bf16.mxu0 %v3136
    %4310 = vmatpush1.bf16.msra.mxu0 %v3135
    %4311 = vmatprep.subr.bf16.mxu0 %v3144
    %4312 = vmatpush1.bf16.msra.mxu0 %v3143
    %4313 = vmatprep.subr.bf16.mxu0 %v3152
    %4314 = vmatpush1.bf16.msra.mxu0 %v3151
    %4315 = vmatprep.subr.bf16.mxu0 %v3160
    %4316 = vmatpush1.bf16.msra.mxu0 %v3159
    %4317 = vmatprep.subr.bf16.mxu0 %v3168
    %4318 = vmatpush1.bf16.msra.mxu0 %v3167
    %4319 = vmatprep.subr.bf16.mxu0 %v3176
    %4320 = vmatpush1.bf16.msra.mxu0 %v3175
    %4321 = vmatprep.subr.bf16.mxu0 %v3184
    %4322 = vmatpush1.bf16.msra.mxu0 %v3183
    %4323 = vmatprep.subr.bf16.mxu0 %v3192
    %4324 = vmatpush1.bf16.msra.mxu0 %v3191
    %4325 = vmatprep.subr.bf16.mxu0 %v3200
    %4326 = vmatpush1.bf16.msra.mxu0 %v3199
    %4327 = vmatprep.subr.bf16.mxu0 %v3208
    %4328 = vmatpush1.bf16.msra.mxu0 %v3207
    %4329 = vmatprep.subr.bf16.mxu0 %v3216
    %4330 = vmatpush1.bf16.msra.mxu0 %v3215
    %4331 = vmatprep.subr.bf16.mxu0 %v3224
    %4332 = vmatpush1.bf16.msra.mxu0 %v3223
    %4333 = vmatprep.subr.bf16.mxu0 %v3232
    %4334 = vmatpush1.bf16.msra.mxu0 %v3231
    %4335 = vmatprep.subr.bf16.mxu0 %v3240
    %4336 = vmatpush1.bf16.msra.mxu0 %v3239
    %4337 = vmatprep.subr.bf16.mxu0 %v3248
    %4338 = vmatpush1.bf16.msra.mxu0 %v3247
    %4339 = vmatprep.subr.bf16.mxu0 %v3256
    %4340 = vmatpush1.bf16.msra.mxu0 %v3255
    %4341 = vmatprep.mubr.bf16.mxu0 %v464
    %4342 = vmatmul.mubr.bf16.gmra.mrb[0].mxu0 %v463
    %v4343 = vpop.f32.mrb[0].mxu0
    %v4344 = vadd.f32 %v4303, %v4343
    %v4345 = vpop.f32.mrb[0].mxu0
    %v4346 = vadd.f32 %v4305, %v4345
    %v4347 = vpop.f32.mrb[0].mxu0
    %v4348 = vpop.f32.mrb[0].mxu0
    %4349 = vdwg.mxu0
    %4350 = vmatprep.subr.bf16.mxu0 %v3264
    %4351 = vmatpush1.bf16.msra.mxu0 %v3263
    %4352 = vmatprep.subr.bf16.mxu0 %v3272
    %4353 = vmatpush1.bf16.msra.mxu0 %v3271
    %4354 = vmatprep.subr.bf16.mxu0 %v3280
    %4355 = vmatpush1.bf16.msra.mxu0 %v3279
    %4356 = vmatprep.subr.bf16.mxu0 %v3288
    %4357 = vmatpush1.bf16.msra.mxu0 %v3287
    %4358 = vmatprep.subr.bf16.mxu0 %v3296
    %4359 = vmatpush1.bf16.msra.mxu0 %v3295
    %4360 = vmatprep.subr.bf16.mxu0 %v3304
    %4361 = vmatpush1.bf16.msra.mxu0 %v3303
    %4362 = vmatprep.subr.bf16.mxu0 %v3312
    %4363 = vmatpush1.bf16.msra.mxu0 %v3311
    %4364 = vmatprep.subr.bf16.mxu0 %v3320
    %4365 = vmatpush1.bf16.msra.mxu0 %v3319
    %4366 = vmatprep.subr.bf16.mxu0 %v3328
    %4367 = vmatpush1.bf16.msra.mxu0 %v3327
    %4368 = vmatprep.subr.bf16.mxu0 %v3336
    %4369 = vmatpush1.bf16.msra.mxu0 %v3335
    %4370 = vmatprep.subr.bf16.mxu0 %v3344
    %4371 = vmatpush1.bf16.msra.mxu0 %v3343
    %4372 = vmatprep.subr.bf16.mxu0 %v3352
    %4373 = vmatpush1.bf16.msra.mxu0 %v3351
    %4374 = vmatprep.subr.bf16.mxu0 %v3360
    %4375 = vmatpush1.bf16.msra.mxu0 %v3359
    %4376 = vmatprep.subr.bf16.mxu0 %v3368
    %4377 = vmatpush1.bf16.msra.mxu0 %v3367
    %4378 = vmatprep.subr.bf16.mxu0 %v3376
    %4379 = vmatpush1.bf16.msra.mxu0 %v3375
    %4380 = vmatprep.subr.bf16.mxu0 %v3384
    %4381 = vmatpush1.bf16.msra.mxu0 %v3383
    %4382 = vmatprep.mubr.bf16.mxu0 %v466
    %4383 = vmatmul.mubr.bf16.gmra.mrb[0].mxu0 %v465
    %v4384 = vpop.f32.mrb[0].mxu0
    %v4385 = vadd.f32 %v4344, %v4384
    %v4386 = vpop.f32.mrb[0].mxu0
    %v4387 = vadd.f32 %v4346, %v4386
    %v4388 = vpop.f32.mrb[0].mxu0
    %v4389 = vpop.f32.mrb[0].mxu0
    %4390 = vdwg.mxu0
    %4391 = vmatprep.subr.bf16.mxu0 %v2882
    %4392 = vmatpush1.bf16.msra.mxu0 %v2881
    %4393 = vmatprep.subr.bf16.mxu0 %v2890
    %4394 = vmatpush1.bf16.msra.mxu0 %v2889
    %4395 = vmatprep.subr.bf16.mxu0 %v2898
    %4396 = vmatpush1.bf16.msra.mxu0 %v2897
    %4397 = vmatprep.subr.bf16.mxu0 %v2906
    %4398 = vmatpush1.bf16.msra.mxu0 %v2905
    %4399 = vmatprep.subr.bf16.mxu0 %v2914
    %4400 = vmatpush1.bf16.msra.mxu0 %v2913
    %4401 = vmatprep.subr.bf16.mxu0 %v2922
    %4402 = vmatpush1.bf16.msra.mxu0 %v2921
    %4403 = vmatprep.subr.bf16.mxu0 %v2930
    %4404 = vmatpush1.bf16.msra.mxu0 %v2929
    %4405 = vmatprep.subr.bf16.mxu0 %v2938
    %4406 = vmatpush1.bf16.msra.mxu0 %v2937
    %4407 = vmatprep.subr.bf16.mxu0 %v2946
    %4408 = vmatpush1.bf16.msra.mxu0 %v2945
    %4409 = vmatprep.subr.bf16.mxu0 %v2954
    %4410 = vmatpush1.bf16.msra.mxu0 %v2953
    %4411 = vmatprep.subr.bf16.mxu0 %v2962
    %4412 = vmatpush1.bf16.msra.mxu0 %v2961
    %4413 = vmatprep.subr.bf16.mxu0 %v2970
    %4414 = vmatpush1.bf16.msra.mxu0 %v2969
    %4415 = vmatprep.subr.bf16.mxu0 %v2978
    %4416 = vmatpush1.bf16.msra.mxu0 %v2977
    %4417 = vmatprep.subr.bf16.mxu0 %v2986
    %4418 = vmatpush1.bf16.msra.mxu0 %v2985
    %4419 = vmatprep.subr.bf16.mxu0 %v2994
    %4420 = vmatpush1.bf16.msra.mxu0 %v2993
    %4421 = vmatprep.subr.bf16.mxu0 %v3002
    %4422 = vmatpush1.bf16.msra.mxu0 %v3001
    %4423 = vmatprep.mubr.bf16.mxu0 %v460
    %4424 = vmatmul.mubr.bf16.gmra.mrb[0].mxu0 %v459
    %v4425 = vpop.f32.mrb[0].mxu0
    %v4426 = vadd.f32 %v1326, %v4425
    %v4427 = vpop.f32.mrb[0].mxu0
    %v4428 = vadd.f32 %v1330, %v4427
    %v4429 = vpop.f32.mrb[0].mxu0
    %v4430 = vpop.f32.mrb[0].mxu0
    %4431 = vdwg.mxu0
    %4432 = vmatprep.subr.bf16.mxu0 %v3010
    %4433 = vmatpush1.bf16.msra.mxu0 %v3009
    %4434 = vmatprep.subr.bf16.mxu0 %v3018
    %4435 = vmatpush1.bf16.msra.mxu0 %v3017
    %4436 = vmatprep.subr.bf16.mxu0 %v3026
    %4437 = vmatpush1.bf16.msra.mxu0 %v3025
    %4438 = vmatprep.subr.bf16.mxu0 %v3034
    %4439 = vmatpush1.bf16.msra.mxu0 %v3033
    %4440 = vmatprep.subr.bf16.mxu0 %v3042
    %4441 = vmatpush1.bf16.msra.mxu0 %v3041
    %4442 = vmatprep.subr.bf16.mxu0 %v3050
    %4443 = vmatpush1.bf16.msra.mxu0 %v3049
    %4444 = vmatprep.subr.bf16.mxu0 %v3058
    %4445 = vmatpush1.bf16.msra.mxu0 %v3057
    %4446 = vmatprep.subr.bf16.mxu0 %v3066
    %4447 = vmatpush1.bf16.msra.mxu0 %v3065
    %4448 = vmatprep.subr.bf16.mxu0 %v3074
    %4449 = vmatpush1.bf16.msra.mxu0 %v3073
    %4450 = vmatprep.subr.bf16.mxu0 %v3082
    %4451 = vmatpush1.bf16.msra.mxu0 %v3081
    %4452 = vmatprep.subr.bf16.mxu0 %v3090
    %4453 = vmatpush1.bf16.msra.mxu0 %v3089
    %4454 = vmatprep.subr.bf16.mxu0 %v3098
    %4455 = vmatpush1.bf16.msra.mxu0 %v3097
    %4456 = vmatprep.subr.bf16.mxu0 %v3106
    %4457 = vmatpush1.bf16.msra.mxu0 %v3105
    %4458 = vmatprep.subr.bf16.mxu0 %v3114
    %4459 = vmatpush1.bf16.msra.mxu0 %v3113
    %4460 = vmatprep.subr.bf16.mxu0 %v3122
    %4461 = vmatpush1.bf16.msra.mxu0 %v3121
    %4462 = vmatprep.subr.bf16.mxu0 %v3130
    %4463 = vmatpush1.bf16.msra.mxu0 %v3129
    %4464 = vmatprep.mubr.bf16.mxu0 %v462
    %4465 = vmatmul.mubr.bf16.gmra.mrb[0].mxu0 %v461
    %v4466 = vpop.f32.mrb[0].mxu0
    %v4467 = vadd.f32 %v4426, %v4466
    %v4468 = vpop.f32.mrb[0].mxu0
    %v4469 = vadd.f32 %v4428, %v4468
    %v4470 = vpop.f32.mrb[0].mxu0
    %v4471 = vpop.f32.mrb[0].mxu0
    %4472 = vdwg.mxu0
    %4473 = vmatprep.subr.bf16.mxu0 %v3138
    %4474 = vmatpush1.bf16.msra.mxu0 %v3137
    %4475 = vmatprep.subr.bf16.mxu0 %v3146
    %4476 = vmatpush1.bf16.msra.mxu0 %v3145
    %4477 = vmatprep.subr.bf16.mxu0 %v3154
    %4478 = vmatpush1.bf16.msra.mxu0 %v3153
    %4479 = vmatprep.subr.bf16.mxu0 %v3162
    %4480 = vmatpush1.bf16.msra.mxu0 %v3161
    %4481 = vmatprep.subr.bf16.mxu0 %v3170
    %4482 = vmatpush1.bf16.msra.mxu0 %v3169
    %4483 = vmatprep.subr.bf16.mxu0 %v3178
    %4484 = vmatpush1.bf16.msra.mxu0 %v3177
    %4485 = vmatprep.subr.bf16.mxu0 %v3186
    %4486 = vmatpush1.bf16.msra.mxu0 %v3185
    %4487 = vmatprep.subr.bf16.mxu0 %v3194
    %4488 = vmatpush1.bf16.msra.mxu0 %v3193
    %4489 = vmatprep.subr.bf16.mxu0 %v3202
    %4490 = vmatpush1.bf16.msra.mxu0 %v3201
    %4491 = vmatprep.subr.bf16.mxu0 %v3210
    %4492 = vmatpush1.bf16.msra.mxu0 %v3209
    %4493 = vmatprep.subr.bf16.mxu0 %v3218
    %4494 = vmatpush1.bf16.msra.mxu0 %v3217
    %4495 = vmatprep.subr.bf16.mxu0 %v3226
    %4496 = vmatpush1.bf16.msra.mxu0 %v3225
    %4497 = vmatprep.subr.bf16.mxu0 %v3234
    %4498 = vmatpush1.bf16.msra.mxu0 %v3233
    %4499 = vmatprep.subr.bf16.mxu0 %v3242
    %4500 = vmatpush1.bf16.msra.mxu0 %v3241
    %4501 = vmatprep.subr.bf16.mxu0 %v3250
    %4502 = vmatpush1.bf16.msra.mxu0 %v3249
    %4503 = vmatprep.subr.bf16.mxu0 %v3258
    %4504 = vmatpush1.bf16.msra.mxu0 %v3257
    %4505 = vmatprep.mubr.bf16.mxu0 %v464
    %4506 = vmatmul.mubr.bf16.gmra.mrb[0].mxu0 %v463
    %v4507 = vpop.f32.mrb[0].mxu0
    %v4508 = vadd.f32 %v4467, %v4507
    %v4509 = vpop.f32.mrb[0].mxu0
    %v4510 = vadd.f32 %v4469, %v4509
    %v4511 = vpop.f32.mrb[0].mxu0
    %v4512 = vpop.f32.mrb[0].mxu0
    %4513 = vdwg.mxu0
    %4514 = vmatprep.subr.bf16.mxu0 %v3266
    %4515 = vmatpush1.bf16.msra.mxu0 %v3265
    %4516 = vmatprep.subr.bf16.mxu0 %v3274
    %4517 = vmatpush1.bf16.msra.mxu0 %v3273
    %4518 = vmatprep.subr.bf16.mxu0 %v3282
    %4519 = vmatpush1.bf16.msra.mxu0 %v3281
    %4520 = vmatprep.subr.bf16.mxu0 %v3290
    %4521 = vmatpush1.bf16.msra.mxu0 %v3289
    %4522 = vmatprep.subr.bf16.mxu0 %v3298
    %4523 = vmatpush1.bf16.msra.mxu0 %v3297
    %4524 = vmatprep.subr.bf16.mxu0 %v3306
    %4525 = vmatpush1.bf16.msra.mxu0 %v3305
    %4526 = vmatprep.subr.bf16.mxu0 %v3314
    %4527 = vmatpush1.bf16.msra.mxu0 %v3313
    %4528 = vmatprep.subr.bf16.mxu0 %v3322
    %4529 = vmatpush1.bf16.msra.mxu0 %v3321
    %4530 = vmatprep.subr.bf16.mxu0 %v3330
    %4531 = vmatpush1.bf16.msra.mxu0 %v3329
    %4532 = vmatprep.subr.bf16.mxu0 %v3338
    %4533 = vmatpush1.bf16.msra.mxu0 %v3337
    %4534 = vmatprep.subr.bf16.mxu0 %v3346
    %4535 = vmatpush1.bf16.msra.mxu0 %v3345
    %4536 = vmatprep.subr.bf16.mxu0 %v3354
    %4537 = vmatpush1.bf16.msra.mxu0 %v3353
    %4538 = vmatprep.subr.bf16.mxu0 %v3362
    %4539 = vmatpush1.bf16.msra.mxu0 %v3361
    %4540 = vmatprep.subr.bf16.mxu0 %v3370
    %4541 = vmatpush1.bf16.msra.mxu0 %v3369
    %4542 = vmatprep.subr.bf16.mxu0 %v3378
    %4543 = vmatpush1.bf16.msra.mxu0 %v3377
    %4544 = vmatprep.subr.bf16.mxu0 %v3386
    %4545 = vmatpush1.bf16.msra.mxu0 %v3385
    %4546 = vmatprep.mubr.bf16.mxu0 %v466
    %4547 = vmatmul.mubr.bf16.gmra.mrb[0].mxu0 %v465
    %v4548 = vpop.f32.mrb[0].mxu0
    %v4549 = vadd.f32 %v4508, %v4548
    %v4550 = vpop.f32.mrb[0].mxu0
    %v4551 = vadd.f32 %v4510, %v4550
    %v4552 = vpop.f32.mrb[0].mxu0
    %v4553 = vpop.f32.mrb[0].mxu0
    %4554 = vdwg.mxu0
    %v4555 = vmax.f32 %v4057, 0.0
    %v4556 = vmax.f32 %v4059, 0.0
    %v4557 = vmax.f32 %v4221, 0.0
    %v4558 = vmax.f32 %v4223, 0.0
    %v4559 = vmax.f32 %v4385, 0.0
    %v4560 = vmax.f32 %v4387, 0.0
    %v4561 = vmax.f32 %v4549, 0.0
    %v4562 = vmax.f32 %v4551, 0.0
    %v4563 = vld [vmem:[#allocation11] sm:$0xff]
    %v4564 = vld [vmem:[#allocation11 + $0x8] sm:$0xff]
    %v4565 = vld [vmem:[#allocation11 + $0x10] sm:$0xff]
    %v4566 = vld [vmem:[#allocation11 + $0x18] sm:$0xff]
    %v4567 = vld [vmem:[#allocation11 + $0x20] sm:$0xff]
    %v4568 = vld [vmem:[#allocation11 + $0x28] sm:$0xff]
    %v4569 = vld [vmem:[#allocation11 + $0x30] sm:$0xff]
    %v4570 = vld [vmem:[#allocation11 + $0x38] sm:$0xff]
    %v4571 = vld [vmem:[#allocation11 + $0x40] sm:$0xff]
    %v4572 = vld [vmem:[#allocation11 + $0x48] sm:$0xff]
    %v4573 = vld [vmem:[#allocation11 + $0x50] sm:$0xff]
    %v4574 = vld [vmem:[#allocation11 + $0x58] sm:$0xff]
    %v4575 = vld [vmem:[#allocation11 + $0x60] sm:$0xff]
    %v4576 = vld [vmem:[#allocation11 + $0x68] sm:$0xff]
    %v4577 = vld [vmem:[#allocation11 + $0x70] sm:$0xff]
    %v4578 = vld [vmem:[#allocation11 + $0x78] sm:$0xff]
    %v4579 = vld [vmem:[#allocation11 + $0x80] sm:$0xff]
    %v4580 = vld [vmem:[#allocation11 + $0x88] sm:$0xff]
    %v4581 = vld [vmem:[#allocation11 + $0x90] sm:$0xff]
    %v4582 = vld [vmem:[#allocation11 + $0x98] sm:$0xff]
    %v4583 = vld [vmem:[#allocation11 + $0xa0] sm:$0xff]
    %v4584 = vld [vmem:[#allocation11 + $0xa8] sm:$0xff]
    %v4585 = vld [vmem:[#allocation11 + $0xb0] sm:$0xff]
    %v4586 = vld [vmem:[#allocation11 + $0xb8] sm:$0xff]
    %v4587 = vld [vmem:[#allocation11 + $0xc0] sm:$0xff]
    %v4588 = vld [vmem:[#allocation11 + $0xc8] sm:$0xff]
    %v4589 = vld [vmem:[#allocation11 + $0xd0] sm:$0xff]
    %v4590 = vld [vmem:[#allocation11 + $0xd8] sm:$0xff]
    %v4591 = vld [vmem:[#allocation11 + $0xe0] sm:$0xff]
    %v4592 = vld [vmem:[#allocation11 + $0xe8] sm:$0xff]
    %v4593 = vld [vmem:[#allocation11 + $0xf0] sm:$0xff]
    %v4594 = vld [vmem:[#allocation11 + $0xf8] sm:$0xff]
    %v4595 = vld [vmem:[#allocation11 + $0x100] sm:$0xff]
    %v4596 = vld [vmem:[#allocation11 + $0x108] sm:$0xff]
    %v4597 = vld [vmem:[#allocation11 + $0x110] sm:$0xff]
    %v4598 = vld [vmem:[#allocation11 + $0x118] sm:$0xff]
    %v4599 = vld [vmem:[#allocation11 + $0x120] sm:$0xff]
    %v4600 = vld [vmem:[#allocation11 + $0x128] sm:$0xff]
    %v4601 = vld [vmem:[#allocation11 + $0x130] sm:$0xff]
    %v4602 = vld [vmem:[#allocation11 + $0x138] sm:$0xff]
    %v4603 = vld [vmem:[#allocation11 + $0x140] sm:$0xff]
    %v4604 = vld [vmem:[#allocation11 + $0x148] sm:$0xff]
    %v4605 = vld [vmem:[#allocation11 + $0x150] sm:$0xff]
    %v4606 = vld [vmem:[#allocation11 + $0x158] sm:$0xff]
    %v4607 = vld [vmem:[#allocation11 + $0x160] sm:$0xff]
    %v4608 = vld [vmem:[#allocation11 + $0x168] sm:$0xff]
    %v4609 = vld [vmem:[#allocation11 + $0x170] sm:$0xff]
    %v4610 = vld [vmem:[#allocation11 + $0x178] sm:$0xff]
    %v4611 = vld [vmem:[#allocation11 + $0x180] sm:$0xff]
    %v4612 = vld [vmem:[#allocation11 + $0x188] sm:$0xff]
    %v4613 = vld [vmem:[#allocation11 + $0x190] sm:$0xff]
    %v4614 = vld [vmem:[#allocation11 + $0x198] sm:$0xff]
    %v4615 = vld [vmem:[#allocation11 + $0x1a0] sm:$0xff]
    %v4616 = vld [vmem:[#allocation11 + $0x1a8] sm:$0xff]
    %v4617 = vld [vmem:[#allocation11 + $0x1b0] sm:$0xff]
    %v4618 = vld [vmem:[#allocation11 + $0x1b8] sm:$0xff]
    %v4619 = vld [vmem:[#allocation11 + $0x1c0] sm:$0xff]
    %v4620 = vld [vmem:[#allocation11 + $0x1c8] sm:$0xff]
    %v4621 = vld [vmem:[#allocation11 + $0x1d0] sm:$0xff]
    %v4622 = vld [vmem:[#allocation11 + $0x1d8] sm:$0xff]
    %v4623 = vld [vmem:[#allocation11 + $0x1e0] sm:$0xff]
    %v4624 = vld [vmem:[#allocation11 + $0x1e8] sm:$0xff]
    %v4625 = vld [vmem:[#allocation11 + $0x1f0] sm:$0xff]
    %v4626 = vld [vmem:[#allocation11 + $0x1f8] sm:$0xff]
    %v4627 = vld [vmem:[#allocation11 + $0x200] sm:$0xff]
    %v4628 = vld [vmem:[#allocation11 + $0x208] sm:$0xff]
    %v4629 = vld [vmem:[#allocation11 + $0x210] sm:$0xff]
    %v4630 = vld [vmem:[#allocation11 + $0x218] sm:$0xff]
    %v4631 = vld [vmem:[#allocation11 + $0x220] sm:$0xff]
    %v4632 = vld [vmem:[#allocation11 + $0x228] sm:$0xff]
    %v4633 = vld [vmem:[#allocation11 + $0x230] sm:$0xff]
    %v4634 = vld [vmem:[#allocation11 + $0x238] sm:$0xff]
    %v4635 = vld [vmem:[#allocation11 + $0x240] sm:$0xff]
    %v4636 = vld [vmem:[#allocation11 + $0x248] sm:$0xff]
    %v4637 = vld [vmem:[#allocation11 + $0x250] sm:$0xff]
    %v4638 = vld [vmem:[#allocation11 + $0x258] sm:$0xff]
    %v4639 = vld [vmem:[#allocation11 + $0x260] sm:$0xff]
    %v4640 = vld [vmem:[#allocation11 + $0x268] sm:$0xff]
    %v4641 = vld [vmem:[#allocation11 + $0x270] sm:$0xff]
    %v4642 = vld [vmem:[#allocation11 + $0x278] sm:$0xff]
    %v4643 = vld [vmem:[#allocation11 + $0x280] sm:$0xff]
    %v4644 = vld [vmem:[#allocation11 + $0x288] sm:$0xff]
    %v4645 = vld [vmem:[#allocation11 + $0x290] sm:$0xff]
    %v4646 = vld [vmem:[#allocation11 + $0x298] sm:$0xff]
    %v4647 = vld [vmem:[#allocation11 + $0x2a0] sm:$0xff]
    %v4648 = vld [vmem:[#allocation11 + $0x2a8] sm:$0xff]
    %v4649 = vld [vmem:[#allocation11 + $0x2b0] sm:$0xff]
    %v4650 = vld [vmem:[#allocation11 + $0x2b8] sm:$0xff]
    %v4651 = vld [vmem:[#allocation11 + $0x2c0] sm:$0xff]
    %v4652 = vld [vmem:[#allocation11 + $0x2c8] sm:$0xff]
    %v4653 = vld [vmem:[#allocation11 + $0x2d0] sm:$0xff]
    %v4654 = vld [vmem:[#allocation11 + $0x2d8] sm:$0xff]
    %v4655 = vld [vmem:[#allocation11 + $0x2e0] sm:$0xff]
    %v4656 = vld [vmem:[#allocation11 + $0x2e8] sm:$0xff]
    %v4657 = vld [vmem:[#allocation11 + $0x2f0] sm:$0xff]
    %v4658 = vld [vmem:[#allocation11 + $0x2f8] sm:$0xff]
    %v4659 = vld [vmem:[#allocation11 + $0x300] sm:$0xff]
    %v4660 = vld [vmem:[#allocation11 + $0x308] sm:$0xff]
    %v4661 = vld [vmem:[#allocation11 + $0x310] sm:$0xff]
    %v4662 = vld [vmem:[#allocation11 + $0x318] sm:$0xff]
    %v4663 = vld [vmem:[#allocation11 + $0x320] sm:$0xff]
    %v4664 = vld [vmem:[#allocation11 + $0x328] sm:$0xff]
    %v4665 = vld [vmem:[#allocation11 + $0x330] sm:$0xff]
    %v4666 = vld [vmem:[#allocation11 + $0x338] sm:$0xff]
    %v4667 = vld [vmem:[#allocation11 + $0x340] sm:$0xff]
    %v4668 = vld [vmem:[#allocation11 + $0x348] sm:$0xff]
    %v4669 = vld [vmem:[#allocation11 + $0x350] sm:$0xff]
    %v4670 = vld [vmem:[#allocation11 + $0x358] sm:$0xff]
    %v4671 = vld [vmem:[#allocation11 + $0x360] sm:$0xff]
    %v4672 = vld [vmem:[#allocation11 + $0x368] sm:$0xff]
    %v4673 = vld [vmem:[#allocation11 + $0x370] sm:$0xff]
    %v4674 = vld [vmem:[#allocation11 + $0x378] sm:$0xff]
    %v4675 = vld [vmem:[#allocation11 + $0x380] sm:$0xff]
    %v4676 = vld [vmem:[#allocation11 + $0x388] sm:$0xff]
    %v4677 = vld [vmem:[#allocation11 + $0x390] sm:$0xff]
    %v4678 = vld [vmem:[#allocation11 + $0x398] sm:$0xff]
    %v4679 = vld [vmem:[#allocation11 + $0x3a0] sm:$0xff]
    %v4680 = vld [vmem:[#allocation11 + $0x3a8] sm:$0xff]
    %v4681 = vld [vmem:[#allocation11 + $0x3b0] sm:$0xff]
    %v4682 = vld [vmem:[#allocation11 + $0x3b8] sm:$0xff]
    %v4683 = vld [vmem:[#allocation11 + $0x3c0] sm:$0xff]
    %v4684 = vld [vmem:[#allocation11 + $0x3c8] sm:$0xff]
    %v4685 = vld [vmem:[#allocation11 + $0x3d0] sm:$0xff]
    %v4686 = vld [vmem:[#allocation11 + $0x3d8] sm:$0xff]
    %v4687 = vld [vmem:[#allocation11 + $0x3e0] sm:$0xff]
    %v4688 = vld [vmem:[#allocation11 + $0x3e8] sm:$0xff]
    %v4689 = vld [vmem:[#allocation11 + $0x3f0] sm:$0xff]
    %v4690 = vld [vmem:[#allocation11 + $0x3f8] sm:$0xff]
    %v4691 = vld [vmem:[#allocation11 + $0x400] sm:$0xff]
    %v4692 = vld [vmem:[#allocation11 + $0x408] sm:$0xff]
    %v4693 = vld [vmem:[#allocation11 + $0x410] sm:$0xff]
    %v4694 = vld [vmem:[#allocation11 + $0x418] sm:$0xff]
    %v4695 = vld [vmem:[#allocation11 + $0x420] sm:$0xff]
    %v4696 = vld [vmem:[#allocation11 + $0x428] sm:$0xff]
    %v4697 = vld [vmem:[#allocation11 + $0x430] sm:$0xff]
    %v4698 = vld [vmem:[#allocation11 + $0x438] sm:$0xff]
    %v4699 = vld [vmem:[#allocation11 + $0x440] sm:$0xff]
    %v4700 = vld [vmem:[#allocation11 + $0x448] sm:$0xff]
    %v4701 = vld [vmem:[#allocation11 + $0x450] sm:$0xff]
    %v4702 = vld [vmem:[#allocation11 + $0x458] sm:$0xff]
    %v4703 = vld [vmem:[#allocation11 + $0x460] sm:$0xff]
    %v4704 = vld [vmem:[#allocation11 + $0x468] sm:$0xff]
    %v4705 = vld [vmem:[#allocation11 + $0x470] sm:$0xff]
    %v4706 = vld [vmem:[#allocation11 + $0x478] sm:$0xff]
    %v4707 = vld [vmem:[#allocation11 + $0x480] sm:$0xff]
    %v4708 = vld [vmem:[#allocation11 + $0x488] sm:$0xff]
    %v4709 = vld [vmem:[#allocation11 + $0x490] sm:$0xff]
    %v4710 = vld [vmem:[#allocation11 + $0x498] sm:$0xff]
    %v4711 = vld [vmem:[#allocation11 + $0x4a0] sm:$0xff]
    %v4712 = vld [vmem:[#allocation11 + $0x4a8] sm:$0xff]
    %v4713 = vld [vmem:[#allocation11 + $0x4b0] sm:$0xff]
    %v4714 = vld [vmem:[#allocation11 + $0x4b8] sm:$0xff]
    %v4715 = vld [vmem:[#allocation11 + $0x4c0] sm:$0xff]
    %v4716 = vld [vmem:[#allocation11 + $0x4c8] sm:$0xff]
    %v4717 = vld [vmem:[#allocation11 + $0x4d0] sm:$0xff]
    %v4718 = vld [vmem:[#allocation11 + $0x4d8] sm:$0xff]
    %v4719 = vld [vmem:[#allocation11 + $0x4e0] sm:$0xff]
    %v4720 = vld [vmem:[#allocation11 + $0x4e8] sm:$0xff]
    %v4721 = vld [vmem:[#allocation11 + $0x4f0] sm:$0xff]
    %v4722 = vld [vmem:[#allocation11 + $0x4f8] sm:$0xff]
    %v4723 = vld [vmem:[#allocation11 + $0x500] sm:$0xff]
    %v4724 = vld [vmem:[#allocation11 + $0x508] sm:$0xff]
    %v4725 = vld [vmem:[#allocation11 + $0x510] sm:$0xff]
    %v4726 = vld [vmem:[#allocation11 + $0x518] sm:$0xff]
    %v4727 = vld [vmem:[#allocation11 + $0x520] sm:$0xff]
    %v4728 = vld [vmem:[#allocation11 + $0x528] sm:$0xff]
    %v4729 = vld [vmem:[#allocation11 + $0x530] sm:$0xff]
    %v4730 = vld [vmem:[#allocation11 + $0x538] sm:$0xff]
    %v4731 = vld [vmem:[#allocation11 + $0x540] sm:$0xff]
    %v4732 = vld [vmem:[#allocation11 + $0x548] sm:$0xff]
    %v4733 = vld [vmem:[#allocation11 + $0x550] sm:$0xff]
    %v4734 = vld [vmem:[#allocation11 + $0x558] sm:$0xff]
    %v4735 = vld [vmem:[#allocation11 + $0x560] sm:$0xff]
    %v4736 = vld [vmem:[#allocation11 + $0x568] sm:$0xff]
    %v4737 = vld [vmem:[#allocation11 + $0x570] sm:$0xff]
    %v4738 = vld [vmem:[#allocation11 + $0x578] sm:$0xff]
    %v4739 = vld [vmem:[#allocation11 + $0x580] sm:$0xff]
    %v4740 = vld [vmem:[#allocation11 + $0x588] sm:$0xff]
    %v4741 = vld [vmem:[#allocation11 + $0x590] sm:$0xff]
    %v4742 = vld [vmem:[#allocation11 + $0x598] sm:$0xff]
    %v4743 = vld [vmem:[#allocation11 + $0x5a0] sm:$0xff]
    %v4744 = vld [vmem:[#allocation11 + $0x5a8] sm:$0xff]
    %v4745 = vld [vmem:[#allocation11 + $0x5b0] sm:$0xff]
    %v4746 = vld [vmem:[#allocation11 + $0x5b8] sm:$0xff]
    %v4747 = vld [vmem:[#allocation11 + $0x5c0] sm:$0xff]
    %v4748 = vld [vmem:[#allocation11 + $0x5c8] sm:$0xff]
    %v4749 = vld [vmem:[#allocation11 + $0x5d0] sm:$0xff]
    %v4750 = vld [vmem:[#allocation11 + $0x5d8] sm:$0xff]
    %v4751 = vld [vmem:[#allocation11 + $0x5e0] sm:$0xff]
    %v4752 = vld [vmem:[#allocation11 + $0x5e8] sm:$0xff]
    %v4753 = vld [vmem:[#allocation11 + $0x5f0] sm:$0xff]
    %v4754 = vld [vmem:[#allocation11 + $0x5f8] sm:$0xff]
    %v4755 = vld [vmem:[#allocation11 + $0x600] sm:$0xff]
    %v4756 = vld [vmem:[#allocation11 + $0x608] sm:$0xff]
    %v4757 = vld [vmem:[#allocation11 + $0x610] sm:$0xff]
    %v4758 = vld [vmem:[#allocation11 + $0x618] sm:$0xff]
    %v4759 = vld [vmem:[#allocation11 + $0x620] sm:$0xff]
    %v4760 = vld [vmem:[#allocation11 + $0x628] sm:$0xff]
    %v4761 = vld [vmem:[#allocation11 + $0x630] sm:$0xff]
    %v4762 = vld [vmem:[#allocation11 + $0x638] sm:$0xff]
    %v4763 = vld [vmem:[#allocation11 + $0x640] sm:$0xff]
    %v4764 = vld [vmem:[#allocation11 + $0x648] sm:$0xff]
    %v4765 = vld [vmem:[#allocation11 + $0x650] sm:$0xff]
    %v4766 = vld [vmem:[#allocation11 + $0x658] sm:$0xff]
    %v4767 = vld [vmem:[#allocation11 + $0x660] sm:$0xff]
    %v4768 = vld [vmem:[#allocation11 + $0x668] sm:$0xff]
    %v4769 = vld [vmem:[#allocation11 + $0x670] sm:$0xff]
    %v4770 = vld [vmem:[#allocation11 + $0x678] sm:$0xff]
    %v4771 = vld [vmem:[#allocation11 + $0x680] sm:$0xff]
    %v4772 = vld [vmem:[#allocation11 + $0x688] sm:$0xff]
    %v4773 = vld [vmem:[#allocation11 + $0x690] sm:$0xff]
    %v4774 = vld [vmem:[#allocation11 + $0x698] sm:$0xff]
    %v4775 = vld [vmem:[#allocation11 + $0x6a0] sm:$0xff]
    %v4776 = vld [vmem:[#allocation11 + $0x6a8] sm:$0xff]
    %v4777 = vld [vmem:[#allocation11 + $0x6b0] sm:$0xff]
    %v4778 = vld [vmem:[#allocation11 + $0x6b8] sm:$0xff]
    %v4779 = vld [vmem:[#allocation11 + $0x6c0] sm:$0xff]
    %v4780 = vld [vmem:[#allocation11 + $0x6c8] sm:$0xff]
    %v4781 = vld [vmem:[#allocation11 + $0x6d0] sm:$0xff]
    %v4782 = vld [vmem:[#allocation11 + $0x6d8] sm:$0xff]
    %v4783 = vld [vmem:[#allocation11 + $0x6e0] sm:$0xff]
    %v4784 = vld [vmem:[#allocation11 + $0x6e8] sm:$0xff]
    %v4785 = vld [vmem:[#allocation11 + $0x6f0] sm:$0xff]
    %v4786 = vld [vmem:[#allocation11 + $0x6f8] sm:$0xff]
    %v4787 = vld [vmem:[#allocation11 + $0x700] sm:$0xff]
    %v4788 = vld [vmem:[#allocation11 + $0x708] sm:$0xff]
    %v4789 = vld [vmem:[#allocation11 + $0x710] sm:$0xff]
    %v4790 = vld [vmem:[#allocation11 + $0x718] sm:$0xff]
    %v4791 = vld [vmem:[#allocation11 + $0x720] sm:$0xff]
    %v4792 = vld [vmem:[#allocation11 + $0x728] sm:$0xff]
    %v4793 = vld [vmem:[#allocation11 + $0x730] sm:$0xff]
    %v4794 = vld [vmem:[#allocation11 + $0x738] sm:$0xff]
    %v4795 = vld [vmem:[#allocation11 + $0x740] sm:$0xff]
    %v4796 = vld [vmem:[#allocation11 + $0x748] sm:$0xff]
    %v4797 = vld [vmem:[#allocation11 + $0x750] sm:$0xff]
    %v4798 = vld [vmem:[#allocation11 + $0x758] sm:$0xff]
    %v4799 = vld [vmem:[#allocation11 + $0x760] sm:$0xff]
    %v4800 = vld [vmem:[#allocation11 + $0x768] sm:$0xff]
    %v4801 = vld [vmem:[#allocation11 + $0x770] sm:$0xff]
    %v4802 = vld [vmem:[#allocation11 + $0x778] sm:$0xff]
    %v4803 = vld [vmem:[#allocation11 + $0x780] sm:$0xff]
    %v4804 = vld [vmem:[#allocation11 + $0x788] sm:$0xff]
    %v4805 = vld [vmem:[#allocation11 + $0x790] sm:$0xff]
    %v4806 = vld [vmem:[#allocation11 + $0x798] sm:$0xff]
    %v4807 = vld [vmem:[#allocation11 + $0x7a0] sm:$0xff]
    %v4808 = vld [vmem:[#allocation11 + $0x7a8] sm:$0xff]
    %v4809 = vld [vmem:[#allocation11 + $0x7b0] sm:$0xff]
    %v4810 = vld [vmem:[#allocation11 + $0x7b8] sm:$0xff]
    %v4811 = vld [vmem:[#allocation11 + $0x7c0] sm:$0xff]
    %v4812 = vld [vmem:[#allocation11 + $0x7c8] sm:$0xff]
    %v4813 = vld [vmem:[#allocation11 + $0x7d0] sm:$0xff]
    %v4814 = vld [vmem:[#allocation11 + $0x7d8] sm:$0xff]
    %v4815 = vld [vmem:[#allocation11 + $0x7e0] sm:$0xff]
    %v4816 = vld [vmem:[#allocation11 + $0x7e8] sm:$0xff]
    %v4817 = vld [vmem:[#allocation11 + $0x7f0] sm:$0xff]
    %v4818 = vld [vmem:[#allocation11 + $0x7f8] sm:$0xff]
    %v4819 = vld [vmem:[#allocation11 + $0x800] sm:$0xff]
    %v4820 = vld [vmem:[#allocation11 + $0x808] sm:$0xff]
    %v4821 = vld [vmem:[#allocation11 + $0x810] sm:$0xff]
    %v4822 = vld [vmem:[#allocation11 + $0x818] sm:$0xff]
    %v4823 = vld [vmem:[#allocation11 + $0x820] sm:$0xff]
    %v4824 = vld [vmem:[#allocation11 + $0x828] sm:$0xff]
    %v4825 = vld [vmem:[#allocation11 + $0x830] sm:$0xff]
    %v4826 = vld [vmem:[#allocation11 + $0x838] sm:$0xff]
    %v4827 = vld [vmem:[#allocation11 + $0x840] sm:$0xff]
    %v4828 = vld [vmem:[#allocation11 + $0x848] sm:$0xff]
    %v4829 = vld [vmem:[#allocation11 + $0x850] sm:$0xff]
    %v4830 = vld [vmem:[#allocation11 + $0x858] sm:$0xff]
    %v4831 = vld [vmem:[#allocation11 + $0x860] sm:$0xff]
    %v4832 = vld [vmem:[#allocation11 + $0x868] sm:$0xff]
    %v4833 = vld [vmem:[#allocation11 + $0x870] sm:$0xff]
    %v4834 = vld [vmem:[#allocation11 + $0x878] sm:$0xff]
    %v4835 = vld [vmem:[#allocation11 + $0x880] sm:$0xff]
    %v4836 = vld [vmem:[#allocation11 + $0x888] sm:$0xff]
    %v4837 = vld [vmem:[#allocation11 + $0x890] sm:$0xff]
    %v4838 = vld [vmem:[#allocation11 + $0x898] sm:$0xff]
    %v4839 = vld [vmem:[#allocation11 + $0x8a0] sm:$0xff]
    %v4840 = vld [vmem:[#allocation11 + $0x8a8] sm:$0xff]
    %v4841 = vld [vmem:[#allocation11 + $0x8b0] sm:$0xff]
    %v4842 = vld [vmem:[#allocation11 + $0x8b8] sm:$0xff]
    %v4843 = vld [vmem:[#allocation11 + $0x8c0] sm:$0xff]
    %v4844 = vld [vmem:[#allocation11 + $0x8c8] sm:$0xff]
    %v4845 = vld [vmem:[#allocation11 + $0x8d0] sm:$0xff]
    %v4846 = vld [vmem:[#allocation11 + $0x8d8] sm:$0xff]
    %v4847 = vld [vmem:[#allocation11 + $0x8e0] sm:$0xff]
    %v4848 = vld [vmem:[#allocation11 + $0x8e8] sm:$0xff]
    %v4849 = vld [vmem:[#allocation11 + $0x8f0] sm:$0xff]
    %v4850 = vld [vmem:[#allocation11 + $0x8f8] sm:$0xff]
    %v4851 = vld [vmem:[#allocation11 + $0x900] sm:$0xff]
    %v4852 = vld [vmem:[#allocation11 + $0x908] sm:$0xff]
    %v4853 = vld [vmem:[#allocation11 + $0x910] sm:$0xff]
    %v4854 = vld [vmem:[#allocation11 + $0x918] sm:$0xff]
    %v4855 = vld [vmem:[#allocation11 + $0x920] sm:$0xff]
    %v4856 = vld [vmem:[#allocation11 + $0x928] sm:$0xff]
    %v4857 = vld [vmem:[#allocation11 + $0x930] sm:$0xff]
    %v4858 = vld [vmem:[#allocation11 + $0x938] sm:$0xff]
    %v4859 = vld [vmem:[#allocation11 + $0x940] sm:$0xff]
    %v4860 = vld [vmem:[#allocation11 + $0x948] sm:$0xff]
    %v4861 = vld [vmem:[#allocation11 + $0x950] sm:$0xff]
    %v4862 = vld [vmem:[#allocation11 + $0x958] sm:$0xff]
    %v4863 = vld [vmem:[#allocation11 + $0x960] sm:$0xff]
    %v4864 = vld [vmem:[#allocation11 + $0x968] sm:$0xff]
    %v4865 = vld [vmem:[#allocation11 + $0x970] sm:$0xff]
    %v4866 = vld [vmem:[#allocation11 + $0x978] sm:$0xff]
    %v4867 = vld [vmem:[#allocation11 + $0x980] sm:$0xff]
    %v4868 = vld [vmem:[#allocation11 + $0x988] sm:$0xff]
    %v4869 = vld [vmem:[#allocation11 + $0x990] sm:$0xff]
    %v4870 = vld [vmem:[#allocation11 + $0x998] sm:$0xff]
    %v4871 = vld [vmem:[#allocation11 + $0x9a0] sm:$0xff]
    %v4872 = vld [vmem:[#allocation11 + $0x9a8] sm:$0xff]
    %v4873 = vld [vmem:[#allocation11 + $0x9b0] sm:$0xff]
    %v4874 = vld [vmem:[#allocation11 + $0x9b8] sm:$0xff]
    %v4875 = vld [vmem:[#allocation11 + $0x9c0] sm:$0xff]
    %v4876 = vld [vmem:[#allocation11 + $0x9c8] sm:$0xff]
    %v4877 = vld [vmem:[#allocation11 + $0x9d0] sm:$0xff]
    %v4878 = vld [vmem:[#allocation11 + $0x9d8] sm:$0xff]
    %v4879 = vld [vmem:[#allocation11 + $0x9e0] sm:$0xff]
    %v4880 = vld [vmem:[#allocation11 + $0x9e8] sm:$0xff]
    %v4881 = vld [vmem:[#allocation11 + $0x9f0] sm:$0xff]
    %v4882 = vld [vmem:[#allocation11 + $0x9f8] sm:$0xff]
    %v4883 = vld [vmem:[#allocation11 + $0xa00] sm:$0xff]
    %v4884 = vld [vmem:[#allocation11 + $0xa08] sm:$0xff]
    %v4885 = vld [vmem:[#allocation11 + $0xa10] sm:$0xff]
    %v4886 = vld [vmem:[#allocation11 + $0xa18] sm:$0xff]
    %v4887 = vld [vmem:[#allocation11 + $0xa20] sm:$0xff]
    %v4888 = vld [vmem:[#allocation11 + $0xa28] sm:$0xff]
    %v4889 = vld [vmem:[#allocation11 + $0xa30] sm:$0xff]
    %v4890 = vld [vmem:[#allocation11 + $0xa38] sm:$0xff]
    %v4891 = vld [vmem:[#allocation11 + $0xa40] sm:$0xff]
    %v4892 = vld [vmem:[#allocation11 + $0xa48] sm:$0xff]
    %v4893 = vld [vmem:[#allocation11 + $0xa50] sm:$0xff]
    %v4894 = vld [vmem:[#allocation11 + $0xa58] sm:$0xff]
    %v4895 = vld [vmem:[#allocation11 + $0xa60] sm:$0xff]
    %v4896 = vld [vmem:[#allocation11 + $0xa68] sm:$0xff]
    %v4897 = vld [vmem:[#allocation11 + $0xa70] sm:$0xff]
    %v4898 = vld [vmem:[#allocation11 + $0xa78] sm:$0xff]
    %v4899 = vld [vmem:[#allocation11 + $0xa80] sm:$0xff]
    %v4900 = vld [vmem:[#allocation11 + $0xa88] sm:$0xff]
    %v4901 = vld [vmem:[#allocation11 + $0xa90] sm:$0xff]
    %v4902 = vld [vmem:[#allocation11 + $0xa98] sm:$0xff]
    %v4903 = vld [vmem:[#allocation11 + $0xaa0] sm:$0xff]
    %v4904 = vld [vmem:[#allocation11 + $0xaa8] sm:$0xff]
    %v4905 = vld [vmem:[#allocation11 + $0xab0] sm:$0xff]
    %v4906 = vld [vmem:[#allocation11 + $0xab8] sm:$0xff]
    %v4907 = vld [vmem:[#allocation11 + $0xac0] sm:$0xff]
    %v4908 = vld [vmem:[#allocation11 + $0xac8] sm:$0xff]
    %v4909 = vld [vmem:[#allocation11 + $0xad0] sm:$0xff]
    %v4910 = vld [vmem:[#allocation11 + $0xad8] sm:$0xff]
    %v4911 = vld [vmem:[#allocation11 + $0xae0] sm:$0xff]
    %v4912 = vld [vmem:[#allocation11 + $0xae8] sm:$0xff]
    %v4913 = vld [vmem:[#allocation11 + $0xaf0] sm:$0xff]
    %v4914 = vld [vmem:[#allocation11 + $0xaf8] sm:$0xff]
    %v4915 = vld [vmem:[#allocation11 + $0xb00] sm:$0xff]
    %v4916 = vld [vmem:[#allocation11 + $0xb08] sm:$0xff]
    %v4917 = vld [vmem:[#allocation11 + $0xb10] sm:$0xff]
    %v4918 = vld [vmem:[#allocation11 + $0xb18] sm:$0xff]
    %v4919 = vld [vmem:[#allocation11 + $0xb20] sm:$0xff]
    %v4920 = vld [vmem:[#allocation11 + $0xb28] sm:$0xff]
    %v4921 = vld [vmem:[#allocation11 + $0xb30] sm:$0xff]
    %v4922 = vld [vmem:[#allocation11 + $0xb38] sm:$0xff]
    %v4923 = vld [vmem:[#allocation11 + $0xb40] sm:$0xff]
    %v4924 = vld [vmem:[#allocation11 + $0xb48] sm:$0xff]
    %v4925 = vld [vmem:[#allocation11 + $0xb50] sm:$0xff]
    %v4926 = vld [vmem:[#allocation11 + $0xb58] sm:$0xff]
    %v4927 = vld [vmem:[#allocation11 + $0xb60] sm:$0xff]
    %v4928 = vld [vmem:[#allocation11 + $0xb68] sm:$0xff]
    %v4929 = vld [vmem:[#allocation11 + $0xb70] sm:$0xff]
    %v4930 = vld [vmem:[#allocation11 + $0xb78] sm:$0xff]
    %v4931 = vld [vmem:[#allocation11 + $0xb80] sm:$0xff]
    %v4932 = vld [vmem:[#allocation11 + $0xb88] sm:$0xff]
    %v4933 = vld [vmem:[#allocation11 + $0xb90] sm:$0xff]
    %v4934 = vld [vmem:[#allocation11 + $0xb98] sm:$0xff]
    %v4935 = vld [vmem:[#allocation11 + $0xba0] sm:$0xff]
    %v4936 = vld [vmem:[#allocation11 + $0xba8] sm:$0xff]
    %v4937 = vld [vmem:[#allocation11 + $0xbb0] sm:$0xff]
    %v4938 = vld [vmem:[#allocation11 + $0xbb8] sm:$0xff]
    %v4939 = vld [vmem:[#allocation11 + $0xbc0] sm:$0xff]
    %v4940 = vld [vmem:[#allocation11 + $0xbc8] sm:$0xff]
    %v4941 = vld [vmem:[#allocation11 + $0xbd0] sm:$0xff]
    %v4942 = vld [vmem:[#allocation11 + $0xbd8] sm:$0xff]
    %v4943 = vld [vmem:[#allocation11 + $0xbe0] sm:$0xff]
    %v4944 = vld [vmem:[#allocation11 + $0xbe8] sm:$0xff]
    %v4945 = vld [vmem:[#allocation11 + $0xbf0] sm:$0xff]
    %v4946 = vld [vmem:[#allocation11 + $0xbf8] sm:$0xff]
    %v4947 = vld [vmem:[#allocation11 + $0xc00] sm:$0xff]
    %v4948 = vld [vmem:[#allocation11 + $0xc08] sm:$0xff]
    %v4949 = vld [vmem:[#allocation11 + $0xc10] sm:$0xff]
    %v4950 = vld [vmem:[#allocation11 + $0xc18] sm:$0xff]
    %v4951 = vld [vmem:[#allocation11 + $0xc20] sm:$0xff]
    %v4952 = vld [vmem:[#allocation11 + $0xc28] sm:$0xff]
    %v4953 = vld [vmem:[#allocation11 + $0xc30] sm:$0xff]
    %v4954 = vld [vmem:[#allocation11 + $0xc38] sm:$0xff]
    %v4955 = vld [vmem:[#allocation11 + $0xc40] sm:$0xff]
    %v4956 = vld [vmem:[#allocation11 + $0xc48] sm:$0xff]
    %v4957 = vld [vmem:[#allocation11 + $0xc50] sm:$0xff]
    %v4958 = vld [vmem:[#allocation11 + $0xc58] sm:$0xff]
    %v4959 = vld [vmem:[#allocation11 + $0xc60] sm:$0xff]
    %v4960 = vld [vmem:[#allocation11 + $0xc68] sm:$0xff]
    %v4961 = vld [vmem:[#allocation11 + $0xc70] sm:$0xff]
    %v4962 = vld [vmem:[#allocation11 + $0xc78] sm:$0xff]
    %v4963 = vld [vmem:[#allocation11 + $0xc80] sm:$0xff]
    %v4964 = vld [vmem:[#allocation11 + $0xc88] sm:$0xff]
    %v4965 = vld [vmem:[#allocation11 + $0xc90] sm:$0xff]
    %v4966 = vld [vmem:[#allocation11 + $0xc98] sm:$0xff]
    %v4967 = vld [vmem:[#allocation11 + $0xca0] sm:$0xff]
    %v4968 = vld [vmem:[#allocation11 + $0xca8] sm:$0xff]
    %v4969 = vld [vmem:[#allocation11 + $0xcb0] sm:$0xff]
    %v4970 = vld [vmem:[#allocation11 + $0xcb8] sm:$0xff]
    %v4971 = vld [vmem:[#allocation11 + $0xcc0] sm:$0xff]
    %v4972 = vld [vmem:[#allocation11 + $0xcc8] sm:$0xff]
    %v4973 = vld [vmem:[#allocation11 + $0xcd0] sm:$0xff]
    %v4974 = vld [vmem:[#allocation11 + $0xcd8] sm:$0xff]
    %v4975 = vld [vmem:[#allocation11 + $0xce0] sm:$0xff]
    %v4976 = vld [vmem:[#allocation11 + $0xce8] sm:$0xff]
    %v4977 = vld [vmem:[#allocation11 + $0xcf0] sm:$0xff]
    %v4978 = vld [vmem:[#allocation11 + $0xcf8] sm:$0xff]
    %v4979 = vld [vmem:[#allocation11 + $0xd00] sm:$0xff]
    %v4980 = vld [vmem:[#allocation11 + $0xd08] sm:$0xff]
    %v4981 = vld [vmem:[#allocation11 + $0xd10] sm:$0xff]
    %v4982 = vld [vmem:[#allocation11 + $0xd18] sm:$0xff]
    %v4983 = vld [vmem:[#allocation11 + $0xd20] sm:$0xff]
    %v4984 = vld [vmem:[#allocation11 + $0xd28] sm:$0xff]
    %v4985 = vld [vmem:[#allocation11 + $0xd30] sm:$0xff]
    %v4986 = vld [vmem:[#allocation11 + $0xd38] sm:$0xff]
    %v4987 = vld [vmem:[#allocation11 + $0xd40] sm:$0xff]
    %v4988 = vld [vmem:[#allocation11 + $0xd48] sm:$0xff]
    %v4989 = vld [vmem:[#allocation11 + $0xd50] sm:$0xff]
    %v4990 = vld [vmem:[#allocation11 + $0xd58] sm:$0xff]
    %v4991 = vld [vmem:[#allocation11 + $0xd60] sm:$0xff]
    %v4992 = vld [vmem:[#allocation11 + $0xd68] sm:$0xff]
    %v4993 = vld [vmem:[#allocation11 + $0xd70] sm:$0xff]
    %v4994 = vld [vmem:[#allocation11 + $0xd78] sm:$0xff]
    %v4995 = vld [vmem:[#allocation11 + $0xd80] sm:$0xff]
    %v4996 = vld [vmem:[#allocation11 + $0xd88] sm:$0xff]
    %v4997 = vld [vmem:[#allocation11 + $0xd90] sm:$0xff]
    %v4998 = vld [vmem:[#allocation11 + $0xd98] sm:$0xff]
    %v4999 = vld [vmem:[#allocation11 + $0xda0] sm:$0xff]
    %v5000 = vld [vmem:[#allocation11 + $0xda8] sm:$0xff]
    %v5001 = vld [vmem:[#allocation11 + $0xdb0] sm:$0xff]
    %v5002 = vld [vmem:[#allocation11 + $0xdb8] sm:$0xff]
    %v5003 = vld [vmem:[#allocation11 + $0xdc0] sm:$0xff]
    %v5004 = vld [vmem:[#allocation11 + $0xdc8] sm:$0xff]
    %v5005 = vld [vmem:[#allocation11 + $0xdd0] sm:$0xff]
    %v5006 = vld [vmem:[#allocation11 + $0xdd8] sm:$0xff]
    %v5007 = vld [vmem:[#allocation11 + $0xde0] sm:$0xff]
    %v5008 = vld [vmem:[#allocation11 + $0xde8] sm:$0xff]
    %v5009 = vld [vmem:[#allocation11 + $0xdf0] sm:$0xff]
    %v5010 = vld [vmem:[#allocation11 + $0xdf8] sm:$0xff]
    %v5011 = vld [vmem:[#allocation11 + $0xe00] sm:$0xff]
    %v5012 = vld [vmem:[#allocation11 + $0xe08] sm:$0xff]
    %v5013 = vld [vmem:[#allocation11 + $0xe10] sm:$0xff]
    %v5014 = vld [vmem:[#allocation11 + $0xe18] sm:$0xff]
    %v5015 = vld [vmem:[#allocation11 + $0xe20] sm:$0xff]
    %v5016 = vld [vmem:[#allocation11 + $0xe28] sm:$0xff]
    %v5017 = vld [vmem:[#allocation11 + $0xe30] sm:$0xff]
    %v5018 = vld [vmem:[#allocation11 + $0xe38] sm:$0xff]
    %v5019 = vld [vmem:[#allocation11 + $0xe40] sm:$0xff]
    %v5020 = vld [vmem:[#allocation11 + $0xe48] sm:$0xff]
    %v5021 = vld [vmem:[#allocation11 + $0xe50] sm:$0xff]
    %v5022 = vld [vmem:[#allocation11 + $0xe58] sm:$0xff]
    %v5023 = vld [vmem:[#allocation11 + $0xe60] sm:$0xff]
    %v5024 = vld [vmem:[#allocation11 + $0xe68] sm:$0xff]
    %v5025 = vld [vmem:[#allocation11 + $0xe70] sm:$0xff]
    %v5026 = vld [vmem:[#allocation11 + $0xe78] sm:$0xff]
    %v5027 = vld [vmem:[#allocation11 + $0xe80] sm:$0xff]
    %v5028 = vld [vmem:[#allocation11 + $0xe88] sm:$0xff]
    %v5029 = vld [vmem:[#allocation11 + $0xe90] sm:$0xff]
    %v5030 = vld [vmem:[#allocation11 + $0xe98] sm:$0xff]
    %v5031 = vld [vmem:[#allocation11 + $0xea0] sm:$0xff]
    %v5032 = vld [vmem:[#allocation11 + $0xea8] sm:$0xff]
    %v5033 = vld [vmem:[#allocation11 + $0xeb0] sm:$0xff]
    %v5034 = vld [vmem:[#allocation11 + $0xeb8] sm:$0xff]
    %v5035 = vld [vmem:[#allocation11 + $0xec0] sm:$0xff]
    %v5036 = vld [vmem:[#allocation11 + $0xec8] sm:$0xff]
    %v5037 = vld [vmem:[#allocation11 + $0xed0] sm:$0xff]
    %v5038 = vld [vmem:[#allocation11 + $0xed8] sm:$0xff]
    %v5039 = vld [vmem:[#allocation11 + $0xee0] sm:$0xff]
    %v5040 = vld [vmem:[#allocation11 + $0xee8] sm:$0xff]
    %v5041 = vld [vmem:[#allocation11 + $0xef0] sm:$0xff]
    %v5042 = vld [vmem:[#allocation11 + $0xef8] sm:$0xff]
    %v5043 = vld [vmem:[#allocation11 + $0xf00] sm:$0xff]
    %v5044 = vld [vmem:[#allocation11 + $0xf08] sm:$0xff]
    %v5045 = vld [vmem:[#allocation11 + $0xf10] sm:$0xff]
    %v5046 = vld [vmem:[#allocation11 + $0xf18] sm:$0xff]
    %v5047 = vld [vmem:[#allocation11 + $0xf20] sm:$0xff]
    %v5048 = vld [vmem:[#allocation11 + $0xf28] sm:$0xff]
    %v5049 = vld [vmem:[#allocation11 + $0xf30] sm:$0xff]
    %v5050 = vld [vmem:[#allocation11 + $0xf38] sm:$0xff]
    %v5051 = vld [vmem:[#allocation11 + $0xf40] sm:$0xff]
    %v5052 = vld [vmem:[#allocation11 + $0xf48] sm:$0xff]
    %v5053 = vld [vmem:[#allocation11 + $0xf50] sm:$0xff]
    %v5054 = vld [vmem:[#allocation11 + $0xf58] sm:$0xff]
    %v5055 = vld [vmem:[#allocation11 + $0xf60] sm:$0xff]
    %v5056 = vld [vmem:[#allocation11 + $0xf68] sm:$0xff]
    %v5057 = vld [vmem:[#allocation11 + $0xf70] sm:$0xff]
    %v5058 = vld [vmem:[#allocation11 + $0xf78] sm:$0xff]
    %v5059 = vld [vmem:[#allocation11 + $0xf80] sm:$0xff]
    %v5060 = vld [vmem:[#allocation11 + $0xf88] sm:$0xff]
    %v5061 = vld [vmem:[#allocation11 + $0xf90] sm:$0xff]
    %v5062 = vld [vmem:[#allocation11 + $0xf98] sm:$0xff]
    %v5063 = vld [vmem:[#allocation11 + $0xfa0] sm:$0xff]
    %v5064 = vld [vmem:[#allocation11 + $0xfa8] sm:$0xff]
    %v5065 = vld [vmem:[#allocation11 + $0xfb0] sm:$0xff]
    %v5066 = vld [vmem:[#allocation11 + $0xfb8] sm:$0xff]
    %v5067 = vld [vmem:[#allocation11 + $0xfc0] sm:$0xff]
    %v5068 = vld [vmem:[#allocation11 + $0xfc8] sm:$0xff]
    %v5069 = vld [vmem:[#allocation11 + $0xfd0] sm:$0xff]
    %v5070 = vld [vmem:[#allocation11 + $0xfd8] sm:$0xff]
    %v5071 = vld [vmem:[#allocation11 + $0xfe0] sm:$0xff]
    %v5072 = vld [vmem:[#allocation11 + $0xfe8] sm:$0xff]
    %v5073 = vld [vmem:[#allocation11 + $0xff0] sm:$0xff]
    %v5074 = vld [vmem:[#allocation11 + $0xff8] sm:$0xff]
    %v5075 = vld [vmem:[#allocation13] sm:$0xff]
    %v5077 = vlaneseq
    %v5078 = vshrl.u32 %v5077, 7
    %v5079 = vsub.s32 0, %v5078
    %v5080 = vrot.slane %v5075, %v5079
    %v5081 = vlaneseq
    %v5082 = vshrl.u32 %v5081, 7
    %v5083 = vsub.s32 1, %v5082
    %v5084 = vrot.slane %v5075, %v5083
    %v5085 = vlaneseq
    %v5086 = vshrl.u32 %v5085, 7
    %v5087 = vsub.s32 2, %v5086
    %v5088 = vrot.slane %v5075, %v5087
    %v5089 = vlaneseq
    %v5090 = vshrl.u32 %v5089, 7
    %v5091 = vsub.s32 3, %v5090
    %v5092 = vrot.slane %v5075, %v5091
    %v5093 = vlaneseq
    %v5094 = vshrl.u32 %v5093, 7
    %v5095 = vsub.s32 4, %v5094
    %v5096 = vrot.slane %v5075, %v5095
    %v5097 = vlaneseq
    %v5098 = vshrl.u32 %v5097, 7
    %v5099 = vsub.s32 5, %v5098
    %v5100 = vrot.slane %v5075, %v5099
    %v5101 = vlaneseq
    %v5102 = vshrl.u32 %v5101, 7
    %v5103 = vsub.s32 6, %v5102
    %v5104 = vrot.slane %v5075, %v5103
    %v5105 = vlaneseq
    %v5106 = vshrl.u32 %v5105, 7
    %v5107 = vsub.s32 7, %v5106
    %v5108 = vrot.slane %v5075, %v5107
    %v5629 = vunpack.c.l.b16 %v4563
    %v5630 = vunpack.c.h.b16 %v4563
    %v5631 = vunpack.c.l.b16 %v4564
    %v5632 = vunpack.c.h.b16 %v4564
    %v5633 = vunpack.c.l.b16 %v4565
    %v5634 = vunpack.c.h.b16 %v4565
    %v5635 = vunpack.c.l.b16 %v4566
    %v5636 = vunpack.c.h.b16 %v4566
    %v5637 = vunpack.c.l.b16 %v4567
    %v5638 = vunpack.c.h.b16 %v4567
    %v5639 = vunpack.c.l.b16 %v4568
    %v5640 = vunpack.c.h.b16 %v4568
    %v5641 = vunpack.c.l.b16 %v4569
    %v5642 = vunpack.c.h.b16 %v4569
    %v5643 = vunpack.c.l.b16 %v4570
    %v5644 = vunpack.c.h.b16 %v4570
    %v5645 = vunpack.c.l.b16 %v4571
    %v5646 = vunpack.c.h.b16 %v4571
    %v5647 = vunpack.c.l.b16 %v4572
    %v5648 = vunpack.c.h.b16 %v4572
    %v5649 = vunpack.c.l.b16 %v4573
    %v5650 = vunpack.c.h.b16 %v4573
    %v5651 = vunpack.c.l.b16 %v4574
    %v5652 = vunpack.c.h.b16 %v4574
    %v5653 = vunpack.c.l.b16 %v4575
    %v5654 = vunpack.c.h.b16 %v4575
    %v5655 = vunpack.c.l.b16 %v4576
    %v5656 = vunpack.c.h.b16 %v4576
    %v5657 = vunpack.c.l.b16 %v4577
    %v5658 = vunpack.c.h.b16 %v4577
    %v5659 = vunpack.c.l.b16 %v4578
    %v5660 = vunpack.c.h.b16 %v4578
    %v5661 = vunpack.c.l.b16 %v4579
    %v5662 = vunpack.c.h.b16 %v4579
    %v5663 = vunpack.c.l.b16 %v4580
    %v5664 = vunpack.c.h.b16 %v4580
    %v5665 = vunpack.c.l.b16 %v4581
    %v5666 = vunpack.c.h.b16 %v4581
    %v5667 = vunpack.c.l.b16 %v4582
    %v5668 = vunpack.c.h.b16 %v4582
    %v5669 = vunpack.c.l.b16 %v4583
    %v5670 = vunpack.c.h.b16 %v4583
    %v5671 = vunpack.c.l.b16 %v4584
    %v5672 = vunpack.c.h.b16 %v4584
    %v5673 = vunpack.c.l.b16 %v4585
    %v5674 = vunpack.c.h.b16 %v4585
    %v5675 = vunpack.c.l.b16 %v4586
    %v5676 = vunpack.c.h.b16 %v4586
    %v5677 = vunpack.c.l.b16 %v4587
    %v5678 = vunpack.c.h.b16 %v4587
    %v5679 = vunpack.c.l.b16 %v4588
    %v5680 = vunpack.c.h.b16 %v4588
    %v5681 = vunpack.c.l.b16 %v4589
    %v5682 = vunpack.c.h.b16 %v4589
    %v5683 = vunpack.c.l.b16 %v4590
    %v5684 = vunpack.c.h.b16 %v4590
    %v5685 = vunpack.c.l.b16 %v4591
    %v5686 = vunpack.c.h.b16 %v4591
    %v5687 = vunpack.c.l.b16 %v4592
    %v5688 = vunpack.c.h.b16 %v4592
    %v5689 = vunpack.c.l.b16 %v4593
    %v5690 = vunpack.c.h.b16 %v4593
    %v5691 = vunpack.c.l.b16 %v4594
    %v5692 = vunpack.c.h.b16 %v4594
    %v5693 = vunpack.c.l.b16 %v4595
    %v5694 = vunpack.c.h.b16 %v4595
    %v5695 = vunpack.c.l.b16 %v4596
    %v5696 = vunpack.c.h.b16 %v4596
    %v5697 = vunpack.c.l.b16 %v4597
    %v5698 = vunpack.c.h.b16 %v4597
    %v5699 = vunpack.c.l.b16 %v4598
    %v5700 = vunpack.c.h.b16 %v4598
    %v5701 = vunpack.c.l.b16 %v4599
    %v5702 = vunpack.c.h.b16 %v4599
    %v5703 = vunpack.c.l.b16 %v4600
    %v5704 = vunpack.c.h.b16 %v4600
    %v5705 = vunpack.c.l.b16 %v4601
    %v5706 = vunpack.c.h.b16 %v4601
    %v5707 = vunpack.c.l.b16 %v4602
    %v5708 = vunpack.c.h.b16 %v4602
    %v5709 = vunpack.c.l.b16 %v4603
    %v5710 = vunpack.c.h.b16 %v4603
    %v5711 = vunpack.c.l.b16 %v4604
    %v5712 = vunpack.c.h.b16 %v4604
    %v5713 = vunpack.c.l.b16 %v4605
    %v5714 = vunpack.c.h.b16 %v4605
    %v5715 = vunpack.c.l.b16 %v4606
    %v5716 = vunpack.c.h.b16 %v4606
    %v5717 = vunpack.c.l.b16 %v4607
    %v5718 = vunpack.c.h.b16 %v4607
    %v5719 = vunpack.c.l.b16 %v4608
    %v5720 = vunpack.c.h.b16 %v4608
    %v5721 = vunpack.c.l.b16 %v4609
    %v5722 = vunpack.c.h.b16 %v4609
    %v5723 = vunpack.c.l.b16 %v4610
    %v5724 = vunpack.c.h.b16 %v4610
    %v5725 = vunpack.c.l.b16 %v4611
    %v5726 = vunpack.c.h.b16 %v4611
    %v5727 = vunpack.c.l.b16 %v4612
    %v5728 = vunpack.c.h.b16 %v4612
    %v5729 = vunpack.c.l.b16 %v4613
    %v5730 = vunpack.c.h.b16 %v4613
    %v5731 = vunpack.c.l.b16 %v4614
    %v5732 = vunpack.c.h.b16 %v4614
    %v5733 = vunpack.c.l.b16 %v4615
    %v5734 = vunpack.c.h.b16 %v4615
    %v5735 = vunpack.c.l.b16 %v4616
    %v5736 = vunpack.c.h.b16 %v4616
    %v5737 = vunpack.c.l.b16 %v4617
    %v5738 = vunpack.c.h.b16 %v4617
    %v5739 = vunpack.c.l.b16 %v4618
    %v5740 = vunpack.c.h.b16 %v4618
    %v5741 = vunpack.c.l.b16 %v4619
    %v5742 = vunpack.c.h.b16 %v4619
    %v5743 = vunpack.c.l.b16 %v4620
    %v5744 = vunpack.c.h.b16 %v4620
    %v5745 = vunpack.c.l.b16 %v4621
    %v5746 = vunpack.c.h.b16 %v4621
    %v5747 = vunpack.c.l.b16 %v4622
    %v5748 = vunpack.c.h.b16 %v4622
    %v5749 = vunpack.c.l.b16 %v4623
    %v5750 = vunpack.c.h.b16 %v4623
    %v5751 = vunpack.c.l.b16 %v4624
    %v5752 = vunpack.c.h.b16 %v4624
    %v5753 = vunpack.c.l.b16 %v4625
    %v5754 = vunpack.c.h.b16 %v4625
    %v5755 = vunpack.c.l.b16 %v4626
    %v5756 = vunpack.c.h.b16 %v4626
    %v5757 = vunpack.c.l.b16 %v4627
    %v5758 = vunpack.c.h.b16 %v4627
    %v5759 = vunpack.c.l.b16 %v4628
    %v5760 = vunpack.c.h.b16 %v4628
    %v5761 = vunpack.c.l.b16 %v4629
    %v5762 = vunpack.c.h.b16 %v4629
    %v5763 = vunpack.c.l.b16 %v4630
    %v5764 = vunpack.c.h.b16 %v4630
    %v5765 = vunpack.c.l.b16 %v4631
    %v5766 = vunpack.c.h.b16 %v4631
    %v5767 = vunpack.c.l.b16 %v4632
    %v5768 = vunpack.c.h.b16 %v4632
    %v5769 = vunpack.c.l.b16 %v4633
    %v5770 = vunpack.c.h.b16 %v4633
    %v5771 = vunpack.c.l.b16 %v4634
    %v5772 = vunpack.c.h.b16 %v4634
    %v5773 = vunpack.c.l.b16 %v4635
    %v5774 = vunpack.c.h.b16 %v4635
    %v5775 = vunpack.c.l.b16 %v4636
    %v5776 = vunpack.c.h.b16 %v4636
    %v5777 = vunpack.c.l.b16 %v4637
    %v5778 = vunpack.c.h.b16 %v4637
    %v5779 = vunpack.c.l.b16 %v4638
    %v5780 = vunpack.c.h.b16 %v4638
    %v5781 = vunpack.c.l.b16 %v4639
    %v5782 = vunpack.c.h.b16 %v4639
    %v5783 = vunpack.c.l.b16 %v4640
    %v5784 = vunpack.c.h.b16 %v4640
    %v5785 = vunpack.c.l.b16 %v4641
    %v5786 = vunpack.c.h.b16 %v4641
    %v5787 = vunpack.c.l.b16 %v4642
    %v5788 = vunpack.c.h.b16 %v4642
    %v5789 = vunpack.c.l.b16 %v4643
    %v5790 = vunpack.c.h.b16 %v4643
    %v5791 = vunpack.c.l.b16 %v4644
    %v5792 = vunpack.c.h.b16 %v4644
    %v5793 = vunpack.c.l.b16 %v4645
    %v5794 = vunpack.c.h.b16 %v4645
    %v5795 = vunpack.c.l.b16 %v4646
    %v5796 = vunpack.c.h.b16 %v4646
    %v5797 = vunpack.c.l.b16 %v4647
    %v5798 = vunpack.c.h.b16 %v4647
    %v5799 = vunpack.c.l.b16 %v4648
    %v5800 = vunpack.c.h.b16 %v4648
    %v5801 = vunpack.c.l.b16 %v4649
    %v5802 = vunpack.c.h.b16 %v4649
    %v5803 = vunpack.c.l.b16 %v4650
    %v5804 = vunpack.c.h.b16 %v4650
    %v5805 = vunpack.c.l.b16 %v4651
    %v5806 = vunpack.c.h.b16 %v4651
    %v5807 = vunpack.c.l.b16 %v4652
    %v5808 = vunpack.c.h.b16 %v4652
    %v5809 = vunpack.c.l.b16 %v4653
    %v5810 = vunpack.c.h.b16 %v4653
    %v5811 = vunpack.c.l.b16 %v4654
    %v5812 = vunpack.c.h.b16 %v4654
    %v5813 = vunpack.c.l.b16 %v4655
    %v5814 = vunpack.c.h.b16 %v4655
    %v5815 = vunpack.c.l.b16 %v4656
    %v5816 = vunpack.c.h.b16 %v4656
    %v5817 = vunpack.c.l.b16 %v4657
    %v5818 = vunpack.c.h.b16 %v4657
    %v5819 = vunpack.c.l.b16 %v4658
    %v5820 = vunpack.c.h.b16 %v4658
    %v5821 = vunpack.c.l.b16 %v4659
    %v5822 = vunpack.c.h.b16 %v4659
    %v5823 = vunpack.c.l.b16 %v4660
    %v5824 = vunpack.c.h.b16 %v4660
    %v5825 = vunpack.c.l.b16 %v4661
    %v5826 = vunpack.c.h.b16 %v4661
    %v5827 = vunpack.c.l.b16 %v4662
    %v5828 = vunpack.c.h.b16 %v4662
    %v5829 = vunpack.c.l.b16 %v4663
    %v5830 = vunpack.c.h.b16 %v4663
    %v5831 = vunpack.c.l.b16 %v4664
    %v5832 = vunpack.c.h.b16 %v4664
    %v5833 = vunpack.c.l.b16 %v4665
    %v5834 = vunpack.c.h.b16 %v4665
    %v5835 = vunpack.c.l.b16 %v4666
    %v5836 = vunpack.c.h.b16 %v4666
    %v5837 = vunpack.c.l.b16 %v4667
    %v5838 = vunpack.c.h.b16 %v4667
    %v5839 = vunpack.c.l.b16 %v4668
    %v5840 = vunpack.c.h.b16 %v4668
    %v5841 = vunpack.c.l.b16 %v4669
    %v5842 = vunpack.c.h.b16 %v4669
    %v5843 = vunpack.c.l.b16 %v4670
    %v5844 = vunpack.c.h.b16 %v4670
    %v5845 = vunpack.c.l.b16 %v4671
    %v5846 = vunpack.c.h.b16 %v4671
    %v5847 = vunpack.c.l.b16 %v4672
    %v5848 = vunpack.c.h.b16 %v4672
    %v5849 = vunpack.c.l.b16 %v4673
    %v5850 = vunpack.c.h.b16 %v4673
    %v5851 = vunpack.c.l.b16 %v4674
    %v5852 = vunpack.c.h.b16 %v4674
    %v5853 = vunpack.c.l.b16 %v4675
    %v5854 = vunpack.c.h.b16 %v4675
    %v5855 = vunpack.c.l.b16 %v4676
    %v5856 = vunpack.c.h.b16 %v4676
    %v5857 = vunpack.c.l.b16 %v4677
    %v5858 = vunpack.c.h.b16 %v4677
    %v5859 = vunpack.c.l.b16 %v4678
    %v5860 = vunpack.c.h.b16 %v4678
    %v5861 = vunpack.c.l.b16 %v4679
    %v5862 = vunpack.c.h.b16 %v4679
    %v5863 = vunpack.c.l.b16 %v4680
    %v5864 = vunpack.c.h.b16 %v4680
    %v5865 = vunpack.c.l.b16 %v4681
    %v5866 = vunpack.c.h.b16 %v4681
    %v5867 = vunpack.c.l.b16 %v4682
    %v5868 = vunpack.c.h.b16 %v4682
    %v5869 = vunpack.c.l.b16 %v4683
    %v5870 = vunpack.c.h.b16 %v4683
    %v5871 = vunpack.c.l.b16 %v4684
    %v5872 = vunpack.c.h.b16 %v4684
    %v5873 = vunpack.c.l.b16 %v4685
    %v5874 = vunpack.c.h.b16 %v4685
    %v5875 = vunpack.c.l.b16 %v4686
    %v5876 = vunpack.c.h.b16 %v4686
    %v5877 = vunpack.c.l.b16 %v4687
    %v5878 = vunpack.c.h.b16 %v4687
    %v5879 = vunpack.c.l.b16 %v4688
    %v5880 = vunpack.c.h.b16 %v4688
    %v5881 = vunpack.c.l.b16 %v4689
    %v5882 = vunpack.c.h.b16 %v4689
    %v5883 = vunpack.c.l.b16 %v4690
    %v5884 = vunpack.c.h.b16 %v4690
    %v5885 = vunpack.c.l.b16 %v4691
    %v5886 = vunpack.c.h.b16 %v4691
    %v5887 = vunpack.c.l.b16 %v4692
    %v5888 = vunpack.c.h.b16 %v4692
    %v5889 = vunpack.c.l.b16 %v4693
    %v5890 = vunpack.c.h.b16 %v4693
    %v5891 = vunpack.c.l.b16 %v4694
    %v5892 = vunpack.c.h.b16 %v4694
    %v5893 = vunpack.c.l.b16 %v4695
    %v5894 = vunpack.c.h.b16 %v4695
    %v5895 = vunpack.c.l.b16 %v4696
    %v5896 = vunpack.c.h.b16 %v4696
    %v5897 = vunpack.c.l.b16 %v4697
    %v5898 = vunpack.c.h.b16 %v4697
    %v5899 = vunpack.c.l.b16 %v4698
    %v5900 = vunpack.c.h.b16 %v4698
    %v5901 = vunpack.c.l.b16 %v4699
    %v5902 = vunpack.c.h.b16 %v4699
    %v5903 = vunpack.c.l.b16 %v4700
    %v5904 = vunpack.c.h.b16 %v4700
    %v5905 = vunpack.c.l.b16 %v4701
    %v5906 = vunpack.c.h.b16 %v4701
    %v5907 = vunpack.c.l.b16 %v4702
    %v5908 = vunpack.c.h.b16 %v4702
    %v5909 = vunpack.c.l.b16 %v4703
    %v5910 = vunpack.c.h.b16 %v4703
    %v5911 = vunpack.c.l.b16 %v4704
    %v5912 = vunpack.c.h.b16 %v4704
    %v5913 = vunpack.c.l.b16 %v4705
    %v5914 = vunpack.c.h.b16 %v4705
    %v5915 = vunpack.c.l.b16 %v4706
    %v5916 = vunpack.c.h.b16 %v4706
    %v5917 = vunpack.c.l.b16 %v4707
    %v5918 = vunpack.c.h.b16 %v4707
    %v5919 = vunpack.c.l.b16 %v4708
    %v5920 = vunpack.c.h.b16 %v4708
    %v5921 = vunpack.c.l.b16 %v4709
    %v5922 = vunpack.c.h.b16 %v4709
    %v5923 = vunpack.c.l.b16 %v4710
    %v5924 = vunpack.c.h.b16 %v4710
    %v5925 = vunpack.c.l.b16 %v4711
    %v5926 = vunpack.c.h.b16 %v4711
    %v5927 = vunpack.c.l.b16 %v4712
    %v5928 = vunpack.c.h.b16 %v4712
    %v5929 = vunpack.c.l.b16 %v4713
    %v5930 = vunpack.c.h.b16 %v4713
    %v5931 = vunpack.c.l.b16 %v4714
    %v5932 = vunpack.c.h.b16 %v4714
    %v5933 = vunpack.c.l.b16 %v4715
    %v5934 = vunpack.c.h.b16 %v4715
    %v5935 = vunpack.c.l.b16 %v4716
    %v5936 = vunpack.c.h.b16 %v4716
    %v5937 = vunpack.c.l.b16 %v4717
    %v5938 = vunpack.c.h.b16 %v4717
    %v5939 = vunpack.c.l.b16 %v4718
    %v5940 = vunpack.c.h.b16 %v4718
    %v5941 = vunpack.c.l.b16 %v4719
    %v5942 = vunpack.c.h.b16 %v4719
    %v5943 = vunpack.c.l.b16 %v4720
    %v5944 = vunpack.c.h.b16 %v4720
    %v5945 = vunpack.c.l.b16 %v4721
    %v5946 = vunpack.c.h.b16 %v4721
    %v5947 = vunpack.c.l.b16 %v4722
    %v5948 = vunpack.c.h.b16 %v4722
    %v5949 = vunpack.c.l.b16 %v4723
    %v5950 = vunpack.c.h.b16 %v4723
    %v5951 = vunpack.c.l.b16 %v4724
    %v5952 = vunpack.c.h.b16 %v4724
    %v5953 = vunpack.c.l.b16 %v4725
    %v5954 = vunpack.c.h.b16 %v4725
    %v5955 = vunpack.c.l.b16 %v4726
    %v5956 = vunpack.c.h.b16 %v4726
    %v5957 = vunpack.c.l.b16 %v4727
    %v5958 = vunpack.c.h.b16 %v4727
    %v5959 = vunpack.c.l.b16 %v4728
    %v5960 = vunpack.c.h.b16 %v4728
    %v5961 = vunpack.c.l.b16 %v4729
    %v5962 = vunpack.c.h.b16 %v4729
    %v5963 = vunpack.c.l.b16 %v4730
    %v5964 = vunpack.c.h.b16 %v4730
    %v5965 = vunpack.c.l.b16 %v4731
    %v5966 = vunpack.c.h.b16 %v4731
    %v5967 = vunpack.c.l.b16 %v4732
    %v5968 = vunpack.c.h.b16 %v4732
    %v5969 = vunpack.c.l.b16 %v4733
    %v5970 = vunpack.c.h.b16 %v4733
    %v5971 = vunpack.c.l.b16 %v4734
    %v5972 = vunpack.c.h.b16 %v4734
    %v5973 = vunpack.c.l.b16 %v4735
    %v5974 = vunpack.c.h.b16 %v4735
    %v5975 = vunpack.c.l.b16 %v4736
    %v5976 = vunpack.c.h.b16 %v4736
    %v5977 = vunpack.c.l.b16 %v4737
    %v5978 = vunpack.c.h.b16 %v4737
    %v5979 = vunpack.c.l.b16 %v4738
    %v5980 = vunpack.c.h.b16 %v4738
    %v5981 = vunpack.c.l.b16 %v4739
    %v5982 = vunpack.c.h.b16 %v4739
    %v5983 = vunpack.c.l.b16 %v4740
    %v5984 = vunpack.c.h.b16 %v4740
    %v5985 = vunpack.c.l.b16 %v4741
    %v5986 = vunpack.c.h.b16 %v4741
    %v5987 = vunpack.c.l.b16 %v4742
    %v5988 = vunpack.c.h.b16 %v4742
    %v5989 = vunpack.c.l.b16 %v4743
    %v5990 = vunpack.c.h.b16 %v4743
    %v5991 = vunpack.c.l.b16 %v4744
    %v5992 = vunpack.c.h.b16 %v4744
    %v5993 = vunpack.c.l.b16 %v4745
    %v5994 = vunpack.c.h.b16 %v4745
    %v5995 = vunpack.c.l.b16 %v4746
    %v5996 = vunpack.c.h.b16 %v4746
    %v5997 = vunpack.c.l.b16 %v4747
    %v5998 = vunpack.c.h.b16 %v4747
    %v5999 = vunpack.c.l.b16 %v4748
    %v6000 = vunpack.c.h.b16 %v4748
    %v6001 = vunpack.c.l.b16 %v4749
    %v6002 = vunpack.c.h.b16 %v4749
    %v6003 = vunpack.c.l.b16 %v4750
    %v6004 = vunpack.c.h.b16 %v4750
    %v6005 = vunpack.c.l.b16 %v4751
    %v6006 = vunpack.c.h.b16 %v4751
    %v6007 = vunpack.c.l.b16 %v4752
    %v6008 = vunpack.c.h.b16 %v4752
    %v6009 = vunpack.c.l.b16 %v4753
    %v6010 = vunpack.c.h.b16 %v4753
    %v6011 = vunpack.c.l.b16 %v4754
    %v6012 = vunpack.c.h.b16 %v4754
    %v6013 = vunpack.c.l.b16 %v4755
    %v6014 = vunpack.c.h.b16 %v4755
    %v6015 = vunpack.c.l.b16 %v4756
    %v6016 = vunpack.c.h.b16 %v4756
    %v6017 = vunpack.c.l.b16 %v4757
    %v6018 = vunpack.c.h.b16 %v4757
    %v6019 = vunpack.c.l.b16 %v4758
    %v6020 = vunpack.c.h.b16 %v4758
    %v6021 = vunpack.c.l.b16 %v4759
    %v6022 = vunpack.c.h.b16 %v4759
    %v6023 = vunpack.c.l.b16 %v4760
    %v6024 = vunpack.c.h.b16 %v4760
    %v6025 = vunpack.c.l.b16 %v4761
    %v6026 = vunpack.c.h.b16 %v4761
    %v6027 = vunpack.c.l.b16 %v4762
    %v6028 = vunpack.c.h.b16 %v4762
    %v6029 = vunpack.c.l.b16 %v4763
    %v6030 = vunpack.c.h.b16 %v4763
    %v6031 = vunpack.c.l.b16 %v4764
    %v6032 = vunpack.c.h.b16 %v4764
    %v6033 = vunpack.c.l.b16 %v4765
    %v6034 = vunpack.c.h.b16 %v4765
    %v6035 = vunpack.c.l.b16 %v4766
    %v6036 = vunpack.c.h.b16 %v4766
    %v6037 = vunpack.c.l.b16 %v4767
    %v6038 = vunpack.c.h.b16 %v4767
    %v6039 = vunpack.c.l.b16 %v4768
    %v6040 = vunpack.c.h.b16 %v4768
    %v6041 = vunpack.c.l.b16 %v4769
    %v6042 = vunpack.c.h.b16 %v4769
    %v6043 = vunpack.c.l.b16 %v4770
    %v6044 = vunpack.c.h.b16 %v4770
    %v6045 = vunpack.c.l.b16 %v4771
    %v6046 = vunpack.c.h.b16 %v4771
    %v6047 = vunpack.c.l.b16 %v4772
    %v6048 = vunpack.c.h.b16 %v4772
    %v6049 = vunpack.c.l.b16 %v4773
    %v6050 = vunpack.c.h.b16 %v4773
    %v6051 = vunpack.c.l.b16 %v4774
    %v6052 = vunpack.c.h.b16 %v4774
    %v6053 = vunpack.c.l.b16 %v4775
    %v6054 = vunpack.c.h.b16 %v4775
    %v6055 = vunpack.c.l.b16 %v4776
    %v6056 = vunpack.c.h.b16 %v4776
    %v6057 = vunpack.c.l.b16 %v4777
    %v6058 = vunpack.c.h.b16 %v4777
    %v6059 = vunpack.c.l.b16 %v4778
    %v6060 = vunpack.c.h.b16 %v4778
    %v6061 = vunpack.c.l.b16 %v4779
    %v6062 = vunpack.c.h.b16 %v4779
    %v6063 = vunpack.c.l.b16 %v4780
    %v6064 = vunpack.c.h.b16 %v4780
    %v6065 = vunpack.c.l.b16 %v4781
    %v6066 = vunpack.c.h.b16 %v4781
    %v6067 = vunpack.c.l.b16 %v4782
    %v6068 = vunpack.c.h.b16 %v4782
    %v6069 = vunpack.c.l.b16 %v4783
    %v6070 = vunpack.c.h.b16 %v4783
    %v6071 = vunpack.c.l.b16 %v4784
    %v6072 = vunpack.c.h.b16 %v4784
    %v6073 = vunpack.c.l.b16 %v4785
    %v6074 = vunpack.c.h.b16 %v4785
    %v6075 = vunpack.c.l.b16 %v4786
    %v6076 = vunpack.c.h.b16 %v4786
    %v6077 = vunpack.c.l.b16 %v4787
    %v6078 = vunpack.c.h.b16 %v4787
    %v6079 = vunpack.c.l.b16 %v4788
    %v6080 = vunpack.c.h.b16 %v4788
    %v6081 = vunpack.c.l.b16 %v4789
    %v6082 = vunpack.c.h.b16 %v4789
    %v6083 = vunpack.c.l.b16 %v4790
    %v6084 = vunpack.c.h.b16 %v4790
    %v6085 = vunpack.c.l.b16 %v4791
    %v6086 = vunpack.c.h.b16 %v4791
    %v6087 = vunpack.c.l.b16 %v4792
    %v6088 = vunpack.c.h.b16 %v4792
    %v6089 = vunpack.c.l.b16 %v4793
    %v6090 = vunpack.c.h.b16 %v4793
    %v6091 = vunpack.c.l.b16 %v4794
    %v6092 = vunpack.c.h.b16 %v4794
    %v6093 = vunpack.c.l.b16 %v4795
    %v6094 = vunpack.c.h.b16 %v4795
    %v6095 = vunpack.c.l.b16 %v4796
    %v6096 = vunpack.c.h.b16 %v4796
    %v6097 = vunpack.c.l.b16 %v4797
    %v6098 = vunpack.c.h.b16 %v4797
    %v6099 = vunpack.c.l.b16 %v4798
    %v6100 = vunpack.c.h.b16 %v4798
    %v6101 = vunpack.c.l.b16 %v4799
    %v6102 = vunpack.c.h.b16 %v4799
    %v6103 = vunpack.c.l.b16 %v4800
    %v6104 = vunpack.c.h.b16 %v4800
    %v6105 = vunpack.c.l.b16 %v4801
    %v6106 = vunpack.c.h.b16 %v4801
    %v6107 = vunpack.c.l.b16 %v4802
    %v6108 = vunpack.c.h.b16 %v4802
    %v6109 = vunpack.c.l.b16 %v4803
    %v6110 = vunpack.c.h.b16 %v4803
    %v6111 = vunpack.c.l.b16 %v4804
    %v6112 = vunpack.c.h.b16 %v4804
    %v6113 = vunpack.c.l.b16 %v4805
    %v6114 = vunpack.c.h.b16 %v4805
    %v6115 = vunpack.c.l.b16 %v4806
    %v6116 = vunpack.c.h.b16 %v4806
    %v6117 = vunpack.c.l.b16 %v4807
    %v6118 = vunpack.c.h.b16 %v4807
    %v6119 = vunpack.c.l.b16 %v4808
    %v6120 = vunpack.c.h.b16 %v4808
    %v6121 = vunpack.c.l.b16 %v4809
    %v6122 = vunpack.c.h.b16 %v4809
    %v6123 = vunpack.c.l.b16 %v4810
    %v6124 = vunpack.c.h.b16 %v4810
    %v6125 = vunpack.c.l.b16 %v4811
    %v6126 = vunpack.c.h.b16 %v4811
    %v6127 = vunpack.c.l.b16 %v4812
    %v6128 = vunpack.c.h.b16 %v4812
    %v6129 = vunpack.c.l.b16 %v4813
    %v6130 = vunpack.c.h.b16 %v4813
    %v6131 = vunpack.c.l.b16 %v4814
    %v6132 = vunpack.c.h.b16 %v4814
    %v6133 = vunpack.c.l.b16 %v4815
    %v6134 = vunpack.c.h.b16 %v4815
    %v6135 = vunpack.c.l.b16 %v4816
    %v6136 = vunpack.c.h.b16 %v4816
    %v6137 = vunpack.c.l.b16 %v4817
    %v6138 = vunpack.c.h.b16 %v4817
    %v6139 = vunpack.c.l.b16 %v4818
    %v6140 = vunpack.c.h.b16 %v4818
    %v6141 = vunpack.c.l.b16 %v4819
    %v6142 = vunpack.c.h.b16 %v4819
    %v6143 = vunpack.c.l.b16 %v4820
    %v6144 = vunpack.c.h.b16 %v4820
    %v6145 = vunpack.c.l.b16 %v4821
    %v6146 = vunpack.c.h.b16 %v4821
    %v6147 = vunpack.c.l.b16 %v4822
    %v6148 = vunpack.c.h.b16 %v4822
    %v6149 = vunpack.c.l.b16 %v4823
    %v6150 = vunpack.c.h.b16 %v4823
    %v6151 = vunpack.c.l.b16 %v4824
    %v6152 = vunpack.c.h.b16 %v4824
    %v6153 = vunpack.c.l.b16 %v4825
    %v6154 = vunpack.c.h.b16 %v4825
    %v6155 = vunpack.c.l.b16 %v4826
    %v6156 = vunpack.c.h.b16 %v4826
    %v6157 = vunpack.c.l.b16 %v4827
    %v6158 = vunpack.c.h.b16 %v4827
    %v6159 = vunpack.c.l.b16 %v4828
    %v6160 = vunpack.c.h.b16 %v4828
    %v6161 = vunpack.c.l.b16 %v4829
    %v6162 = vunpack.c.h.b16 %v4829
    %v6163 = vunpack.c.l.b16 %v4830
    %v6164 = vunpack.c.h.b16 %v4830
    %v6165 = vunpack.c.l.b16 %v4831
    %v6166 = vunpack.c.h.b16 %v4831
    %v6167 = vunpack.c.l.b16 %v4832
    %v6168 = vunpack.c.h.b16 %v4832
    %v6169 = vunpack.c.l.b16 %v4833
    %v6170 = vunpack.c.h.b16 %v4833
    %v6171 = vunpack.c.l.b16 %v4834
    %v6172 = vunpack.c.h.b16 %v4834
    %v6173 = vunpack.c.l.b16 %v4835
    %v6174 = vunpack.c.h.b16 %v4835
    %v6175 = vunpack.c.l.b16 %v4836
    %v6176 = vunpack.c.h.b16 %v4836
    %v6177 = vunpack.c.l.b16 %v4837
    %v6178 = vunpack.c.h.b16 %v4837
    %v6179 = vunpack.c.l.b16 %v4838
    %v6180 = vunpack.c.h.b16 %v4838
    %v6181 = vunpack.c.l.b16 %v4839
    %v6182 = vunpack.c.h.b16 %v4839
    %v6183 = vunpack.c.l.b16 %v4840
    %v6184 = vunpack.c.h.b16 %v4840
    %v6185 = vunpack.c.l.b16 %v4841
    %v6186 = vunpack.c.h.b16 %v4841
    %v6187 = vunpack.c.l.b16 %v4842
    %v6188 = vunpack.c.h.b16 %v4842
    %v6189 = vunpack.c.l.b16 %v4843
    %v6190 = vunpack.c.h.b16 %v4843
    %v6191 = vunpack.c.l.b16 %v4844
    %v6192 = vunpack.c.h.b16 %v4844
    %v6193 = vunpack.c.l.b16 %v4845
    %v6194 = vunpack.c.h.b16 %v4845
    %v6195 = vunpack.c.l.b16 %v4846
    %v6196 = vunpack.c.h.b16 %v4846
    %v6197 = vunpack.c.l.b16 %v4847
    %v6198 = vunpack.c.h.b16 %v4847
    %v6199 = vunpack.c.l.b16 %v4848
    %v6200 = vunpack.c.h.b16 %v4848
    %v6201 = vunpack.c.l.b16 %v4849
    %v6202 = vunpack.c.h.b16 %v4849
    %v6203 = vunpack.c.l.b16 %v4850
    %v6204 = vunpack.c.h.b16 %v4850
    %v6205 = vunpack.c.l.b16 %v4851
    %v6206 = vunpack.c.h.b16 %v4851
    %v6207 = vunpack.c.l.b16 %v4852
    %v6208 = vunpack.c.h.b16 %v4852
    %v6209 = vunpack.c.l.b16 %v4853
    %v6210 = vunpack.c.h.b16 %v4853
    %v6211 = vunpack.c.l.b16 %v4854
    %v6212 = vunpack.c.h.b16 %v4854
    %v6213 = vunpack.c.l.b16 %v4855
    %v6214 = vunpack.c.h.b16 %v4855
    %v6215 = vunpack.c.l.b16 %v4856
    %v6216 = vunpack.c.h.b16 %v4856
    %v6217 = vunpack.c.l.b16 %v4857
    %v6218 = vunpack.c.h.b16 %v4857
    %v6219 = vunpack.c.l.b16 %v4858
    %v6220 = vunpack.c.h.b16 %v4858
    %v6221 = vunpack.c.l.b16 %v4859
    %v6222 = vunpack.c.h.b16 %v4859
    %v6223 = vunpack.c.l.b16 %v4860
    %v6224 = vunpack.c.h.b16 %v4860
    %v6225 = vunpack.c.l.b16 %v4861
    %v6226 = vunpack.c.h.b16 %v4861
    %v6227 = vunpack.c.l.b16 %v4862
    %v6228 = vunpack.c.h.b16 %v4862
    %v6229 = vunpack.c.l.b16 %v4863
    %v6230 = vunpack.c.h.b16 %v4863
    %v6231 = vunpack.c.l.b16 %v4864
    %v6232 = vunpack.c.h.b16 %v4864
    %v6233 = vunpack.c.l.b16 %v4865
    %v6234 = vunpack.c.h.b16 %v4865
    %v6235 = vunpack.c.l.b16 %v4866
    %v6236 = vunpack.c.h.b16 %v4866
    %v6237 = vunpack.c.l.b16 %v4867
    %v6238 = vunpack.c.h.b16 %v4867
    %v6239 = vunpack.c.l.b16 %v4868
    %v6240 = vunpack.c.h.b16 %v4868
    %v6241 = vunpack.c.l.b16 %v4869
    %v6242 = vunpack.c.h.b16 %v4869
    %v6243 = vunpack.c.l.b16 %v4870
    %v6244 = vunpack.c.h.b16 %v4870
    %v6245 = vunpack.c.l.b16 %v4871
    %v6246 = vunpack.c.h.b16 %v4871
    %v6247 = vunpack.c.l.b16 %v4872
    %v6248 = vunpack.c.h.b16 %v4872
    %v6249 = vunpack.c.l.b16 %v4873
    %v6250 = vunpack.c.h.b16 %v4873
    %v6251 = vunpack.c.l.b16 %v4874
    %v6252 = vunpack.c.h.b16 %v4874
    %v6253 = vunpack.c.l.b16 %v4875
    %v6254 = vunpack.c.h.b16 %v4875
    %v6255 = vunpack.c.l.b16 %v4876
    %v6256 = vunpack.c.h.b16 %v4876
    %v6257 = vunpack.c.l.b16 %v4877
    %v6258 = vunpack.c.h.b16 %v4877
    %v6259 = vunpack.c.l.b16 %v4878
    %v6260 = vunpack.c.h.b16 %v4878
    %v6261 = vunpack.c.l.b16 %v4879
    %v6262 = vunpack.c.h.b16 %v4879
    %v6263 = vunpack.c.l.b16 %v4880
    %v6264 = vunpack.c.h.b16 %v4880
    %v6265 = vunpack.c.l.b16 %v4881
    %v6266 = vunpack.c.h.b16 %v4881
    %v6267 = vunpack.c.l.b16 %v4882
    %v6268 = vunpack.c.h.b16 %v4882
    %v6269 = vunpack.c.l.b16 %v4883
    %v6270 = vunpack.c.h.b16 %v4883
    %v6271 = vunpack.c.l.b16 %v4884
    %v6272 = vunpack.c.h.b16 %v4884
    %v6273 = vunpack.c.l.b16 %v4885
    %v6274 = vunpack.c.h.b16 %v4885
    %v6275 = vunpack.c.l.b16 %v4886
    %v6276 = vunpack.c.h.b16 %v4886
    %v6277 = vunpack.c.l.b16 %v4887
    %v6278 = vunpack.c.h.b16 %v4887
    %v6279 = vunpack.c.l.b16 %v4888
    %v6280 = vunpack.c.h.b16 %v4888
    %v6281 = vunpack.c.l.b16 %v4889
    %v6282 = vunpack.c.h.b16 %v4889
    %v6283 = vunpack.c.l.b16 %v4890
    %v6284 = vunpack.c.h.b16 %v4890
    %v6285 = vunpack.c.l.b16 %v4891
    %v6286 = vunpack.c.h.b16 %v4891
    %v6287 = vunpack.c.l.b16 %v4892
    %v6288 = vunpack.c.h.b16 %v4892
    %v6289 = vunpack.c.l.b16 %v4893
    %v6290 = vunpack.c.h.b16 %v4893
    %v6291 = vunpack.c.l.b16 %v4894
    %v6292 = vunpack.c.h.b16 %v4894
    %v6293 = vunpack.c.l.b16 %v4895
    %v6294 = vunpack.c.h.b16 %v4895
    %v6295 = vunpack.c.l.b16 %v4896
    %v6296 = vunpack.c.h.b16 %v4896
    %v6297 = vunpack.c.l.b16 %v4897
    %v6298 = vunpack.c.h.b16 %v4897
    %v6299 = vunpack.c.l.b16 %v4898
    %v6300 = vunpack.c.h.b16 %v4898
    %v6301 = vunpack.c.l.b16 %v4899
    %v6302 = vunpack.c.h.b16 %v4899
    %v6303 = vunpack.c.l.b16 %v4900
    %v6304 = vunpack.c.h.b16 %v4900
    %v6305 = vunpack.c.l.b16 %v4901
    %v6306 = vunpack.c.h.b16 %v4901
    %v6307 = vunpack.c.l.b16 %v4902
    %v6308 = vunpack.c.h.b16 %v4902
    %v6309 = vunpack.c.l.b16 %v4903
    %v6310 = vunpack.c.h.b16 %v4903
    %v6311 = vunpack.c.l.b16 %v4904
    %v6312 = vunpack.c.h.b16 %v4904
    %v6313 = vunpack.c.l.b16 %v4905
    %v6314 = vunpack.c.h.b16 %v4905
    %v6315 = vunpack.c.l.b16 %v4906
    %v6316 = vunpack.c.h.b16 %v4906
    %v6317 = vunpack.c.l.b16 %v4907
    %v6318 = vunpack.c.h.b16 %v4907
    %v6319 = vunpack.c.l.b16 %v4908
    %v6320 = vunpack.c.h.b16 %v4908
    %v6321 = vunpack.c.l.b16 %v4909
    %v6322 = vunpack.c.h.b16 %v4909
    %v6323 = vunpack.c.l.b16 %v4910
    %v6324 = vunpack.c.h.b16 %v4910
    %v6325 = vunpack.c.l.b16 %v4911
    %v6326 = vunpack.c.h.b16 %v4911
    %v6327 = vunpack.c.l.b16 %v4912
    %v6328 = vunpack.c.h.b16 %v4912
    %v6329 = vunpack.c.l.b16 %v4913
    %v6330 = vunpack.c.h.b16 %v4913
    %v6331 = vunpack.c.l.b16 %v4914
    %v6332 = vunpack.c.h.b16 %v4914
    %v6333 = vunpack.c.l.b16 %v4915
    %v6334 = vunpack.c.h.b16 %v4915
    %v6335 = vunpack.c.l.b16 %v4916
    %v6336 = vunpack.c.h.b16 %v4916
    %v6337 = vunpack.c.l.b16 %v4917
    %v6338 = vunpack.c.h.b16 %v4917
    %v6339 = vunpack.c.l.b16 %v4918
    %v6340 = vunpack.c.h.b16 %v4918
    %v6341 = vunpack.c.l.b16 %v4919
    %v6342 = vunpack.c.h.b16 %v4919
    %v6343 = vunpack.c.l.b16 %v4920
    %v6344 = vunpack.c.h.b16 %v4920
    %v6345 = vunpack.c.l.b16 %v4921
    %v6346 = vunpack.c.h.b16 %v4921
    %v6347 = vunpack.c.l.b16 %v4922
    %v6348 = vunpack.c.h.b16 %v4922
    %v6349 = vunpack.c.l.b16 %v4923
    %v6350 = vunpack.c.h.b16 %v4923
    %v6351 = vunpack.c.l.b16 %v4924
    %v6352 = vunpack.c.h.b16 %v4924
    %v6353 = vunpack.c.l.b16 %v4925
    %v6354 = vunpack.c.h.b16 %v4925
    %v6355 = vunpack.c.l.b16 %v4926
    %v6356 = vunpack.c.h.b16 %v4926
    %v6357 = vunpack.c.l.b16 %v4927
    %v6358 = vunpack.c.h.b16 %v4927
    %v6359 = vunpack.c.l.b16 %v4928
    %v6360 = vunpack.c.h.b16 %v4928
    %v6361 = vunpack.c.l.b16 %v4929
    %v6362 = vunpack.c.h.b16 %v4929
    %v6363 = vunpack.c.l.b16 %v4930
    %v6364 = vunpack.c.h.b16 %v4930
    %v6365 = vunpack.c.l.b16 %v4931
    %v6366 = vunpack.c.h.b16 %v4931
    %v6367 = vunpack.c.l.b16 %v4932
    %v6368 = vunpack.c.h.b16 %v4932
    %v6369 = vunpack.c.l.b16 %v4933
    %v6370 = vunpack.c.h.b16 %v4933
    %v6371 = vunpack.c.l.b16 %v4934
    %v6372 = vunpack.c.h.b16 %v4934
    %v6373 = vunpack.c.l.b16 %v4935
    %v6374 = vunpack.c.h.b16 %v4935
    %v6375 = vunpack.c.l.b16 %v4936
    %v6376 = vunpack.c.h.b16 %v4936
    %v6377 = vunpack.c.l.b16 %v4937
    %v6378 = vunpack.c.h.b16 %v4937
    %v6379 = vunpack.c.l.b16 %v4938
    %v6380 = vunpack.c.h.b16 %v4938
    %v6381 = vunpack.c.l.b16 %v4939
    %v6382 = vunpack.c.h.b16 %v4939
    %v6383 = vunpack.c.l.b16 %v4940
    %v6384 = vunpack.c.h.b16 %v4940
    %v6385 = vunpack.c.l.b16 %v4941
    %v6386 = vunpack.c.h.b16 %v4941
    %v6387 = vunpack.c.l.b16 %v4942
    %v6388 = vunpack.c.h.b16 %v4942
    %v6389 = vunpack.c.l.b16 %v4943
    %v6390 = vunpack.c.h.b16 %v4943
    %v6391 = vunpack.c.l.b16 %v4944
    %v6392 = vunpack.c.h.b16 %v4944
    %v6393 = vunpack.c.l.b16 %v4945
    %v6394 = vunpack.c.h.b16 %v4945
    %v6395 = vunpack.c.l.b16 %v4946
    %v6396 = vunpack.c.h.b16 %v4946
    %v6397 = vunpack.c.l.b16 %v4947
    %v6398 = vunpack.c.h.b16 %v4947
    %v6399 = vunpack.c.l.b16 %v4948
    %v6400 = vunpack.c.h.b16 %v4948
    %v6401 = vunpack.c.l.b16 %v4949
    %v6402 = vunpack.c.h.b16 %v4949
    %v6403 = vunpack.c.l.b16 %v4950
    %v6404 = vunpack.c.h.b16 %v4950
    %v6405 = vunpack.c.l.b16 %v4951
    %v6406 = vunpack.c.h.b16 %v4951
    %v6407 = vunpack.c.l.b16 %v4952
    %v6408 = vunpack.c.h.b16 %v4952
    %v6409 = vunpack.c.l.b16 %v4953
    %v6410 = vunpack.c.h.b16 %v4953
    %v6411 = vunpack.c.l.b16 %v4954
    %v6412 = vunpack.c.h.b16 %v4954
    %v6413 = vunpack.c.l.b16 %v4955
    %v6414 = vunpack.c.h.b16 %v4955
    %v6415 = vunpack.c.l.b16 %v4956
    %v6416 = vunpack.c.h.b16 %v4956
    %v6417 = vunpack.c.l.b16 %v4957
    %v6418 = vunpack.c.h.b16 %v4957
    %v6419 = vunpack.c.l.b16 %v4958
    %v6420 = vunpack.c.h.b16 %v4958
    %v6421 = vunpack.c.l.b16 %v4959
    %v6422 = vunpack.c.h.b16 %v4959
    %v6423 = vunpack.c.l.b16 %v4960
    %v6424 = vunpack.c.h.b16 %v4960
    %v6425 = vunpack.c.l.b16 %v4961
    %v6426 = vunpack.c.h.b16 %v4961
    %v6427 = vunpack.c.l.b16 %v4962
    %v6428 = vunpack.c.h.b16 %v4962
    %v6429 = vunpack.c.l.b16 %v4963
    %v6430 = vunpack.c.h.b16 %v4963
    %v6431 = vunpack.c.l.b16 %v4964
    %v6432 = vunpack.c.h.b16 %v4964
    %v6433 = vunpack.c.l.b16 %v4965
    %v6434 = vunpack.c.h.b16 %v4965
    %v6435 = vunpack.c.l.b16 %v4966
    %v6436 = vunpack.c.h.b16 %v4966
    %v6437 = vunpack.c.l.b16 %v4967
    %v6438 = vunpack.c.h.b16 %v4967
    %v6439 = vunpack.c.l.b16 %v4968
    %v6440 = vunpack.c.h.b16 %v4968
    %v6441 = vunpack.c.l.b16 %v4969
    %v6442 = vunpack.c.h.b16 %v4969
    %v6443 = vunpack.c.l.b16 %v4970
    %v6444 = vunpack.c.h.b16 %v4970
    %v6445 = vunpack.c.l.b16 %v4971
    %v6446 = vunpack.c.h.b16 %v4971
    %v6447 = vunpack.c.l.b16 %v4972
    %v6448 = vunpack.c.h.b16 %v4972
    %v6449 = vunpack.c.l.b16 %v4973
    %v6450 = vunpack.c.h.b16 %v4973
    %v6451 = vunpack.c.l.b16 %v4974
    %v6452 = vunpack.c.h.b16 %v4974
    %v6453 = vunpack.c.l.b16 %v4975
    %v6454 = vunpack.c.h.b16 %v4975
    %v6455 = vunpack.c.l.b16 %v4976
    %v6456 = vunpack.c.h.b16 %v4976
    %v6457 = vunpack.c.l.b16 %v4977
    %v6458 = vunpack.c.h.b16 %v4977
    %v6459 = vunpack.c.l.b16 %v4978
    %v6460 = vunpack.c.h.b16 %v4978
    %v6461 = vunpack.c.l.b16 %v4979
    %v6462 = vunpack.c.h.b16 %v4979
    %v6463 = vunpack.c.l.b16 %v4980
    %v6464 = vunpack.c.h.b16 %v4980
    %v6465 = vunpack.c.l.b16 %v4981
    %v6466 = vunpack.c.h.b16 %v4981
    %v6467 = vunpack.c.l.b16 %v4982
    %v6468 = vunpack.c.h.b16 %v4982
    %v6469 = vunpack.c.l.b16 %v4983
    %v6470 = vunpack.c.h.b16 %v4983
    %v6471 = vunpack.c.l.b16 %v4984
    %v6472 = vunpack.c.h.b16 %v4984
    %v6473 = vunpack.c.l.b16 %v4985
    %v6474 = vunpack.c.h.b16 %v4985
    %v6475 = vunpack.c.l.b16 %v4986
    %v6476 = vunpack.c.h.b16 %v4986
    %v6477 = vunpack.c.l.b16 %v4987
    %v6478 = vunpack.c.h.b16 %v4987
    %v6479 = vunpack.c.l.b16 %v4988
    %v6480 = vunpack.c.h.b16 %v4988
    %v6481 = vunpack.c.l.b16 %v4989
    %v6482 = vunpack.c.h.b16 %v4989
    %v6483 = vunpack.c.l.b16 %v4990
    %v6484 = vunpack.c.h.b16 %v4990
    %v6485 = vunpack.c.l.b16 %v4991
    %v6486 = vunpack.c.h.b16 %v4991
    %v6487 = vunpack.c.l.b16 %v4992
    %v6488 = vunpack.c.h.b16 %v4992
    %v6489 = vunpack.c.l.b16 %v4993
    %v6490 = vunpack.c.h.b16 %v4993
    %v6491 = vunpack.c.l.b16 %v4994
    %v6492 = vunpack.c.h.b16 %v4994
    %v6493 = vunpack.c.l.b16 %v4995
    %v6494 = vunpack.c.h.b16 %v4995
    %v6495 = vunpack.c.l.b16 %v4996
    %v6496 = vunpack.c.h.b16 %v4996
    %v6497 = vunpack.c.l.b16 %v4997
    %v6498 = vunpack.c.h.b16 %v4997
    %v6499 = vunpack.c.l.b16 %v4998
    %v6500 = vunpack.c.h.b16 %v4998
    %v6501 = vunpack.c.l.b16 %v4999
    %v6502 = vunpack.c.h.b16 %v4999
    %v6503 = vunpack.c.l.b16 %v5000
    %v6504 = vunpack.c.h.b16 %v5000
    %v6505 = vunpack.c.l.b16 %v5001
    %v6506 = vunpack.c.h.b16 %v5001
    %v6507 = vunpack.c.l.b16 %v5002
    %v6508 = vunpack.c.h.b16 %v5002
    %v6509 = vunpack.c.l.b16 %v5003
    %v6510 = vunpack.c.h.b16 %v5003
    %v6511 = vunpack.c.l.b16 %v5004
    %v6512 = vunpack.c.h.b16 %v5004
    %v6513 = vunpack.c.l.b16 %v5005
    %v6514 = vunpack.c.h.b16 %v5005
    %v6515 = vunpack.c.l.b16 %v5006
    %v6516 = vunpack.c.h.b16 %v5006
    %v6517 = vunpack.c.l.b16 %v5007
    %v6518 = vunpack.c.h.b16 %v5007
    %v6519 = vunpack.c.l.b16 %v5008
    %v6520 = vunpack.c.h.b16 %v5008
    %v6521 = vunpack.c.l.b16 %v5009
    %v6522 = vunpack.c.h.b16 %v5009
    %v6523 = vunpack.c.l.b16 %v5010
    %v6524 = vunpack.c.h.b16 %v5010
    %v6525 = vunpack.c.l.b16 %v5011
    %v6526 = vunpack.c.h.b16 %v5011
    %v6527 = vunpack.c.l.b16 %v5012
    %v6528 = vunpack.c.h.b16 %v5012
    %v6529 = vunpack.c.l.b16 %v5013
    %v6530 = vunpack.c.h.b16 %v5013
    %v6531 = vunpack.c.l.b16 %v5014
    %v6532 = vunpack.c.h.b16 %v5014
    %v6533 = vunpack.c.l.b16 %v5015
    %v6534 = vunpack.c.h.b16 %v5015
    %v6535 = vunpack.c.l.b16 %v5016
    %v6536 = vunpack.c.h.b16 %v5016
    %v6537 = vunpack.c.l.b16 %v5017
    %v6538 = vunpack.c.h.b16 %v5017
    %v6539 = vunpack.c.l.b16 %v5018
    %v6540 = vunpack.c.h.b16 %v5018
    %v6541 = vunpack.c.l.b16 %v5019
    %v6542 = vunpack.c.h.b16 %v5019
    %v6543 = vunpack.c.l.b16 %v5020
    %v6544 = vunpack.c.h.b16 %v5020
    %v6545 = vunpack.c.l.b16 %v5021
    %v6546 = vunpack.c.h.b16 %v5021
    %v6547 = vunpack.c.l.b16 %v5022
    %v6548 = vunpack.c.h.b16 %v5022
    %v6549 = vunpack.c.l.b16 %v5023
    %v6550 = vunpack.c.h.b16 %v5023
    %v6551 = vunpack.c.l.b16 %v5024
    %v6552 = vunpack.c.h.b16 %v5024
    %v6553 = vunpack.c.l.b16 %v5025
    %v6554 = vunpack.c.h.b16 %v5025
    %v6555 = vunpack.c.l.b16 %v5026
    %v6556 = vunpack.c.h.b16 %v5026
    %v6557 = vunpack.c.l.b16 %v5027
    %v6558 = vunpack.c.h.b16 %v5027
    %v6559 = vunpack.c.l.b16 %v5028
    %v6560 = vunpack.c.h.b16 %v5028
    %v6561 = vunpack.c.l.b16 %v5029
    %v6562 = vunpack.c.h.b16 %v5029
    %v6563 = vunpack.c.l.b16 %v5030
    %v6564 = vunpack.c.h.b16 %v5030
    %v6565 = vunpack.c.l.b16 %v5031
    %v6566 = vunpack.c.h.b16 %v5031
    %v6567 = vunpack.c.l.b16 %v5032
    %v6568 = vunpack.c.h.b16 %v5032
    %v6569 = vunpack.c.l.b16 %v5033
    %v6570 = vunpack.c.h.b16 %v5033
    %v6571 = vunpack.c.l.b16 %v5034
    %v6572 = vunpack.c.h.b16 %v5034
    %v6573 = vunpack.c.l.b16 %v5035
    %v6574 = vunpack.c.h.b16 %v5035
    %v6575 = vunpack.c.l.b16 %v5036
    %v6576 = vunpack.c.h.b16 %v5036
    %v6577 = vunpack.c.l.b16 %v5037
    %v6578 = vunpack.c.h.b16 %v5037
    %v6579 = vunpack.c.l.b16 %v5038
    %v6580 = vunpack.c.h.b16 %v5038
    %v6581 = vunpack.c.l.b16 %v5039
    %v6582 = vunpack.c.h.b16 %v5039
    %v6583 = vunpack.c.l.b16 %v5040
    %v6584 = vunpack.c.h.b16 %v5040
    %v6585 = vunpack.c.l.b16 %v5041
    %v6586 = vunpack.c.h.b16 %v5041
    %v6587 = vunpack.c.l.b16 %v5042
    %v6588 = vunpack.c.h.b16 %v5042
    %v6589 = vunpack.c.l.b16 %v5043
    %v6590 = vunpack.c.h.b16 %v5043
    %v6591 = vunpack.c.l.b16 %v5044
    %v6592 = vunpack.c.h.b16 %v5044
    %v6593 = vunpack.c.l.b16 %v5045
    %v6594 = vunpack.c.h.b16 %v5045
    %v6595 = vunpack.c.l.b16 %v5046
    %v6596 = vunpack.c.h.b16 %v5046
    %v6597 = vunpack.c.l.b16 %v5047
    %v6598 = vunpack.c.h.b16 %v5047
    %v6599 = vunpack.c.l.b16 %v5048
    %v6600 = vunpack.c.h.b16 %v5048
    %v6601 = vunpack.c.l.b16 %v5049
    %v6602 = vunpack.c.h.b16 %v5049
    %v6603 = vunpack.c.l.b16 %v5050
    %v6604 = vunpack.c.h.b16 %v5050
    %v6605 = vunpack.c.l.b16 %v5051
    %v6606 = vunpack.c.h.b16 %v5051
    %v6607 = vunpack.c.l.b16 %v5052
    %v6608 = vunpack.c.h.b16 %v5052
    %v6609 = vunpack.c.l.b16 %v5053
    %v6610 = vunpack.c.h.b16 %v5053
    %v6611 = vunpack.c.l.b16 %v5054
    %v6612 = vunpack.c.h.b16 %v5054
    %v6613 = vunpack.c.l.b16 %v5055
    %v6614 = vunpack.c.h.b16 %v5055
    %v6615 = vunpack.c.l.b16 %v5056
    %v6616 = vunpack.c.h.b16 %v5056
    %v6617 = vunpack.c.l.b16 %v5057
    %v6618 = vunpack.c.h.b16 %v5057
    %v6619 = vunpack.c.l.b16 %v5058
    %v6620 = vunpack.c.h.b16 %v5058
    %v6621 = vunpack.c.l.b16 %v5059
    %v6622 = vunpack.c.h.b16 %v5059
    %v6623 = vunpack.c.l.b16 %v5060
    %v6624 = vunpack.c.h.b16 %v5060
    %v6625 = vunpack.c.l.b16 %v5061
    %v6626 = vunpack.c.h.b16 %v5061
    %v6627 = vunpack.c.l.b16 %v5062
    %v6628 = vunpack.c.h.b16 %v5062
    %v6629 = vunpack.c.l.b16 %v5063
    %v6630 = vunpack.c.h.b16 %v5063
    %v6631 = vunpack.c.l.b16 %v5064
    %v6632 = vunpack.c.h.b16 %v5064
    %v6633 = vunpack.c.l.b16 %v5065
    %v6634 = vunpack.c.h.b16 %v5065
    %v6635 = vunpack.c.l.b16 %v5066
    %v6636 = vunpack.c.h.b16 %v5066
    %v6637 = vunpack.c.l.b16 %v5067
    %v6638 = vunpack.c.h.b16 %v5067
    %v6639 = vunpack.c.l.b16 %v5068
    %v6640 = vunpack.c.h.b16 %v5068
    %v6641 = vunpack.c.l.b16 %v5069
    %v6642 = vunpack.c.h.b16 %v5069
    %v6643 = vunpack.c.l.b16 %v5070
    %v6644 = vunpack.c.h.b16 %v5070
    %v6645 = vunpack.c.l.b16 %v5071
    %v6646 = vunpack.c.h.b16 %v5071
    %v6647 = vunpack.c.l.b16 %v5072
    %v6648 = vunpack.c.h.b16 %v5072
    %v6649 = vunpack.c.l.b16 %v5073
    %v6650 = vunpack.c.h.b16 %v5073
    %v6651 = vunpack.c.l.b16 %v5074
    %v6652 = vunpack.c.h.b16 %v5074
    %v6653 = vpack.c.b16 %v5637, %v5629
    %v6654 = vpack.c.b16 %v5638, %v5630
    %v6655 = vpack.c.b16 %v5639, %v5631
    %v6656 = vpack.c.b16 %v5640, %v5632
    %v6657 = vpack.c.b16 %v5641, %v5633
    %v6658 = vpack.c.b16 %v5642, %v5634
    %v6659 = vpack.c.b16 %v5643, %v5635
    %v6660 = vpack.c.b16 %v5644, %v5636
    %v6661 = vpack.c.b16 %v5653, %v5645
    %v6662 = vpack.c.b16 %v5654, %v5646
    %v6663 = vpack.c.b16 %v5655, %v5647
    %v6664 = vpack.c.b16 %v5656, %v5648
    %v6665 = vpack.c.b16 %v5657, %v5649
    %v6666 = vpack.c.b16 %v5658, %v5650
    %v6667 = vpack.c.b16 %v5659, %v5651
    %v6668 = vpack.c.b16 %v5660, %v5652
    %v6669 = vpack.c.b16 %v5669, %v5661
    %v6670 = vpack.c.b16 %v5670, %v5662
    %v6671 = vpack.c.b16 %v5671, %v5663
    %v6672 = vpack.c.b16 %v5672, %v5664
    %v6673 = vpack.c.b16 %v5673, %v5665
    %v6674 = vpack.c.b16 %v5674, %v5666
    %v6675 = vpack.c.b16 %v5675, %v5667
    %v6676 = vpack.c.b16 %v5676, %v5668
    %v6677 = vpack.c.b16 %v5685, %v5677
    %v6678 = vpack.c.b16 %v5686, %v5678
    %v6679 = vpack.c.b16 %v5687, %v5679
    %v6680 = vpack.c.b16 %v5688, %v5680
    %v6681 = vpack.c.b16 %v5689, %v5681
    %v6682 = vpack.c.b16 %v5690, %v5682
    %v6683 = vpack.c.b16 %v5691, %v5683
    %v6684 = vpack.c.b16 %v5692, %v5684
    %v6685 = vpack.c.b16 %v5701, %v5693
    %v6686 = vpack.c.b16 %v5702, %v5694
    %v6687 = vpack.c.b16 %v5703, %v5695
    %v6688 = vpack.c.b16 %v5704, %v5696
    %v6689 = vpack.c.b16 %v5705, %v5697
    %v6690 = vpack.c.b16 %v5706, %v5698
    %v6691 = vpack.c.b16 %v5707, %v5699
    %v6692 = vpack.c.b16 %v5708, %v5700
    %v6693 = vpack.c.b16 %v5717, %v5709
    %v6694 = vpack.c.b16 %v5718, %v5710
    %v6695 = vpack.c.b16 %v5719, %v5711
    %v6696 = vpack.c.b16 %v5720, %v5712
    %v6697 = vpack.c.b16 %v5721, %v5713
    %v6698 = vpack.c.b16 %v5722, %v5714
    %v6699 = vpack.c.b16 %v5723, %v5715
    %v6700 = vpack.c.b16 %v5724, %v5716
    %v6701 = vpack.c.b16 %v5733, %v5725
    %v6702 = vpack.c.b16 %v5734, %v5726
    %v6703 = vpack.c.b16 %v5735, %v5727
    %v6704 = vpack.c.b16 %v5736, %v5728
    %v6705 = vpack.c.b16 %v5737, %v5729
    %v6706 = vpack.c.b16 %v5738, %v5730
    %v6707 = vpack.c.b16 %v5739, %v5731
    %v6708 = vpack.c.b16 %v5740, %v5732
    %v6709 = vpack.c.b16 %v5749, %v5741
    %v6710 = vpack.c.b16 %v5750, %v5742
    %v6711 = vpack.c.b16 %v5751, %v5743
    %v6712 = vpack.c.b16 %v5752, %v5744
    %v6713 = vpack.c.b16 %v5753, %v5745
    %v6714 = vpack.c.b16 %v5754, %v5746
    %v6715 = vpack.c.b16 %v5755, %v5747
    %v6716 = vpack.c.b16 %v5756, %v5748
    %v6717 = vpack.c.b16 %v5765, %v5757
    %v6718 = vpack.c.b16 %v5766, %v5758
    %v6719 = vpack.c.b16 %v5767, %v5759
    %v6720 = vpack.c.b16 %v5768, %v5760
    %v6721 = vpack.c.b16 %v5769, %v5761
    %v6722 = vpack.c.b16 %v5770, %v5762
    %v6723 = vpack.c.b16 %v5771, %v5763
    %v6724 = vpack.c.b16 %v5772, %v5764
    %v6725 = vpack.c.b16 %v5781, %v5773
    %v6726 = vpack.c.b16 %v5782, %v5774
    %v6727 = vpack.c.b16 %v5783, %v5775
    %v6728 = vpack.c.b16 %v5784, %v5776
    %v6729 = vpack.c.b16 %v5785, %v5777
    %v6730 = vpack.c.b16 %v5786, %v5778
    %v6731 = vpack.c.b16 %v5787, %v5779
    %v6732 = vpack.c.b16 %v5788, %v5780
    %v6733 = vpack.c.b16 %v5797, %v5789
    %v6734 = vpack.c.b16 %v5798, %v5790
    %v6735 = vpack.c.b16 %v5799, %v5791
    %v6736 = vpack.c.b16 %v5800, %v5792
    %v6737 = vpack.c.b16 %v5801, %v5793
    %v6738 = vpack.c.b16 %v5802, %v5794
    %v6739 = vpack.c.b16 %v5803, %v5795
    %v6740 = vpack.c.b16 %v5804, %v5796
    %v6741 = vpack.c.b16 %v5813, %v5805
    %v6742 = vpack.c.b16 %v5814, %v5806
    %v6743 = vpack.c.b16 %v5815, %v5807
    %v6744 = vpack.c.b16 %v5816, %v5808
    %v6745 = vpack.c.b16 %v5817, %v5809
    %v6746 = vpack.c.b16 %v5818, %v5810
    %v6747 = vpack.c.b16 %v5819, %v5811
    %v6748 = vpack.c.b16 %v5820, %v5812
    %v6749 = vpack.c.b16 %v5829, %v5821
    %v6750 = vpack.c.b16 %v5830, %v5822
    %v6751 = vpack.c.b16 %v5831, %v5823
    %v6752 = vpack.c.b16 %v5832, %v5824
    %v6753 = vpack.c.b16 %v5833, %v5825
    %v6754 = vpack.c.b16 %v5834, %v5826
    %v6755 = vpack.c.b16 %v5835, %v5827
    %v6756 = vpack.c.b16 %v5836, %v5828
    %v6757 = vpack.c.b16 %v5845, %v5837
    %v6758 = vpack.c.b16 %v5846, %v5838
    %v6759 = vpack.c.b16 %v5847, %v5839
    %v6760 = vpack.c.b16 %v5848, %v5840
    %v6761 = vpack.c.b16 %v5849, %v5841
    %v6762 = vpack.c.b16 %v5850, %v5842
    %v6763 = vpack.c.b16 %v5851, %v5843
    %v6764 = vpack.c.b16 %v5852, %v5844
    %v6765 = vpack.c.b16 %v5861, %v5853
    %v6766 = vpack.c.b16 %v5862, %v5854
    %v6767 = vpack.c.b16 %v5863, %v5855
    %v6768 = vpack.c.b16 %v5864, %v5856
    %v6769 = vpack.c.b16 %v5865, %v5857
    %v6770 = vpack.c.b16 %v5866, %v5858
    %v6771 = vpack.c.b16 %v5867, %v5859
    %v6772 = vpack.c.b16 %v5868, %v5860
    %v6773 = vpack.c.b16 %v5877, %v5869
    %v6774 = vpack.c.b16 %v5878, %v5870
    %v6775 = vpack.c.b16 %v5879, %v5871
    %v6776 = vpack.c.b16 %v5880, %v5872
    %v6777 = vpack.c.b16 %v5881, %v5873
    %v6778 = vpack.c.b16 %v5882, %v5874
    %v6779 = vpack.c.b16 %v5883, %v5875
    %v6780 = vpack.c.b16 %v5884, %v5876
    %v6781 = vpack.c.b16 %v5893, %v5885
    %v6782 = vpack.c.b16 %v5894, %v5886
    %v6783 = vpack.c.b16 %v5895, %v5887
    %v6784 = vpack.c.b16 %v5896, %v5888
    %v6785 = vpack.c.b16 %v5897, %v5889
    %v6786 = vpack.c.b16 %v5898, %v5890
    %v6787 = vpack.c.b16 %v5899, %v5891
    %v6788 = vpack.c.b16 %v5900, %v5892
    %v6789 = vpack.c.b16 %v5909, %v5901
    %v6790 = vpack.c.b16 %v5910, %v5902
    %v6791 = vpack.c.b16 %v5911, %v5903
    %v6792 = vpack.c.b16 %v5912, %v5904
    %v6793 = vpack.c.b16 %v5913, %v5905
    %v6794 = vpack.c.b16 %v5914, %v5906
    %v6795 = vpack.c.b16 %v5915, %v5907
    %v6796 = vpack.c.b16 %v5916, %v5908
    %v6797 = vpack.c.b16 %v5925, %v5917
    %v6798 = vpack.c.b16 %v5926, %v5918
    %v6799 = vpack.c.b16 %v5927, %v5919
    %v6800 = vpack.c.b16 %v5928, %v5920
    %v6801 = vpack.c.b16 %v5929, %v5921
    %v6802 = vpack.c.b16 %v5930, %v5922
    %v6803 = vpack.c.b16 %v5931, %v5923
    %v6804 = vpack.c.b16 %v5932, %v5924
    %v6805 = vpack.c.b16 %v5941, %v5933
    %v6806 = vpack.c.b16 %v5942, %v5934
    %v6807 = vpack.c.b16 %v5943, %v5935
    %v6808 = vpack.c.b16 %v5944, %v5936
    %v6809 = vpack.c.b16 %v5945, %v5937
    %v6810 = vpack.c.b16 %v5946, %v5938
    %v6811 = vpack.c.b16 %v5947, %v5939
    %v6812 = vpack.c.b16 %v5948, %v5940
    %v6813 = vpack.c.b16 %v5957, %v5949
    %v6814 = vpack.c.b16 %v5958, %v5950
    %v6815 = vpack.c.b16 %v5959, %v5951
    %v6816 = vpack.c.b16 %v5960, %v5952
    %v6817 = vpack.c.b16 %v5961, %v5953
    %v6818 = vpack.c.b16 %v5962, %v5954
    %v6819 = vpack.c.b16 %v5963, %v5955
    %v6820 = vpack.c.b16 %v5964, %v5956
    %v6821 = vpack.c.b16 %v5973, %v5965
    %v6822 = vpack.c.b16 %v5974, %v5966
    %v6823 = vpack.c.b16 %v5975, %v5967
    %v6824 = vpack.c.b16 %v5976, %v5968
    %v6825 = vpack.c.b16 %v5977, %v5969
    %v6826 = vpack.c.b16 %v5978, %v5970
    %v6827 = vpack.c.b16 %v5979, %v5971
    %v6828 = vpack.c.b16 %v5980, %v5972
    %v6829 = vpack.c.b16 %v5989, %v5981
    %v6830 = vpack.c.b16 %v5990, %v5982
    %v6831 = vpack.c.b16 %v5991, %v5983
    %v6832 = vpack.c.b16 %v5992, %v5984
    %v6833 = vpack.c.b16 %v5993, %v5985
    %v6834 = vpack.c.b16 %v5994, %v5986
    %v6835 = vpack.c.b16 %v5995, %v5987
    %v6836 = vpack.c.b16 %v5996, %v5988
    %v6837 = vpack.c.b16 %v6005, %v5997
    %v6838 = vpack.c.b16 %v6006, %v5998
    %v6839 = vpack.c.b16 %v6007, %v5999
    %v6840 = vpack.c.b16 %v6008, %v6000
    %v6841 = vpack.c.b16 %v6009, %v6001
    %v6842 = vpack.c.b16 %v6010, %v6002
    %v6843 = vpack.c.b16 %v6011, %v6003
    %v6844 = vpack.c.b16 %v6012, %v6004
    %v6845 = vpack.c.b16 %v6021, %v6013
    %v6846 = vpack.c.b16 %v6022, %v6014
    %v6847 = vpack.c.b16 %v6023, %v6015
    %v6848 = vpack.c.b16 %v6024, %v6016
    %v6849 = vpack.c.b16 %v6025, %v6017
    %v6850 = vpack.c.b16 %v6026, %v6018
    %v6851 = vpack.c.b16 %v6027, %v6019
    %v6852 = vpack.c.b16 %v6028, %v6020
    %v6853 = vpack.c.b16 %v6037, %v6029
    %v6854 = vpack.c.b16 %v6038, %v6030
    %v6855 = vpack.c.b16 %v6039, %v6031
    %v6856 = vpack.c.b16 %v6040, %v6032
    %v6857 = vpack.c.b16 %v6041, %v6033
    %v6858 = vpack.c.b16 %v6042, %v6034
    %v6859 = vpack.c.b16 %v6043, %v6035
    %v6860 = vpack.c.b16 %v6044, %v6036
    %v6861 = vpack.c.b16 %v6053, %v6045
    %v6862 = vpack.c.b16 %v6054, %v6046
    %v6863 = vpack.c.b16 %v6055, %v6047
    %v6864 = vpack.c.b16 %v6056, %v6048
    %v6865 = vpack.c.b16 %v6057, %v6049
    %v6866 = vpack.c.b16 %v6058, %v6050
    %v6867 = vpack.c.b16 %v6059, %v6051
    %v6868 = vpack.c.b16 %v6060, %v6052
    %v6869 = vpack.c.b16 %v6069, %v6061
    %v6870 = vpack.c.b16 %v6070, %v6062
    %v6871 = vpack.c.b16 %v6071, %v6063
    %v6872 = vpack.c.b16 %v6072, %v6064
    %v6873 = vpack.c.b16 %v6073, %v6065
    %v6874 = vpack.c.b16 %v6074, %v6066
    %v6875 = vpack.c.b16 %v6075, %v6067
    %v6876 = vpack.c.b16 %v6076, %v6068
    %v6877 = vpack.c.b16 %v6085, %v6077
    %v6878 = vpack.c.b16 %v6086, %v6078
    %v6879 = vpack.c.b16 %v6087, %v6079
    %v6880 = vpack.c.b16 %v6088, %v6080
    %v6881 = vpack.c.b16 %v6089, %v6081
    %v6882 = vpack.c.b16 %v6090, %v6082
    %v6883 = vpack.c.b16 %v6091, %v6083
    %v6884 = vpack.c.b16 %v6092, %v6084
    %v6885 = vpack.c.b16 %v6101, %v6093
    %v6886 = vpack.c.b16 %v6102, %v6094
    %v6887 = vpack.c.b16 %v6103, %v6095
    %v6888 = vpack.c.b16 %v6104, %v6096
    %v6889 = vpack.c.b16 %v6105, %v6097
    %v6890 = vpack.c.b16 %v6106, %v6098
    %v6891 = vpack.c.b16 %v6107, %v6099
    %v6892 = vpack.c.b16 %v6108, %v6100
    %v6893 = vpack.c.b16 %v6117, %v6109
    %v6894 = vpack.c.b16 %v6118, %v6110
    %v6895 = vpack.c.b16 %v6119, %v6111
    %v6896 = vpack.c.b16 %v6120, %v6112
    %v6897 = vpack.c.b16 %v6121, %v6113
    %v6898 = vpack.c.b16 %v6122, %v6114
    %v6899 = vpack.c.b16 %v6123, %v6115
    %v6900 = vpack.c.b16 %v6124, %v6116
    %v6901 = vpack.c.b16 %v6133, %v6125
    %v6902 = vpack.c.b16 %v6134, %v6126
    %v6903 = vpack.c.b16 %v6135, %v6127
    %v6904 = vpack.c.b16 %v6136, %v6128
    %v6905 = vpack.c.b16 %v6137, %v6129
    %v6906 = vpack.c.b16 %v6138, %v6130
    %v6907 = vpack.c.b16 %v6139, %v6131
    %v6908 = vpack.c.b16 %v6140, %v6132
    %v6909 = vpack.c.b16 %v6149, %v6141
    %v6910 = vpack.c.b16 %v6150, %v6142
    %v6911 = vpack.c.b16 %v6151, %v6143
    %v6912 = vpack.c.b16 %v6152, %v6144
    %v6913 = vpack.c.b16 %v6153, %v6145
    %v6914 = vpack.c.b16 %v6154, %v6146
    %v6915 = vpack.c.b16 %v6155, %v6147
    %v6916 = vpack.c.b16 %v6156, %v6148
    %v6917 = vpack.c.b16 %v6165, %v6157
    %v6918 = vpack.c.b16 %v6166, %v6158
    %v6919 = vpack.c.b16 %v6167, %v6159
    %v6920 = vpack.c.b16 %v6168, %v6160
    %v6921 = vpack.c.b16 %v6169, %v6161
    %v6922 = vpack.c.b16 %v6170, %v6162
    %v6923 = vpack.c.b16 %v6171, %v6163
    %v6924 = vpack.c.b16 %v6172, %v6164
    %v6925 = vpack.c.b16 %v6181, %v6173
    %v6926 = vpack.c.b16 %v6182, %v6174
    %v6927 = vpack.c.b16 %v6183, %v6175
    %v6928 = vpack.c.b16 %v6184, %v6176
    %v6929 = vpack.c.b16 %v6185, %v6177
    %v6930 = vpack.c.b16 %v6186, %v6178
    %v6931 = vpack.c.b16 %v6187, %v6179
    %v6932 = vpack.c.b16 %v6188, %v6180
    %v6933 = vpack.c.b16 %v6197, %v6189
    %v6934 = vpack.c.b16 %v6198, %v6190
    %v6935 = vpack.c.b16 %v6199, %v6191
    %v6936 = vpack.c.b16 %v6200, %v6192
    %v6937 = vpack.c.b16 %v6201, %v6193
    %v6938 = vpack.c.b16 %v6202, %v6194
    %v6939 = vpack.c.b16 %v6203, %v6195
    %v6940 = vpack.c.b16 %v6204, %v6196
    %v6941 = vpack.c.b16 %v6213, %v6205
    %v6942 = vpack.c.b16 %v6214, %v6206
    %v6943 = vpack.c.b16 %v6215, %v6207
    %v6944 = vpack.c.b16 %v6216, %v6208
    %v6945 = vpack.c.b16 %v6217, %v6209
    %v6946 = vpack.c.b16 %v6218, %v6210
    %v6947 = vpack.c.b16 %v6219, %v6211
    %v6948 = vpack.c.b16 %v6220, %v6212
    %v6949 = vpack.c.b16 %v6229, %v6221
    %v6950 = vpack.c.b16 %v6230, %v6222
    %v6951 = vpack.c.b16 %v6231, %v6223
    %v6952 = vpack.c.b16 %v6232, %v6224
    %v6953 = vpack.c.b16 %v6233, %v6225
    %v6954 = vpack.c.b16 %v6234, %v6226
    %v6955 = vpack.c.b16 %v6235, %v6227
    %v6956 = vpack.c.b16 %v6236, %v6228
    %v6957 = vpack.c.b16 %v6245, %v6237
    %v6958 = vpack.c.b16 %v6246, %v6238
    %v6959 = vpack.c.b16 %v6247, %v6239
    %v6960 = vpack.c.b16 %v6248, %v6240
    %v6961 = vpack.c.b16 %v6249, %v6241
    %v6962 = vpack.c.b16 %v6250, %v6242
    %v6963 = vpack.c.b16 %v6251, %v6243
    %v6964 = vpack.c.b16 %v6252, %v6244
    %v6965 = vpack.c.b16 %v6261, %v6253
    %v6966 = vpack.c.b16 %v6262, %v6254
    %v6967 = vpack.c.b16 %v6263, %v6255
    %v6968 = vpack.c.b16 %v6264, %v6256
    %v6969 = vpack.c.b16 %v6265, %v6257
    %v6970 = vpack.c.b16 %v6266, %v6258
    %v6971 = vpack.c.b16 %v6267, %v6259
    %v6972 = vpack.c.b16 %v6268, %v6260
    %v6973 = vpack.c.b16 %v6277, %v6269
    %v6974 = vpack.c.b16 %v6278, %v6270
    %v6975 = vpack.c.b16 %v6279, %v6271
    %v6976 = vpack.c.b16 %v6280, %v6272
    %v6977 = vpack.c.b16 %v6281, %v6273
    %v6978 = vpack.c.b16 %v6282, %v6274
    %v6979 = vpack.c.b16 %v6283, %v6275
    %v6980 = vpack.c.b16 %v6284, %v6276
    %v6981 = vpack.c.b16 %v6293, %v6285
    %v6982 = vpack.c.b16 %v6294, %v6286
    %v6983 = vpack.c.b16 %v6295, %v6287
    %v6984 = vpack.c.b16 %v6296, %v6288
    %v6985 = vpack.c.b16 %v6297, %v6289
    %v6986 = vpack.c.b16 %v6298, %v6290
    %v6987 = vpack.c.b16 %v6299, %v6291
    %v6988 = vpack.c.b16 %v6300, %v6292
    %v6989 = vpack.c.b16 %v6309, %v6301
    %v6990 = vpack.c.b16 %v6310, %v6302
    %v6991 = vpack.c.b16 %v6311, %v6303
    %v6992 = vpack.c.b16 %v6312, %v6304
    %v6993 = vpack.c.b16 %v6313, %v6305
    %v6994 = vpack.c.b16 %v6314, %v6306
    %v6995 = vpack.c.b16 %v6315, %v6307
    %v6996 = vpack.c.b16 %v6316, %v6308
    %v6997 = vpack.c.b16 %v6325, %v6317
    %v6998 = vpack.c.b16 %v6326, %v6318
    %v6999 = vpack.c.b16 %v6327, %v6319
    %v7000 = vpack.c.b16 %v6328, %v6320
    %v7001 = vpack.c.b16 %v6329, %v6321
    %v7002 = vpack.c.b16 %v6330, %v6322
    %v7003 = vpack.c.b16 %v6331, %v6323
    %v7004 = vpack.c.b16 %v6332, %v6324
    %v7005 = vpack.c.b16 %v6341, %v6333
    %v7006 = vpack.c.b16 %v6342, %v6334
    %v7007 = vpack.c.b16 %v6343, %v6335
    %v7008 = vpack.c.b16 %v6344, %v6336
    %v7009 = vpack.c.b16 %v6345, %v6337
    %v7010 = vpack.c.b16 %v6346, %v6338
    %v7011 = vpack.c.b16 %v6347, %v6339
    %v7012 = vpack.c.b16 %v6348, %v6340
    %v7013 = vpack.c.b16 %v6357, %v6349
    %v7014 = vpack.c.b16 %v6358, %v6350
    %v7015 = vpack.c.b16 %v6359, %v6351
    %v7016 = vpack.c.b16 %v6360, %v6352
    %v7017 = vpack.c.b16 %v6361, %v6353
    %v7018 = vpack.c.b16 %v6362, %v6354
    %v7019 = vpack.c.b16 %v6363, %v6355
    %v7020 = vpack.c.b16 %v6364, %v6356
    %v7021 = vpack.c.b16 %v6373, %v6365
    %v7022 = vpack.c.b16 %v6374, %v6366
    %v7023 = vpack.c.b16 %v6375, %v6367
    %v7024 = vpack.c.b16 %v6376, %v6368
    %v7025 = vpack.c.b16 %v6377, %v6369
    %v7026 = vpack.c.b16 %v6378, %v6370
    %v7027 = vpack.c.b16 %v6379, %v6371
    %v7028 = vpack.c.b16 %v6380, %v6372
    %v7029 = vpack.c.b16 %v6389, %v6381
    %v7030 = vpack.c.b16 %v6390, %v6382
    %v7031 = vpack.c.b16 %v6391, %v6383
    %v7032 = vpack.c.b16 %v6392, %v6384
    %v7033 = vpack.c.b16 %v6393, %v6385
    %v7034 = vpack.c.b16 %v6394, %v6386
    %v7035 = vpack.c.b16 %v6395, %v6387
    %v7036 = vpack.c.b16 %v6396, %v6388
    %v7037 = vpack.c.b16 %v6405, %v6397
    %v7038 = vpack.c.b16 %v6406, %v6398
    %v7039 = vpack.c.b16 %v6407, %v6399
    %v7040 = vpack.c.b16 %v6408, %v6400
    %v7041 = vpack.c.b16 %v6409, %v6401
    %v7042 = vpack.c.b16 %v6410, %v6402
    %v7043 = vpack.c.b16 %v6411, %v6403
    %v7044 = vpack.c.b16 %v6412, %v6404
    %v7045 = vpack.c.b16 %v6421, %v6413
    %v7046 = vpack.c.b16 %v6422, %v6414
    %v7047 = vpack.c.b16 %v6423, %v6415
    %v7048 = vpack.c.b16 %v6424, %v6416
    %v7049 = vpack.c.b16 %v6425, %v6417
    %v7050 = vpack.c.b16 %v6426, %v6418
    %v7051 = vpack.c.b16 %v6427, %v6419
    %v7052 = vpack.c.b16 %v6428, %v6420
    %v7053 = vpack.c.b16 %v6437, %v6429
    %v7054 = vpack.c.b16 %v6438, %v6430
    %v7055 = vpack.c.b16 %v6439, %v6431
    %v7056 = vpack.c.b16 %v6440, %v6432
    %v7057 = vpack.c.b16 %v6441, %v6433
    %v7058 = vpack.c.b16 %v6442, %v6434
    %v7059 = vpack.c.b16 %v6443, %v6435
    %v7060 = vpack.c.b16 %v6444, %v6436
    %v7061 = vpack.c.b16 %v6453, %v6445
    %v7062 = vpack.c.b16 %v6454, %v6446
    %v7063 = vpack.c.b16 %v6455, %v6447
    %v7064 = vpack.c.b16 %v6456, %v6448
    %v7065 = vpack.c.b16 %v6457, %v6449
    %v7066 = vpack.c.b16 %v6458, %v6450
    %v7067 = vpack.c.b16 %v6459, %v6451
    %v7068 = vpack.c.b16 %v6460, %v6452
    %v7069 = vpack.c.b16 %v6469, %v6461
    %v7070 = vpack.c.b16 %v6470, %v6462
    %v7071 = vpack.c.b16 %v6471, %v6463
    %v7072 = vpack.c.b16 %v6472, %v6464
    %v7073 = vpack.c.b16 %v6473, %v6465
    %v7074 = vpack.c.b16 %v6474, %v6466
    %v7075 = vpack.c.b16 %v6475, %v6467
    %v7076 = vpack.c.b16 %v6476, %v6468
    %v7077 = vpack.c.b16 %v6485, %v6477
    %v7078 = vpack.c.b16 %v6486, %v6478
    %v7079 = vpack.c.b16 %v6487, %v6479
    %v7080 = vpack.c.b16 %v6488, %v6480
    %v7081 = vpack.c.b16 %v6489, %v6481
    %v7082 = vpack.c.b16 %v6490, %v6482
    %v7083 = vpack.c.b16 %v6491, %v6483
    %v7084 = vpack.c.b16 %v6492, %v6484
    %v7085 = vpack.c.b16 %v6501, %v6493
    %v7086 = vpack.c.b16 %v6502, %v6494
    %v7087 = vpack.c.b16 %v6503, %v6495
    %v7088 = vpack.c.b16 %v6504, %v6496
    %v7089 = vpack.c.b16 %v6505, %v6497
    %v7090 = vpack.c.b16 %v6506, %v6498
    %v7091 = vpack.c.b16 %v6507, %v6499
    %v7092 = vpack.c.b16 %v6508, %v6500
    %v7093 = vpack.c.b16 %v6517, %v6509
    %v7094 = vpack.c.b16 %v6518, %v6510
    %v7095 = vpack.c.b16 %v6519, %v6511
    %v7096 = vpack.c.b16 %v6520, %v6512
    %v7097 = vpack.c.b16 %v6521, %v6513
    %v7098 = vpack.c.b16 %v6522, %v6514
    %v7099 = vpack.c.b16 %v6523, %v6515
    %v7100 = vpack.c.b16 %v6524, %v6516
    %v7101 = vpack.c.b16 %v6533, %v6525
    %v7102 = vpack.c.b16 %v6534, %v6526
    %v7103 = vpack.c.b16 %v6535, %v6527
    %v7104 = vpack.c.b16 %v6536, %v6528
    %v7105 = vpack.c.b16 %v6537, %v6529
    %v7106 = vpack.c.b16 %v6538, %v6530
    %v7107 = vpack.c.b16 %v6539, %v6531
    %v7108 = vpack.c.b16 %v6540, %v6532
    %v7109 = vpack.c.b16 %v6549, %v6541
    %v7110 = vpack.c.b16 %v6550, %v6542
    %v7111 = vpack.c.b16 %v6551, %v6543
    %v7112 = vpack.c.b16 %v6552, %v6544
    %v7113 = vpack.c.b16 %v6553, %v6545
    %v7114 = vpack.c.b16 %v6554, %v6546
    %v7115 = vpack.c.b16 %v6555, %v6547
    %v7116 = vpack.c.b16 %v6556, %v6548
    %v7117 = vpack.c.b16 %v6565, %v6557
    %v7118 = vpack.c.b16 %v6566, %v6558
    %v7119 = vpack.c.b16 %v6567, %v6559
    %v7120 = vpack.c.b16 %v6568, %v6560
    %v7121 = vpack.c.b16 %v6569, %v6561
    %v7122 = vpack.c.b16 %v6570, %v6562
    %v7123 = vpack.c.b16 %v6571, %v6563
    %v7124 = vpack.c.b16 %v6572, %v6564
    %v7125 = vpack.c.b16 %v6581, %v6573
    %v7126 = vpack.c.b16 %v6582, %v6574
    %v7127 = vpack.c.b16 %v6583, %v6575
    %v7128 = vpack.c.b16 %v6584, %v6576
    %v7129 = vpack.c.b16 %v6585, %v6577
    %v7130 = vpack.c.b16 %v6586, %v6578
    %v7131 = vpack.c.b16 %v6587, %v6579
    %v7132 = vpack.c.b16 %v6588, %v6580
    %v7133 = vpack.c.b16 %v6597, %v6589
    %v7134 = vpack.c.b16 %v6598, %v6590
    %v7135 = vpack.c.b16 %v6599, %v6591
    %v7136 = vpack.c.b16 %v6600, %v6592
    %v7137 = vpack.c.b16 %v6601, %v6593
    %v7138 = vpack.c.b16 %v6602, %v6594
    %v7139 = vpack.c.b16 %v6603, %v6595
    %v7140 = vpack.c.b16 %v6604, %v6596
    %v7141 = vpack.c.b16 %v6613, %v6605
    %v7142 = vpack.c.b16 %v6614, %v6606
    %v7143 = vpack.c.b16 %v6615, %v6607
    %v7144 = vpack.c.b16 %v6616, %v6608
    %v7145 = vpack.c.b16 %v6617, %v6609
    %v7146 = vpack.c.b16 %v6618, %v6610
    %v7147 = vpack.c.b16 %v6619, %v6611
    %v7148 = vpack.c.b16 %v6620, %v6612
    %v7149 = vpack.c.b16 %v6629, %v6621
    %v7150 = vpack.c.b16 %v6630, %v6622
    %v7151 = vpack.c.b16 %v6631, %v6623
    %v7152 = vpack.c.b16 %v6632, %v6624
    %v7153 = vpack.c.b16 %v6633, %v6625
    %v7154 = vpack.c.b16 %v6634, %v6626
    %v7155 = vpack.c.b16 %v6635, %v6627
    %v7156 = vpack.c.b16 %v6636, %v6628
    %v7157 = vpack.c.b16 %v6645, %v6637
    %v7158 = vpack.c.b16 %v6646, %v6638
    %v7159 = vpack.c.b16 %v6647, %v6639
    %v7160 = vpack.c.b16 %v6648, %v6640
    %v7161 = vpack.c.b16 %v6649, %v6641
    %v7162 = vpack.c.b16 %v6650, %v6642
    %v7163 = vpack.c.b16 %v6651, %v6643
    %v7164 = vpack.c.b16 %v6652, %v6644
    %7677 = vmatprep.subr.bf16.mxu0 %v6654
    %7678 = vmatpush1.bf16.msra.mxu0 %v6653
    %7679 = vmatprep.subr.bf16.mxu0 %v6662
    %7680 = vmatpush1.bf16.msra.mxu0 %v6661
    %7681 = vmatprep.subr.bf16.mxu0 %v6670
    %7682 = vmatpush1.bf16.msra.mxu0 %v6669
    %7683 = vmatprep.subr.bf16.mxu0 %v6678
    %7684 = vmatpush1.bf16.msra.mxu0 %v6677
    %7685 = vmatprep.subr.bf16.mxu0 %v6686
    %7686 = vmatpush1.bf16.msra.mxu0 %v6685
    %7687 = vmatprep.subr.bf16.mxu0 %v6694
    %7688 = vmatpush1.bf16.msra.mxu0 %v6693
    %7689 = vmatprep.subr.bf16.mxu0 %v6702
    %7690 = vmatpush1.bf16.msra.mxu0 %v6701
    %7691 = vmatprep.subr.bf16.mxu0 %v6710
    %7692 = vmatpush1.bf16.msra.mxu0 %v6709
    %7693 = vmatprep.subr.bf16.mxu0 %v6718
    %7694 = vmatpush1.bf16.msra.mxu0 %v6717
    %7695 = vmatprep.subr.bf16.mxu0 %v6726
    %7696 = vmatpush1.bf16.msra.mxu0 %v6725
    %7697 = vmatprep.subr.bf16.mxu0 %v6734
    %7698 = vmatpush1.bf16.msra.mxu0 %v6733
    %7699 = vmatprep.subr.bf16.mxu0 %v6742
    %7700 = vmatpush1.bf16.msra.mxu0 %v6741
    %7701 = vmatprep.subr.bf16.mxu0 %v6750
    %7702 = vmatpush1.bf16.msra.mxu0 %v6749
    %7703 = vmatprep.subr.bf16.mxu0 %v6758
    %7704 = vmatpush1.bf16.msra.mxu0 %v6757
    %7705 = vmatprep.subr.bf16.mxu0 %v6766
    %7706 = vmatpush1.bf16.msra.mxu0 %v6765
    %7707 = vmatprep.subr.bf16.mxu0 %v6774
    %7708 = vmatpush1.bf16.msra.mxu0 %v6773
    %7709 = vmatprep.mubr.bf16.mxu0 %v778
    %7710 = vmatmul.mubr.bf16.gmra.mrb[0].mxu0 %v777
    %v7711 = vpop.f32.mrb[0].mxu0
    %v7712 = vadd.f32 %v5080, %v7711
    %v7713 = vpop.f32.mrb[0].mxu0
    %v7714 = vadd.f32 %v5084, %v7713
    %v7715 = vpop.f32.mrb[0].mxu0
    %v7716 = vpop.f32.mrb[0].mxu0
    %7717 = vdwg.mxu0
    %7718 = vmatprep.subr.bf16.mxu0 %v6782
    %7719 = vmatpush1.bf16.msra.mxu0 %v6781
    %7720 = vmatprep.subr.bf16.mxu0 %v6790
    %7721 = vmatpush1.bf16.msra.mxu0 %v6789
    %7722 = vmatprep.subr.bf16.mxu0 %v6798
    %7723 = vmatpush1.bf16.msra.mxu0 %v6797
    %7724 = vmatprep.subr.bf16.mxu0 %v6806
    %7725 = vmatpush1.bf16.msra.mxu0 %v6805
    %7726 = vmatprep.subr.bf16.mxu0 %v6814
    %7727 = vmatpush1.bf16.msra.mxu0 %v6813
    %7728 = vmatprep.subr.bf16.mxu0 %v6822
    %7729 = vmatpush1.bf16.msra.mxu0 %v6821
    %7730 = vmatprep.subr.bf16.mxu0 %v6830
    %7731 = vmatpush1.bf16.msra.mxu0 %v6829
    %7732 = vmatprep.subr.bf16.mxu0 %v6838
    %7733 = vmatpush1.bf16.msra.mxu0 %v6837
    %7734 = vmatprep.subr.bf16.mxu0 %v6846
    %7735 = vmatpush1.bf16.msra.mxu0 %v6845
    %7736 = vmatprep.subr.bf16.mxu0 %v6854
    %7737 = vmatpush1.bf16.msra.mxu0 %v6853
    %7738 = vmatprep.subr.bf16.mxu0 %v6862
    %7739 = vmatpush1.bf16.msra.mxu0 %v6861
    %7740 = vmatprep.subr.bf16.mxu0 %v6870
    %7741 = vmatpush1.bf16.msra.mxu0 %v6869
    %7742 = vmatprep.subr.bf16.mxu0 %v6878
    %7743 = vmatpush1.bf16.msra.mxu0 %v6877
    %7744 = vmatprep.subr.bf16.mxu0 %v6886
    %7745 = vmatpush1.bf16.msra.mxu0 %v6885
    %7746 = vmatprep.subr.bf16.mxu0 %v6894
    %7747 = vmatpush1.bf16.msra.mxu0 %v6893
    %7748 = vmatprep.subr.bf16.mxu0 %v6902
    %7749 = vmatpush1.bf16.msra.mxu0 %v6901
    %7750 = vmatprep.mubr.bf16.mxu0 %v780
    %7751 = vmatmul.mubr.bf16.gmra.mrb[0].mxu0 %v779
    %v7752 = vpop.f32.mrb[0].mxu0
    %v7753 = vadd.f32 %v7712, %v7752
    %v7754 = vpop.f32.mrb[0].mxu0
    %v7755 = vadd.f32 %v7714, %v7754
    %v7756 = vpop.f32.mrb[0].mxu0
    %v7757 = vpop.f32.mrb[0].mxu0
    %7758 = vdwg.mxu0
    %7759 = vmatprep.subr.bf16.mxu0 %v6910
    %7760 = vmatpush1.bf16.msra.mxu0 %v6909
    %7761 = vmatprep.subr.bf16.mxu0 %v6918
    %7762 = vmatpush1.bf16.msra.mxu0 %v6917
    %7763 = vmatprep.subr.bf16.mxu0 %v6926
    %7764 = vmatpush1.bf16.msra.mxu0 %v6925
    %7765 = vmatprep.subr.bf16.mxu0 %v6934
    %7766 = vmatpush1.bf16.msra.mxu0 %v6933
    %7767 = vmatprep.subr.bf16.mxu0 %v6942
    %7768 = vmatpush1.bf16.msra.mxu0 %v6941
    %7769 = vmatprep.subr.bf16.mxu0 %v6950
    %7770 = vmatpush1.bf16.msra.mxu0 %v6949
    %7771 = vmatprep.subr.bf16.mxu0 %v6958
    %7772 = vmatpush1.bf16.msra.mxu0 %v6957
    %7773 = vmatprep.subr.bf16.mxu0 %v6966
    %7774 = vmatpush1.bf16.msra.mxu0 %v6965
    %7775 = vmatprep.subr.bf16.mxu0 %v6974
    %7776 = vmatpush1.bf16.msra.mxu0 %v6973
    %7777 = vmatprep.subr.bf16.mxu0 %v6982
    %7778 = vmatpush1.bf16.msra.mxu0 %v6981
    %7779 = vmatprep.subr.bf16.mxu0 %v6990
    %7780 = vmatpush1.bf16.msra.mxu0 %v6989
    %7781 = vmatprep.subr.bf16.mxu0 %v6998
    %7782 = vmatpush1.bf16.msra.mxu0 %v6997
    %7783 = vmatprep.subr.bf16.mxu0 %v7006
    %7784 = vmatpush1.bf16.msra.mxu0 %v7005
    %7785 = vmatprep.subr.bf16.mxu0 %v7014
    %7786 = vmatpush1.bf16.msra.mxu0 %v7013
    %7787 = vmatprep.subr.bf16.mxu0 %v7022
    %7788 = vmatpush1.bf16.msra.mxu0 %v7021
    %7789 = vmatprep.subr.bf16.mxu0 %v7030
    %7790 = vmatpush1.bf16.msra.mxu0 %v7029
    %7791 = vmatprep.mubr.bf16.mxu0 %v782
    %7792 = vmatmul.mubr.bf16.gmra.mrb[0].mxu0 %v781
    %v7793 = vpop.f32.mrb[0].mxu0
    %v7794 = vadd.f32 %v7753, %v7793
    %v7795 = vpop.f32.mrb[0].mxu0
    %v7796 = vadd.f32 %v7755, %v7795
    %v7797 = vpop.f32.mrb[0].mxu0
    %v7798 = vpop.f32.mrb[0].mxu0
    %7799 = vdwg.mxu0
    %7800 = vmatprep.subr.bf16.mxu0 %v7038
    %7801 = vmatpush1.bf16.msra.mxu0 %v7037
    %7802 = vmatprep.subr.bf16.mxu0 %v7046
    %7803 = vmatpush1.bf16.msra.mxu0 %v7045
    %7804 = vmatprep.subr.bf16.mxu0 %v7054
    %7805 = vmatpush1.bf16.msra.mxu0 %v7053
    %7806 = vmatprep.subr.bf16.mxu0 %v7062
    %7807 = vmatpush1.bf16.msra.mxu0 %v7061
    %7808 = vmatprep.subr.bf16.mxu0 %v7070
    %7809 = vmatpush1.bf16.msra.mxu0 %v7069
    %7810 = vmatprep.subr.bf16.mxu0 %v7078
    %7811 = vmatpush1.bf16.msra.mxu0 %v7077
    %7812 = vmatprep.subr.bf16.mxu0 %v7086
    %7813 = vmatpush1.bf16.msra.mxu0 %v7085
    %7814 = vmatprep.subr.bf16.mxu0 %v7094
    %7815 = vmatpush1.bf16.msra.mxu0 %v7093
    %7816 = vmatprep.subr.bf16.mxu0 %v7102
    %7817 = vmatpush1.bf16.msra.mxu0 %v7101
    %7818 = vmatprep.subr.bf16.mxu0 %v7110
    %7819 = vmatpush1.bf16.msra.mxu0 %v7109
    %7820 = vmatprep.subr.bf16.mxu0 %v7118
    %7821 = vmatpush1.bf16.msra.mxu0 %v7117
    %7822 = vmatprep.subr.bf16.mxu0 %v7126
    %7823 = vmatpush1.bf16.msra.mxu0 %v7125
    %7824 = vmatprep.subr.bf16.mxu0 %v7134
    %7825 = vmatpush1.bf16.msra.mxu0 %v7133
    %7826 = vmatprep.subr.bf16.mxu0 %v7142
    %7827 = vmatpush1.bf16.msra.mxu0 %v7141
    %7828 = vmatprep.subr.bf16.mxu0 %v7150
    %7829 = vmatpush1.bf16.msra.mxu0 %v7149
    %7830 = vmatprep.subr.bf16.mxu0 %v7158
    %7831 = vmatpush1.bf16.msra.mxu0 %v7157
    %7832 = vmatprep.mubr.bf16.mxu0 %v784
    %7833 = vmatmul.mubr.bf16.gmra.mrb[0].mxu0 %v783
    %v7834 = vpop.f32.mrb[0].mxu0
    %v7835 = vadd.f32 %v7794, %v7834
    %v7836 = vpop.f32.mrb[0].mxu0
    %v7837 = vadd.f32 %v7796, %v7836
    %v7838 = vpop.f32.mrb[0].mxu0
    %v7839 = vpop.f32.mrb[0].mxu0
    %7840 = vdwg.mxu0
    %7841 = vmatprep.subr.bf16.mxu0 %v6656
    %7842 = vmatpush1.bf16.msra.mxu0 %v6655
    %7843 = vmatprep.subr.bf16.mxu0 %v6664
    %7844 = vmatpush1.bf16.msra.mxu0 %v6663
    %7845 = vmatprep.subr.bf16.mxu0 %v6672
    %7846 = vmatpush1.bf16.msra.mxu0 %v6671
    %7847 = vmatprep.subr.bf16.mxu0 %v6680
    %7848 = vmatpush1.bf16.msra.mxu0 %v6679
    %7849 = vmatprep.subr.bf16.mxu0 %v6688
    %7850 = vmatpush1.bf16.msra.mxu0 %v6687
    %7851 = vmatprep.subr.bf16.mxu0 %v6696
    %7852 = vmatpush1.bf16.msra.mxu0 %v6695
    %7853 = vmatprep.subr.bf16.mxu0 %v6704
    %7854 = vmatpush1.bf16.msra.mxu0 %v6703
    %7855 = vmatprep.subr.bf16.mxu0 %v6712
    %7856 = vmatpush1.bf16.msra.mxu0 %v6711
    %7857 = vmatprep.subr.bf16.mxu0 %v6720
    %7858 = vmatpush1.bf16.msra.mxu0 %v6719
    %7859 = vmatprep.subr.bf16.mxu0 %v6728
    %7860 = vmatpush1.bf16.msra.mxu0 %v6727
    %7861 = vmatprep.subr.bf16.mxu0 %v6736
    %7862 = vmatpush1.bf16.msra.mxu0 %v6735
    %7863 = vmatprep.subr.bf16.mxu0 %v6744
    %7864 = vmatpush1.bf16.msra.mxu0 %v6743
    %7865 = vmatprep.subr.bf16.mxu0 %v6752
    %7866 = vmatpush1.bf16.msra.mxu0 %v6751
    %7867 = vmatprep.subr.bf16.mxu0 %v6760
    %7868 = vmatpush1.bf16.msra.mxu0 %v6759
    %7869 = vmatprep.subr.bf16.mxu0 %v6768
    %7870 = vmatpush1.bf16.msra.mxu0 %v6767
    %7871 = vmatprep.subr.bf16.mxu0 %v6776
    %7872 = vmatpush1.bf16.msra.mxu0 %v6775
    %7873 = vmatprep.mubr.bf16.mxu0 %v778
    %7874 = vmatmul.mubr.bf16.gmra.mrb[0].mxu0 %v777
    %v7875 = vpop.f32.mrb[0].mxu0
    %v7876 = vadd.f32 %v5088, %v7875
    %v7877 = vpop.f32.mrb[0].mxu0
    %v7878 = vadd.f32 %v5092, %v7877
    %v7879 = vpop.f32.mrb[0].mxu0
    %v7880 = vpop.f32.mrb[0].mxu0
    %7881 = vdwg.mxu0
    %7882 = vmatprep.subr.bf16.mxu0 %v6784
    %7883 = vmatpush1.bf16.msra.mxu0 %v6783
    %7884 = vmatprep.subr.bf16.mxu0 %v6792
    %7885 = vmatpush1.bf16.msra.mxu0 %v6791
    %7886 = vmatprep.subr.bf16.mxu0 %v6800
    %7887 = vmatpush1.bf16.msra.mxu0 %v6799
    %7888 = vmatprep.subr.bf16.mxu0 %v6808
    %7889 = vmatpush1.bf16.msra.mxu0 %v6807
    %7890 = vmatprep.subr.bf16.mxu0 %v6816
    %7891 = vmatpush1.bf16.msra.mxu0 %v6815
    %7892 = vmatprep.subr.bf16.mxu0 %v6824
    %7893 = vmatpush1.bf16.msra.mxu0 %v6823
    %7894 = vmatprep.subr.bf16.mxu0 %v6832
    %7895 = vmatpush1.bf16.msra.mxu0 %v6831
    %7896 = vmatprep.subr.bf16.mxu0 %v6840
    %7897 = vmatpush1.bf16.msra.mxu0 %v6839
    %7898 = vmatprep.subr.bf16.mxu0 %v6848
    %7899 = vmatpush1.bf16.msra.mxu0 %v6847
    %7900 = vmatprep.subr.bf16.mxu0 %v6856
    %7901 = vmatpush1.bf16.msra.mxu0 %v6855
    %7902 = vmatprep.subr.bf16.mxu0 %v6864
    %7903 = vmatpush1.bf16.msra.mxu0 %v6863
    %7904 = vmatprep.subr.bf16.mxu0 %v6872
    %7905 = vmatpush1.bf16.msra.mxu0 %v6871
    %7906 = vmatprep.subr.bf16.mxu0 %v6880
    %7907 = vmatpush1.bf16.msra.mxu0 %v6879
    %7908 = vmatprep.subr.bf16.mxu0 %v6888
    %7909 = vmatpush1.bf16.msra.mxu0 %v6887
    %7910 = vmatprep.subr.bf16.mxu0 %v6896
    %7911 = vmatpush1.bf16.msra.mxu0 %v6895
    %7912 = vmatprep.subr.bf16.mxu0 %v6904
    %7913 = vmatpush1.bf16.msra.mxu0 %v6903
    %7914 = vmatprep.mubr.bf16.mxu0 %v780
    %7915 = vmatmul.mubr.bf16.gmra.mrb[0].mxu0 %v779
    %v7916 = vpop.f32.mrb[0].mxu0
    %v7917 = vadd.f32 %v7876, %v7916
    %v7918 = vpop.f32.mrb[0].mxu0
    %v7919 = vadd.f32 %v7878, %v7918
    %v7920 = vpop.f32.mrb[0].mxu0
    %v7921 = vpop.f32.mrb[0].mxu0
    %7922 = vdwg.mxu0
    %7923 = vmatprep.subr.bf16.mxu0 %v6912
    %7924 = vmatpush1.bf16.msra.mxu0 %v6911
    %7925 = vmatprep.subr.bf16.mxu0 %v6920
    %7926 = vmatpush1.bf16.msra.mxu0 %v6919
    %7927 = vmatprep.subr.bf16.mxu0 %v6928
    %7928 = vmatpush1.bf16.msra.mxu0 %v6927
    %7929 = vmatprep.subr.bf16.mxu0 %v6936
    %7930 = vmatpush1.bf16.msra.mxu0 %v6935
    %7931 = vmatprep.subr.bf16.mxu0 %v6944
    %7932 = vmatpush1.bf16.msra.mxu0 %v6943
    %7933 = vmatprep.subr.bf16.mxu0 %v6952
    %7934 = vmatpush1.bf16.msra.mxu0 %v6951
    %7935 = vmatprep.subr.bf16.mxu0 %v6960
    %7936 = vmatpush1.bf16.msra.mxu0 %v6959
    %7937 = vmatprep.subr.bf16.mxu0 %v6968
    %7938 = vmatpush1.bf16.msra.mxu0 %v6967
    %7939 = vmatprep.subr.bf16.mxu0 %v6976
    %7940 = vmatpush1.bf16.msra.mxu0 %v6975
    %7941 = vmatprep.subr.bf16.mxu0 %v6984
    %7942 = vmatpush1.bf16.msra.mxu0 %v6983
    %7943 = vmatprep.subr.bf16.mxu0 %v6992
    %7944 = vmatpush1.bf16.msra.mxu0 %v6991
    %7945 = vmatprep.subr.bf16.mxu0 %v7000
    %7946 = vmatpush1.bf16.msra.mxu0 %v6999
    %7947 = vmatprep.subr.bf16.mxu0 %v7008
    %7948 = vmatpush1.bf16.msra.mxu0 %v7007
    %7949 = vmatprep.subr.bf16.mxu0 %v7016
    %7950 = vmatpush1.bf16.msra.mxu0 %v7015
    %7951 = vmatprep.subr.bf16.mxu0 %v7024
    %7952 = vmatpush1.bf16.msra.mxu0 %v7023
    %7953 = vmatprep.subr.bf16.mxu0 %v7032
    %7954 = vmatpush1.bf16.msra.mxu0 %v7031
    %7955 = vmatprep.mubr.bf16.mxu0 %v782
    %7956 = vmatmul.mubr.bf16.gmra.mrb[0].mxu0 %v781
    %v7957 = vpop.f32.mrb[0].mxu0
    %v7958 = vadd.f32 %v7917, %v7957
    %v7959 = vpop.f32.mrb[0].mxu0
    %v7960 = vadd.f32 %v7919, %v7959
    %v7961 = vpop.f32.mrb[0].mxu0
    %v7962 = vpop.f32.mrb[0].mxu0
    %7963 = vdwg.mxu0
    %7964 = vmatprep.subr.bf16.mxu0 %v7040
    %7965 = vmatpush1.bf16.msra.mxu0 %v7039
    %7966 = vmatprep.subr.bf16.mxu0 %v7048
    %7967 = vmatpush1.bf16.msra.mxu0 %v7047
    %7968 = vmatprep.subr.bf16.mxu0 %v7056
    %7969 = vmatpush1.bf16.msra.mxu0 %v7055
    %7970 = vmatprep.subr.bf16.mxu0 %v7064
    %7971 = vmatpush1.bf16.msra.mxu0 %v7063
    %7972 = vmatprep.subr.bf16.mxu0 %v7072
    %7973 = vmatpush1.bf16.msra.mxu0 %v7071
    %7974 = vmatprep.subr.bf16.mxu0 %v7080
    %7975 = vmatpush1.bf16.msra.mxu0 %v7079
    %7976 = vmatprep.subr.bf16.mxu0 %v7088
    %7977 = vmatpush1.bf16.msra.mxu0 %v7087
    %7978 = vmatprep.subr.bf16.mxu0 %v7096
    %7979 = vmatpush1.bf16.msra.mxu0 %v7095
    %7980 = vmatprep.subr.bf16.mxu0 %v7104
    %7981 = vmatpush1.bf16.msra.mxu0 %v7103
    %7982 = vmatprep.subr.bf16.mxu0 %v7112
    %7983 = vmatpush1.bf16.msra.mxu0 %v7111
    %7984 = vmatprep.subr.bf16.mxu0 %v7120
    %7985 = vmatpush1.bf16.msra.mxu0 %v7119
    %7986 = vmatprep.subr.bf16.mxu0 %v7128
    %7987 = vmatpush1.bf16.msra.mxu0 %v7127
    %7988 = vmatprep.subr.bf16.mxu0 %v7136
    %7989 = vmatpush1.bf16.msra.mxu0 %v7135
    %7990 = vmatprep.subr.bf16.mxu0 %v7144
    %7991 = vmatpush1.bf16.msra.mxu0 %v7143
    %7992 = vmatprep.subr.bf16.mxu0 %v7152
    %7993 = vmatpush1.bf16.msra.mxu0 %v7151
    %7994 = vmatprep.subr.bf16.mxu0 %v7160
    %7995 = vmatpush1.bf16.msra.mxu0 %v7159
    %7996 = vmatprep.mubr.bf16.mxu0 %v784
    %7997 = vmatmul.mubr.bf16.gmra.mrb[0].mxu0 %v783
    %v7998 = vpop.f32.mrb[0].mxu0
    %v7999 = vadd.f32 %v7958, %v7998
    %v8000 = vpop.f32.mrb[0].mxu0
    %v8001 = vadd.f32 %v7960, %v8000
    %v8002 = vpop.f32.mrb[0].mxu0
    %v8003 = vpop.f32.mrb[0].mxu0
    %8004 = vdwg.mxu0
    %8005 = vmatprep.subr.bf16.mxu0 %v6658
    %8006 = vmatpush1.bf16.msra.mxu0 %v6657
    %8007 = vmatprep.subr.bf16.mxu0 %v6666
    %8008 = vmatpush1.bf16.msra.mxu0 %v6665
    %8009 = vmatprep.subr.bf16.mxu0 %v6674
    %8010 = vmatpush1.bf16.msra.mxu0 %v6673
    %8011 = vmatprep.subr.bf16.mxu0 %v6682
    %8012 = vmatpush1.bf16.msra.mxu0 %v6681
    %8013 = vmatprep.subr.bf16.mxu0 %v6690
    %8014 = vmatpush1.bf16.msra.mxu0 %v6689
    %8015 = vmatprep.subr.bf16.mxu0 %v6698
    %8016 = vmatpush1.bf16.msra.mxu0 %v6697
    %8017 = vmatprep.subr.bf16.mxu0 %v6706
    %8018 = vmatpush1.bf16.msra.mxu0 %v6705
    %8019 = vmatprep.subr.bf16.mxu0 %v6714
    %8020 = vmatpush1.bf16.msra.mxu0 %v6713
    %8021 = vmatprep.subr.bf16.mxu0 %v6722
    %8022 = vmatpush1.bf16.msra.mxu0 %v6721
    %8023 = vmatprep.subr.bf16.mxu0 %v6730
    %8024 = vmatpush1.bf16.msra.mxu0 %v6729
    %8025 = vmatprep.subr.bf16.mxu0 %v6738
    %8026 = vmatpush1.bf16.msra.mxu0 %v6737
    %8027 = vmatprep.subr.bf16.mxu0 %v6746
    %8028 = vmatpush1.bf16.msra.mxu0 %v6745
    %8029 = vmatprep.subr.bf16.mxu0 %v6754
    %8030 = vmatpush1.bf16.msra.mxu0 %v6753
    %8031 = vmatprep.subr.bf16.mxu0 %v6762
    %8032 = vmatpush1.bf16.msra.mxu0 %v6761
    %8033 = vmatprep.subr.bf16.mxu0 %v6770
    %8034 = vmatpush1.bf16.msra.mxu0 %v6769
    %8035 = vmatprep.subr.bf16.mxu0 %v6778
    %8036 = vmatpush1.bf16.msra.mxu0 %v6777
    %8037 = vmatprep.mubr.bf16.mxu0 %v778
    %8038 = vmatmul.mubr.bf16.gmra.mrb[0].mxu0 %v777
    %v8039 = vpop.f32.mrb[0].mxu0
    %v8040 = vadd.f32 %v5096, %v8039
    %v8041 = vpop.f32.mrb[0].mxu0
    %v8042 = vadd.f32 %v5100, %v8041
    %v8043 = vpop.f32.mrb[0].mxu0
    %v8044 = vpop.f32.mrb[0].mxu0
    %8045 = vdwg.mxu0
    %8046 = vmatprep.subr.bf16.mxu0 %v6786
    %8047 = vmatpush1.bf16.msra.mxu0 %v6785
    %8048 = vmatprep.subr.bf16.mxu0 %v6794
    %8049 = vmatpush1.bf16.msra.mxu0 %v6793
    %8050 = vmatprep.subr.bf16.mxu0 %v6802
    %8051 = vmatpush1.bf16.msra.mxu0 %v6801
    %8052 = vmatprep.subr.bf16.mxu0 %v6810
    %8053 = vmatpush1.bf16.msra.mxu0 %v6809
    %8054 = vmatprep.subr.bf16.mxu0 %v6818
    %8055 = vmatpush1.bf16.msra.mxu0 %v6817
    %8056 = vmatprep.subr.bf16.mxu0 %v6826
    %8057 = vmatpush1.bf16.msra.mxu0 %v6825
    %8058 = vmatprep.subr.bf16.mxu0 %v6834
    %8059 = vmatpush1.bf16.msra.mxu0 %v6833
    %8060 = vmatprep.subr.bf16.mxu0 %v6842
    %8061 = vmatpush1.bf16.msra.mxu0 %v6841
    %8062 = vmatprep.subr.bf16.mxu0 %v6850
    %8063 = vmatpush1.bf16.msra.mxu0 %v6849
    %8064 = vmatprep.subr.bf16.mxu0 %v6858
    %8065 = vmatpush1.bf16.msra.mxu0 %v6857
    %8066 = vmatprep.subr.bf16.mxu0 %v6866
    %8067 = vmatpush1.bf16.msra.mxu0 %v6865
    %8068 = vmatprep.subr.bf16.mxu0 %v6874
    %8069 = vmatpush1.bf16.msra.mxu0 %v6873
    %8070 = vmatprep.subr.bf16.mxu0 %v6882
    %8071 = vmatpush1.bf16.msra.mxu0 %v6881
    %8072 = vmatprep.subr.bf16.mxu0 %v6890
    %8073 = vmatpush1.bf16.msra.mxu0 %v6889
    %8074 = vmatprep.subr.bf16.mxu0 %v6898
    %8075 = vmatpush1.bf16.msra.mxu0 %v6897
    %8076 = vmatprep.subr.bf16.mxu0 %v6906
    %8077 = vmatpush1.bf16.msra.mxu0 %v6905
    %8078 = vmatprep.mubr.bf16.mxu0 %v780
    %8079 = vmatmul.mubr.bf16.gmra.mrb[0].mxu0 %v779
    %v8080 = vpop.f32.mrb[0].mxu0
    %v8081 = vadd.f32 %v8040, %v8080
    %v8082 = vpop.f32.mrb[0].mxu0
    %v8083 = vadd.f32 %v8042, %v8082
    %v8084 = vpop.f32.mrb[0].mxu0
    %v8085 = vpop.f32.mrb[0].mxu0
    %8086 = vdwg.mxu0
    %8087 = vmatprep.subr.bf16.mxu0 %v6914
    %8088 = vmatpush1.bf16.msra.mxu0 %v6913
    %8089 = vmatprep.subr.bf16.mxu0 %v6922
    %8090 = vmatpush1.bf16.msra.mxu0 %v6921
    %8091 = vmatprep.subr.bf16.mxu0 %v6930
    %8092 = vmatpush1.bf16.msra.mxu0 %v6929
    %8093 = vmatprep.subr.bf16.mxu0 %v6938
    %8094 = vmatpush1.bf16.msra.mxu0 %v6937
    %8095 = vmatprep.subr.bf16.mxu0 %v6946
    %8096 = vmatpush1.bf16.msra.mxu0 %v6945
    %8097 = vmatprep.subr.bf16.mxu0 %v6954
    %8098 = vmatpush1.bf16.msra.mxu0 %v6953
    %8099 = vmatprep.subr.bf16.mxu0 %v6962
    %8100 = vmatpush1.bf16.msra.mxu0 %v6961
    %8101 = vmatprep.subr.bf16.mxu0 %v6970
    %8102 = vmatpush1.bf16.msra.mxu0 %v6969
    %8103 = vmatprep.subr.bf16.mxu0 %v6978
    %8104 = vmatpush1.bf16.msra.mxu0 %v6977
    %8105 = vmatprep.subr.bf16.mxu0 %v6986
    %8106 = vmatpush1.bf16.msra.mxu0 %v6985
    %8107 = vmatprep.subr.bf16.mxu0 %v6994
    %8108 = vmatpush1.bf16.msra.mxu0 %v6993
    %8109 = vmatprep.subr.bf16.mxu0 %v7002
    %8110 = vmatpush1.bf16.msra.mxu0 %v7001
    %8111 = vmatprep.subr.bf16.mxu0 %v7010
    %8112 = vmatpush1.bf16.msra.mxu0 %v7009
    %8113 = vmatprep.subr.bf16.mxu0 %v7018
    %8114 = vmatpush1.bf16.msra.mxu0 %v7017
    %8115 = vmatprep.subr.bf16.mxu0 %v7026
    %8116 = vmatpush1.bf16.msra.mxu0 %v7025
    %8117 = vmatprep.subr.bf16.mxu0 %v7034
    %8118 = vmatpush1.bf16.msra.mxu0 %v7033
    %8119 = vmatprep.mubr.bf16.mxu0 %v782
    %8120 = vmatmul.mubr.bf16.gmra.mrb[0].mxu0 %v781
    %v8121 = vpop.f32.mrb[0].mxu0
    %v8122 = vadd.f32 %v8081, %v8121
    %v8123 = vpop.f32.mrb[0].mxu0
    %v8124 = vadd.f32 %v8083, %v8123
    %v8125 = vpop.f32.mrb[0].mxu0
    %v8126 = vpop.f32.mrb[0].mxu0
    %8127 = vdwg.mxu0
    %8128 = vmatprep.subr.bf16.mxu0 %v7042
    %8129 = vmatpush1.bf16.msra.mxu0 %v7041
    %8130 = vmatprep.subr.bf16.mxu0 %v7050
    %8131 = vmatpush1.bf16.msra.mxu0 %v7049
    %8132 = vmatprep.subr.bf16.mxu0 %v7058
    %8133 = vmatpush1.bf16.msra.mxu0 %v7057
    %8134 = vmatprep.subr.bf16.mxu0 %v7066
    %8135 = vmatpush1.bf16.msra.mxu0 %v7065
    %8136 = vmatprep.subr.bf16.mxu0 %v7074
    %8137 = vmatpush1.bf16.msra.mxu0 %v7073
    %8138 = vmatprep.subr.bf16.mxu0 %v7082
    %8139 = vmatpush1.bf16.msra.mxu0 %v7081
    %8140 = vmatprep.subr.bf16.mxu0 %v7090
    %8141 = vmatpush1.bf16.msra.mxu0 %v7089
    %8142 = vmatprep.subr.bf16.mxu0 %v7098
    %8143 = vmatpush1.bf16.msra.mxu0 %v7097
    %8144 = vmatprep.subr.bf16.mxu0 %v7106
    %8145 = vmatpush1.bf16.msra.mxu0 %v7105
    %8146 = vmatprep.subr.bf16.mxu0 %v7114
    %8147 = vmatpush1.bf16.msra.mxu0 %v7113
    %8148 = vmatprep.subr.bf16.mxu0 %v7122
    %8149 = vmatpush1.bf16.msra.mxu0 %v7121
    %8150 = vmatprep.subr.bf16.mxu0 %v7130
    %8151 = vmatpush1.bf16.msra.mxu0 %v7129
    %8152 = vmatprep.subr.bf16.mxu0 %v7138
    %8153 = vmatpush1.bf16.msra.mxu0 %v7137
    %8154 = vmatprep.subr.bf16.mxu0 %v7146
    %8155 = vmatpush1.bf16.msra.mxu0 %v7145
    %8156 = vmatprep.subr.bf16.mxu0 %v7154
    %8157 = vmatpush1.bf16.msra.mxu0 %v7153
    %8158 = vmatprep.subr.bf16.mxu0 %v7162
    %8159 = vmatpush1.bf16.msra.mxu0 %v7161
    %8160 = vmatprep.mubr.bf16.mxu0 %v784
    %8161 = vmatmul.mubr.bf16.gmra.mrb[0].mxu0 %v783
    %v8162 = vpop.f32.mrb[0].mxu0
    %v8163 = vadd.f32 %v8122, %v8162
    %v8164 = vpop.f32.mrb[0].mxu0
    %v8165 = vadd.f32 %v8124, %v8164
    %v8166 = vpop.f32.mrb[0].mxu0
    %v8167 = vpop.f32.mrb[0].mxu0
    %8168 = vdwg.mxu0
    %8169 = vmatprep.subr.bf16.mxu0 %v6660
    %8170 = vmatpush1.bf16.msra.mxu0 %v6659
    %8171 = vmatprep.subr.bf16.mxu0 %v6668
    %8172 = vmatpush1.bf16.msra.mxu0 %v6667
    %8173 = vmatprep.subr.bf16.mxu0 %v6676
    %8174 = vmatpush1.bf16.msra.mxu0 %v6675
    %8175 = vmatprep.subr.bf16.mxu0 %v6684
    %8176 = vmatpush1.bf16.msra.mxu0 %v6683
    %8177 = vmatprep.subr.bf16.mxu0 %v6692
    %8178 = vmatpush1.bf16.msra.mxu0 %v6691
    %8179 = vmatprep.subr.bf16.mxu0 %v6700
    %8180 = vmatpush1.bf16.msra.mxu0 %v6699
    %8181 = vmatprep.subr.bf16.mxu0 %v6708
    %8182 = vmatpush1.bf16.msra.mxu0 %v6707
    %8183 = vmatprep.subr.bf16.mxu0 %v6716
    %8184 = vmatpush1.bf16.msra.mxu0 %v6715
    %8185 = vmatprep.subr.bf16.mxu0 %v6724
    %8186 = vmatpush1.bf16.msra.mxu0 %v6723
    %8187 = vmatprep.subr.bf16.mxu0 %v6732
    %8188 = vmatpush1.bf16.msra.mxu0 %v6731
    %8189 = vmatprep.subr.bf16.mxu0 %v6740
    %8190 = vmatpush1.bf16.msra.mxu0 %v6739
    %8191 = vmatprep.subr.bf16.mxu0 %v6748
    %8192 = vmatpush1.bf16.msra.mxu0 %v6747
    %8193 = vmatprep.subr.bf16.mxu0 %v6756
    %8194 = vmatpush1.bf16.msra.mxu0 %v6755
    %8195 = vmatprep.subr.bf16.mxu0 %v6764
    %8196 = vmatpush1.bf16.msra.mxu0 %v6763
    %8197 = vmatprep.subr.bf16.mxu0 %v6772
    %8198 = vmatpush1.bf16.msra.mxu0 %v6771
    %8199 = vmatprep.subr.bf16.mxu0 %v6780
    %8200 = vmatpush1.bf16.msra.mxu0 %v6779
    %8201 = vmatprep.mubr.bf16.mxu0 %v778
    %8202 = vmatmul.mubr.bf16.gmra.mrb[0].mxu0 %v777
    %v8203 = vpop.f32.mrb[0].mxu0
    %v8204 = vadd.f32 %v5104, %v8203
    %v8205 = vpop.f32.mrb[0].mxu0
    %v8206 = vadd.f32 %v5108, %v8205
    %v8207 = vpop.f32.mrb[0].mxu0
    %v8208 = vpop.f32.mrb[0].mxu0
    %8209 = vdwg.mxu0
    %8210 = vmatprep.subr.bf16.mxu0 %v6788
    %8211 = vmatpush1.bf16.msra.mxu0 %v6787
    %8212 = vmatprep.subr.bf16.mxu0 %v6796
    %8213 = vmatpush1.bf16.msra.mxu0 %v6795
    %8214 = vmatprep.subr.bf16.mxu0 %v6804
    %8215 = vmatpush1.bf16.msra.mxu0 %v6803
    %8216 = vmatprep.subr.bf16.mxu0 %v6812
    %8217 = vmatpush1.bf16.msra.mxu0 %v6811
    %8218 = vmatprep.subr.bf16.mxu0 %v6820
    %8219 = vmatpush1.bf16.msra.mxu0 %v6819
    %8220 = vmatprep.subr.bf16.mxu0 %v6828
    %8221 = vmatpush1.bf16.msra.mxu0 %v6827
    %8222 = vmatprep.subr.bf16.mxu0 %v6836
    %8223 = vmatpush1.bf16.msra.mxu0 %v6835
    %8224 = vmatprep.subr.bf16.mxu0 %v6844
    %8225 = vmatpush1.bf16.msra.mxu0 %v6843
    %8226 = vmatprep.subr.bf16.mxu0 %v6852
    %8227 = vmatpush1.bf16.msra.mxu0 %v6851
    %8228 = vmatprep.subr.bf16.mxu0 %v6860
    %8229 = vmatpush1.bf16.msra.mxu0 %v6859
    %8230 = vmatprep.subr.bf16.mxu0 %v6868
    %8231 = vmatpush1.bf16.msra.mxu0 %v6867
    %8232 = vmatprep.subr.bf16.mxu0 %v6876
    %8233 = vmatpush1.bf16.msra.mxu0 %v6875
    %8234 = vmatprep.subr.bf16.mxu0 %v6884
    %8235 = vmatpush1.bf16.msra.mxu0 %v6883
    %8236 = vmatprep.subr.bf16.mxu0 %v6892
    %8237 = vmatpush1.bf16.msra.mxu0 %v6891
    %8238 = vmatprep.subr.bf16.mxu0 %v6900
    %8239 = vmatpush1.bf16.msra.mxu0 %v6899
    %8240 = vmatprep.subr.bf16.mxu0 %v6908
    %8241 = vmatpush1.bf16.msra.mxu0 %v6907
    %8242 = vmatprep.mubr.bf16.mxu0 %v780
    %8243 = vmatmul.mubr.bf16.gmra.mrb[0].mxu0 %v779
    %v8244 = vpop.f32.mrb[0].mxu0
    %v8245 = vadd.f32 %v8204, %v8244
    %v8246 = vpop.f32.mrb[0].mxu0
    %v8247 = vadd.f32 %v8206, %v8246
    %v8248 = vpop.f32.mrb[0].mxu0
    %v8249 = vpop.f32.mrb[0].mxu0
    %8250 = vdwg.mxu0
    %8251 = vmatprep.subr.bf16.mxu0 %v6916
    %8252 = vmatpush1.bf16.msra.mxu0 %v6915
    %8253 = vmatprep.subr.bf16.mxu0 %v6924
    %8254 = vmatpush1.bf16.msra.mxu0 %v6923
    %8255 = vmatprep.subr.bf16.mxu0 %v6932
    %8256 = vmatpush1.bf16.msra.mxu0 %v6931
    %8257 = vmatprep.subr.bf16.mxu0 %v6940
    %8258 = vmatpush1.bf16.msra.mxu0 %v6939
    %8259 = vmatprep.subr.bf16.mxu0 %v6948
    %8260 = vmatpush1.bf16.msra.mxu0 %v6947
    %8261 = vmatprep.subr.bf16.mxu0 %v6956
    %8262 = vmatpush1.bf16.msra.mxu0 %v6955
    %8263 = vmatprep.subr.bf16.mxu0 %v6964
    %8264 = vmatpush1.bf16.msra.mxu0 %v6963
    %8265 = vmatprep.subr.bf16.mxu0 %v6972
    %8266 = vmatpush1.bf16.msra.mxu0 %v6971
    %8267 = vmatprep.subr.bf16.mxu0 %v6980
    %8268 = vmatpush1.bf16.msra.mxu0 %v6979
    %8269 = vmatprep.subr.bf16.mxu0 %v6988
    %8270 = vmatpush1.bf16.msra.mxu0 %v6987
    %8271 = vmatprep.subr.bf16.mxu0 %v6996
    %8272 = vmatpush1.bf16.msra.mxu0 %v6995
    %8273 = vmatprep.subr.bf16.mxu0 %v7004
    %8274 = vmatpush1.bf16.msra.mxu0 %v7003
    %8275 = vmatprep.subr.bf16.mxu0 %v7012
    %8276 = vmatpush1.bf16.msra.mxu0 %v7011
    %8277 = vmatprep.subr.bf16.mxu0 %v7020
    %8278 = vmatpush1.bf16.msra.mxu0 %v7019
    %8279 = vmatprep.subr.bf16.mxu0 %v7028
    %8280 = vmatpush1.bf16.msra.mxu0 %v7027
    %8281 = vmatprep.subr.bf16.mxu0 %v7036
    %8282 = vmatpush1.bf16.msra.mxu0 %v7035
    %8283 = vmatprep.mubr.bf16.mxu0 %v782
    %8284 = vmatmul.mubr.bf16.gmra.mrb[0].mxu0 %v781
    %v8285 = vpop.f32.mrb[0].mxu0
    %v8286 = vadd.f32 %v8245, %v8285
    %v8287 = vpop.f32.mrb[0].mxu0
    %v8288 = vadd.f32 %v8247, %v8287
    %v8289 = vpop.f32.mrb[0].mxu0
    %v8290 = vpop.f32.mrb[0].mxu0
    %8291 = vdwg.mxu0
    %8292 = vmatprep.subr.bf16.mxu0 %v7044
    %8293 = vmatpush1.bf16.msra.mxu0 %v7043
    %8294 = vmatprep.subr.bf16.mxu0 %v7052
    %8295 = vmatpush1.bf16.msra.mxu0 %v7051
    %8296 = vmatprep.subr.bf16.mxu0 %v7060
    %8297 = vmatpush1.bf16.msra.mxu0 %v7059
    %8298 = vmatprep.subr.bf16.mxu0 %v7068
    %8299 = vmatpush1.bf16.msra.mxu0 %v7067
    %8300 = vmatprep.subr.bf16.mxu0 %v7076
    %8301 = vmatpush1.bf16.msra.mxu0 %v7075
    %8302 = vmatprep.subr.bf16.mxu0 %v7084
    %8303 = vmatpush1.bf16.msra.mxu0 %v7083
    %8304 = vmatprep.subr.bf16.mxu0 %v7092
    %8305 = vmatpush1.bf16.msra.mxu0 %v7091
    %8306 = vmatprep.subr.bf16.mxu0 %v7100
    %8307 = vmatpush1.bf16.msra.mxu0 %v7099
    %8308 = vmatprep.subr.bf16.mxu0 %v7108
    %8309 = vmatpush1.bf16.msra.mxu0 %v7107
    %8310 = vmatprep.subr.bf16.mxu0 %v7116
    %8311 = vmatpush1.bf16.msra.mxu0 %v7115
    %8312 = vmatprep.subr.bf16.mxu0 %v7124
    %8313 = vmatpush1.bf16.msra.mxu0 %v7123
    %8314 = vmatprep.subr.bf16.mxu0 %v7132
    %8315 = vmatpush1.bf16.msra.mxu0 %v7131
    %8316 = vmatprep.subr.bf16.mxu0 %v7140
    %8317 = vmatpush1.bf16.msra.mxu0 %v7139
    %8318 = vmatprep.subr.bf16.mxu0 %v7148
    %8319 = vmatpush1.bf16.msra.mxu0 %v7147
    %8320 = vmatprep.subr.bf16.mxu0 %v7156
    %8321 = vmatpush1.bf16.msra.mxu0 %v7155
    %8322 = vmatprep.subr.bf16.mxu0 %v7164
    %8323 = vmatpush1.bf16.msra.mxu0 %v7163
    %8324 = vmatprep.mubr.bf16.mxu0 %v784
    %8325 = vmatmul.mubr.bf16.gmra.mrb[0].mxu0 %v783
    %v8326 = vpop.f32.mrb[0].mxu0
    %v8327 = vadd.f32 %v8286, %v8326
    %v8328 = vpop.f32.mrb[0].mxu0
    %v8329 = vadd.f32 %v8288, %v8328
    %v8330 = vpop.f32.mrb[0].mxu0
    %v8331 = vpop.f32.mrb[0].mxu0
    %8332 = vdwg.mxu0
    %v8333 = vmax.f32 %v7835, 0.0
    %v8334 = vmax.f32 %v7837, 0.0
    %v8335 = vmax.f32 %v7999, 0.0
    %v8336 = vmax.f32 %v8001, 0.0
    %v8337 = vmax.f32 %v8163, 0.0
    %v8338 = vmax.f32 %v8165, 0.0
    %v8339 = vmax.f32 %v8327, 0.0
    %v8340 = vmax.f32 %v8329, 0.0
    %v8341 = vld [vmem:[#allocation14] ss:$2 sm:$0xff]
    %v8343 = vlaneseq
    %v8344 = vshrl.u32 %v8343, 7
    %v8345 = vsub.s32 0, %v8344
    %v8346 = vrot.slane %v8341, %v8345
    %v8347 = vlaneseq
    %v8348 = vshrl.u32 %v8347, 7
    %v8349 = vsub.s32 1, %v8348
    %v8350 = vrot.slane %v8341, %v8349
    %v8351 = vlaneseq
    %v8352 = vshrl.u32 %v8351, 7
    %v8353 = vsub.s32 2, %v8352
    %v8354 = vrot.slane %v8341, %v8353
    %v8355 = vlaneseq
    %v8356 = vshrl.u32 %v8355, 7
    %v8357 = vsub.s32 3, %v8356
    %v8358 = vrot.slane %v8341, %v8357
    %v8359 = vlaneseq
    %v8360 = vshrl.u32 %v8359, 7
    %v8361 = vsub.s32 4, %v8360
    %v8362 = vrot.slane %v8341, %v8361
    %v8363 = vlaneseq
    %v8364 = vshrl.u32 %v8363, 7
    %v8365 = vsub.s32 5, %v8364
    %v8366 = vrot.slane %v8341, %v8365
    %v8367 = vlaneseq
    %v8368 = vshrl.u32 %v8367, 7
    %v8369 = vsub.s32 6, %v8368
    %v8370 = vrot.slane %v8341, %v8369
    %v8371 = vlaneseq
    %v8372 = vshrl.u32 %v8371, 7
    %v8373 = vsub.s32 7, %v8372
    %v8374 = vrot.slane %v8341, %v8373
    %v8383 = vmul.f32 %v4555, %v8346
    %v8384 = vmul.f32 %v4556, %v8350
    %v8385 = vmul.f32 %v4557, %v8354
    %v8386 = vmul.f32 %v4558, %v8358
    %v8387 = vmul.f32 %v4559, %v8362
    %v8388 = vmul.f32 %v4560, %v8366
    %v8389 = vmul.f32 %v4561, %v8370
    %v8390 = vmul.f32 %v4562, %v8374
    %v8391 = vadd.f32 %v8383, %v8384
    %v8392 = vadd.f32 %v8391, %v8385
    %v8393 = vadd.f32 %v8392, %v8386
    %v8394 = vadd.f32 %v8393, %v8387
    %v8395 = vadd.f32 %v8394, %v8388
    %v8396 = vadd.f32 %v8395, %v8389
    %v8397 = vadd.f32 %v8396, %v8390
    %8398 = vadd.xlane.f32.xlu0 %v8397
    %v8399 = vpop.xlane.xlu0 %8398
    %v8400 = vld [vmem:[#allocation16] sm:$0x1]
    %v8402 = vlaneseq
    %v8403 = vshrl.u32 %v8402, 7
    %v8404 = vsub.s32 0, %v8403
    %v8405 = vrot.slane %v8400, %v8404
    %v8407 = vadd.f32 %v8399, %v8405
    %s8408 = scalar_lea.vmem [#allocation14], 1
    %v8409 = vld [vmem:[%s8408] ss:$2 sm:$0xff]
    %v8411 = vlaneseq
    %v8412 = vshrl.u32 %v8411, 7
    %v8413 = vsub.s32 0, %v8412
    %v8414 = vrot.slane %v8409, %v8413
    %v8415 = vlaneseq
    %v8416 = vshrl.u32 %v8415, 7
    %v8417 = vsub.s32 1, %v8416
    %v8418 = vrot.slane %v8409, %v8417
    %v8419 = vlaneseq
    %v8420 = vshrl.u32 %v8419, 7
    %v8421 = vsub.s32 2, %v8420
    %v8422 = vrot.slane %v8409, %v8421
    %v8423 = vlaneseq
    %v8424 = vshrl.u32 %v8423, 7
    %v8425 = vsub.s32 3, %v8424
    %v8426 = vrot.slane %v8409, %v8425
    %v8427 = vlaneseq
    %v8428 = vshrl.u32 %v8427, 7
    %v8429 = vsub.s32 4, %v8428
    %v8430 = vrot.slane %v8409, %v8429
    %v8431 = vlaneseq
    %v8432 = vshrl.u32 %v8431, 7
    %v8433 = vsub.s32 5, %v8432
    %v8434 = vrot.slane %v8409, %v8433
    %v8435 = vlaneseq
    %v8436 = vshrl.u32 %v8435, 7
    %v8437 = vsub.s32 6, %v8436
    %v8438 = vrot.slane %v8409, %v8437
    %v8439 = vlaneseq
    %v8440 = vshrl.u32 %v8439, 7
    %v8441 = vsub.s32 7, %v8440
    %v8442 = vrot.slane %v8409, %v8441
    %v8451 = vmul.f32 %v8333, %v8414
    %v8452 = vmul.f32 %v8334, %v8418
    %v8453 = vmul.f32 %v8335, %v8422
    %v8454 = vmul.f32 %v8336, %v8426
    %v8455 = vmul.f32 %v8337, %v8430
    %v8456 = vmul.f32 %v8338, %v8434
    %v8457 = vmul.f32 %v8339, %v8438
    %v8458 = vmul.f32 %v8340, %v8442
    %v8459 = vadd.f32 %v8451, %v8452
    %v8460 = vadd.f32 %v8459, %v8453
    %v8461 = vadd.f32 %v8460, %v8454
    %v8462 = vadd.f32 %v8461, %v8455
    %v8463 = vadd.f32 %v8462, %v8456
    %v8464 = vadd.f32 %v8463, %v8457
    %v8465 = vadd.f32 %v8464, %v8458
    %8466 = vadd.xlane.f32.xlu0 %v8465
    %v8467 = vpop.xlane.xlu0 %8466
    %v8468 = vadd.f32 %v8467, %v8405
    %v8469 = vmax.f32 %v8407, 0.0
    %v8470 = vxor.u32 %v8468, 2147483648
    %v8471 = vmul.f32 %v8470, 1.442695
    %v8472 = vpow.pop %v8471
    %v8473 = vadd.f32 %v8472, 1.0
    %v8474 = vrcp.pop %v8473
    %v8475 = vmul.f32 1.0, %v8474
    %v8476 = vlaneseq
    %v8477 = vand.u32 %v8476, 127
    %vm8478 = vcmp.eq.s32.totalorder %v8477, 0
    %vm8479 = vcmp.eq.s32.totalorder %v8477, 1
    %8481 = vset.pattern.permute.xlu0 1
    %8482 = vperm.xlu0 %8481, %v8475
    %v8483 = vpop.permute.xlu0 %8482
    %v8485 = vsel %vm8479, %v8483, 0.0
    %8487 = vset.pattern.permute.xlu0 0
    %8488 = vperm.xlu0 %8487, %v8469
    %v8489 = vpop.permute.xlu0 %8488
    %v8491 = vsel %vm8478, %v8489, %v8485
    %8492 = vst [vmem:[#allocation17] sm:$0xff] %v8491
    // Predicated region
    $region74: #{tpu_custom_call.1} parent=1 // pred_check
      _
    $region75: #{tpu_custom_call.1} parent=1 // pred_check_branch
      %8494 = sbr.rel (0) target = $region77
    $region76: #{tpu_custom_call.1} parent=1 // pred_region
      %s8496 = ssub.s32 128, 128
      %8497 = vsyncadd [#allocation4], %s8496
      %s8499 = sshll.u32 [#allocation17], 4
      %s8500 = int_to_ptr.vmem [resolvable:$true] %s8499
      %8502 = dma.vmem_to_hbm [thread:$0]  %s8500, 128, %s9, [#allocation4]
    $region77: #{tpu_custom_call.1} parent=1 // pred_fallthru
      _
    // Predicated region
    $region78: #{tpu_custom_call.1} parent=1 // pred_check
      _
    $region79: #{tpu_custom_call.1} parent=1 // pred_check_branch
      %8504 = sbr.rel (0) target = $region81
    $region80: #{tpu_custom_call.1} parent=1 // pred_region
      %8505 = dma.done [#allocation4], 128
    $region81: #{tpu_custom_call.1} parent=1 // pred_fallthru
      _
    %8506 = vsyncpa [#allocation3], 1
    %8507 = vsyncpa [#allocation6], 1
    %8508 = vsyncpa [#allocation9], 1
    %8509 = vsyncpa [#allocation12], 1
    %8510 = vsyncpa [#allocation15], 1
    %8511 = vsyncpa [#allocation4], 1

</llo_original>
